<compile_context>
chip_gen: v6e
topology: v6e:2x2x1
jax: 0.10.0
libtpu: 0.0.40
codegen_flags: <defaults>
</compile_context>

<pallas_src>
import math

import numpy as np

import jax
import jax.numpy as jnp
from jax.experimental import pallas as pl
from jax.experimental.pallas import tpu as pltpu


def _make_fused_kernel(B, M1p, w1o, d1, d2, n_act2, n_vmax, n_hmax):
    """conv1 -> ReLU -> conv2 -> ReLU -> maxpool(2) -> NCHW-flatten, B images/step."""
    tap_offsets = [ki * w1o + kj for ki in range(3) for kj in range(3)]

    def kernel(p1_ref, w1_ref, b1_ref, wcat_ref, b2_ref, sel_ref, o_ref,
               act1_ref, y_ref):
        # ---- conv1 + ReLU: bf16 MXU, f32 accum, stored bf16 (aligned stride M1p) ----
        w1 = w1_ref[...]                                   # (16, d1) bf16
        b1 = b1_ref[...]                                   # (1, d1) f32
        for b in range(B):
            a1 = jnp.dot(p1_ref[b], w1, preferred_element_type=jnp.float32)
            a1 = jnp.maximum(a1 + b1, 0.0)                 # (M1p, d1)
            act1_ref[b * M1p:(b + 1) * M1p, :] = a1.astype(jnp.bfloat16)

        # ---- conv2 as ONE wide GEMM over the whole batch ----
        # (B*M1p, d1) bf16 @ (d1, 9*d2) bf16 -> (B*M1p, 9*d2) f32
        y_ref[...] = jnp.dot(act1_ref[...], wcat_ref[...],
                             preferred_element_type=jnp.float32)

        # ---- per image: 9 shifted 64-wide adds + bias + ReLU + pool + NCHW flatten ----
        b2 = b2_ref[...]                                   # (1, d2) f32
        sel = sel_ref[...]                                 # (HP*WP, n_hmax) f32
        for b in range(B):
            base = b * M1p
            acc = y_ref[base:base + n_act2, 0:d2]          # tap 0 (offset 0)
            for tap in range(1, 9):
                off = tap_offsets[tap]
                acc = acc + y_ref[base + off:base + off + n_act2,
                                  tap * d2:(tap + 1) * d2]
            act2 = jnp.maximum(acc + b2, 0.0)              # (n_act2, d2)

            # 2x2 max-pool: act2 row r = ho*W1o + wo; window max at (ho,wo) is
            # max(act2[r], act2[r+1], act2[r+W1o], act2[r+W1o+1]).
            vmax = jnp.maximum(act2[0:n_vmax, :], act2[w1o:w1o + n_vmax, :])
            hmax = jnp.maximum(vmax[0:n_hmax, :], vmax[1:1 + n_hmax, :])
            pooled = jnp.dot(sel, hmax,
                             preferred_element_type=jnp.float32)   # (HP*WP, d2)
            o_ref[b] = jnp.transpose(pooled)               # (d2, HP*WP) = NCHW order

    return kernel


def net_part1_forward(x_nchw, params):
    """Forward pass of NetPart1 (inference). x_nchw: (N, 1, H, W) float32."""
    N, _, H, W = x_nchw.shape
    w1, b1, w2, b2 = params["w1"], params["b1"], params["w2"], params["b2"]
    d1, d2 = w1.shape[0], w2.shape[0]

    H1, W1o = H - 2, W - 2             # conv1 output spatial
    H2, W2o = H1 - 2, W1o - 2          # conv2 output spatial
    HP, WP = H2 // 2, W2o // 2         # pooled spatial
    M1 = H1 * W1o                      # conv1 rows (flattened spatial)
    M1p = ((M1 + 15) // 16) * 16       # bf16-sublane-aligned per-image row stride
    KP = 16                            # conv1 contraction (9 taps) padded to 16 lanes only

    # Row-window sizes for the in-kernel shift trick + pooling.  All reads of the
    # Y scratch stay strictly inside each image's M1 real rows (no garbage read).
    max_sel = 2 * (HP - 1) * W1o + 2 * (WP - 1)
    n_hmax = max_sel + 1
    n_vmax = max_sel + 2
    n_act2 = max_sel + W1o + 2

    # Images per grid step (amortizes per-step overhead; weights stay resident).
    B = next(b for b in (8, 4, 2, 1) if N % b == 0)

    # ---- tiny wrapper-side prep (the big conv2 im2col is NOT built) ----
    x = x_nchw.astype(jnp.float32)[:, 0, :, :]                         # (N, H, W)
    cols = [x[:, ki:ki + H1, kj:kj + W1o] for ki in range(3) for kj in range(3)]
    p1 = jnp.stack(cols, axis=-1).reshape(N, M1, 9)                    # conv1 im2col
    p1 = jnp.pad(p1, ((0, 0), (0, M1p - M1), (0, KP - 9)))
    p1 = p1.astype(jnp.bfloat16)                                       # (N, M1p, 16) bf16

    w1m = jnp.transpose(w1, (2, 3, 1, 0)).reshape(9, d1)
    w1m = jnp.pad(w1m, ((0, KP - 9), (0, 0))).astype(jnp.bfloat16)     # (16, d1) bf16
    b1m = b1.reshape(1, d1).astype(jnp.float32)
    # Concatenated conv2 tap weights: column block tap*d2:(tap+1)*d2 = tap (ki,kj).
    wcat = jnp.transpose(w2, (1, 2, 3, 0)).reshape(d1, 9 * d2).astype(jnp.bfloat16)
    b2m = b2.reshape(1, d2).astype(jnp.float32)

    # 0/1 row-selection matrix: pooled[po*WP + pw] = hmax[2*po*W1o + 2*pw]
    m = np.arange(HP * WP)
    sel_np = np.zeros((HP * WP, n_hmax), np.float32)
    sel_np[m, 2 * (m // WP) * W1o + 2 * (m % WP)] = 1.0
    sel = jnp.asarray(sel_np)

    kernel = _make_fused_kernel(B, M1p, W1o, d1, d2, n_act2, n_vmax, n_hmax)

    out = pl.pallas_call(
        kernel,
        out_shape=jax.ShapeDtypeStruct((N, d2, HP * WP), jnp.float32),
        grid_spec=pltpu.PrefetchScalarGridSpec(
            num_scalar_prefetch=0,
            grid=(N // B,),
            in_specs=[
                pl.BlockSpec((B, M1p, KP), lambda g: (g, 0, 0)),       # conv1 patches (bf16)
                pl.BlockSpec((KP, d1), lambda g: (0, 0)),              # conv1 weights (bf16)
                pl.BlockSpec((1, d1), lambda g: (0, 0)),               # conv1 bias (f32)
                pl.BlockSpec((d1, 9 * d2), lambda g: (0, 0)),          # conv2 Wcat (bf16)
                pl.BlockSpec((1, d2), lambda g: (0, 0)),               # conv2 bias (f32)
                pl.BlockSpec((HP * WP, n_hmax), lambda g: (0, 0)),     # pool row-selector
            ],
            out_specs=pl.BlockSpec((B, d2, HP * WP), lambda g: (g, 0, 0)),
            scratch_shapes=[
                pltpu.VMEM((B * M1p, d1), jnp.bfloat16),      # conv1 activations (bf16)
                pltpu.VMEM((B * M1p, 9 * d2), jnp.float32),   # conv2 wide-GEMM output Y
            ],
        ),
        compiler_params=pltpu.CompilerParams(
            dimension_semantics=("parallel",)),               # batch groups across TCs
    )(p1, w1m, b1m, wcat, b2m, sel)

    # Dropout2d(p=0.25) is identity at inference.
    # TODO(synk): training-mode channel dropout (pltpu PRNG) not implemented.
    return out.reshape(N, d2 * HP * WP)     # torch.flatten(x, 1), NCHW order (free reshape)


def _reference_forward(x_nchw, params):
    """Plain-XLA reference for a numerics sanity check."""
    dn = ("NCHW", "OIHW", "NCHW")
    y = jax.lax.conv_general_dilated(x_nchw, params["w1"], (1, 1), "VALID",
                                     dimension_numbers=dn)
    y = jax.nn.relu(y + params["b1"][None, :, None, None])
    y = jax.lax.conv_general_dilated(y, params["w2"], (1, 1), "VALID",
                                     dimension_numbers=dn)
    y = jax.nn.relu(y + params["b2"][None, :, None, None])
    y = jax.lax.reduce_window(y, -jnp.inf, jax.lax.max,
                              (1, 1, 2, 2), (1, 1, 2, 2), "VALID")
    return y.reshape(y.shape[0], -1)


def init_params(key):
    """PyTorch-style uniform(-1/sqrt(fan_in), 1/sqrt(fan_in)) init."""
    d1 = 768
    k1, k2, k3, k4 = jax.random.split(key, 4)
    b1v = 1.0 / math.sqrt(1 * 3 * 3)
    b2v = 1.0 / math.sqrt(d1 * 3 * 3)
    return {
        "w1": jax.random.uniform(k1, (d1, 1, 3, 3), jnp.float32, -b1v, b1v),
        "b1": jax.random.uniform(k2, (d1,), jnp.float32, -b1v, b1v),
        "w2": jax.random.uniform(k3, (64, d1, 3, 3), jnp.float32, -b2v, b2v),
        "b2": jax.random.uniform(k4, (64,), jnp.float32, -b2v, b2v),
    }


if __name__ == "__main__":
    key = jax.random.PRNGKey(0)
    pkey, xkey = jax.random.split(key)
    params = init_params(pkey)

    # Small MNIST-like input: batch=2, 1 channel, 16x16 spatial (NCHW).
    x = jax.random.normal(xkey, (2, 1, 16, 16), dtype=jnp.float32)

    fwd = jax.jit(net_part1_forward)
    out = fwd(x, params)
    jax.block_until_ready(out)

    # 16 -> conv1 -> 14 -> conv2 -> 12 -> pool -> 6 ; 64 channels ; flatten -> 2304
    assert out.shape == (2, 64 * 6 * 6), out.shape

    # Numerics check vs. plain-XLA f32 reference (bf16 conv operands => loose tol).
    ref = jax.jit(_reference_forward)(x, params)
    np.testing.assert_allclose(np.asarray(out), np.asarray(ref), rtol=3e-2, atol=3e-2)

    print("KERNEL_OK")
</pallas_src>

<mosaic_0001>
module attributes {stable_mosaic.version = 11 : i64} {
  func.func @kernel(%arg0: i32, %arg1: memref<2x208x16xbf16, #tpu.memory_space<vmem>>, %arg2: memref<16x768xbf16, #tpu.memory_space<vmem>>, %arg3: memref<1x768xf32, #tpu.memory_space<vmem>>, %arg4: memref<768x576xbf16, #tpu.memory_space<vmem>>, %arg5: memref<1x64xf32, #tpu.memory_space<vmem>>, %arg6: memref<36x151xf32, #tpu.memory_space<vmem>>, %arg7: memref<2x64x36xf32, #tpu.memory_space<vmem>>, %arg8: memref<416x768xbf16, #tpu.memory_space<vmem>>, %arg9: memref<416x576xf32, #tpu.memory_space<vmem>>) attributes {dimension_semantics = [#tpu.dimension_semantics<parallel>], iteration_bounds = array<i64: 1>, scalar_prefetch = 0 : i64, scratch_operands = 2 : i64, tpu.core_type = #tpu.core_type<tc>, window_params = [{transform_indices = @transform_0, window_bounds = array<i64: 2, 208, 16>}, {pipeline_mode = #tpu.pipeline_mode<synchronous>, transform_indices = @transform_1, window_bounds = array<i64: 16, 768>}, {pipeline_mode = #tpu.pipeline_mode<synchronous>, transform_indices = @transform_2, window_bounds = array<i64: 1, 768>}, {pipeline_mode = #tpu.pipeline_mode<synchronous>, transform_indices = @transform_3, window_bounds = array<i64: 768, 576>}, {pipeline_mode = #tpu.pipeline_mode<synchronous>, transform_indices = @transform_4, window_bounds = array<i64: 1, 64>}, {pipeline_mode = #tpu.pipeline_mode<synchronous>, transform_indices = @transform_5, window_bounds = array<i64: 36, 151>}, {transform_indices = @transform_6, window_bounds = array<i64: 2, 64, 36>}]} {
    %c0 = arith.constant 0 : index
    %c0_0 = arith.constant 0 : index
    %0 = vector.load %arg2[%c0, %c0_0] : memref<16x768xbf16, #tpu.memory_space<vmem>>, vector<16x768xbf16>
    %c0_1 = arith.constant 0 : index
    %c0_2 = arith.constant 0 : index
    %1 = vector.load %arg3[%c0_1, %c0_2] : memref<1x768xf32, #tpu.memory_space<vmem>>, vector<1x768xf32>
    %c0_3 = arith.constant 0 : index
    %c0_4 = arith.constant 0 : index
    %c0_5 = arith.constant 0 : index
    %2 = vector.load %arg1[%c0_3, %c0_4, %c0_5] : memref<2x208x16xbf16, #tpu.memory_space<vmem>>, vector<1x208x16xbf16>
    %3 = vector.shape_cast %2 : vector<1x208x16xbf16> to vector<208x16xbf16>
    %cst = arith.constant dense<0.000000e+00> : vector<208x768xf32>
    %4 = tpu.matmul %3, %0, %cst {dimension_numbers = #tpu.dot_dimension_numbers<[1], [0], [0], [1], [0, 0, 1, 1], [], []>} : vector<208x16xbf16>, vector<16x768xbf16>, vector<208x768xf32> -> vector<208x768xf32>
    %5 = vector.broadcast %1 : vector<1x768xf32> to vector<208x768xf32>
    %6 = arith.addf %4, %5 : vector<208x768xf32>
    %cst_6 = arith.constant 0.000000e+00 : f32
    %7 = vector.broadcast %cst_6 : f32 to vector<208x768xf32>
    %8 = arith.maximumf %6, %7 : vector<208x768xf32>
    %9 = arith.truncf %8 : vector<208x768xf32> to vector<208x768xbf16>
    %c0_7 = arith.constant 0 : index
    %c0_8 = arith.constant 0 : index
    %10 = vector.load %arg8[%c0_7, %c0_8] : memref<416x768xbf16, #tpu.memory_space<vmem>>, vector<208x768xbf16>
    tpu.vector_store %arg8[%c0_7, %c0_8], %9 {strides = array<i32>} : memref<416x768xbf16, #tpu.memory_space<vmem>>, vector<208x768xbf16>,
    %c1 = arith.constant 1 : index
    %c0_9 = arith.constant 0 : index
    %c0_10 = arith.constant 0 : index
    %11 = vector.load %arg1[%c1, %c0_9, %c0_10] : memref<2x208x16xbf16, #tpu.memory_space<vmem>>, vector<1x208x16xbf16>
    %12 = vector.shape_cast %11 : vector<1x208x16xbf16> to vector<208x16xbf16>
    %cst_11 = arith.constant dense<0.000000e+00> : vector<208x768xf32>
    %13 = tpu.matmul %12, %0, %cst_11 {dimension_numbers = #tpu.dot_dimension_numbers<[1], [0], [0], [1], [0, 0, 1, 1], [], []>} : vector<208x16xbf16>, vector<16x768xbf16>, vector<208x768xf32> -> vector<208x768xf32>
    %14 = vector.broadcast %1 : vector<1x768xf32> to vector<208x768xf32>
    %15 = arith.addf %13, %14 : vector<208x768xf32>
    %cst_12 = arith.constant 0.000000e+00 : f32
    %16 = vector.broadcast %cst_12 : f32 to vector<208x768xf32>
    %17 = arith.maximumf %15, %16 : vector<208x768xf32>
    %18 = arith.truncf %17 : vector<208x768xf32> to vector<208x768xbf16>
    %c208 = arith.constant 208 : index
    %c0_13 = arith.constant 0 : index
    %19 = vector.load %arg8[%c208, %c0_13] : memref<416x768xbf16, #tpu.memory_space<vmem>>, vector<208x768xbf16>
    tpu.vector_store %arg8[%c208, %c0_13], %18 {strides = array<i32>} : memref<416x768xbf16, #tpu.memory_space<vmem>>, vector<208x768xbf16>,
    %c0_14 = arith.constant 0 : index
    %c0_15 = arith.constant 0 : index
    %20 = vector.load %arg8[%c0_14, %c0_15] : memref<416x768xbf16, #tpu.memory_space<vmem>>, vector<416x768xbf16>
    %c0_16 = arith.constant 0 : index
    %c0_17 = arith.constant 0 : index
    %21 = vector.load %arg4[%c0_16, %c0_17] : memref<768x576xbf16, #tpu.memory_space<vmem>>, vector<768x576xbf16>
    %cst_18 = arith.constant dense<0.000000e+00> : vector<416x576xf32>
    %22 = tpu.matmul %20, %21, %cst_18 {dimension_numbers = #tpu.dot_dimension_numbers<[1], [0], [0], [1], [0, 0, 1, 1], [], []>} : vector<416x768xbf16>, vector<768x576xbf16>, vector<416x576xf32> -> vector<416x576xf32>
    %c0_19 = arith.constant 0 : index
    %c0_20 = arith.constant 0 : index
    %23 = vector.load %arg9[%c0_19, %c0_20] : memref<416x576xf32, #tpu.memory_space<vmem>>, vector<416x576xf32>
    tpu.vector_store %arg9[%c0_19, %c0_20], %22 {strides = array<i32>} : memref<416x576xf32, #tpu.memory_space<vmem>>, vector<416x576xf32>,
    %c0_21 = arith.constant 0 : index
    %c0_22 = arith.constant 0 : index
    %24 = vector.load %arg5[%c0_21, %c0_22] : memref<1x64xf32, #tpu.memory_space<vmem>>, vector<1x64xf32>
    %c0_23 = arith.constant 0 : index
    %c0_24 = arith.constant 0 : index
    %25 = vector.load %arg6[%c0_23, %c0_24] : memref<36x151xf32, #tpu.memory_space<vmem>>, vector<36x151xf32>
    %c0_25 = arith.constant 0 : index
    %c0_26 = arith.constant 0 : index
    %26 = vector.load %arg9[%c0_25, %c0_26] : memref<416x576xf32, #tpu.memory_space<vmem>>, vector<166x64xf32>
    %c1_27 = arith.constant 1 : index
    %c64 = arith.constant 64 : index
    %27 = vector.load %arg9[%c1_27, %c64] : memref<416x576xf32, #tpu.memory_space<vmem>>, vector<166x64xf32>
    %28 = arith.addf %26, %27 : vector<166x64xf32>
    %c2 = arith.constant 2 : index
    %c128 = arith.constant 128 : index
    %29 = vector.load %arg9[%c2, %c128] : memref<416x576xf32, #tpu.memory_space<vmem>>, vector<166x64xf32>
    %30 = arith.addf %28, %29 : vector<166x64xf32>
    %c14 = arith.constant 14 : index
    %c192 = arith.constant 192 : index
    %31 = vector.load %arg9[%c14, %c192] : memref<416x576xf32, #tpu.memory_space<vmem>>, vector<166x64xf32>
    %32 = arith.addf %30, %31 : vector<166x64xf32>
    %c15 = arith.constant 15 : index
    %c256 = arith.constant 256 : index
    %33 = vector.load %arg9[%c15, %c256] : memref<416x576xf32, #tpu.memory_space<vmem>>, vector<166x64xf32>
    %34 = arith.addf %32, %33 : vector<166x64xf32>
    %c16 = arith.constant 16 : index
    %c320 = arith.constant 320 : index
    %35 = vector.load %arg9[%c16, %c320] : memref<416x576xf32, #tpu.memory_space<vmem>>, vector<166x64xf32>
    %36 = arith.addf %34, %35 : vector<166x64xf32>
    %c28 = arith.constant 28 : index
    %c384 = arith.constant 384 : index
    %37 = vector.load %arg9[%c28, %c384] : memref<416x576xf32, #tpu.memory_space<vmem>>, vector<166x64xf32>
    %38 = arith.addf %36, %37 : vector<166x64xf32>
    %c29 = arith.constant 29 : index
    %c448 = arith.constant 448 : index
    %39 = vector.load %arg9[%c29, %c448] : memref<416x576xf32, #tpu.memory_space<vmem>>, vector<166x64xf32>
    %40 = arith.addf %38, %39 : vector<166x64xf32>
    %c30 = arith.constant 30 : index
    %c512 = arith.constant 512 : index
    %41 = vector.load %arg9[%c30, %c512] : memref<416x576xf32, #tpu.memory_space<vmem>>, vector<166x64xf32>
    %42 = arith.addf %40, %41 : vector<166x64xf32>
    %43 = vector.broadcast %24 : vector<1x64xf32> to vector<166x64xf32>
    %44 = arith.addf %42, %43 : vector<166x64xf32>
    %cst_28 = arith.constant 0.000000e+00 : f32
    %45 = vector.broadcast %cst_28 : f32 to vector<166x64xf32>
    %46 = arith.maximumf %44, %45 : vector<166x64xf32>
    %47 = vector.extract_strided_slice %46 {offsets = [0, 0], sizes = [152, 64], strides = [1, 1]} : vector<166x64xf32> to vector<152x64xf32>
    %48 = vector.extract_strided_slice %46 {offsets = [14, 0], sizes = [152, 64], strides = [1, 1]} : vector<166x64xf32> to vector<152x64xf32>
    %49 = arith.maximumf %47, %48 : vector<152x64xf32>
    %50 = vector.extract_strided_slice %49 {offsets = [0, 0], sizes = [151, 64], strides = [1, 1]} : vector<152x64xf32> to vector<151x64xf32>
    %51 = vector.extract_strided_slice %49 {offsets = [1, 0], sizes = [151, 64], strides = [1, 1]} : vector<152x64xf32> to vector<151x64xf32>
    %52 = arith.maximumf %50, %51 : vector<151x64xf32>
    %cst_29 = arith.constant dense<0.000000e+00> : vector<36x64xf32>
    %53 = tpu.matmul %25, %52, %cst_29 {dimension_numbers = #tpu.dot_dimension_numbers<[1], [0], [0], [1], [0, 0, 1, 1], [], []>} : vector<36x151xf32>, vector<151x64xf32>, vector<36x64xf32> -> vector<36x64xf32>
    %54 = tpu.transpose %53, [1, 0] : vector<36x64xf32> -> vector<64x36xf32>
    %c0_30 = arith.constant 0 : index
    %c0_31 = arith.constant 0 : index
    %c0_32 = arith.constant 0 : index
    %55 = vector.load %arg7[%c0_30, %c0_31, %c0_32] : memref<2x64x36xf32, #tpu.memory_space<vmem>>, vector<1x64x36xf32>
    %56 = vector.shape_cast %55 : vector<1x64x36xf32> to vector<64x36xf32>
    %57 = vector.shape_cast %54 : vector<64x36xf32> to vector<1x64x36xf32>
    tpu.vector_store %arg7[%c0_30, %c0_31, %c0_32], %57 {strides = array<i32>} : memref<2x64x36xf32, #tpu.memory_space<vmem>>, vector<1x64x36xf32>,
    %c208_33 = arith.constant 208 : index
    %c0_34 = arith.constant 0 : index
    %58 = vector.load %arg9[%c208_33, %c0_34] : memref<416x576xf32, #tpu.memory_space<vmem>>, vector<166x64xf32>
    %c209 = arith.constant 209 : index
    %c64_35 = arith.constant 64 : index
    %59 = vector.load %arg9[%c209, %c64_35] : memref<416x576xf32, #tpu.memory_space<vmem>>, vector<166x64xf32>
    %60 = arith.addf %58, %59 : vector<166x64xf32>
    %c210 = arith.constant 210 : index
    %c128_36 = arith.constant 128 : index
    %61 = vector.load %arg9[%c210, %c128_36] : memref<416x576xf32, #tpu.memory_space<vmem>>, vector<166x64xf32>
    %62 = arith.addf %60, %61 : vector<166x64xf32>
    %c222 = arith.constant 222 : index
    %c192_37 = arith.constant 192 : index
    %63 = vector.load %arg9[%c222, %c192_37] : memref<416x576xf32, #tpu.memory_space<vmem>>, vector<166x64xf32>
    %64 = arith.addf %62, %63 : vector<166x64xf32>
    %c223 = arith.constant 223 : index
    %c256_38 = arith.constant 256 : index
    %65 = vector.load %arg9[%c223, %c256_38] : memref<416x576xf32, #tpu.memory_space<vmem>>, vector<166x64xf32>
    %66 = arith.addf %64, %65 : vector<166x64xf32>
    %c224 = arith.constant 224 : index
    %c320_39 = arith.constant 320 : index
    %67 = vector.load %arg9[%c224, %c320_39] : memref<416x576xf32, #tpu.memory_space<vmem>>, vector<166x64xf32>
    %68 = arith.addf %66, %67 : vector<166x64xf32>
    %c236 = arith.constant 236 : index
    %c384_40 = arith.constant 384 : index
    %69 = vector.load %arg9[%c236, %c384_40] : memref<416x576xf32, #tpu.memory_space<vmem>>, vector<166x64xf32>
    %70 = arith.addf %68, %69 : vector<166x64xf32>
    %c237 = arith.constant 237 : index
    %c448_41 = arith.constant 448 : index
    %71 = vector.load %arg9[%c237, %c448_41] : memref<416x576xf32, #tpu.memory_space<vmem>>, vector<166x64xf32>
    %72 = arith.addf %70, %71 : vector<166x64xf32>
    %c238 = arith.constant 238 : index
    %c512_42 = arith.constant 512 : index
    %73 = vector.load %arg9[%c238, %c512_42] : memref<416x576xf32, #tpu.memory_space<vmem>>, vector<166x64xf32>
    %74 = arith.addf %72, %73 : vector<166x64xf32>
    %75 = vector.broadcast %24 : vector<1x64xf32> to vector<166x64xf32>
    %76 = arith.addf %74, %75 : vector<166x64xf32>
    %cst_43 = arith.constant 0.000000e+00 : f32
    %77 = vector.broadcast %cst_43 : f32 to vector<166x64xf32>
    %78 = arith.maximumf %76, %77 : vector<166x64xf32>
    %79 = vector.extract_strided_slice %78 {offsets = [0, 0], sizes = [152, 64], strides = [1, 1]} : vector<166x64xf32> to vector<152x64xf32>
    %80 = vector.extract_strided_slice %78 {offsets = [14, 0], sizes = [152, 64], strides = [1, 1]} : vector<166x64xf32> to vector<152x64xf32>
    %81 = arith.maximumf %79, %80 : vector<152x64xf32>
    %82 = vector.extract_strided_slice %81 {offsets = [0, 0], sizes = [151, 64], strides = [1, 1]} : vector<152x64xf32> to vector<151x64xf32>
    %83 = vector.extract_strided_slice %81 {offsets = [1, 0], sizes = [151, 64], strides = [1, 1]} : vector<152x64xf32> to vector<151x64xf32>
    %84 = arith.maximumf %82, %83 : vector<151x64xf32>
    %cst_44 = arith.constant dense<0.000000e+00> : vector<36x64xf32>
    %85 = tpu.matmul %25, %84, %cst_44 {dimension_numbers = #tpu.dot_dimension_numbers<[1], [0], [0], [1], [0, 0, 1, 1], [], []>} : vector<36x151xf32>, vector<151x64xf32>, vector<36x64xf32> -> vector<36x64xf32>
    %86 = tpu.transpose %85, [1, 0] : vector<36x64xf32> -> vector<64x36xf32>
    %c1_45 = arith.constant 1 : index
    %c0_46 = arith.constant 0 : index
    %c0_47 = arith.constant 0 : index
    %87 = vector.load %arg7[%c1_45, %c0_46, %c0_47] : memref<2x64x36xf32, #tpu.memory_space<vmem>>, vector<1x64x36xf32>
    %88 = vector.shape_cast %87 : vector<1x64x36xf32> to vector<64x36xf32>
    %89 = vector.shape_cast %86 : vector<64x36xf32> to vector<1x64x36xf32>
    tpu.vector_store %arg7[%c1_45, %c0_46, %c0_47], %89 {strides = array<i32>} : memref<2x64x36xf32, #tpu.memory_space<vmem>>, vector<1x64x36xf32>,
    return
  }
  func.func @transform_0(%arg0: i32) -> (i32, i32, i32) {
    %c0_i32 = arith.constant 0 : i32
    %c0_i32_0 = arith.constant 0 : i32
    %c0_i32_1 = arith.constant 0 : i32
    return %arg0, %c0_i32, %c0_i32_0 : i32, i32, i32
  }
  func.func @transform_1(%arg0: i32) -> (i32, i32) {
    %c0_i32 = arith.constant 0 : i32
    %c0_i32_0 = arith.constant 0 : i32
    %c0_i32_1 = arith.constant 0 : i32
    return %c0_i32, %c0_i32_0 : i32, i32
  }
  func.func @transform_2(%arg0: i32) -> (i32, i32) {
    %c0_i32 = arith.constant 0 : i32
    %c0_i32_0 = arith.constant 0 : i32
    %c0_i32_1 = arith.constant 0 : i32
    return %c0_i32, %c0_i32_0 : i32, i32
  }
  func.func @transform_3(%arg0: i32) -> (i32, i32) {
    %c0_i32 = arith.constant 0 : i32
    %c0_i32_0 = arith.constant 0 : i32
    %c0_i32_1 = arith.constant 0 : i32
    return %c0_i32, %c0_i32_0 : i32, i32
  }
  func.func @transform_4(%arg0: i32) -> (i32, i32) {
    %c0_i32 = arith.constant 0 : i32
    %c0_i32_0 = arith.constant 0 : i32
    %c0_i32_1 = arith.constant 0 : i32
    return %c0_i32, %c0_i32_0 : i32, i32
  }
  func.func @transform_5(%arg0: i32) -> (i32, i32) {
    %c0_i32 = arith.constant 0 : i32
    %c0_i32_0 = arith.constant 0 : i32
    %c0_i32_1 = arith.constant 0 : i32
    return %c0_i32, %c0_i32_0 : i32, i32
  }
  func.func @transform_6(%arg0: i32) -> (i32, i32, i32) {
    %c0_i32 = arith.constant 0 : i32
    %c0_i32_0 = arith.constant 0 : i32
    %c0_i32_1 = arith.constant 0 : i32
    return %arg0, %c0_i32, %c0_i32_0 : i32, i32, i32
  }
}

</mosaic_0001>

<llo_original>
// kernel: net_part1_forward.1
$region0: #{net_part1_forward.1}
  #allocation0 [shape = 'u32[]', space=smem, size = 0x4, offset = 0x4, fixed_abs, tag = 'smem constant byte address 0x4 - core index']
  #allocation1 [shape = 'u32[144,128]{1,0:T(1,128)}', space=vmem, size = 0x12000, scoped, tag = 'internal scratch']
  #allocation2 [shape = 'bf16[416,768]{1,0:T(8,128)(2,1)}', space=vmem, size = 0x9c000, scoped, tag = 'scratch operand']
  #allocation3 [shape = 'f32[416,576]{1,0:T(8,128)}', space=vmem, size = 0x104000, scoped, tag = 'scratch operand']
  %s0 = inlined_call_operand.vmem [shape: bf16[2,208,16], index: 0, kind: input, shape index: {}]
  %s1 = inlined_call_operand.vmem [shape: bf16[16,768], index: 1, kind: input, shape index: {}]
  %s2 = inlined_call_operand.vmem [shape: f32[1,768], index: 2, kind: input, shape index: {}]
  %s3 = inlined_call_operand.vmem [shape: bf16[768,576], index: 3, kind: input, shape index: {}]
  %s4 = inlined_call_operand.vmem [shape: f32[1,64], index: 4, kind: input, shape index: {}]
  %s5 = inlined_call_operand.vmem [shape: f32[36,151], index: 5, kind: input, shape index: {}]
  %s6 = inlined_call_operand.vmem [shape: f32[2,64,36], index: 6, kind: output, shape index: {}]
  %s7 = sld [smem:[#allocation0]]
  $region34: #{net_part1_forward.1} parent=0
    _
  %s9 = ssub.s32 1, %s7
  %s10 = scalar_select 0, %s9, %s7
  // Predicated region
  $region2: #{net_part1_forward.1} parent=0 // pred_check
    _
  $region3: #{net_part1_forward.1} parent=0 // pred_check_branch
    %12 = sbr.rel (0) target = $region5
  $region4: #{net_part1_forward.1} parent=0 // pred_region
    _
  $region5: #{net_part1_forward.1} parent=0 // pred_fallthru
    _
  // Predicated region
  $region6: #{net_part1_forward.1} parent=0 // pred_check
    _
  $region7: #{net_part1_forward.1} parent=0 // pred_check_branch
    %14 = sbr.rel (0) target = $region9
  $region8: #{net_part1_forward.1} parent=0 // pred_region
    _
  $region9: #{net_part1_forward.1} parent=0 // pred_fallthru
    _
  // Predicated region
  $region10: #{net_part1_forward.1} parent=0 // pred_check
    _
  $region11: #{net_part1_forward.1} parent=0 // pred_check_branch
    %16 = sbr.rel (0) target = $region13
  $region12: #{net_part1_forward.1} parent=0 // pred_region
    _
  $region13: #{net_part1_forward.1} parent=0 // pred_fallthru
    _
  // Predicated region
  $region14: #{net_part1_forward.1} parent=0 // pred_check
    _
  $region15: #{net_part1_forward.1} parent=0 // pred_check_branch
    %18 = sbr.rel (0) target = $region17
  $region16: #{net_part1_forward.1} parent=0 // pred_region
    _
  $region17: #{net_part1_forward.1} parent=0 // pred_fallthru
    _
  // Predicated region
  $region18: #{net_part1_forward.1} parent=0 // pred_check
    _
  $region19: #{net_part1_forward.1} parent=0 // pred_check_branch
    %20 = sbr.rel (0) target = $region21
  $region20: #{net_part1_forward.1} parent=0 // pred_region
    _
  $region21: #{net_part1_forward.1} parent=0 // pred_fallthru
    _
  // Predicated region
  $region22: #{net_part1_forward.1} parent=0 // pred_check
    _
  $region23: #{net_part1_forward.1} parent=0 // pred_check_branch
    %22 = sbr.rel (0) target = $region25
  $region24: #{net_part1_forward.1} parent=0 // pred_region
    _
  $region25: #{net_part1_forward.1} parent=0 // pred_fallthru
    _
  %v24 = vld [vmem:[%s1] sm:$0xff]
  %v25 = vld [vmem:[%s1 + $0x8] sm:$0xff]
  %v26 = vld [vmem:[%s1 + $0x10] sm:$0xff]
  %v27 = vld [vmem:[%s1 + $0x18] sm:$0xff]
  %v28 = vld [vmem:[%s1 + $0x20] sm:$0xff]
  %v29 = vld [vmem:[%s1 + $0x28] sm:$0xff]
  %v30 = vld [vmem:[%s2] sm:$0x3f]
  %v31 = vld [vmem:[%s0] sm:$0xf]
  %v32 = vld [vmem:[%s0 + $0x4] sm:$0xf]
  %v33 = vld [vmem:[%s0 + $0x8] sm:$0xf]
  %v34 = vld [vmem:[%s0 + $0xc] sm:$0xf]
  %v35 = vld [vmem:[%s0 + $0x10] sm:$0xf]
  %v36 = vld [vmem:[%s0 + $0x14] sm:$0xf]
  %v37 = vld [vmem:[%s0 + $0x18] sm:$0xf]
  %v38 = vld [vmem:[%s0 + $0x1c] sm:$0xf]
  %v39 = vld [vmem:[%s0 + $0x20] sm:$0xf]
  %v40 = vld [vmem:[%s0 + $0x24] sm:$0xf]
  %v41 = vld [vmem:[%s0 + $0x28] sm:$0xf]
  %v42 = vld [vmem:[%s0 + $0x2c] sm:$0xf]
  %v43 = vld [vmem:[%s0 + $0x30] sm:$0xf]
  %v44 = vld [vmem:[%s0 + $0x34] sm:$0xf]
  %v45 = vld [vmem:[%s0 + $0x38] sm:$0xf]
  %v46 = vld [vmem:[%s0 + $0x3c] sm:$0xf]
  %v47 = vld [vmem:[%s0 + $0x40] sm:$0xf]
  %v48 = vld [vmem:[%s0 + $0x44] sm:$0xf]
  %v49 = vld [vmem:[%s0 + $0x48] sm:$0xf]
  %v50 = vld [vmem:[%s0 + $0x4c] sm:$0xf]
  %v51 = vld [vmem:[%s0 + $0x50] sm:$0xf]
  %v52 = vld [vmem:[%s0 + $0x54] sm:$0xf]
  %v53 = vld [vmem:[%s0 + $0x58] sm:$0xf]
  %v54 = vld [vmem:[%s0 + $0x5c] sm:$0xf]
  %v55 = vld [vmem:[%s0 + $0x60] sm:$0xf]
  %v56 = vld [vmem:[%s0 + $0x64] sm:$0xf]
  %v58 = vlaneseq
  %v59 = vshrl.u32 %v58, 7
  %v60 = vsub.s32 0, %v59
  %v61 = vrot.slane %v30, %v60
  %v62 = vlaneseq
  %v63 = vshrl.u32 %v62, 7
  %v64 = vsub.s32 1, %v63
  %v65 = vrot.slane %v30, %v64
  %v66 = vlaneseq
  %v67 = vshrl.u32 %v66, 7
  %v68 = vsub.s32 2, %v67
  %v69 = vrot.slane %v30, %v68
  %v70 = vlaneseq
  %v71 = vshrl.u32 %v70, 7
  %v72 = vsub.s32 3, %v71
  %v73 = vrot.slane %v30, %v72
  %v74 = vlaneseq
  %v75 = vshrl.u32 %v74, 7
  %v76 = vsub.s32 4, %v75
  %v77 = vrot.slane %v30, %v76
  %v78 = vlaneseq
  %v79 = vshrl.u32 %v78, 7
  %v80 = vsub.s32 5, %v79
  %v81 = vrot.slane %v30, %v80
  %v114 = vunpack.c.l.b16 %v31
  %v115 = vunpack.c.l.b16 %v32
  %v116 = vunpack.c.l.b16 %v33
  %v117 = vunpack.c.l.b16 %v34
  %v118 = vunpack.c.l.b16 %v35
  %v119 = vunpack.c.l.b16 %v36
  %v120 = vunpack.c.l.b16 %v37
  %v121 = vunpack.c.l.b16 %v38
  %v122 = vunpack.c.l.b16 %v39
  %v123 = vunpack.c.l.b16 %v40
  %v124 = vunpack.c.l.b16 %v41
  %v125 = vunpack.c.l.b16 %v42
  %v126 = vunpack.c.l.b16 %v43
  %v127 = vunpack.c.l.b16 %v44
  %v128 = vunpack.c.l.b16 %v45
  %v129 = vunpack.c.l.b16 %v46
  %v130 = vunpack.c.l.b16 %v47
  %v131 = vunpack.c.l.b16 %v48
  %v132 = vunpack.c.l.b16 %v49
  %v133 = vunpack.c.l.b16 %v50
  %v134 = vunpack.c.l.b16 %v51
  %v135 = vunpack.c.l.b16 %v52
  %v136 = vunpack.c.l.b16 %v53
  %v137 = vunpack.c.l.b16 %v54
  %v138 = vunpack.c.l.b16 %v55
  %v139 = vunpack.c.l.b16 %v56
  %v140 = vpack.c.b16 %v115, %v114
  %v141 = vpack.c.b16 %v117, %v116
  %v142 = vpack.c.b16 %v119, %v118
  %v143 = vpack.c.b16 %v121, %v120
  %v144 = vpack.c.b16 %v123, %v122
  %v145 = vpack.c.b16 %v125, %v124
  %v146 = vpack.c.b16 %v127, %v126
  %v147 = vpack.c.b16 %v129, %v128
  %v148 = vpack.c.b16 %v131, %v130
  %v149 = vpack.c.b16 %v133, %v132
  %v150 = vpack.c.b16 %v135, %v134
  %v151 = vpack.c.b16 %v137, %v136
  %v152 = vpack.c.b16 %v139, %v138
  %v159 = vunpack.c.l.b16 %v24
  %v160 = vunpack.c.h.b16 %v24
  %v161 = vunpack.c.l.b16 %v25
  %v162 = vunpack.c.h.b16 %v25
  %v163 = vunpack.c.l.b16 %v26
  %v164 = vunpack.c.h.b16 %v26
  %v165 = vunpack.c.l.b16 %v27
  %v166 = vunpack.c.h.b16 %v27
  %v167 = vunpack.c.l.b16 %v28
  %v168 = vunpack.c.h.b16 %v28
  %v169 = vunpack.c.l.b16 %v29
  %v170 = vunpack.c.h.b16 %v29
  %v171 = vpack.c.b16 %v165, %v159
  %v172 = vpack.c.b16 %v166, %v160
  %v173 = vpack.c.b16 %v167, %v161
  %v174 = vpack.c.b16 %v168, %v162
  %v175 = vpack.c.b16 %v169, %v163
  %v176 = vpack.c.b16 %v170, %v164
  %vm183 = vcmask 130048
  %v185 = vsel %vm183, %v140, 0
  %v188 = vsel %vm183, %v141, 0
  %v191 = vsel %vm183, %v142, 0
  %v194 = vsel %vm183, %v143, 0
  %v197 = vsel %vm183, %v144, 0
  %v200 = vsel %vm183, %v145, 0
  %v203 = vsel %vm183, %v146, 0
  %v206 = vsel %vm183, %v147, 0
  %v209 = vsel %vm183, %v148, 0
  %v212 = vsel %vm183, %v149, 0
  %v215 = vsel %vm183, %v150, 0
  %v218 = vsel %vm183, %v151, 0
  %v221 = vsel %vm183, %v152, 0
  %223 = vmatprep.subr.bf16.mxu0 0
  %224 = vmatpush1.bf16.msra.mxu0 0
  %225 = vmatprep.subr.bf16.mxu0 0
  %226 = vmatpush1.bf16.msra.mxu0 0
  %227 = vmatprep.subr.bf16.mxu0 0
  %228 = vmatpush1.bf16.msra.mxu0 0
  %229 = vmatprep.subr.bf16.mxu0 0
  %230 = vmatpush1.bf16.msra.mxu0 0
  %231 = vmatprep.subr.bf16.mxu0 0
  %232 = vmatpush1.bf16.msra.mxu0 0
  %233 = vmatprep.subr.bf16.mxu0 0
  %234 = vmatpush1.bf16.msra.mxu0 0
  %235 = vmatprep.subr.bf16.mxu0 0
  %236 = vmatpush1.bf16.msra.mxu0 0
  %237 = vmatprep.subr.bf16.mxu0 %v172
  %238 = vmatpush1.bf16.msra.mxu0 %v171
  %239 = vmatprep.subr.bf16.mxu0 0
  %240 = vmatpush2.bf16.msra.mxu0 0
  %241 = vmatprep.subr.bf16.mxu0 0
  %242 = vmatpush2.bf16.msra.mxu0 0
  %243 = vmatprep.subr.bf16.mxu0 0
  %244 = vmatpush2.bf16.msra.mxu0 0
  %245 = vmatprep.subr.bf16.mxu0 0
  %246 = vmatpush2.bf16.msra.mxu0 0
  %247 = vmatprep.subr.bf16.mxu0 0
  %248 = vmatpush2.bf16.msra.mxu0 0
  %249 = vmatprep.subr.bf16.mxu0 0
  %250 = vmatpush2.bf16.msra.mxu0 0
  %251 = vmatprep.subr.bf16.mxu0 0
  %252 = vmatpush2.bf16.msra.mxu0 0
  %253 = vmatprep.subr.bf16.mxu0 0
  %254 = vmatpush2.bf16.msra.mxu0 0
  %255 = vmatprep.mubr.bf16.mxu0 0
  %256 = vmatmul.mubr.bf16.gmra.mxu0 %v185
  %v257 = vpop.f32.mrf.mxu0
  %v258 = vadd.f32 %v61, %v257
  %v259 = vpop.f32.mrf.mxu0
  %v260 = vadd.f32 %v65, %v259
  %v261 = vpop.f32.mrf.mxu0
  %v262 = vadd.f32 %v61, %v261
  %v263 = vpop.f32.mrf.mxu0
  %v264 = vadd.f32 %v65, %v263
  %265 = vmatprep.mubr.bf16.mxu0 0
  %266 = vmatmul.mubr.bf16.gmra.mxu0 %v188
  %v267 = vpop.f32.mrf.mxu0
  %v268 = vadd.f32 %v61, %v267
  %v269 = vpop.f32.mrf.mxu0
  %v270 = vadd.f32 %v65, %v269
  %v271 = vpop.f32.mrf.mxu0
  %v272 = vadd.f32 %v61, %v271
  %v273 = vpop.f32.mrf.mxu0
  %v274 = vadd.f32 %v65, %v273
  %275 = vmatprep.mubr.bf16.mxu0 0
  %276 = vmatmul.mubr.bf16.gmra.mxu0 %v191
  %v277 = vpop.f32.mrf.mxu0
  %v278 = vadd.f32 %v61, %v277
  %v279 = vpop.f32.mrf.mxu0
  %v280 = vadd.f32 %v65, %v279
  %v281 = vpop.f32.mrf.mxu0
  %v282 = vadd.f32 %v61, %v281
  %v283 = vpop.f32.mrf.mxu0
  %v284 = vadd.f32 %v65, %v283
  %285 = vmatprep.mubr.bf16.mxu0 0
  %286 = vmatmul.mubr.bf16.gmra.mxu0 %v194
  %v287 = vpop.f32.mrf.mxu0
  %v288 = vadd.f32 %v61, %v287
  %v289 = vpop.f32.mrf.mxu0
  %v290 = vadd.f32 %v65, %v289
  %v291 = vpop.f32.mrf.mxu0
  %v292 = vadd.f32 %v61, %v291
  %v293 = vpop.f32.mrf.mxu0
  %v294 = vadd.f32 %v65, %v293
  %295 = vmatprep.mubr.bf16.mxu0 0
  %296 = vmatmul.mubr.bf16.gmra.mxu0 %v197
  %v297 = vpop.f32.mrf.mxu0
  %v298 = vadd.f32 %v61, %v297
  %v299 = vpop.f32.mrf.mxu0
  %v300 = vadd.f32 %v65, %v299
  %v301 = vpop.f32.mrf.mxu0
  %v302 = vadd.f32 %v61, %v301
  %v303 = vpop.f32.mrf.mxu0
  %v304 = vadd.f32 %v65, %v303
  %305 = vmatprep.mubr.bf16.mxu0 0
  %306 = vmatmul.mubr.bf16.gmra.mxu0 %v200
  %v307 = vpop.f32.mrf.mxu0
  %v308 = vadd.f32 %v61, %v307
  %v309 = vpop.f32.mrf.mxu0
  %v310 = vadd.f32 %v65, %v309
  %v311 = vpop.f32.mrf.mxu0
  %v312 = vadd.f32 %v61, %v311
  %v313 = vpop.f32.mrf.mxu0
  %v314 = vadd.f32 %v65, %v313
  %315 = vmatprep.mubr.bf16.mxu0 0
  %316 = vmatmul.mubr.bf16.gmra.mxu0 %v203
  %v317 = vpop.f32.mrf.mxu0
  %v318 = vadd.f32 %v61, %v317
  %v319 = vpop.f32.mrf.mxu0
  %v320 = vadd.f32 %v65, %v319
  %v321 = vpop.f32.mrf.mxu0
  %v322 = vadd.f32 %v61, %v321
  %v323 = vpop.f32.mrf.mxu0
  %v324 = vadd.f32 %v65, %v323
  %325 = vmatprep.mubr.bf16.mxu0 0
  %326 = vmatmul.mubr.bf16.gmra.mxu0 %v206
  %v327 = vpop.f32.mrf.mxu0
  %v328 = vadd.f32 %v61, %v327
  %v329 = vpop.f32.mrf.mxu0
  %v330 = vadd.f32 %v65, %v329
  %v331 = vpop.f32.mrf.mxu0
  %v332 = vadd.f32 %v61, %v331
  %v333 = vpop.f32.mrf.mxu0
  %v334 = vadd.f32 %v65, %v333
  %335 = vmatprep.mubr.bf16.mxu0 0
  %336 = vmatmul.mubr.bf16.gmra.mxu0 %v209
  %v337 = vpop.f32.mrf.mxu0
  %v338 = vadd.f32 %v61, %v337
  %v339 = vpop.f32.mrf.mxu0
  %v340 = vadd.f32 %v65, %v339
  %v341 = vpop.f32.mrf.mxu0
  %v342 = vadd.f32 %v61, %v341
  %v343 = vpop.f32.mrf.mxu0
  %v344 = vadd.f32 %v65, %v343
  %345 = vmatprep.mubr.bf16.mxu0 0
  %346 = vmatmul.mubr.bf16.gmra.mxu0 %v212
  %v347 = vpop.f32.mrf.mxu0
  %v348 = vadd.f32 %v61, %v347
  %v349 = vpop.f32.mrf.mxu0
  %v350 = vadd.f32 %v65, %v349
  %v351 = vpop.f32.mrf.mxu0
  %v352 = vadd.f32 %v61, %v351
  %v353 = vpop.f32.mrf.mxu0
  %v354 = vadd.f32 %v65, %v353
  %355 = vmatprep.mubr.bf16.mxu0 0
  %356 = vmatmul.mubr.bf16.gmra.mxu0 %v215
  %v357 = vpop.f32.mrf.mxu0
  %v358 = vadd.f32 %v61, %v357
  %v359 = vpop.f32.mrf.mxu0
  %v360 = vadd.f32 %v65, %v359
  %v361 = vpop.f32.mrf.mxu0
  %v362 = vadd.f32 %v61, %v361
  %v363 = vpop.f32.mrf.mxu0
  %v364 = vadd.f32 %v65, %v363
  %365 = vmatprep.mubr.bf16.mxu0 0
  %366 = vmatmul.mubr.bf16.gmra.mxu0 %v218
  %v367 = vpop.f32.mrf.mxu0
  %v368 = vadd.f32 %v61, %v367
  %v369 = vpop.f32.mrf.mxu0
  %v370 = vadd.f32 %v65, %v369
  %v371 = vpop.f32.mrf.mxu0
  %v372 = vadd.f32 %v61, %v371
  %v373 = vpop.f32.mrf.mxu0
  %v374 = vadd.f32 %v65, %v373
  %375 = vmatprep.mubr.bf16.mxu0 0
  %376 = vmatmul.mubr.bf16.gmra.mxu0 %v221
  %v377 = vpop.f32.mrf.mxu0
  %v378 = vadd.f32 %v61, %v377
  %v379 = vpop.f32.mrf.mxu0
  %v380 = vadd.f32 %v65, %v379
  %v381 = vpop.f32.mrf.mxu0
  %v382 = vadd.f32 %v61, %v381
  %v383 = vpop.f32.mrf.mxu0
  %v384 = vadd.f32 %v65, %v383
  %385 = vdwg.mxu0
  %386 = vmatprep.subr.bf16.mxu0 0
  %387 = vmatpush1.bf16.msra.mxu0 0
  %388 = vmatprep.subr.bf16.mxu0 0
  %389 = vmatpush1.bf16.msra.mxu0 0
  %390 = vmatprep.subr.bf16.mxu0 0
  %391 = vmatpush1.bf16.msra.mxu0 0
  %392 = vmatprep.subr.bf16.mxu0 0
  %393 = vmatpush1.bf16.msra.mxu0 0
  %394 = vmatprep.subr.bf16.mxu0 0
  %395 = vmatpush1.bf16.msra.mxu0 0
  %396 = vmatprep.subr.bf16.mxu0 0
  %397 = vmatpush1.bf16.msra.mxu0 0
  %398 = vmatprep.subr.bf16.mxu0 0
  %399 = vmatpush1.bf16.msra.mxu0 0
  %400 = vmatprep.subr.bf16.mxu0 %v174
  %401 = vmatpush1.bf16.msra.mxu0 %v173
  %402 = vmatprep.subr.bf16.mxu0 0
  %403 = vmatpush2.bf16.msra.mxu0 0
  %404 = vmatprep.subr.bf16.mxu0 0
  %405 = vmatpush2.bf16.msra.mxu0 0
  %406 = vmatprep.subr.bf16.mxu0 0
  %407 = vmatpush2.bf16.msra.mxu0 0
  %408 = vmatprep.subr.bf16.mxu0 0
  %409 = vmatpush2.bf16.msra.mxu0 0
  %410 = vmatprep.subr.bf16.mxu0 0
  %411 = vmatpush2.bf16.msra.mxu0 0
  %412 = vmatprep.subr.bf16.mxu0 0
  %413 = vmatpush2.bf16.msra.mxu0 0
  %414 = vmatprep.subr.bf16.mxu0 0
  %415 = vmatpush2.bf16.msra.mxu0 0
  %416 = vmatprep.subr.bf16.mxu0 0
  %417 = vmatpush2.bf16.msra.mxu0 0
  %418 = vmatprep.mubr.bf16.mxu0 0
  %419 = vmatmul.mubr.bf16.gmra.mxu0 %v185
  %v420 = vpop.f32.mrf.mxu0
  %v421 = vadd.f32 %v69, %v420
  %v422 = vpop.f32.mrf.mxu0
  %v423 = vadd.f32 %v73, %v422
  %v424 = vpop.f32.mrf.mxu0
  %v425 = vadd.f32 %v69, %v424
  %v426 = vpop.f32.mrf.mxu0
  %v427 = vadd.f32 %v73, %v426
  %428 = vmatprep.mubr.bf16.mxu0 0
  %429 = vmatmul.mubr.bf16.gmra.mxu0 %v188
  %v430 = vpop.f32.mrf.mxu0
  %v431 = vadd.f32 %v69, %v430
  %v432 = vpop.f32.mrf.mxu0
  %v433 = vadd.f32 %v73, %v432
  %v434 = vpop.f32.mrf.mxu0
  %v435 = vadd.f32 %v69, %v434
  %v436 = vpop.f32.mrf.mxu0
  %v437 = vadd.f32 %v73, %v436
  %438 = vmatprep.mubr.bf16.mxu0 0
  %439 = vmatmul.mubr.bf16.gmra.mxu0 %v191
  %v440 = vpop.f32.mrf.mxu0
  %v441 = vadd.f32 %v69, %v440
  %v442 = vpop.f32.mrf.mxu0
  %v443 = vadd.f32 %v73, %v442
  %v444 = vpop.f32.mrf.mxu0
  %v445 = vadd.f32 %v69, %v444
  %v446 = vpop.f32.mrf.mxu0
  %v447 = vadd.f32 %v73, %v446
  %448 = vmatprep.mubr.bf16.mxu0 0
  %449 = vmatmul.mubr.bf16.gmra.mxu0 %v194
  %v450 = vpop.f32.mrf.mxu0
  %v451 = vadd.f32 %v69, %v450
  %v452 = vpop.f32.mrf.mxu0
  %v453 = vadd.f32 %v73, %v452
  %v454 = vpop.f32.mrf.mxu0
  %v455 = vadd.f32 %v69, %v454
  %v456 = vpop.f32.mrf.mxu0
  %v457 = vadd.f32 %v73, %v456
  %458 = vmatprep.mubr.bf16.mxu0 0
  %459 = vmatmul.mubr.bf16.gmra.mxu0 %v197
  %v460 = vpop.f32.mrf.mxu0
  %v461 = vadd.f32 %v69, %v460
  %v462 = vpop.f32.mrf.mxu0
  %v463 = vadd.f32 %v73, %v462
  %v464 = vpop.f32.mrf.mxu0
  %v465 = vadd.f32 %v69, %v464
  %v466 = vpop.f32.mrf.mxu0
  %v467 = vadd.f32 %v73, %v466
  %468 = vmatprep.mubr.bf16.mxu0 0
  %469 = vmatmul.mubr.bf16.gmra.mxu0 %v200
  %v470 = vpop.f32.mrf.mxu0
  %v471 = vadd.f32 %v69, %v470
  %v472 = vpop.f32.mrf.mxu0
  %v473 = vadd.f32 %v73, %v472
  %v474 = vpop.f32.mrf.mxu0
  %v475 = vadd.f32 %v69, %v474
  %v476 = vpop.f32.mrf.mxu0
  %v477 = vadd.f32 %v73, %v476
  %478 = vmatprep.mubr.bf16.mxu0 0
  %479 = vmatmul.mubr.bf16.gmra.mxu0 %v203
  %v480 = vpop.f32.mrf.mxu0
  %v481 = vadd.f32 %v69, %v480
  %v482 = vpop.f32.mrf.mxu0
  %v483 = vadd.f32 %v73, %v482
  %v484 = vpop.f32.mrf.mxu0
  %v485 = vadd.f32 %v69, %v484
  %v486 = vpop.f32.mrf.mxu0
  %v487 = vadd.f32 %v73, %v486
  %488 = vmatprep.mubr.bf16.mxu0 0
  %489 = vmatmul.mubr.bf16.gmra.mxu0 %v206
  %v490 = vpop.f32.mrf.mxu0
  %v491 = vadd.f32 %v69, %v490
  %v492 = vpop.f32.mrf.mxu0
  %v493 = vadd.f32 %v73, %v492
  %v494 = vpop.f32.mrf.mxu0
  %v495 = vadd.f32 %v69, %v494
  %v496 = vpop.f32.mrf.mxu0
  %v497 = vadd.f32 %v73, %v496
  %498 = vmatprep.mubr.bf16.mxu0 0
  %499 = vmatmul.mubr.bf16.gmra.mxu0 %v209
  %v500 = vpop.f32.mrf.mxu0
  %v501 = vadd.f32 %v69, %v500
  %v502 = vpop.f32.mrf.mxu0
  %v503 = vadd.f32 %v73, %v502
  %v504 = vpop.f32.mrf.mxu0
  %v505 = vadd.f32 %v69, %v504
  %v506 = vpop.f32.mrf.mxu0
  %v507 = vadd.f32 %v73, %v506
  %508 = vmatprep.mubr.bf16.mxu0 0
  %509 = vmatmul.mubr.bf16.gmra.mxu0 %v212
  %v510 = vpop.f32.mrf.mxu0
  %v511 = vadd.f32 %v69, %v510
  %v512 = vpop.f32.mrf.mxu0
  %v513 = vadd.f32 %v73, %v512
  %v514 = vpop.f32.mrf.mxu0
  %v515 = vadd.f32 %v69, %v514
  %v516 = vpop.f32.mrf.mxu0
  %v517 = vadd.f32 %v73, %v516
  %518 = vmatprep.mubr.bf16.mxu0 0
  %519 = vmatmul.mubr.bf16.gmra.mxu0 %v215
  %v520 = vpop.f32.mrf.mxu0
  %v521 = vadd.f32 %v69, %v520
  %v522 = vpop.f32.mrf.mxu0
  %v523 = vadd.f32 %v73, %v522
  %v524 = vpop.f32.mrf.mxu0
  %v525 = vadd.f32 %v69, %v524
  %v526 = vpop.f32.mrf.mxu0
  %v527 = vadd.f32 %v73, %v526
  %528 = vmatprep.mubr.bf16.mxu0 0
  %529 = vmatmul.mubr.bf16.gmra.mxu0 %v218
  %v530 = vpop.f32.mrf.mxu0
  %v531 = vadd.f32 %v69, %v530
  %v532 = vpop.f32.mrf.mxu0
  %v533 = vadd.f32 %v73, %v532
  %v534 = vpop.f32.mrf.mxu0
  %v535 = vadd.f32 %v69, %v534
  %v536 = vpop.f32.mrf.mxu0
  %v537 = vadd.f32 %v73, %v536
  %538 = vmatprep.mubr.bf16.mxu0 0
  %539 = vmatmul.mubr.bf16.gmra.mxu0 %v221
  %v540 = vpop.f32.mrf.mxu0
  %v541 = vadd.f32 %v69, %v540
  %v542 = vpop.f32.mrf.mxu0
  %v543 = vadd.f32 %v73, %v542
  %v544 = vpop.f32.mrf.mxu0
  %v545 = vadd.f32 %v69, %v544
  %v546 = vpop.f32.mrf.mxu0
  %v547 = vadd.f32 %v73, %v546
  %548 = vdwg.mxu0
  %549 = vmatprep.subr.bf16.mxu0 0
  %550 = vmatpush1.bf16.msra.mxu0 0
  %551 = vmatprep.subr.bf16.mxu0 0
  %552 = vmatpush1.bf16.msra.mxu0 0
  %553 = vmatprep.subr.bf16.mxu0 0
  %554 = vmatpush1.bf16.msra.mxu0 0
  %555 = vmatprep.subr.bf16.mxu0 0
  %556 = vmatpush1.bf16.msra.mxu0 0
  %557 = vmatprep.subr.bf16.mxu0 0
  %558 = vmatpush1.bf16.msra.mxu0 0
  %559 = vmatprep.subr.bf16.mxu0 0
  %560 = vmatpush1.bf16.msra.mxu0 0
  %561 = vmatprep.subr.bf16.mxu0 0
  %562 = vmatpush1.bf16.msra.mxu0 0
  %563 = vmatprep.subr.bf16.mxu0 %v176
  %564 = vmatpush1.bf16.msra.mxu0 %v175
  %565 = vmatprep.subr.bf16.mxu0 0
  %566 = vmatpush2.bf16.msra.mxu0 0
  %567 = vmatprep.subr.bf16.mxu0 0
  %568 = vmatpush2.bf16.msra.mxu0 0
  %569 = vmatprep.subr.bf16.mxu0 0
  %570 = vmatpush2.bf16.msra.mxu0 0
  %571 = vmatprep.subr.bf16.mxu0 0
  %572 = vmatpush2.bf16.msra.mxu0 0
  %573 = vmatprep.subr.bf16.mxu0 0
  %574 = vmatpush2.bf16.msra.mxu0 0
  %575 = vmatprep.subr.bf16.mxu0 0
  %576 = vmatpush2.bf16.msra.mxu0 0
  %577 = vmatprep.subr.bf16.mxu0 0
  %578 = vmatpush2.bf16.msra.mxu0 0
  %579 = vmatprep.subr.bf16.mxu0 0
  %580 = vmatpush2.bf16.msra.mxu0 0
  %581 = vmatprep.mubr.bf16.mxu0 0
  %582 = vmatmul.mubr.bf16.gmra.mxu0 %v185
  %v583 = vpop.f32.mrf.mxu0
  %v584 = vadd.f32 %v77, %v583
  %v585 = vpop.f32.mrf.mxu0
  %v586 = vadd.f32 %v81, %v585
  %v587 = vpop.f32.mrf.mxu0
  %v588 = vadd.f32 %v77, %v587
  %v589 = vpop.f32.mrf.mxu0
  %v590 = vadd.f32 %v81, %v589
  %591 = vmatprep.mubr.bf16.mxu0 0
  %592 = vmatmul.mubr.bf16.gmra.mxu0 %v188
  %v593 = vpop.f32.mrf.mxu0
  %v594 = vadd.f32 %v77, %v593
  %v595 = vpop.f32.mrf.mxu0
  %v596 = vadd.f32 %v81, %v595
  %v597 = vpop.f32.mrf.mxu0
  %v598 = vadd.f32 %v77, %v597
  %v599 = vpop.f32.mrf.mxu0
  %v600 = vadd.f32 %v81, %v599
  %601 = vmatprep.mubr.bf16.mxu0 0
  %602 = vmatmul.mubr.bf16.gmra.mxu0 %v191
  %v603 = vpop.f32.mrf.mxu0
  %v604 = vadd.f32 %v77, %v603
  %v605 = vpop.f32.mrf.mxu0
  %v606 = vadd.f32 %v81, %v605
  %v607 = vpop.f32.mrf.mxu0
  %v608 = vadd.f32 %v77, %v607
  %v609 = vpop.f32.mrf.mxu0
  %v610 = vadd.f32 %v81, %v609
  %611 = vmatprep.mubr.bf16.mxu0 0
  %612 = vmatmul.mubr.bf16.gmra.mxu0 %v194
  %v613 = vpop.f32.mrf.mxu0
  %v614 = vadd.f32 %v77, %v613
  %v615 = vpop.f32.mrf.mxu0
  %v616 = vadd.f32 %v81, %v615
  %v617 = vpop.f32.mrf.mxu0
  %v618 = vadd.f32 %v77, %v617
  %v619 = vpop.f32.mrf.mxu0
  %v620 = vadd.f32 %v81, %v619
  %621 = vmatprep.mubr.bf16.mxu0 0
  %622 = vmatmul.mubr.bf16.gmra.mxu0 %v197
  %v623 = vpop.f32.mrf.mxu0
  %v624 = vadd.f32 %v77, %v623
  %v625 = vpop.f32.mrf.mxu0
  %v626 = vadd.f32 %v81, %v625
  %v627 = vpop.f32.mrf.mxu0
  %v628 = vadd.f32 %v77, %v627
  %v629 = vpop.f32.mrf.mxu0
  %v630 = vadd.f32 %v81, %v629
  %631 = vmatprep.mubr.bf16.mxu0 0
  %632 = vmatmul.mubr.bf16.gmra.mxu0 %v200
  %v633 = vpop.f32.mrf.mxu0
  %v634 = vadd.f32 %v77, %v633
  %v635 = vpop.f32.mrf.mxu0
  %v636 = vadd.f32 %v81, %v635
  %v637 = vpop.f32.mrf.mxu0
  %v638 = vadd.f32 %v77, %v637
  %v639 = vpop.f32.mrf.mxu0
  %v640 = vadd.f32 %v81, %v639
  %641 = vmatprep.mubr.bf16.mxu0 0
  %642 = vmatmul.mubr.bf16.gmra.mxu0 %v203
  %v643 = vpop.f32.mrf.mxu0
  %v644 = vadd.f32 %v77, %v643
  %v645 = vpop.f32.mrf.mxu0
  %v646 = vadd.f32 %v81, %v645
  %v647 = vpop.f32.mrf.mxu0
  %v648 = vadd.f32 %v77, %v647
  %v649 = vpop.f32.mrf.mxu0
  %v650 = vadd.f32 %v81, %v649
  %651 = vmatprep.mubr.bf16.mxu0 0
  %652 = vmatmul.mubr.bf16.gmra.mxu0 %v206
  %v653 = vpop.f32.mrf.mxu0
  %v654 = vadd.f32 %v77, %v653
  %v655 = vpop.f32.mrf.mxu0
  %v656 = vadd.f32 %v81, %v655
  %v657 = vpop.f32.mrf.mxu0
  %v658 = vadd.f32 %v77, %v657
  %v659 = vpop.f32.mrf.mxu0
  %v660 = vadd.f32 %v81, %v659
  %661 = vmatprep.mubr.bf16.mxu0 0
  %662 = vmatmul.mubr.bf16.gmra.mxu0 %v209
  %v663 = vpop.f32.mrf.mxu0
  %v664 = vadd.f32 %v77, %v663
  %v665 = vpop.f32.mrf.mxu0
  %v666 = vadd.f32 %v81, %v665
  %v667 = vpop.f32.mrf.mxu0
  %v668 = vadd.f32 %v77, %v667
  %v669 = vpop.f32.mrf.mxu0
  %v670 = vadd.f32 %v81, %v669
  %671 = vmatprep.mubr.bf16.mxu0 0
  %672 = vmatmul.mubr.bf16.gmra.mxu0 %v212
  %v673 = vpop.f32.mrf.mxu0
  %v674 = vadd.f32 %v77, %v673
  %v675 = vpop.f32.mrf.mxu0
  %v676 = vadd.f32 %v81, %v675
  %v677 = vpop.f32.mrf.mxu0
  %v678 = vadd.f32 %v77, %v677
  %v679 = vpop.f32.mrf.mxu0
  %v680 = vadd.f32 %v81, %v679
  %681 = vmatprep.mubr.bf16.mxu0 0
  %682 = vmatmul.mubr.bf16.gmra.mxu0 %v215
  %v683 = vpop.f32.mrf.mxu0
  %v684 = vadd.f32 %v77, %v683
  %v685 = vpop.f32.mrf.mxu0
  %v686 = vadd.f32 %v81, %v685
  %v687 = vpop.f32.mrf.mxu0
  %v688 = vadd.f32 %v77, %v687
  %v689 = vpop.f32.mrf.mxu0
  %v690 = vadd.f32 %v81, %v689
  %691 = vmatprep.mubr.bf16.mxu0 0
  %692 = vmatmul.mubr.bf16.gmra.mxu0 %v218
  %v693 = vpop.f32.mrf.mxu0
  %v694 = vadd.f32 %v77, %v693
  %v695 = vpop.f32.mrf.mxu0
  %v696 = vadd.f32 %v81, %v695
  %v697 = vpop.f32.mrf.mxu0
  %v698 = vadd.f32 %v77, %v697
  %v699 = vpop.f32.mrf.mxu0
  %v700 = vadd.f32 %v81, %v699
  %701 = vmatprep.mubr.bf16.mxu0 0
  %702 = vmatmul.mubr.bf16.gmra.mxu0 %v221
  %v703 = vpop.f32.mrf.mxu0
  %v704 = vadd.f32 %v77, %v703
  %v705 = vpop.f32.mrf.mxu0
  %v706 = vadd.f32 %v81, %v705
  %v707 = vpop.f32.mrf.mxu0
  %v708 = vadd.f32 %v77, %v707
  %v709 = vpop.f32.mrf.mxu0
  %v710 = vadd.f32 %v81, %v709
  %711 = vdwg.mxu0
  %v712 = vmax.f32 %v258, 0.0
  %v713 = vmax.f32 %v260, 0.0
  %v714 = vmax.f32 %v421, 0.0
  %v715 = vmax.f32 %v423, 0.0
  %v716 = vmax.f32 %v584, 0.0
  %v717 = vmax.f32 %v586, 0.0
  %v718 = vmax.f32 %v262, 0.0
  %v719 = vmax.f32 %v264, 0.0
  %v720 = vmax.f32 %v425, 0.0
  %v721 = vmax.f32 %v427, 0.0
  %v722 = vmax.f32 %v588, 0.0
  %v723 = vmax.f32 %v590, 0.0
  %v724 = vmax.f32 %v268, 0.0
  %v725 = vmax.f32 %v270, 0.0
  %v726 = vmax.f32 %v431, 0.0
  %v727 = vmax.f32 %v433, 0.0
  %v728 = vmax.f32 %v594, 0.0
  %v729 = vmax.f32 %v596, 0.0
  %v730 = vmax.f32 %v272, 0.0
  %v731 = vmax.f32 %v274, 0.0
  %v732 = vmax.f32 %v435, 0.0
  %v733 = vmax.f32 %v437, 0.0
  %v734 = vmax.f32 %v598, 0.0
  %v735 = vmax.f32 %v600, 0.0
  %v736 = vmax.f32 %v278, 0.0
  %v737 = vmax.f32 %v280, 0.0
  %v738 = vmax.f32 %v441, 0.0
  %v739 = vmax.f32 %v443, 0.0
  %v740 = vmax.f32 %v604, 0.0
  %v741 = vmax.f32 %v606, 0.0
  %v742 = vmax.f32 %v282, 0.0
  %v743 = vmax.f32 %v284, 0.0
  %v744 = vmax.f32 %v445, 0.0
  %v745 = vmax.f32 %v447, 0.0
  %v746 = vmax.f32 %v608, 0.0
  %v747 = vmax.f32 %v610, 0.0
  %v748 = vmax.f32 %v288, 0.0
  %v749 = vmax.f32 %v290, 0.0
  %v750 = vmax.f32 %v451, 0.0
  %v751 = vmax.f32 %v453, 0.0
  %v752 = vmax.f32 %v614, 0.0
  %v753 = vmax.f32 %v616, 0.0
  %v754 = vmax.f32 %v292, 0.0
  %v755 = vmax.f32 %v294, 0.0
  %v756 = vmax.f32 %v455, 0.0
  %v757 = vmax.f32 %v457, 0.0
  %v758 = vmax.f32 %v618, 0.0
  %v759 = vmax.f32 %v620, 0.0
  %v760 = vmax.f32 %v298, 0.0
  %v761 = vmax.f32 %v300, 0.0
  %v762 = vmax.f32 %v461, 0.0
  %v763 = vmax.f32 %v463, 0.0
  %v764 = vmax.f32 %v624, 0.0
  %v765 = vmax.f32 %v626, 0.0
  %v766 = vmax.f32 %v302, 0.0
  %v767 = vmax.f32 %v304, 0.0
  %v768 = vmax.f32 %v465, 0.0
  %v769 = vmax.f32 %v467, 0.0
  %v770 = vmax.f32 %v628, 0.0
  %v771 = vmax.f32 %v630, 0.0
  %v772 = vmax.f32 %v308, 0.0
  %v773 = vmax.f32 %v310, 0.0
  %v774 = vmax.f32 %v471, 0.0
  %v775 = vmax.f32 %v473, 0.0
  %v776 = vmax.f32 %v634, 0.0
  %v777 = vmax.f32 %v636, 0.0
  %v778 = vmax.f32 %v312, 0.0
  %v779 = vmax.f32 %v314, 0.0
  %v780 = vmax.f32 %v475, 0.0
  %v781 = vmax.f32 %v477, 0.0
  %v782 = vmax.f32 %v638, 0.0
  %v783 = vmax.f32 %v640, 0.0
  %v784 = vmax.f32 %v318, 0.0
  %v785 = vmax.f32 %v320, 0.0
  %v786 = vmax.f32 %v481, 0.0
  %v787 = vmax.f32 %v483, 0.0
  %v788 = vmax.f32 %v644, 0.0
  %v789 = vmax.f32 %v646, 0.0
  %v790 = vmax.f32 %v322, 0.0
  %v791 = vmax.f32 %v324, 0.0
  %v792 = vmax.f32 %v485, 0.0
  %v793 = vmax.f32 %v487, 0.0
  %v794 = vmax.f32 %v648, 0.0
  %v795 = vmax.f32 %v650, 0.0
  %v796 = vmax.f32 %v328, 0.0
  %v797 = vmax.f32 %v330, 0.0
  %v798 = vmax.f32 %v491, 0.0
  %v799 = vmax.f32 %v493, 0.0
  %v800 = vmax.f32 %v654, 0.0
  %v801 = vmax.f32 %v656, 0.0
  %v802 = vmax.f32 %v332, 0.0
  %v803 = vmax.f32 %v334, 0.0
  %v804 = vmax.f32 %v495, 0.0
  %v805 = vmax.f32 %v497, 0.0
  %v806 = vmax.f32 %v658, 0.0
  %v807 = vmax.f32 %v660, 0.0
  %v808 = vmax.f32 %v338, 0.0
  %v809 = vmax.f32 %v340, 0.0
  %v810 = vmax.f32 %v501, 0.0
  %v811 = vmax.f32 %v503, 0.0
  %v812 = vmax.f32 %v664, 0.0
  %v813 = vmax.f32 %v666, 0.0
  %v814 = vmax.f32 %v342, 0.0
  %v815 = vmax.f32 %v344, 0.0
  %v816 = vmax.f32 %v505, 0.0
  %v817 = vmax.f32 %v507, 0.0
  %v818 = vmax.f32 %v668, 0.0
  %v819 = vmax.f32 %v670, 0.0
  %v820 = vmax.f32 %v348, 0.0
  %v821 = vmax.f32 %v350, 0.0
  %v822 = vmax.f32 %v511, 0.0
  %v823 = vmax.f32 %v513, 0.0
  %v824 = vmax.f32 %v674, 0.0
  %v825 = vmax.f32 %v676, 0.0
  %v826 = vmax.f32 %v352, 0.0
  %v827 = vmax.f32 %v354, 0.0
  %v828 = vmax.f32 %v515, 0.0
  %v829 = vmax.f32 %v517, 0.0
  %v830 = vmax.f32 %v678, 0.0
  %v831 = vmax.f32 %v680, 0.0
  %v832 = vmax.f32 %v358, 0.0
  %v833 = vmax.f32 %v360, 0.0
  %v834 = vmax.f32 %v521, 0.0
  %v835 = vmax.f32 %v523, 0.0
  %v836 = vmax.f32 %v684, 0.0
  %v837 = vmax.f32 %v686, 0.0
  %v838 = vmax.f32 %v362, 0.0
  %v839 = vmax.f32 %v364, 0.0
  %v840 = vmax.f32 %v525, 0.0
  %v841 = vmax.f32 %v527, 0.0
  %v842 = vmax.f32 %v688, 0.0
  %v843 = vmax.f32 %v690, 0.0
  %v844 = vmax.f32 %v368, 0.0
  %v845 = vmax.f32 %v370, 0.0
  %v846 = vmax.f32 %v531, 0.0
  %v847 = vmax.f32 %v533, 0.0
  %v848 = vmax.f32 %v694, 0.0
  %v849 = vmax.f32 %v696, 0.0
  %v850 = vmax.f32 %v372, 0.0
  %v851 = vmax.f32 %v374, 0.0
  %v852 = vmax.f32 %v535, 0.0
  %v853 = vmax.f32 %v537, 0.0
  %v854 = vmax.f32 %v698, 0.0
  %v855 = vmax.f32 %v700, 0.0
  %v856 = vmax.f32 %v378, 0.0
  %v857 = vmax.f32 %v380, 0.0
  %v858 = vmax.f32 %v541, 0.0
  %v859 = vmax.f32 %v543, 0.0
  %v860 = vmax.f32 %v704, 0.0
  %v861 = vmax.f32 %v706, 0.0
  %v862 = vmax.f32 %v382, 0.0
  %v863 = vmax.f32 %v384, 0.0
  %v864 = vmax.f32 %v545, 0.0
  %v865 = vmax.f32 %v547, 0.0
  %v866 = vmax.f32 %v708, 0.0
  %v867 = vmax.f32 %v710, 0.0
  %v868 = vpack.c.bf16 %v718, %v712
  %v869 = vpack.c.bf16 %v719, %v713
  %v870 = vpack.c.bf16 %v720, %v714
  %v871 = vpack.c.bf16 %v721, %v715
  %v872 = vpack.c.bf16 %v722, %v716
  %v873 = vpack.c.bf16 %v723, %v717
  %v874 = vpack.c.bf16 %v730, %v724
  %v875 = vpack.c.bf16 %v731, %v725
  %v876 = vpack.c.bf16 %v732, %v726
  %v877 = vpack.c.bf16 %v733, %v727
  %v878 = vpack.c.bf16 %v734, %v728
  %v879 = vpack.c.bf16 %v735, %v729
  %v880 = vpack.c.bf16 %v742, %v736
  %v881 = vpack.c.bf16 %v743, %v737
  %v882 = vpack.c.bf16 %v744, %v738
  %v883 = vpack.c.bf16 %v745, %v739
  %v884 = vpack.c.bf16 %v746, %v740
  %v885 = vpack.c.bf16 %v747, %v741
  %v886 = vpack.c.bf16 %v754, %v748
  %v887 = vpack.c.bf16 %v755, %v749
  %v888 = vpack.c.bf16 %v756, %v750
  %v889 = vpack.c.bf16 %v757, %v751
  %v890 = vpack.c.bf16 %v758, %v752
  %v891 = vpack.c.bf16 %v759, %v753
  %v892 = vpack.c.bf16 %v766, %v760
  %v893 = vpack.c.bf16 %v767, %v761
  %v894 = vpack.c.bf16 %v768, %v762
  %v895 = vpack.c.bf16 %v769, %v763
  %v896 = vpack.c.bf16 %v770, %v764
  %v897 = vpack.c.bf16 %v771, %v765
  %v898 = vpack.c.bf16 %v778, %v772
  %v899 = vpack.c.bf16 %v779, %v773
  %v900 = vpack.c.bf16 %v780, %v774
  %v901 = vpack.c.bf16 %v781, %v775
  %v902 = vpack.c.bf16 %v782, %v776
  %v903 = vpack.c.bf16 %v783, %v777
  %v904 = vpack.c.bf16 %v790, %v784
  %v905 = vpack.c.bf16 %v791, %v785
  %v906 = vpack.c.bf16 %v792, %v786
  %v907 = vpack.c.bf16 %v793, %v787
  %v908 = vpack.c.bf16 %v794, %v788
  %v909 = vpack.c.bf16 %v795, %v789
  %v910 = vpack.c.bf16 %v802, %v796
  %v911 = vpack.c.bf16 %v803, %v797
  %v912 = vpack.c.bf16 %v804, %v798
  %v913 = vpack.c.bf16 %v805, %v799
  %v914 = vpack.c.bf16 %v806, %v800
  %v915 = vpack.c.bf16 %v807, %v801
  %v916 = vpack.c.bf16 %v814, %v808
  %v917 = vpack.c.bf16 %v815, %v809
  %v918 = vpack.c.bf16 %v816, %v810
  %v919 = vpack.c.bf16 %v817, %v811
  %v920 = vpack.c.bf16 %v818, %v812
  %v921 = vpack.c.bf16 %v819, %v813
  %v922 = vpack.c.bf16 %v826, %v820
  %v923 = vpack.c.bf16 %v827, %v821
  %v924 = vpack.c.bf16 %v828, %v822
  %v925 = vpack.c.bf16 %v829, %v823
  %v926 = vpack.c.bf16 %v830, %v824
  %v927 = vpack.c.bf16 %v831, %v825
  %v928 = vpack.c.bf16 %v838, %v832
  %v929 = vpack.c.bf16 %v839, %v833
  %v930 = vpack.c.bf16 %v840, %v834
  %v931 = vpack.c.bf16 %v841, %v835
  %v932 = vpack.c.bf16 %v842, %v836
  %v933 = vpack.c.bf16 %v843, %v837
  %v934 = vpack.c.bf16 %v850, %v844
  %v935 = vpack.c.bf16 %v851, %v845
  %v936 = vpack.c.bf16 %v852, %v846
  %v937 = vpack.c.bf16 %v853, %v847
  %v938 = vpack.c.bf16 %v854, %v848
  %v939 = vpack.c.bf16 %v855, %v849
  %v940 = vpack.c.bf16 %v862, %v856
  %v941 = vpack.c.bf16 %v863, %v857
  %v942 = vpack.c.bf16 %v864, %v858
  %v943 = vpack.c.bf16 %v865, %v859
  %v944 = vpack.c.bf16 %v866, %v860
  %v945 = vpack.c.bf16 %v867, %v861
  %v1024 = vunpack.c.l.b16 %v868
  %v1025 = vunpack.c.l.b16 %v869
  %v1026 = vunpack.c.l.b16 %v870
  %v1027 = vunpack.c.l.b16 %v871
  %v1028 = vunpack.c.l.b16 %v872
  %v1029 = vunpack.c.l.b16 %v873
  %v1030 = vunpack.c.h.b16 %v868
  %v1031 = vunpack.c.h.b16 %v869
  %v1032 = vunpack.c.h.b16 %v870
  %v1033 = vunpack.c.h.b16 %v871
  %v1034 = vunpack.c.h.b16 %v872
  %v1035 = vunpack.c.h.b16 %v873
  %v1036 = vunpack.c.l.b16 %v874
  %v1037 = vunpack.c.l.b16 %v875
  %v1038 = vunpack.c.l.b16 %v876
  %v1039 = vunpack.c.l.b16 %v877
  %v1040 = vunpack.c.l.b16 %v878
  %v1041 = vunpack.c.l.b16 %v879
  %v1042 = vunpack.c.h.b16 %v874
  %v1043 = vunpack.c.h.b16 %v875
  %v1044 = vunpack.c.h.b16 %v876
  %v1045 = vunpack.c.h.b16 %v877
  %v1046 = vunpack.c.h.b16 %v878
  %v1047 = vunpack.c.h.b16 %v879
  %v1048 = vunpack.c.l.b16 %v880
  %v1049 = vunpack.c.l.b16 %v881
  %v1050 = vunpack.c.l.b16 %v882
  %v1051 = vunpack.c.l.b16 %v883
  %v1052 = vunpack.c.l.b16 %v884
  %v1053 = vunpack.c.l.b16 %v885
  %v1054 = vunpack.c.h.b16 %v880
  %v1055 = vunpack.c.h.b16 %v881
  %v1056 = vunpack.c.h.b16 %v882
  %v1057 = vunpack.c.h.b16 %v883
  %v1058 = vunpack.c.h.b16 %v884
  %v1059 = vunpack.c.h.b16 %v885
  %v1060 = vunpack.c.l.b16 %v886
  %v1061 = vunpack.c.l.b16 %v887
  %v1062 = vunpack.c.l.b16 %v888
  %v1063 = vunpack.c.l.b16 %v889
  %v1064 = vunpack.c.l.b16 %v890
  %v1065 = vunpack.c.l.b16 %v891
  %v1066 = vunpack.c.h.b16 %v886
  %v1067 = vunpack.c.h.b16 %v887
  %v1068 = vunpack.c.h.b16 %v888
  %v1069 = vunpack.c.h.b16 %v889
  %v1070 = vunpack.c.h.b16 %v890
  %v1071 = vunpack.c.h.b16 %v891
  %v1072 = vunpack.c.l.b16 %v892
  %v1073 = vunpack.c.l.b16 %v893
  %v1074 = vunpack.c.l.b16 %v894
  %v1075 = vunpack.c.l.b16 %v895
  %v1076 = vunpack.c.l.b16 %v896
  %v1077 = vunpack.c.l.b16 %v897
  %v1078 = vunpack.c.h.b16 %v892
  %v1079 = vunpack.c.h.b16 %v893
  %v1080 = vunpack.c.h.b16 %v894
  %v1081 = vunpack.c.h.b16 %v895
  %v1082 = vunpack.c.h.b16 %v896
  %v1083 = vunpack.c.h.b16 %v897
  %v1084 = vunpack.c.l.b16 %v898
  %v1085 = vunpack.c.l.b16 %v899
  %v1086 = vunpack.c.l.b16 %v900
  %v1087 = vunpack.c.l.b16 %v901
  %v1088 = vunpack.c.l.b16 %v902
  %v1089 = vunpack.c.l.b16 %v903
  %v1090 = vunpack.c.h.b16 %v898
  %v1091 = vunpack.c.h.b16 %v899
  %v1092 = vunpack.c.h.b16 %v900
  %v1093 = vunpack.c.h.b16 %v901
  %v1094 = vunpack.c.h.b16 %v902
  %v1095 = vunpack.c.h.b16 %v903
  %v1096 = vunpack.c.l.b16 %v904
  %v1097 = vunpack.c.l.b16 %v905
  %v1098 = vunpack.c.l.b16 %v906
  %v1099 = vunpack.c.l.b16 %v907
  %v1100 = vunpack.c.l.b16 %v908
  %v1101 = vunpack.c.l.b16 %v909
  %v1102 = vunpack.c.h.b16 %v904
  %v1103 = vunpack.c.h.b16 %v905
  %v1104 = vunpack.c.h.b16 %v906
  %v1105 = vunpack.c.h.b16 %v907
  %v1106 = vunpack.c.h.b16 %v908
  %v1107 = vunpack.c.h.b16 %v909
  %v1108 = vunpack.c.l.b16 %v910
  %v1109 = vunpack.c.l.b16 %v911
  %v1110 = vunpack.c.l.b16 %v912
  %v1111 = vunpack.c.l.b16 %v913
  %v1112 = vunpack.c.l.b16 %v914
  %v1113 = vunpack.c.l.b16 %v915
  %v1114 = vunpack.c.h.b16 %v910
  %v1115 = vunpack.c.h.b16 %v911
  %v1116 = vunpack.c.h.b16 %v912
  %v1117 = vunpack.c.h.b16 %v913
  %v1118 = vunpack.c.h.b16 %v914
  %v1119 = vunpack.c.h.b16 %v915
  %v1120 = vunpack.c.l.b16 %v916
  %v1121 = vunpack.c.l.b16 %v917
  %v1122 = vunpack.c.l.b16 %v918
  %v1123 = vunpack.c.l.b16 %v919
  %v1124 = vunpack.c.l.b16 %v920
  %v1125 = vunpack.c.l.b16 %v921
  %v1126 = vunpack.c.h.b16 %v916
  %v1127 = vunpack.c.h.b16 %v917
  %v1128 = vunpack.c.h.b16 %v918
  %v1129 = vunpack.c.h.b16 %v919
  %v1130 = vunpack.c.h.b16 %v920
  %v1131 = vunpack.c.h.b16 %v921
  %v1132 = vunpack.c.l.b16 %v922
  %v1133 = vunpack.c.l.b16 %v923
  %v1134 = vunpack.c.l.b16 %v924
  %v1135 = vunpack.c.l.b16 %v925
  %v1136 = vunpack.c.l.b16 %v926
  %v1137 = vunpack.c.l.b16 %v927
  %v1138 = vunpack.c.h.b16 %v922
  %v1139 = vunpack.c.h.b16 %v923
  %v1140 = vunpack.c.h.b16 %v924
  %v1141 = vunpack.c.h.b16 %v925
  %v1142 = vunpack.c.h.b16 %v926
  %v1143 = vunpack.c.h.b16 %v927
  %v1144 = vunpack.c.l.b16 %v928
  %v1145 = vunpack.c.l.b16 %v929
  %v1146 = vunpack.c.l.b16 %v930
  %v1147 = vunpack.c.l.b16 %v931
  %v1148 = vunpack.c.l.b16 %v932
  %v1149 = vunpack.c.l.b16 %v933
  %v1150 = vunpack.c.h.b16 %v928
  %v1151 = vunpack.c.h.b16 %v929
  %v1152 = vunpack.c.h.b16 %v930
  %v1153 = vunpack.c.h.b16 %v931
  %v1154 = vunpack.c.h.b16 %v932
  %v1155 = vunpack.c.h.b16 %v933
  %v1156 = vunpack.c.l.b16 %v934
  %v1157 = vunpack.c.l.b16 %v935
  %v1158 = vunpack.c.l.b16 %v936
  %v1159 = vunpack.c.l.b16 %v937
  %v1160 = vunpack.c.l.b16 %v938
  %v1161 = vunpack.c.l.b16 %v939
  %v1162 = vunpack.c.h.b16 %v934
  %v1163 = vunpack.c.h.b16 %v935
  %v1164 = vunpack.c.h.b16 %v936
  %v1165 = vunpack.c.h.b16 %v937
  %v1166 = vunpack.c.h.b16 %v938
  %v1167 = vunpack.c.h.b16 %v939
  %v1168 = vunpack.c.l.b16 %v940
  %v1169 = vunpack.c.l.b16 %v941
  %v1170 = vunpack.c.l.b16 %v942
  %v1171 = vunpack.c.l.b16 %v943
  %v1172 = vunpack.c.l.b16 %v944
  %v1173 = vunpack.c.l.b16 %v945
  %v1174 = vunpack.c.h.b16 %v940
  %v1175 = vunpack.c.h.b16 %v941
  %v1176 = vunpack.c.h.b16 %v942
  %v1177 = vunpack.c.h.b16 %v943
  %v1178 = vunpack.c.h.b16 %v944
  %v1179 = vunpack.c.h.b16 %v945
  %v1180 = vpack.c.b16 %v1025, %v1024
  %v1181 = vpack.c.b16 %v1027, %v1026
  %v1182 = vpack.c.b16 %v1029, %v1028
  %v1183 = vpack.c.b16 %v1031, %v1030
  %v1184 = vpack.c.b16 %v1033, %v1032
  %v1185 = vpack.c.b16 %v1035, %v1034
  %v1186 = vpack.c.b16 %v1037, %v1036
  %v1187 = vpack.c.b16 %v1039, %v1038
  %v1188 = vpack.c.b16 %v1041, %v1040
  %v1189 = vpack.c.b16 %v1043, %v1042
  %v1190 = vpack.c.b16 %v1045, %v1044
  %v1191 = vpack.c.b16 %v1047, %v1046
  %v1192 = vpack.c.b16 %v1049, %v1048
  %v1193 = vpack.c.b16 %v1051, %v1050
  %v1194 = vpack.c.b16 %v1053, %v1052
  %v1195 = vpack.c.b16 %v1055, %v1054
  %v1196 = vpack.c.b16 %v1057, %v1056
  %v1197 = vpack.c.b16 %v1059, %v1058
  %v1198 = vpack.c.b16 %v1061, %v1060
  %v1199 = vpack.c.b16 %v1063, %v1062
  %v1200 = vpack.c.b16 %v1065, %v1064
  %v1201 = vpack.c.b16 %v1067, %v1066
  %v1202 = vpack.c.b16 %v1069, %v1068
  %v1203 = vpack.c.b16 %v1071, %v1070
  %v1204 = vpack.c.b16 %v1073, %v1072
  %v1205 = vpack.c.b16 %v1075, %v1074
  %v1206 = vpack.c.b16 %v1077, %v1076
  %v1207 = vpack.c.b16 %v1079, %v1078
  %v1208 = vpack.c.b16 %v1081, %v1080
  %v1209 = vpack.c.b16 %v1083, %v1082
  %v1210 = vpack.c.b16 %v1085, %v1084
  %v1211 = vpack.c.b16 %v1087, %v1086
  %v1212 = vpack.c.b16 %v1089, %v1088
  %v1213 = vpack.c.b16 %v1091, %v1090
  %v1214 = vpack.c.b16 %v1093, %v1092
  %v1215 = vpack.c.b16 %v1095, %v1094
  %v1216 = vpack.c.b16 %v1097, %v1096
  %v1217 = vpack.c.b16 %v1099, %v1098
  %v1218 = vpack.c.b16 %v1101, %v1100
  %v1219 = vpack.c.b16 %v1103, %v1102
  %v1220 = vpack.c.b16 %v1105, %v1104
  %v1221 = vpack.c.b16 %v1107, %v1106
  %v1222 = vpack.c.b16 %v1109, %v1108
  %v1223 = vpack.c.b16 %v1111, %v1110
  %v1224 = vpack.c.b16 %v1113, %v1112
  %v1225 = vpack.c.b16 %v1115, %v1114
  %v1226 = vpack.c.b16 %v1117, %v1116
  %v1227 = vpack.c.b16 %v1119, %v1118
  %v1228 = vpack.c.b16 %v1121, %v1120
  %v1229 = vpack.c.b16 %v1123, %v1122
  %v1230 = vpack.c.b16 %v1125, %v1124
  %v1231 = vpack.c.b16 %v1127, %v1126
  %v1232 = vpack.c.b16 %v1129, %v1128
  %v1233 = vpack.c.b16 %v1131, %v1130
  %v1234 = vpack.c.b16 %v1133, %v1132
  %v1235 = vpack.c.b16 %v1135, %v1134
  %v1236 = vpack.c.b16 %v1137, %v1136
  %v1237 = vpack.c.b16 %v1139, %v1138
  %v1238 = vpack.c.b16 %v1141, %v1140
  %v1239 = vpack.c.b16 %v1143, %v1142
  %v1240 = vpack.c.b16 %v1145, %v1144
  %v1241 = vpack.c.b16 %v1147, %v1146
  %v1242 = vpack.c.b16 %v1149, %v1148
  %v1243 = vpack.c.b16 %v1151, %v1150
  %v1244 = vpack.c.b16 %v1153, %v1152
  %v1245 = vpack.c.b16 %v1155, %v1154
  %v1246 = vpack.c.b16 %v1157, %v1156
  %v1247 = vpack.c.b16 %v1159, %v1158
  %v1248 = vpack.c.b16 %v1161, %v1160
  %v1249 = vpack.c.b16 %v1163, %v1162
  %v1250 = vpack.c.b16 %v1165, %v1164
  %v1251 = vpack.c.b16 %v1167, %v1166
  %v1252 = vpack.c.b16 %v1169, %v1168
  %v1253 = vpack.c.b16 %v1171, %v1170
  %v1254 = vpack.c.b16 %v1173, %v1172
  %v1255 = vpack.c.b16 %v1175, %v1174
  %v1256 = vpack.c.b16 %v1177, %v1176
  %v1257 = vpack.c.b16 %v1179, %v1178
  %1336 = vst [vmem:[#allocation2] sm:$0xff] %v1180
  %1337 = vst [vmem:[#allocation2 + $0x8] sm:$0xff] %v1181
  %1338 = vst [vmem:[#allocation2 + $0x10] sm:$0xff] %v1182
  %1339 = vst [vmem:[#allocation2 + $0x18] sm:$0xff] %v1183
  %1340 = vst [vmem:[#allocation2 + $0x20] sm:$0xff] %v1184
  %1341 = vst [vmem:[#allocation2 + $0x28] sm:$0xff] %v1185
  %1342 = vst [vmem:[#allocation2 + $0x30] sm:$0xff] %v1186
  %1343 = vst [vmem:[#allocation2 + $0x38] sm:$0xff] %v1187
  %1344 = vst [vmem:[#allocation2 + $0x40] sm:$0xff] %v1188
  %1345 = vst [vmem:[#allocation2 + $0x48] sm:$0xff] %v1189
  %1346 = vst [vmem:[#allocation2 + $0x50] sm:$0xff] %v1190
  %1347 = vst [vmem:[#allocation2 + $0x58] sm:$0xff] %v1191
  %1348 = vst [vmem:[#allocation2 + $0x60] sm:$0xff] %v1192
  %1349 = vst [vmem:[#allocation2 + $0x68] sm:$0xff] %v1193
  %1350 = vst [vmem:[#allocation2 + $0x70] sm:$0xff] %v1194
  %1351 = vst [vmem:[#allocation2 + $0x78] sm:$0xff] %v1195
  %1352 = vst [vmem:[#allocation2 + $0x80] sm:$0xff] %v1196
  %1353 = vst [vmem:[#allocation2 + $0x88] sm:$0xff] %v1197
  %1354 = vst [vmem:[#allocation2 + $0x90] sm:$0xff] %v1198
  %1355 = vst [vmem:[#allocation2 + $0x98] sm:$0xff] %v1199
  %1356 = vst [vmem:[#allocation2 + $0xa0] sm:$0xff] %v1200
  %1357 = vst [vmem:[#allocation2 + $0xa8] sm:$0xff] %v1201
  %1358 = vst [vmem:[#allocation2 + $0xb0] sm:$0xff] %v1202
  %1359 = vst [vmem:[#allocation2 + $0xb8] sm:$0xff] %v1203
  %1360 = vst [vmem:[#allocation2 + $0xc0] sm:$0xff] %v1204
  %1361 = vst [vmem:[#allocation2 + $0xc8] sm:$0xff] %v1205
  %1362 = vst [vmem:[#allocation2 + $0xd0] sm:$0xff] %v1206
  %1363 = vst [vmem:[#allocation2 + $0xd8] sm:$0xff] %v1207
  %1364 = vst [vmem:[#allocation2 + $0xe0] sm:$0xff] %v1208
  %1365 = vst [vmem:[#allocation2 + $0xe8] sm:$0xff] %v1209
  %1366 = vst [vmem:[#allocation2 + $0xf0] sm:$0xff] %v1210
  %1367 = vst [vmem:[#allocation2 + $0xf8] sm:$0xff] %v1211
  %1368 = vst [vmem:[#allocation2 + $0x100] sm:$0xff] %v1212
  %1369 = vst [vmem:[#allocation2 + $0x108] sm:$0xff] %v1213
  %1370 = vst [vmem:[#allocation2 + $0x110] sm:$0xff] %v1214
  %1371 = vst [vmem:[#allocation2 + $0x118] sm:$0xff] %v1215
  %1372 = vst [vmem:[#allocation2 + $0x120] sm:$0xff] %v1216
  %1373 = vst [vmem:[#allocation2 + $0x128] sm:$0xff] %v1217
  %1374 = vst [vmem:[#allocation2 + $0x130] sm:$0xff] %v1218
  %1375 = vst [vmem:[#allocation2 + $0x138] sm:$0xff] %v1219
  %1376 = vst [vmem:[#allocation2 + $0x140] sm:$0xff] %v1220
  %1377 = vst [vmem:[#allocation2 + $0x148] sm:$0xff] %v1221
  %1378 = vst [vmem:[#allocation2 + $0x150] sm:$0xff] %v1222
  %1379 = vst [vmem:[#allocation2 + $0x158] sm:$0xff] %v1223
  %1380 = vst [vmem:[#allocation2 + $0x160] sm:$0xff] %v1224
  %1381 = vst [vmem:[#allocation2 + $0x168] sm:$0xff] %v1225
  %1382 = vst [vmem:[#allocation2 + $0x170] sm:$0xff] %v1226
  %1383 = vst [vmem:[#allocation2 + $0x178] sm:$0xff] %v1227
  %1384 = vst [vmem:[#allocation2 + $0x180] sm:$0xff] %v1228
  %1385 = vst [vmem:[#allocation2 + $0x188] sm:$0xff] %v1229
  %1386 = vst [vmem:[#allocation2 + $0x190] sm:$0xff] %v1230
  %1387 = vst [vmem:[#allocation2 + $0x198] sm:$0xff] %v1231
  %1388 = vst [vmem:[#allocation2 + $0x1a0] sm:$0xff] %v1232
  %1389 = vst [vmem:[#allocation2 + $0x1a8] sm:$0xff] %v1233
  %1390 = vst [vmem:[#allocation2 + $0x1b0] sm:$0xff] %v1234
  %1391 = vst [vmem:[#allocation2 + $0x1b8] sm:$0xff] %v1235
  %1392 = vst [vmem:[#allocation2 + $0x1c0] sm:$0xff] %v1236
  %1393 = vst [vmem:[#allocation2 + $0x1c8] sm:$0xff] %v1237
  %1394 = vst [vmem:[#allocation2 + $0x1d0] sm:$0xff] %v1238
  %1395 = vst [vmem:[#allocation2 + $0x1d8] sm:$0xff] %v1239
  %1396 = vst [vmem:[#allocation2 + $0x1e0] sm:$0xff] %v1240
  %1397 = vst [vmem:[#allocation2 + $0x1e8] sm:$0xff] %v1241
  %1398 = vst [vmem:[#allocation2 + $0x1f0] sm:$0xff] %v1242
  %1399 = vst [vmem:[#allocation2 + $0x1f8] sm:$0xff] %v1243
  %1400 = vst [vmem:[#allocation2 + $0x200] sm:$0xff] %v1244
  %1401 = vst [vmem:[#allocation2 + $0x208] sm:$0xff] %v1245
  %1402 = vst [vmem:[#allocation2 + $0x210] sm:$0xff] %v1246
  %1403 = vst [vmem:[#allocation2 + $0x218] sm:$0xff] %v1247
  %1404 = vst [vmem:[#allocation2 + $0x220] sm:$0xff] %v1248
  %1405 = vst [vmem:[#allocation2 + $0x228] sm:$0xff] %v1249
  %1406 = vst [vmem:[#allocation2 + $0x230] sm:$0xff] %v1250
  %1407 = vst [vmem:[#allocation2 + $0x238] sm:$0xff] %v1251
  %1408 = vst [vmem:[#allocation2 + $0x240] sm:$0xff] %v1252
  %1409 = vst [vmem:[#allocation2 + $0x248] sm:$0xff] %v1253
  %1410 = vst [vmem:[#allocation2 + $0x250] sm:$0xff] %v1254
  %1411 = vst [vmem:[#allocation2 + $0x258] sm:$0xff] %v1255
  %1412 = vst [vmem:[#allocation2 + $0x260] sm:$0xff] %v1256
  %1413 = vst [vmem:[#allocation2 + $0x268] sm:$0xff] %v1257
  %s1414 = scalar_lea.vmem %s0, 104
  %v1415 = vld [vmem:[%s1414] sm:$0xf]
  %v1416 = vld [vmem:[%s1414 + $0x4] sm:$0xf]
  %v1417 = vld [vmem:[%s1414 + $0x8] sm:$0xf]
  %v1418 = vld [vmem:[%s1414 + $0xc] sm:$0xf]
  %v1419 = vld [vmem:[%s1414 + $0x10] sm:$0xf]
  %v1420 = vld [vmem:[%s1414 + $0x14] sm:$0xf]
  %v1421 = vld [vmem:[%s1414 + $0x18] sm:$0xf]
  %v1422 = vld [vmem:[%s1414 + $0x1c] sm:$0xf]
  %v1423 = vld [vmem:[%s1414 + $0x20] sm:$0xf]
  %v1424 = vld [vmem:[%s1414 + $0x24] sm:$0xf]
  %v1425 = vld [vmem:[%s1414 + $0x28] sm:$0xf]
  %v1426 = vld [vmem:[%s1414 + $0x2c] sm:$0xf]
  %v1427 = vld [vmem:[%s1414 + $0x30] sm:$0xf]
  %v1428 = vld [vmem:[%s1414 + $0x34] sm:$0xf]
  %v1429 = vld [vmem:[%s1414 + $0x38] sm:$0xf]
  %v1430 = vld [vmem:[%s1414 + $0x3c] sm:$0xf]
  %v1431 = vld [vmem:[%s1414 + $0x40] sm:$0xf]
  %v1432 = vld [vmem:[%s1414 + $0x44] sm:$0xf]
  %v1433 = vld [vmem:[%s1414 + $0x48] sm:$0xf]
  %v1434 = vld [vmem:[%s1414 + $0x4c] sm:$0xf]
  %v1435 = vld [vmem:[%s1414 + $0x50] sm:$0xf]
  %v1436 = vld [vmem:[%s1414 + $0x54] sm:$0xf]
  %v1437 = vld [vmem:[%s1414 + $0x58] sm:$0xf]
  %v1438 = vld [vmem:[%s1414 + $0x5c] sm:$0xf]
  %v1439 = vld [vmem:[%s1414 + $0x60] sm:$0xf]
  %v1440 = vld [vmem:[%s1414 + $0x64] sm:$0xf]
  %v1467 = vunpack.c.l.b16 %v1415
  %v1468 = vunpack.c.l.b16 %v1416
  %v1469 = vunpack.c.l.b16 %v1417
  %v1470 = vunpack.c.l.b16 %v1418
  %v1471 = vunpack.c.l.b16 %v1419
  %v1472 = vunpack.c.l.b16 %v1420
  %v1473 = vunpack.c.l.b16 %v1421
  %v1474 = vunpack.c.l.b16 %v1422
  %v1475 = vunpack.c.l.b16 %v1423
  %v1476 = vunpack.c.l.b16 %v1424
  %v1477 = vunpack.c.l.b16 %v1425
  %v1478 = vunpack.c.l.b16 %v1426
  %v1479 = vunpack.c.l.b16 %v1427
  %v1480 = vunpack.c.l.b16 %v1428
  %v1481 = vunpack.c.l.b16 %v1429
  %v1482 = vunpack.c.l.b16 %v1430
  %v1483 = vunpack.c.l.b16 %v1431
  %v1484 = vunpack.c.l.b16 %v1432
  %v1485 = vunpack.c.l.b16 %v1433
  %v1486 = vunpack.c.l.b16 %v1434
  %v1487 = vunpack.c.l.b16 %v1435
  %v1488 = vunpack.c.l.b16 %v1436
  %v1489 = vunpack.c.l.b16 %v1437
  %v1490 = vunpack.c.l.b16 %v1438
  %v1491 = vunpack.c.l.b16 %v1439
  %v1492 = vunpack.c.l.b16 %v1440
  %v1493 = vpack.c.b16 %v1468, %v1467
  %v1494 = vpack.c.b16 %v1470, %v1469
  %v1495 = vpack.c.b16 %v1472, %v1471
  %v1496 = vpack.c.b16 %v1474, %v1473
  %v1497 = vpack.c.b16 %v1476, %v1475
  %v1498 = vpack.c.b16 %v1478, %v1477
  %v1499 = vpack.c.b16 %v1480, %v1479
  %v1500 = vpack.c.b16 %v1482, %v1481
  %v1501 = vpack.c.b16 %v1484, %v1483
  %v1502 = vpack.c.b16 %v1486, %v1485
  %v1503 = vpack.c.b16 %v1488, %v1487
  %v1504 = vpack.c.b16 %v1490, %v1489
  %v1505 = vpack.c.b16 %v1492, %v1491
  %v1507 = vsel %vm183, %v1493, 0
  %v1510 = vsel %vm183, %v1494, 0
  %v1513 = vsel %vm183, %v1495, 0
  %v1516 = vsel %vm183, %v1496, 0
  %v1519 = vsel %vm183, %v1497, 0
  %v1522 = vsel %vm183, %v1498, 0
  %v1525 = vsel %vm183, %v1499, 0
  %v1528 = vsel %vm183, %v1500, 0
  %v1531 = vsel %vm183, %v1501, 0
  %v1534 = vsel %vm183, %v1502, 0
  %v1537 = vsel %vm183, %v1503, 0
  %v1540 = vsel %vm183, %v1504, 0
  %v1543 = vsel %vm183, %v1505, 0
  %1545 = vmatprep.subr.bf16.mxu0 0
  %1546 = vmatpush1.bf16.msra.mxu0 0
  %1547 = vmatprep.subr.bf16.mxu0 0
  %1548 = vmatpush1.bf16.msra.mxu0 0
  %1549 = vmatprep.subr.bf16.mxu0 0
  %1550 = vmatpush1.bf16.msra.mxu0 0
  %1551 = vmatprep.subr.bf16.mxu0 0
  %1552 = vmatpush1.bf16.msra.mxu0 0
  %1553 = vmatprep.subr.bf16.mxu0 0
  %1554 = vmatpush1.bf16.msra.mxu0 0
  %1555 = vmatprep.subr.bf16.mxu0 0
  %1556 = vmatpush1.bf16.msra.mxu0 0
  %1557 = vmatprep.subr.bf16.mxu0 0
  %1558 = vmatpush1.bf16.msra.mxu0 0
  %1559 = vmatprep.subr.bf16.mxu0 %v172
  %1560 = vmatpush1.bf16.msra.mxu0 %v171
  %1561 = vmatprep.subr.bf16.mxu0 0
  %1562 = vmatpush2.bf16.msra.mxu0 0
  %1563 = vmatprep.subr.bf16.mxu0 0
  %1564 = vmatpush2.bf16.msra.mxu0 0
  %1565 = vmatprep.subr.bf16.mxu0 0
  %1566 = vmatpush2.bf16.msra.mxu0 0
  %1567 = vmatprep.subr.bf16.mxu0 0
  %1568 = vmatpush2.bf16.msra.mxu0 0
  %1569 = vmatprep.subr.bf16.mxu0 0
  %1570 = vmatpush2.bf16.msra.mxu0 0
  %1571 = vmatprep.subr.bf16.mxu0 0
  %1572 = vmatpush2.bf16.msra.mxu0 0
  %1573 = vmatprep.subr.bf16.mxu0 0
  %1574 = vmatpush2.bf16.msra.mxu0 0
  %1575 = vmatprep.subr.bf16.mxu0 0
  %1576 = vmatpush2.bf16.msra.mxu0 0
  %1577 = vmatprep.mubr.bf16.mxu0 0
  %1578 = vmatmul.mubr.bf16.gmra.mxu0 %v1507
  %v1579 = vpop.f32.mrf.mxu0
  %v1580 = vadd.f32 %v61, %v1579
  %v1581 = vpop.f32.mrf.mxu0
  %v1582 = vadd.f32 %v65, %v1581
  %v1583 = vpop.f32.mrf.mxu0
  %v1584 = vadd.f32 %v61, %v1583
  %v1585 = vpop.f32.mrf.mxu0
  %v1586 = vadd.f32 %v65, %v1585
  %1587 = vmatprep.mubr.bf16.mxu0 0
  %1588 = vmatmul.mubr.bf16.gmra.mxu0 %v1510
  %v1589 = vpop.f32.mrf.mxu0
  %v1590 = vadd.f32 %v61, %v1589
  %v1591 = vpop.f32.mrf.mxu0
  %v1592 = vadd.f32 %v65, %v1591
  %v1593 = vpop.f32.mrf.mxu0
  %v1594 = vadd.f32 %v61, %v1593
  %v1595 = vpop.f32.mrf.mxu0
  %v1596 = vadd.f32 %v65, %v1595
  %1597 = vmatprep.mubr.bf16.mxu0 0
  %1598 = vmatmul.mubr.bf16.gmra.mxu0 %v1513
  %v1599 = vpop.f32.mrf.mxu0
  %v1600 = vadd.f32 %v61, %v1599
  %v1601 = vpop.f32.mrf.mxu0
  %v1602 = vadd.f32 %v65, %v1601
  %v1603 = vpop.f32.mrf.mxu0
  %v1604 = vadd.f32 %v61, %v1603
  %v1605 = vpop.f32.mrf.mxu0
  %v1606 = vadd.f32 %v65, %v1605
  %1607 = vmatprep.mubr.bf16.mxu0 0
  %1608 = vmatmul.mubr.bf16.gmra.mxu0 %v1516
  %v1609 = vpop.f32.mrf.mxu0
  %v1610 = vadd.f32 %v61, %v1609
  %v1611 = vpop.f32.mrf.mxu0
  %v1612 = vadd.f32 %v65, %v1611
  %v1613 = vpop.f32.mrf.mxu0
  %v1614 = vadd.f32 %v61, %v1613
  %v1615 = vpop.f32.mrf.mxu0
  %v1616 = vadd.f32 %v65, %v1615
  %1617 = vmatprep.mubr.bf16.mxu0 0
  %1618 = vmatmul.mubr.bf16.gmra.mxu0 %v1519
  %v1619 = vpop.f32.mrf.mxu0
  %v1620 = vadd.f32 %v61, %v1619
  %v1621 = vpop.f32.mrf.mxu0
  %v1622 = vadd.f32 %v65, %v1621
  %v1623 = vpop.f32.mrf.mxu0
  %v1624 = vadd.f32 %v61, %v1623
  %v1625 = vpop.f32.mrf.mxu0
  %v1626 = vadd.f32 %v65, %v1625
  %1627 = vmatprep.mubr.bf16.mxu0 0
  %1628 = vmatmul.mubr.bf16.gmra.mxu0 %v1522
  %v1629 = vpop.f32.mrf.mxu0
  %v1630 = vadd.f32 %v61, %v1629
  %v1631 = vpop.f32.mrf.mxu0
  %v1632 = vadd.f32 %v65, %v1631
  %v1633 = vpop.f32.mrf.mxu0
  %v1634 = vadd.f32 %v61, %v1633
  %v1635 = vpop.f32.mrf.mxu0
  %v1636 = vadd.f32 %v65, %v1635
  %1637 = vmatprep.mubr.bf16.mxu0 0
  %1638 = vmatmul.mubr.bf16.gmra.mxu0 %v1525
  %v1639 = vpop.f32.mrf.mxu0
  %v1640 = vadd.f32 %v61, %v1639
  %v1641 = vpop.f32.mrf.mxu0
  %v1642 = vadd.f32 %v65, %v1641
  %v1643 = vpop.f32.mrf.mxu0
  %v1644 = vadd.f32 %v61, %v1643
  %v1645 = vpop.f32.mrf.mxu0
  %v1646 = vadd.f32 %v65, %v1645
  %1647 = vmatprep.mubr.bf16.mxu0 0
  %1648 = vmatmul.mubr.bf16.gmra.mxu0 %v1528
  %v1649 = vpop.f32.mrf.mxu0
  %v1650 = vadd.f32 %v61, %v1649
  %v1651 = vpop.f32.mrf.mxu0
  %v1652 = vadd.f32 %v65, %v1651
  %v1653 = vpop.f32.mrf.mxu0
  %v1654 = vadd.f32 %v61, %v1653
  %v1655 = vpop.f32.mrf.mxu0
  %v1656 = vadd.f32 %v65, %v1655
  %1657 = vmatprep.mubr.bf16.mxu0 0
  %1658 = vmatmul.mubr.bf16.gmra.mxu0 %v1531
  %v1659 = vpop.f32.mrf.mxu0
  %v1660 = vadd.f32 %v61, %v1659
  %v1661 = vpop.f32.mrf.mxu0
  %v1662 = vadd.f32 %v65, %v1661
  %v1663 = vpop.f32.mrf.mxu0
  %v1664 = vadd.f32 %v61, %v1663
  %v1665 = vpop.f32.mrf.mxu0
  %v1666 = vadd.f32 %v65, %v1665
  %1667 = vmatprep.mubr.bf16.mxu0 0
  %1668 = vmatmul.mubr.bf16.gmra.mxu0 %v1534
  %v1669 = vpop.f32.mrf.mxu0
  %v1670 = vadd.f32 %v61, %v1669
  %v1671 = vpop.f32.mrf.mxu0
  %v1672 = vadd.f32 %v65, %v1671
  %v1673 = vpop.f32.mrf.mxu0
  %v1674 = vadd.f32 %v61, %v1673
  %v1675 = vpop.f32.mrf.mxu0
  %v1676 = vadd.f32 %v65, %v1675
  %1677 = vmatprep.mubr.bf16.mxu0 0
  %1678 = vmatmul.mubr.bf16.gmra.mxu0 %v1537
  %v1679 = vpop.f32.mrf.mxu0
  %v1680 = vadd.f32 %v61, %v1679
  %v1681 = vpop.f32.mrf.mxu0
  %v1682 = vadd.f32 %v65, %v1681
  %v1683 = vpop.f32.mrf.mxu0
  %v1684 = vadd.f32 %v61, %v1683
  %v1685 = vpop.f32.mrf.mxu0
  %v1686 = vadd.f32 %v65, %v1685
  %1687 = vmatprep.mubr.bf16.mxu0 0
  %1688 = vmatmul.mubr.bf16.gmra.mxu0 %v1540
  %v1689 = vpop.f32.mrf.mxu0
  %v1690 = vadd.f32 %v61, %v1689
  %v1691 = vpop.f32.mrf.mxu0
  %v1692 = vadd.f32 %v65, %v1691
  %v1693 = vpop.f32.mrf.mxu0
  %v1694 = vadd.f32 %v61, %v1693
  %v1695 = vpop.f32.mrf.mxu0
  %v1696 = vadd.f32 %v65, %v1695
  %1697 = vmatprep.mubr.bf16.mxu0 0
  %1698 = vmatmul.mubr.bf16.gmra.mxu0 %v1543
  %v1699 = vpop.f32.mrf.mxu0
  %v1700 = vadd.f32 %v61, %v1699
  %v1701 = vpop.f32.mrf.mxu0
  %v1702 = vadd.f32 %v65, %v1701
  %v1703 = vpop.f32.mrf.mxu0
  %v1704 = vadd.f32 %v61, %v1703
  %v1705 = vpop.f32.mrf.mxu0
  %v1706 = vadd.f32 %v65, %v1705
  %1707 = vdwg.mxu0
  %1708 = vmatprep.subr.bf16.mxu0 0
  %1709 = vmatpush1.bf16.msra.mxu0 0
  %1710 = vmatprep.subr.bf16.mxu0 0
  %1711 = vmatpush1.bf16.msra.mxu0 0
  %1712 = vmatprep.subr.bf16.mxu0 0
  %1713 = vmatpush1.bf16.msra.mxu0 0
  %1714 = vmatprep.subr.bf16.mxu0 0
  %1715 = vmatpush1.bf16.msra.mxu0 0
  %1716 = vmatprep.subr.bf16.mxu0 0
  %1717 = vmatpush1.bf16.msra.mxu0 0
  %1718 = vmatprep.subr.bf16.mxu0 0
  %1719 = vmatpush1.bf16.msra.mxu0 0
  %1720 = vmatprep.subr.bf16.mxu0 0
  %1721 = vmatpush1.bf16.msra.mxu0 0
  %1722 = vmatprep.subr.bf16.mxu0 %v174
  %1723 = vmatpush1.bf16.msra.mxu0 %v173
  %1724 = vmatprep.subr.bf16.mxu0 0
  %1725 = vmatpush2.bf16.msra.mxu0 0
  %1726 = vmatprep.subr.bf16.mxu0 0
  %1727 = vmatpush2.bf16.msra.mxu0 0
  %1728 = vmatprep.subr.bf16.mxu0 0
  %1729 = vmatpush2.bf16.msra.mxu0 0
  %1730 = vmatprep.subr.bf16.mxu0 0
  %1731 = vmatpush2.bf16.msra.mxu0 0
  %1732 = vmatprep.subr.bf16.mxu0 0
  %1733 = vmatpush2.bf16.msra.mxu0 0
  %1734 = vmatprep.subr.bf16.mxu0 0
  %1735 = vmatpush2.bf16.msra.mxu0 0
  %1736 = vmatprep.subr.bf16.mxu0 0
  %1737 = vmatpush2.bf16.msra.mxu0 0
  %1738 = vmatprep.subr.bf16.mxu0 0
  %1739 = vmatpush2.bf16.msra.mxu0 0
  %1740 = vmatprep.mubr.bf16.mxu0 0
  %1741 = vmatmul.mubr.bf16.gmra.mxu0 %v1507
  %v1742 = vpop.f32.mrf.mxu0
  %v1743 = vadd.f32 %v69, %v1742
  %v1744 = vpop.f32.mrf.mxu0
  %v1745 = vadd.f32 %v73, %v1744
  %v1746 = vpop.f32.mrf.mxu0
  %v1747 = vadd.f32 %v69, %v1746
  %v1748 = vpop.f32.mrf.mxu0
  %v1749 = vadd.f32 %v73, %v1748
  %1750 = vmatprep.mubr.bf16.mxu0 0
  %1751 = vmatmul.mubr.bf16.gmra.mxu0 %v1510
  %v1752 = vpop.f32.mrf.mxu0
  %v1753 = vadd.f32 %v69, %v1752
  %v1754 = vpop.f32.mrf.mxu0
  %v1755 = vadd.f32 %v73, %v1754
  %v1756 = vpop.f32.mrf.mxu0
  %v1757 = vadd.f32 %v69, %v1756
  %v1758 = vpop.f32.mrf.mxu0
  %v1759 = vadd.f32 %v73, %v1758
  %1760 = vmatprep.mubr.bf16.mxu0 0
  %1761 = vmatmul.mubr.bf16.gmra.mxu0 %v1513
  %v1762 = vpop.f32.mrf.mxu0
  %v1763 = vadd.f32 %v69, %v1762
  %v1764 = vpop.f32.mrf.mxu0
  %v1765 = vadd.f32 %v73, %v1764
  %v1766 = vpop.f32.mrf.mxu0
  %v1767 = vadd.f32 %v69, %v1766
  %v1768 = vpop.f32.mrf.mxu0
  %v1769 = vadd.f32 %v73, %v1768
  %1770 = vmatprep.mubr.bf16.mxu0 0
  %1771 = vmatmul.mubr.bf16.gmra.mxu0 %v1516
  %v1772 = vpop.f32.mrf.mxu0
  %v1773 = vadd.f32 %v69, %v1772
  %v1774 = vpop.f32.mrf.mxu0
  %v1775 = vadd.f32 %v73, %v1774
  %v1776 = vpop.f32.mrf.mxu0
  %v1777 = vadd.f32 %v69, %v1776
  %v1778 = vpop.f32.mrf.mxu0
  %v1779 = vadd.f32 %v73, %v1778
  %1780 = vmatprep.mubr.bf16.mxu0 0
  %1781 = vmatmul.mubr.bf16.gmra.mxu0 %v1519
  %v1782 = vpop.f32.mrf.mxu0
  %v1783 = vadd.f32 %v69, %v1782
  %v1784 = vpop.f32.mrf.mxu0
  %v1785 = vadd.f32 %v73, %v1784
  %v1786 = vpop.f32.mrf.mxu0
  %v1787 = vadd.f32 %v69, %v1786
  %v1788 = vpop.f32.mrf.mxu0
  %v1789 = vadd.f32 %v73, %v1788
  %1790 = vmatprep.mubr.bf16.mxu0 0
  %1791 = vmatmul.mubr.bf16.gmra.mxu0 %v1522
  %v1792 = vpop.f32.mrf.mxu0
  %v1793 = vadd.f32 %v69, %v1792
  %v1794 = vpop.f32.mrf.mxu0
  %v1795 = vadd.f32 %v73, %v1794
  %v1796 = vpop.f32.mrf.mxu0
  %v1797 = vadd.f32 %v69, %v1796
  %v1798 = vpop.f32.mrf.mxu0
  %v1799 = vadd.f32 %v73, %v1798
  %1800 = vmatprep.mubr.bf16.mxu0 0
  %1801 = vmatmul.mubr.bf16.gmra.mxu0 %v1525
  %v1802 = vpop.f32.mrf.mxu0
  %v1803 = vadd.f32 %v69, %v1802
  %v1804 = vpop.f32.mrf.mxu0
  %v1805 = vadd.f32 %v73, %v1804
  %v1806 = vpop.f32.mrf.mxu0
  %v1807 = vadd.f32 %v69, %v1806
  %v1808 = vpop.f32.mrf.mxu0
  %v1809 = vadd.f32 %v73, %v1808
  %1810 = vmatprep.mubr.bf16.mxu0 0
  %1811 = vmatmul.mubr.bf16.gmra.mxu0 %v1528
  %v1812 = vpop.f32.mrf.mxu0
  %v1813 = vadd.f32 %v69, %v1812
  %v1814 = vpop.f32.mrf.mxu0
  %v1815 = vadd.f32 %v73, %v1814
  %v1816 = vpop.f32.mrf.mxu0
  %v1817 = vadd.f32 %v69, %v1816
  %v1818 = vpop.f32.mrf.mxu0
  %v1819 = vadd.f32 %v73, %v1818
  %1820 = vmatprep.mubr.bf16.mxu0 0
  %1821 = vmatmul.mubr.bf16.gmra.mxu0 %v1531
  %v1822 = vpop.f32.mrf.mxu0
  %v1823 = vadd.f32 %v69, %v1822
  %v1824 = vpop.f32.mrf.mxu0
  %v1825 = vadd.f32 %v73, %v1824
  %v1826 = vpop.f32.mrf.mxu0
  %v1827 = vadd.f32 %v69, %v1826
  %v1828 = vpop.f32.mrf.mxu0
  %v1829 = vadd.f32 %v73, %v1828
  %1830 = vmatprep.mubr.bf16.mxu0 0
  %1831 = vmatmul.mubr.bf16.gmra.mxu0 %v1534
  %v1832 = vpop.f32.mrf.mxu0
  %v1833 = vadd.f32 %v69, %v1832
  %v1834 = vpop.f32.mrf.mxu0
  %v1835 = vadd.f32 %v73, %v1834
  %v1836 = vpop.f32.mrf.mxu0
  %v1837 = vadd.f32 %v69, %v1836
  %v1838 = vpop.f32.mrf.mxu0
  %v1839 = vadd.f32 %v73, %v1838
  %1840 = vmatprep.mubr.bf16.mxu0 0
  %1841 = vmatmul.mubr.bf16.gmra.mxu0 %v1537
  %v1842 = vpop.f32.mrf.mxu0
  %v1843 = vadd.f32 %v69, %v1842
  %v1844 = vpop.f32.mrf.mxu0
  %v1845 = vadd.f32 %v73, %v1844
  %v1846 = vpop.f32.mrf.mxu0
  %v1847 = vadd.f32 %v69, %v1846
  %v1848 = vpop.f32.mrf.mxu0
  %v1849 = vadd.f32 %v73, %v1848
  %1850 = vmatprep.mubr.bf16.mxu0 0
  %1851 = vmatmul.mubr.bf16.gmra.mxu0 %v1540
  %v1852 = vpop.f32.mrf.mxu0
  %v1853 = vadd.f32 %v69, %v1852
  %v1854 = vpop.f32.mrf.mxu0
  %v1855 = vadd.f32 %v73, %v1854
  %v1856 = vpop.f32.mrf.mxu0
  %v1857 = vadd.f32 %v69, %v1856
  %v1858 = vpop.f32.mrf.mxu0
  %v1859 = vadd.f32 %v73, %v1858
  %1860 = vmatprep.mubr.bf16.mxu0 0
  %1861 = vmatmul.mubr.bf16.gmra.mxu0 %v1543
  %v1862 = vpop.f32.mrf.mxu0
  %v1863 = vadd.f32 %v69, %v1862
  %v1864 = vpop.f32.mrf.mxu0
  %v1865 = vadd.f32 %v73, %v1864
  %v1866 = vpop.f32.mrf.mxu0
  %v1867 = vadd.f32 %v69, %v1866
  %v1868 = vpop.f32.mrf.mxu0
  %v1869 = vadd.f32 %v73, %v1868
  %1870 = vdwg.mxu0
  %1871 = vmatprep.subr.bf16.mxu0 0
  %1872 = vmatpush1.bf16.msra.mxu0 0
  %1873 = vmatprep.subr.bf16.mxu0 0
  %1874 = vmatpush1.bf16.msra.mxu0 0
  %1875 = vmatprep.subr.bf16.mxu0 0
  %1876 = vmatpush1.bf16.msra.mxu0 0
  %1877 = vmatprep.subr.bf16.mxu0 0
  %1878 = vmatpush1.bf16.msra.mxu0 0
  %1879 = vmatprep.subr.bf16.mxu0 0
  %1880 = vmatpush1.bf16.msra.mxu0 0
  %1881 = vmatprep.subr.bf16.mxu0 0
  %1882 = vmatpush1.bf16.msra.mxu0 0
  %1883 = vmatprep.subr.bf16.mxu0 0
  %1884 = vmatpush1.bf16.msra.mxu0 0
  %1885 = vmatprep.subr.bf16.mxu0 %v176
  %1886 = vmatpush1.bf16.msra.mxu0 %v175
  %1887 = vmatprep.subr.bf16.mxu0 0
  %1888 = vmatpush2.bf16.msra.mxu0 0
  %1889 = vmatprep.subr.bf16.mxu0 0
  %1890 = vmatpush2.bf16.msra.mxu0 0
  %1891 = vmatprep.subr.bf16.mxu0 0
  %1892 = vmatpush2.bf16.msra.mxu0 0
  %1893 = vmatprep.subr.bf16.mxu0 0
  %1894 = vmatpush2.bf16.msra.mxu0 0
  %1895 = vmatprep.subr.bf16.mxu0 0
  %1896 = vmatpush2.bf16.msra.mxu0 0
  %1897 = vmatprep.subr.bf16.mxu0 0
  %1898 = vmatpush2.bf16.msra.mxu0 0
  %1899 = vmatprep.subr.bf16.mxu0 0
  %1900 = vmatpush2.bf16.msra.mxu0 0
  %1901 = vmatprep.subr.bf16.mxu0 0
  %1902 = vmatpush2.bf16.msra.mxu0 0
  %1903 = vmatprep.mubr.bf16.mxu0 0
  %1904 = vmatmul.mubr.bf16.gmra.mxu0 %v1507
  %v1905 = vpop.f32.mrf.mxu0
  %v1906 = vadd.f32 %v77, %v1905
  %v1907 = vpop.f32.mrf.mxu0
  %v1908 = vadd.f32 %v81, %v1907
  %v1909 = vpop.f32.mrf.mxu0
  %v1910 = vadd.f32 %v77, %v1909
  %v1911 = vpop.f32.mrf.mxu0
  %v1912 = vadd.f32 %v81, %v1911
  %1913 = vmatprep.mubr.bf16.mxu0 0
  %1914 = vmatmul.mubr.bf16.gmra.mxu0 %v1510
  %v1915 = vpop.f32.mrf.mxu0
  %v1916 = vadd.f32 %v77, %v1915
  %v1917 = vpop.f32.mrf.mxu0
  %v1918 = vadd.f32 %v81, %v1917
  %v1919 = vpop.f32.mrf.mxu0
  %v1920 = vadd.f32 %v77, %v1919
  %v1921 = vpop.f32.mrf.mxu0
  %v1922 = vadd.f32 %v81, %v1921
  %1923 = vmatprep.mubr.bf16.mxu0 0
  %1924 = vmatmul.mubr.bf16.gmra.mxu0 %v1513
  %v1925 = vpop.f32.mrf.mxu0
  %v1926 = vadd.f32 %v77, %v1925
  %v1927 = vpop.f32.mrf.mxu0
  %v1928 = vadd.f32 %v81, %v1927
  %v1929 = vpop.f32.mrf.mxu0
  %v1930 = vadd.f32 %v77, %v1929
  %v1931 = vpop.f32.mrf.mxu0
  %v1932 = vadd.f32 %v81, %v1931
  %1933 = vmatprep.mubr.bf16.mxu0 0
  %1934 = vmatmul.mubr.bf16.gmra.mxu0 %v1516
  %v1935 = vpop.f32.mrf.mxu0
  %v1936 = vadd.f32 %v77, %v1935
  %v1937 = vpop.f32.mrf.mxu0
  %v1938 = vadd.f32 %v81, %v1937
  %v1939 = vpop.f32.mrf.mxu0
  %v1940 = vadd.f32 %v77, %v1939
  %v1941 = vpop.f32.mrf.mxu0
  %v1942 = vadd.f32 %v81, %v1941
  %1943 = vmatprep.mubr.bf16.mxu0 0
  %1944 = vmatmul.mubr.bf16.gmra.mxu0 %v1519
  %v1945 = vpop.f32.mrf.mxu0
  %v1946 = vadd.f32 %v77, %v1945
  %v1947 = vpop.f32.mrf.mxu0
  %v1948 = vadd.f32 %v81, %v1947
  %v1949 = vpop.f32.mrf.mxu0
  %v1950 = vadd.f32 %v77, %v1949
  %v1951 = vpop.f32.mrf.mxu0
  %v1952 = vadd.f32 %v81, %v1951
  %1953 = vmatprep.mubr.bf16.mxu0 0
  %1954 = vmatmul.mubr.bf16.gmra.mxu0 %v1522
  %v1955 = vpop.f32.mrf.mxu0
  %v1956 = vadd.f32 %v77, %v1955
  %v1957 = vpop.f32.mrf.mxu0
  %v1958 = vadd.f32 %v81, %v1957
  %v1959 = vpop.f32.mrf.mxu0
  %v1960 = vadd.f32 %v77, %v1959
  %v1961 = vpop.f32.mrf.mxu0
  %v1962 = vadd.f32 %v81, %v1961
  %1963 = vmatprep.mubr.bf16.mxu0 0
  %1964 = vmatmul.mubr.bf16.gmra.mxu0 %v1525
  %v1965 = vpop.f32.mrf.mxu0
  %v1966 = vadd.f32 %v77, %v1965
  %v1967 = vpop.f32.mrf.mxu0
  %v1968 = vadd.f32 %v81, %v1967
  %v1969 = vpop.f32.mrf.mxu0
  %v1970 = vadd.f32 %v77, %v1969
  %v1971 = vpop.f32.mrf.mxu0
  %v1972 = vadd.f32 %v81, %v1971
  %1973 = vmatprep.mubr.bf16.mxu0 0
  %1974 = vmatmul.mubr.bf16.gmra.mxu0 %v1528
  %v1975 = vpop.f32.mrf.mxu0
  %v1976 = vadd.f32 %v77, %v1975
  %v1977 = vpop.f32.mrf.mxu0
  %v1978 = vadd.f32 %v81, %v1977
  %v1979 = vpop.f32.mrf.mxu0
  %v1980 = vadd.f32 %v77, %v1979
  %v1981 = vpop.f32.mrf.mxu0
  %v1982 = vadd.f32 %v81, %v1981
  %1983 = vmatprep.mubr.bf16.mxu0 0
  %1984 = vmatmul.mubr.bf16.gmra.mxu0 %v1531
  %v1985 = vpop.f32.mrf.mxu0
  %v1986 = vadd.f32 %v77, %v1985
  %v1987 = vpop.f32.mrf.mxu0
  %v1988 = vadd.f32 %v81, %v1987
  %v1989 = vpop.f32.mrf.mxu0
  %v1990 = vadd.f32 %v77, %v1989
  %v1991 = vpop.f32.mrf.mxu0
  %v1992 = vadd.f32 %v81, %v1991
  %1993 = vmatprep.mubr.bf16.mxu0 0
  %1994 = vmatmul.mubr.bf16.gmra.mxu0 %v1534
  %v1995 = vpop.f32.mrf.mxu0
  %v1996 = vadd.f32 %v77, %v1995
  %v1997 = vpop.f32.mrf.mxu0
  %v1998 = vadd.f32 %v81, %v1997
  %v1999 = vpop.f32.mrf.mxu0
  %v2000 = vadd.f32 %v77, %v1999
  %v2001 = vpop.f32.mrf.mxu0
  %v2002 = vadd.f32 %v81, %v2001
  %2003 = vmatprep.mubr.bf16.mxu0 0
  %2004 = vmatmul.mubr.bf16.gmra.mxu0 %v1537
  %v2005 = vpop.f32.mrf.mxu0
  %v2006 = vadd.f32 %v77, %v2005
  %v2007 = vpop.f32.mrf.mxu0
  %v2008 = vadd.f32 %v81, %v2007
  %v2009 = vpop.f32.mrf.mxu0
  %v2010 = vadd.f32 %v77, %v2009
  %v2011 = vpop.f32.mrf.mxu0
  %v2012 = vadd.f32 %v81, %v2011
  %2013 = vmatprep.mubr.bf16.mxu0 0
  %2014 = vmatmul.mubr.bf16.gmra.mxu0 %v1540
  %v2015 = vpop.f32.mrf.mxu0
  %v2016 = vadd.f32 %v77, %v2015
  %v2017 = vpop.f32.mrf.mxu0
  %v2018 = vadd.f32 %v81, %v2017
  %v2019 = vpop.f32.mrf.mxu0
  %v2020 = vadd.f32 %v77, %v2019
  %v2021 = vpop.f32.mrf.mxu0
  %v2022 = vadd.f32 %v81, %v2021
  %2023 = vmatprep.mubr.bf16.mxu0 0
  %2024 = vmatmul.mubr.bf16.gmra.mxu0 %v1543
  %v2025 = vpop.f32.mrf.mxu0
  %v2026 = vadd.f32 %v77, %v2025
  %v2027 = vpop.f32.mrf.mxu0
  %v2028 = vadd.f32 %v81, %v2027
  %v2029 = vpop.f32.mrf.mxu0
  %v2030 = vadd.f32 %v77, %v2029
  %v2031 = vpop.f32.mrf.mxu0
  %v2032 = vadd.f32 %v81, %v2031
  %2033 = vdwg.mxu0
  %v2034 = vmax.f32 %v1580, 0.0
  %v2035 = vmax.f32 %v1582, 0.0
  %v2036 = vmax.f32 %v1743, 0.0
  %v2037 = vmax.f32 %v1745, 0.0
  %v2038 = vmax.f32 %v1906, 0.0
  %v2039 = vmax.f32 %v1908, 0.0
  %v2040 = vmax.f32 %v1584, 0.0
  %v2041 = vmax.f32 %v1586, 0.0
  %v2042 = vmax.f32 %v1747, 0.0
  %v2043 = vmax.f32 %v1749, 0.0
  %v2044 = vmax.f32 %v1910, 0.0
  %v2045 = vmax.f32 %v1912, 0.0
  %v2046 = vmax.f32 %v1590, 0.0
  %v2047 = vmax.f32 %v1592, 0.0
  %v2048 = vmax.f32 %v1753, 0.0
  %v2049 = vmax.f32 %v1755, 0.0
  %v2050 = vmax.f32 %v1916, 0.0
  %v2051 = vmax.f32 %v1918, 0.0
  %v2052 = vmax.f32 %v1594, 0.0
  %v2053 = vmax.f32 %v1596, 0.0
  %v2054 = vmax.f32 %v1757, 0.0
  %v2055 = vmax.f32 %v1759, 0.0
  %v2056 = vmax.f32 %v1920, 0.0
  %v2057 = vmax.f32 %v1922, 0.0
  %v2058 = vmax.f32 %v1600, 0.0
  %v2059 = vmax.f32 %v1602, 0.0
  %v2060 = vmax.f32 %v1763, 0.0
  %v2061 = vmax.f32 %v1765, 0.0
  %v2062 = vmax.f32 %v1926, 0.0
  %v2063 = vmax.f32 %v1928, 0.0
  %v2064 = vmax.f32 %v1604, 0.0
  %v2065 = vmax.f32 %v1606, 0.0
  %v2066 = vmax.f32 %v1767, 0.0
  %v2067 = vmax.f32 %v1769, 0.0
  %v2068 = vmax.f32 %v1930, 0.0
  %v2069 = vmax.f32 %v1932, 0.0
  %v2070 = vmax.f32 %v1610, 0.0
  %v2071 = vmax.f32 %v1612, 0.0
  %v2072 = vmax.f32 %v1773, 0.0
  %v2073 = vmax.f32 %v1775, 0.0
  %v2074 = vmax.f32 %v1936, 0.0
  %v2075 = vmax.f32 %v1938, 0.0
  %v2076 = vmax.f32 %v1614, 0.0
  %v2077 = vmax.f32 %v1616, 0.0
  %v2078 = vmax.f32 %v1777, 0.0
  %v2079 = vmax.f32 %v1779, 0.0
  %v2080 = vmax.f32 %v1940, 0.0
  %v2081 = vmax.f32 %v1942, 0.0
  %v2082 = vmax.f32 %v1620, 0.0
  %v2083 = vmax.f32 %v1622, 0.0
  %v2084 = vmax.f32 %v1783, 0.0
  %v2085 = vmax.f32 %v1785, 0.0
  %v2086 = vmax.f32 %v1946, 0.0
  %v2087 = vmax.f32 %v1948, 0.0
  %v2088 = vmax.f32 %v1624, 0.0
  %v2089 = vmax.f32 %v1626, 0.0
  %v2090 = vmax.f32 %v1787, 0.0
  %v2091 = vmax.f32 %v1789, 0.0
  %v2092 = vmax.f32 %v1950, 0.0
  %v2093 = vmax.f32 %v1952, 0.0
  %v2094 = vmax.f32 %v1630, 0.0
  %v2095 = vmax.f32 %v1632, 0.0
  %v2096 = vmax.f32 %v1793, 0.0
  %v2097 = vmax.f32 %v1795, 0.0
  %v2098 = vmax.f32 %v1956, 0.0
  %v2099 = vmax.f32 %v1958, 0.0
  %v2100 = vmax.f32 %v1634, 0.0
  %v2101 = vmax.f32 %v1636, 0.0
  %v2102 = vmax.f32 %v1797, 0.0
  %v2103 = vmax.f32 %v1799, 0.0
  %v2104 = vmax.f32 %v1960, 0.0
  %v2105 = vmax.f32 %v1962, 0.0
  %v2106 = vmax.f32 %v1640, 0.0
  %v2107 = vmax.f32 %v1642, 0.0
  %v2108 = vmax.f32 %v1803, 0.0
  %v2109 = vmax.f32 %v1805, 0.0
  %v2110 = vmax.f32 %v1966, 0.0
  %v2111 = vmax.f32 %v1968, 0.0
  %v2112 = vmax.f32 %v1644, 0.0
  %v2113 = vmax.f32 %v1646, 0.0
  %v2114 = vmax.f32 %v1807, 0.0
  %v2115 = vmax.f32 %v1809, 0.0
  %v2116 = vmax.f32 %v1970, 0.0
  %v2117 = vmax.f32 %v1972, 0.0
  %v2118 = vmax.f32 %v1650, 0.0
  %v2119 = vmax.f32 %v1652, 0.0
  %v2120 = vmax.f32 %v1813, 0.0
  %v2121 = vmax.f32 %v1815, 0.0
  %v2122 = vmax.f32 %v1976, 0.0
  %v2123 = vmax.f32 %v1978, 0.0
  %v2124 = vmax.f32 %v1654, 0.0
  %v2125 = vmax.f32 %v1656, 0.0
  %v2126 = vmax.f32 %v1817, 0.0
  %v2127 = vmax.f32 %v1819, 0.0
  %v2128 = vmax.f32 %v1980, 0.0
  %v2129 = vmax.f32 %v1982, 0.0
  %v2130 = vmax.f32 %v1660, 0.0
  %v2131 = vmax.f32 %v1662, 0.0
  %v2132 = vmax.f32 %v1823, 0.0
  %v2133 = vmax.f32 %v1825, 0.0
  %v2134 = vmax.f32 %v1986, 0.0
  %v2135 = vmax.f32 %v1988, 0.0
  %v2136 = vmax.f32 %v1664, 0.0
  %v2137 = vmax.f32 %v1666, 0.0
  %v2138 = vmax.f32 %v1827, 0.0
  %v2139 = vmax.f32 %v1829, 0.0
  %v2140 = vmax.f32 %v1990, 0.0
  %v2141 = vmax.f32 %v1992, 0.0
  %v2142 = vmax.f32 %v1670, 0.0
  %v2143 = vmax.f32 %v1672, 0.0
  %v2144 = vmax.f32 %v1833, 0.0
  %v2145 = vmax.f32 %v1835, 0.0
  %v2146 = vmax.f32 %v1996, 0.0
  %v2147 = vmax.f32 %v1998, 0.0
  %v2148 = vmax.f32 %v1674, 0.0
  %v2149 = vmax.f32 %v1676, 0.0
  %v2150 = vmax.f32 %v1837, 0.0
  %v2151 = vmax.f32 %v1839, 0.0
  %v2152 = vmax.f32 %v2000, 0.0
  %v2153 = vmax.f32 %v2002, 0.0
  %v2154 = vmax.f32 %v1680, 0.0
  %v2155 = vmax.f32 %v1682, 0.0
  %v2156 = vmax.f32 %v1843, 0.0
  %v2157 = vmax.f32 %v1845, 0.0
  %v2158 = vmax.f32 %v2006, 0.0
  %v2159 = vmax.f32 %v2008, 0.0
  %v2160 = vmax.f32 %v1684, 0.0
  %v2161 = vmax.f32 %v1686, 0.0
  %v2162 = vmax.f32 %v1847, 0.0
  %v2163 = vmax.f32 %v1849, 0.0
  %v2164 = vmax.f32 %v2010, 0.0
  %v2165 = vmax.f32 %v2012, 0.0
  %v2166 = vmax.f32 %v1690, 0.0
  %v2167 = vmax.f32 %v1692, 0.0
  %v2168 = vmax.f32 %v1853, 0.0
  %v2169 = vmax.f32 %v1855, 0.0
  %v2170 = vmax.f32 %v2016, 0.0
  %v2171 = vmax.f32 %v2018, 0.0
  %v2172 = vmax.f32 %v1694, 0.0
  %v2173 = vmax.f32 %v1696, 0.0
  %v2174 = vmax.f32 %v1857, 0.0
  %v2175 = vmax.f32 %v1859, 0.0
  %v2176 = vmax.f32 %v2020, 0.0
  %v2177 = vmax.f32 %v2022, 0.0
  %v2178 = vmax.f32 %v1700, 0.0
  %v2179 = vmax.f32 %v1702, 0.0
  %v2180 = vmax.f32 %v1863, 0.0
  %v2181 = vmax.f32 %v1865, 0.0
  %v2182 = vmax.f32 %v2026, 0.0
  %v2183 = vmax.f32 %v2028, 0.0
  %v2184 = vmax.f32 %v1704, 0.0
  %v2185 = vmax.f32 %v1706, 0.0
  %v2186 = vmax.f32 %v1867, 0.0
  %v2187 = vmax.f32 %v1869, 0.0
  %v2188 = vmax.f32 %v2030, 0.0
  %v2189 = vmax.f32 %v2032, 0.0
  %v2190 = vpack.c.bf16 %v2040, %v2034
  %v2191 = vpack.c.bf16 %v2041, %v2035
  %v2192 = vpack.c.bf16 %v2042, %v2036
  %v2193 = vpack.c.bf16 %v2043, %v2037
  %v2194 = vpack.c.bf16 %v2044, %v2038
  %v2195 = vpack.c.bf16 %v2045, %v2039
  %v2196 = vpack.c.bf16 %v2052, %v2046
  %v2197 = vpack.c.bf16 %v2053, %v2047
  %v2198 = vpack.c.bf16 %v2054, %v2048
  %v2199 = vpack.c.bf16 %v2055, %v2049
  %v2200 = vpack.c.bf16 %v2056, %v2050
  %v2201 = vpack.c.bf16 %v2057, %v2051
  %v2202 = vpack.c.bf16 %v2064, %v2058
  %v2203 = vpack.c.bf16 %v2065, %v2059
  %v2204 = vpack.c.bf16 %v2066, %v2060
  %v2205 = vpack.c.bf16 %v2067, %v2061
  %v2206 = vpack.c.bf16 %v2068, %v2062
  %v2207 = vpack.c.bf16 %v2069, %v2063
  %v2208 = vpack.c.bf16 %v2076, %v2070
  %v2209 = vpack.c.bf16 %v2077, %v2071
  %v2210 = vpack.c.bf16 %v2078, %v2072
  %v2211 = vpack.c.bf16 %v2079, %v2073
  %v2212 = vpack.c.bf16 %v2080, %v2074
  %v2213 = vpack.c.bf16 %v2081, %v2075
  %v2214 = vpack.c.bf16 %v2088, %v2082
  %v2215 = vpack.c.bf16 %v2089, %v2083
  %v2216 = vpack.c.bf16 %v2090, %v2084
  %v2217 = vpack.c.bf16 %v2091, %v2085
  %v2218 = vpack.c.bf16 %v2092, %v2086
  %v2219 = vpack.c.bf16 %v2093, %v2087
  %v2220 = vpack.c.bf16 %v2100, %v2094
  %v2221 = vpack.c.bf16 %v2101, %v2095
  %v2222 = vpack.c.bf16 %v2102, %v2096
  %v2223 = vpack.c.bf16 %v2103, %v2097
  %v2224 = vpack.c.bf16 %v2104, %v2098
  %v2225 = vpack.c.bf16 %v2105, %v2099
  %v2226 = vpack.c.bf16 %v2112, %v2106
  %v2227 = vpack.c.bf16 %v2113, %v2107
  %v2228 = vpack.c.bf16 %v2114, %v2108
  %v2229 = vpack.c.bf16 %v2115, %v2109
  %v2230 = vpack.c.bf16 %v2116, %v2110
  %v2231 = vpack.c.bf16 %v2117, %v2111
  %v2232 = vpack.c.bf16 %v2124, %v2118
  %v2233 = vpack.c.bf16 %v2125, %v2119
  %v2234 = vpack.c.bf16 %v2126, %v2120
  %v2235 = vpack.c.bf16 %v2127, %v2121
  %v2236 = vpack.c.bf16 %v2128, %v2122
  %v2237 = vpack.c.bf16 %v2129, %v2123
  %v2238 = vpack.c.bf16 %v2136, %v2130
  %v2239 = vpack.c.bf16 %v2137, %v2131
  %v2240 = vpack.c.bf16 %v2138, %v2132
  %v2241 = vpack.c.bf16 %v2139, %v2133
  %v2242 = vpack.c.bf16 %v2140, %v2134
  %v2243 = vpack.c.bf16 %v2141, %v2135
  %v2244 = vpack.c.bf16 %v2148, %v2142
  %v2245 = vpack.c.bf16 %v2149, %v2143
  %v2246 = vpack.c.bf16 %v2150, %v2144
  %v2247 = vpack.c.bf16 %v2151, %v2145
  %v2248 = vpack.c.bf16 %v2152, %v2146
  %v2249 = vpack.c.bf16 %v2153, %v2147
  %v2250 = vpack.c.bf16 %v2160, %v2154
  %v2251 = vpack.c.bf16 %v2161, %v2155
  %v2252 = vpack.c.bf16 %v2162, %v2156
  %v2253 = vpack.c.bf16 %v2163, %v2157
  %v2254 = vpack.c.bf16 %v2164, %v2158
  %v2255 = vpack.c.bf16 %v2165, %v2159
  %v2256 = vpack.c.bf16 %v2172, %v2166
  %v2257 = vpack.c.bf16 %v2173, %v2167
  %v2258 = vpack.c.bf16 %v2174, %v2168
  %v2259 = vpack.c.bf16 %v2175, %v2169
  %v2260 = vpack.c.bf16 %v2176, %v2170
  %v2261 = vpack.c.bf16 %v2177, %v2171
  %v2262 = vpack.c.bf16 %v2184, %v2178
  %v2263 = vpack.c.bf16 %v2185, %v2179
  %v2264 = vpack.c.bf16 %v2186, %v2180
  %v2265 = vpack.c.bf16 %v2187, %v2181
  %v2266 = vpack.c.bf16 %v2188, %v2182
  %v2267 = vpack.c.bf16 %v2189, %v2183
  %v2346 = vunpack.c.l.b16 %v2190
  %v2347 = vunpack.c.l.b16 %v2191
  %v2348 = vunpack.c.l.b16 %v2192
  %v2349 = vunpack.c.l.b16 %v2193
  %v2350 = vunpack.c.l.b16 %v2194
  %v2351 = vunpack.c.l.b16 %v2195
  %v2352 = vunpack.c.h.b16 %v2190
  %v2353 = vunpack.c.h.b16 %v2191
  %v2354 = vunpack.c.h.b16 %v2192
  %v2355 = vunpack.c.h.b16 %v2193
  %v2356 = vunpack.c.h.b16 %v2194
  %v2357 = vunpack.c.h.b16 %v2195
  %v2358 = vunpack.c.l.b16 %v2196
  %v2359 = vunpack.c.l.b16 %v2197
  %v2360 = vunpack.c.l.b16 %v2198
  %v2361 = vunpack.c.l.b16 %v2199
  %v2362 = vunpack.c.l.b16 %v2200
  %v2363 = vunpack.c.l.b16 %v2201
  %v2364 = vunpack.c.h.b16 %v2196
  %v2365 = vunpack.c.h.b16 %v2197
  %v2366 = vunpack.c.h.b16 %v2198
  %v2367 = vunpack.c.h.b16 %v2199
  %v2368 = vunpack.c.h.b16 %v2200
  %v2369 = vunpack.c.h.b16 %v2201
  %v2370 = vunpack.c.l.b16 %v2202
  %v2371 = vunpack.c.l.b16 %v2203
  %v2372 = vunpack.c.l.b16 %v2204
  %v2373 = vunpack.c.l.b16 %v2205
  %v2374 = vunpack.c.l.b16 %v2206
  %v2375 = vunpack.c.l.b16 %v2207
  %v2376 = vunpack.c.h.b16 %v2202
  %v2377 = vunpack.c.h.b16 %v2203
  %v2378 = vunpack.c.h.b16 %v2204
  %v2379 = vunpack.c.h.b16 %v2205
  %v2380 = vunpack.c.h.b16 %v2206
  %v2381 = vunpack.c.h.b16 %v2207
  %v2382 = vunpack.c.l.b16 %v2208
  %v2383 = vunpack.c.l.b16 %v2209
  %v2384 = vunpack.c.l.b16 %v2210
  %v2385 = vunpack.c.l.b16 %v2211
  %v2386 = vunpack.c.l.b16 %v2212
  %v2387 = vunpack.c.l.b16 %v2213
  %v2388 = vunpack.c.h.b16 %v2208
  %v2389 = vunpack.c.h.b16 %v2209
  %v2390 = vunpack.c.h.b16 %v2210
  %v2391 = vunpack.c.h.b16 %v2211
  %v2392 = vunpack.c.h.b16 %v2212
  %v2393 = vunpack.c.h.b16 %v2213
  %v2394 = vunpack.c.l.b16 %v2214
  %v2395 = vunpack.c.l.b16 %v2215
  %v2396 = vunpack.c.l.b16 %v2216
  %v2397 = vunpack.c.l.b16 %v2217
  %v2398 = vunpack.c.l.b16 %v2218
  %v2399 = vunpack.c.l.b16 %v2219
  %v2400 = vunpack.c.h.b16 %v2214
  %v2401 = vunpack.c.h.b16 %v2215
  %v2402 = vunpack.c.h.b16 %v2216
  %v2403 = vunpack.c.h.b16 %v2217
  %v2404 = vunpack.c.h.b16 %v2218
  %v2405 = vunpack.c.h.b16 %v2219
  %v2406 = vunpack.c.l.b16 %v2220
  %v2407 = vunpack.c.l.b16 %v2221
  %v2408 = vunpack.c.l.b16 %v2222
  %v2409 = vunpack.c.l.b16 %v2223
  %v2410 = vunpack.c.l.b16 %v2224
  %v2411 = vunpack.c.l.b16 %v2225
  %v2412 = vunpack.c.h.b16 %v2220
  %v2413 = vunpack.c.h.b16 %v2221
  %v2414 = vunpack.c.h.b16 %v2222
  %v2415 = vunpack.c.h.b16 %v2223
  %v2416 = vunpack.c.h.b16 %v2224
  %v2417 = vunpack.c.h.b16 %v2225
  %v2418 = vunpack.c.l.b16 %v2226
  %v2419 = vunpack.c.l.b16 %v2227
  %v2420 = vunpack.c.l.b16 %v2228
  %v2421 = vunpack.c.l.b16 %v2229
  %v2422 = vunpack.c.l.b16 %v2230
  %v2423 = vunpack.c.l.b16 %v2231
  %v2424 = vunpack.c.h.b16 %v2226
  %v2425 = vunpack.c.h.b16 %v2227
  %v2426 = vunpack.c.h.b16 %v2228
  %v2427 = vunpack.c.h.b16 %v2229
  %v2428 = vunpack.c.h.b16 %v2230
  %v2429 = vunpack.c.h.b16 %v2231
  %v2430 = vunpack.c.l.b16 %v2232
  %v2431 = vunpack.c.l.b16 %v2233
  %v2432 = vunpack.c.l.b16 %v2234
  %v2433 = vunpack.c.l.b16 %v2235
  %v2434 = vunpack.c.l.b16 %v2236
  %v2435 = vunpack.c.l.b16 %v2237
  %v2436 = vunpack.c.h.b16 %v2232
  %v2437 = vunpack.c.h.b16 %v2233
  %v2438 = vunpack.c.h.b16 %v2234
  %v2439 = vunpack.c.h.b16 %v2235
  %v2440 = vunpack.c.h.b16 %v2236
  %v2441 = vunpack.c.h.b16 %v2237
  %v2442 = vunpack.c.l.b16 %v2238
  %v2443 = vunpack.c.l.b16 %v2239
  %v2444 = vunpack.c.l.b16 %v2240
  %v2445 = vunpack.c.l.b16 %v2241
  %v2446 = vunpack.c.l.b16 %v2242
  %v2447 = vunpack.c.l.b16 %v2243
  %v2448 = vunpack.c.h.b16 %v2238
  %v2449 = vunpack.c.h.b16 %v2239
  %v2450 = vunpack.c.h.b16 %v2240
  %v2451 = vunpack.c.h.b16 %v2241
  %v2452 = vunpack.c.h.b16 %v2242
  %v2453 = vunpack.c.h.b16 %v2243
  %v2454 = vunpack.c.l.b16 %v2244
  %v2455 = vunpack.c.l.b16 %v2245
  %v2456 = vunpack.c.l.b16 %v2246
  %v2457 = vunpack.c.l.b16 %v2247
  %v2458 = vunpack.c.l.b16 %v2248
  %v2459 = vunpack.c.l.b16 %v2249
  %v2460 = vunpack.c.h.b16 %v2244
  %v2461 = vunpack.c.h.b16 %v2245
  %v2462 = vunpack.c.h.b16 %v2246
  %v2463 = vunpack.c.h.b16 %v2247
  %v2464 = vunpack.c.h.b16 %v2248
  %v2465 = vunpack.c.h.b16 %v2249
  %v2466 = vunpack.c.l.b16 %v2250
  %v2467 = vunpack.c.l.b16 %v2251
  %v2468 = vunpack.c.l.b16 %v2252
  %v2469 = vunpack.c.l.b16 %v2253
  %v2470 = vunpack.c.l.b16 %v2254
  %v2471 = vunpack.c.l.b16 %v2255
  %v2472 = vunpack.c.h.b16 %v2250
  %v2473 = vunpack.c.h.b16 %v2251
  %v2474 = vunpack.c.h.b16 %v2252
  %v2475 = vunpack.c.h.b16 %v2253
  %v2476 = vunpack.c.h.b16 %v2254
  %v2477 = vunpack.c.h.b16 %v2255
  %v2478 = vunpack.c.l.b16 %v2256
  %v2479 = vunpack.c.l.b16 %v2257
  %v2480 = vunpack.c.l.b16 %v2258
  %v2481 = vunpack.c.l.b16 %v2259
  %v2482 = vunpack.c.l.b16 %v2260
  %v2483 = vunpack.c.l.b16 %v2261
  %v2484 = vunpack.c.h.b16 %v2256
  %v2485 = vunpack.c.h.b16 %v2257
  %v2486 = vunpack.c.h.b16 %v2258
  %v2487 = vunpack.c.h.b16 %v2259
  %v2488 = vunpack.c.h.b16 %v2260
  %v2489 = vunpack.c.h.b16 %v2261
  %v2490 = vunpack.c.l.b16 %v2262
  %v2491 = vunpack.c.l.b16 %v2263
  %v2492 = vunpack.c.l.b16 %v2264
  %v2493 = vunpack.c.l.b16 %v2265
  %v2494 = vunpack.c.l.b16 %v2266
  %v2495 = vunpack.c.l.b16 %v2267
  %v2496 = vunpack.c.h.b16 %v2262
  %v2497 = vunpack.c.h.b16 %v2263
  %v2498 = vunpack.c.h.b16 %v2264
  %v2499 = vunpack.c.h.b16 %v2265
  %v2500 = vunpack.c.h.b16 %v2266
  %v2501 = vunpack.c.h.b16 %v2267
  %v2502 = vpack.c.b16 %v2347, %v2346
  %v2503 = vpack.c.b16 %v2349, %v2348
  %v2504 = vpack.c.b16 %v2351, %v2350
  %v2505 = vpack.c.b16 %v2353, %v2352
  %v2506 = vpack.c.b16 %v2355, %v2354
  %v2507 = vpack.c.b16 %v2357, %v2356
  %v2508 = vpack.c.b16 %v2359, %v2358
  %v2509 = vpack.c.b16 %v2361, %v2360
  %v2510 = vpack.c.b16 %v2363, %v2362
  %v2511 = vpack.c.b16 %v2365, %v2364
  %v2512 = vpack.c.b16 %v2367, %v2366
  %v2513 = vpack.c.b16 %v2369, %v2368
  %v2514 = vpack.c.b16 %v2371, %v2370
  %v2515 = vpack.c.b16 %v2373, %v2372
  %v2516 = vpack.c.b16 %v2375, %v2374
  %v2517 = vpack.c.b16 %v2377, %v2376
  %v2518 = vpack.c.b16 %v2379, %v2378
  %v2519 = vpack.c.b16 %v2381, %v2380
  %v2520 = vpack.c.b16 %v2383, %v2382
  %v2521 = vpack.c.b16 %v2385, %v2384
  %v2522 = vpack.c.b16 %v2387, %v2386
  %v2523 = vpack.c.b16 %v2389, %v2388
  %v2524 = vpack.c.b16 %v2391, %v2390
  %v2525 = vpack.c.b16 %v2393, %v2392
  %v2526 = vpack.c.b16 %v2395, %v2394
  %v2527 = vpack.c.b16 %v2397, %v2396
  %v2528 = vpack.c.b16 %v2399, %v2398
  %v2529 = vpack.c.b16 %v2401, %v2400
  %v2530 = vpack.c.b16 %v2403, %v2402
  %v2531 = vpack.c.b16 %v2405, %v2404
  %v2532 = vpack.c.b16 %v2407, %v2406
  %v2533 = vpack.c.b16 %v2409, %v2408
  %v2534 = vpack.c.b16 %v2411, %v2410
  %v2535 = vpack.c.b16 %v2413, %v2412
  %v2536 = vpack.c.b16 %v2415, %v2414
  %v2537 = vpack.c.b16 %v2417, %v2416
  %v2538 = vpack.c.b16 %v2419, %v2418
  %v2539 = vpack.c.b16 %v2421, %v2420
  %v2540 = vpack.c.b16 %v2423, %v2422
  %v2541 = vpack.c.b16 %v2425, %v2424
  %v2542 = vpack.c.b16 %v2427, %v2426
  %v2543 = vpack.c.b16 %v2429, %v2428
  %v2544 = vpack.c.b16 %v2431, %v2430
  %v2545 = vpack.c.b16 %v2433, %v2432
  %v2546 = vpack.c.b16 %v2435, %v2434
  %v2547 = vpack.c.b16 %v2437, %v2436
  %v2548 = vpack.c.b16 %v2439, %v2438
  %v2549 = vpack.c.b16 %v2441, %v2440
  %v2550 = vpack.c.b16 %v2443, %v2442
  %v2551 = vpack.c.b16 %v2445, %v2444
  %v2552 = vpack.c.b16 %v2447, %v2446
  %v2553 = vpack.c.b16 %v2449, %v2448
  %v2554 = vpack.c.b16 %v2451, %v2450
  %v2555 = vpack.c.b16 %v2453, %v2452
  %v2556 = vpack.c.b16 %v2455, %v2454
  %v2557 = vpack.c.b16 %v2457, %v2456
  %v2558 = vpack.c.b16 %v2459, %v2458
  %v2559 = vpack.c.b16 %v2461, %v2460
  %v2560 = vpack.c.b16 %v2463, %v2462
  %v2561 = vpack.c.b16 %v2465, %v2464
  %v2562 = vpack.c.b16 %v2467, %v2466
  %v2563 = vpack.c.b16 %v2469, %v2468
  %v2564 = vpack.c.b16 %v2471, %v2470
  %v2565 = vpack.c.b16 %v2473, %v2472
  %v2566 = vpack.c.b16 %v2475, %v2474
  %v2567 = vpack.c.b16 %v2477, %v2476
  %v2568 = vpack.c.b16 %v2479, %v2478
  %v2569 = vpack.c.b16 %v2481, %v2480
  %v2570 = vpack.c.b16 %v2483, %v2482
  %v2571 = vpack.c.b16 %v2485, %v2484
  %v2572 = vpack.c.b16 %v2487, %v2486
  %v2573 = vpack.c.b16 %v2489, %v2488
  %v2574 = vpack.c.b16 %v2491, %v2490
  %v2575 = vpack.c.b16 %v2493, %v2492
  %v2576 = vpack.c.b16 %v2495, %v2494
  %v2577 = vpack.c.b16 %v2497, %v2496
  %v2578 = vpack.c.b16 %v2499, %v2498
  %v2579 = vpack.c.b16 %v2501, %v2500
  %2658 = vst [vmem:[#allocation2 + $0x270] sm:$0xff] %v2502
  %2659 = vst [vmem:[#allocation2 + $0x278] sm:$0xff] %v2503
  %2660 = vst [vmem:[#allocation2 + $0x280] sm:$0xff] %v2504
  %2661 = vst [vmem:[#allocation2 + $0x288] sm:$0xff] %v2505
  %2662 = vst [vmem:[#allocation2 + $0x290] sm:$0xff] %v2506
  %2663 = vst [vmem:[#allocation2 + $0x298] sm:$0xff] %v2507
  %2664 = vst [vmem:[#allocation2 + $0x2a0] sm:$0xff] %v2508
  %2665 = vst [vmem:[#allocation2 + $0x2a8] sm:$0xff] %v2509
  %2666 = vst [vmem:[#allocation2 + $0x2b0] sm:$0xff] %v2510
  %2667 = vst [vmem:[#allocation2 + $0x2b8] sm:$0xff] %v2511
  %2668 = vst [vmem:[#allocation2 + $0x2c0] sm:$0xff] %v2512
  %2669 = vst [vmem:[#allocation2 + $0x2c8] sm:$0xff] %v2513
  %2670 = vst [vmem:[#allocation2 + $0x2d0] sm:$0xff] %v2514
  %2671 = vst [vmem:[#allocation2 + $0x2d8] sm:$0xff] %v2515
  %2672 = vst [vmem:[#allocation2 + $0x2e0] sm:$0xff] %v2516
  %2673 = vst [vmem:[#allocation2 + $0x2e8] sm:$0xff] %v2517
  %2674 = vst [vmem:[#allocation2 + $0x2f0] sm:$0xff] %v2518
  %2675 = vst [vmem:[#allocation2 + $0x2f8] sm:$0xff] %v2519
  %2676 = vst [vmem:[#allocation2 + $0x300] sm:$0xff] %v2520
  %2677 = vst [vmem:[#allocation2 + $0x308] sm:$0xff] %v2521
  %2678 = vst [vmem:[#allocation2 + $0x310] sm:$0xff] %v2522
  %2679 = vst [vmem:[#allocation2 + $0x318] sm:$0xff] %v2523
  %2680 = vst [vmem:[#allocation2 + $0x320] sm:$0xff] %v2524
  %2681 = vst [vmem:[#allocation2 + $0x328] sm:$0xff] %v2525
  %2682 = vst [vmem:[#allocation2 + $0x330] sm:$0xff] %v2526
  %2683 = vst [vmem:[#allocation2 + $0x338] sm:$0xff] %v2527
  %2684 = vst [vmem:[#allocation2 + $0x340] sm:$0xff] %v2528
  %2685 = vst [vmem:[#allocation2 + $0x348] sm:$0xff] %v2529
  %2686 = vst [vmem:[#allocation2 + $0x350] sm:$0xff] %v2530
  %2687 = vst [vmem:[#allocation2 + $0x358] sm:$0xff] %v2531
  %2688 = vst [vmem:[#allocation2 + $0x360] sm:$0xff] %v2532
  %2689 = vst [vmem:[#allocation2 + $0x368] sm:$0xff] %v2533
  %2690 = vst [vmem:[#allocation2 + $0x370] sm:$0xff] %v2534
  %2691 = vst [vmem:[#allocation2 + $0x378] sm:$0xff] %v2535
  %2692 = vst [vmem:[#allocation2 + $0x380] sm:$0xff] %v2536
  %2693 = vst [vmem:[#allocation2 + $0x388] sm:$0xff] %v2537
  %2694 = vst [vmem:[#allocation2 + $0x390] sm:$0xff] %v2538
  %2695 = vst [vmem:[#allocation2 + $0x398] sm:$0xff] %v2539
  %2696 = vst [vmem:[#allocation2 + $0x3a0] sm:$0xff] %v2540
  %2697 = vst [vmem:[#allocation2 + $0x3a8] sm:$0xff] %v2541
  %2698 = vst [vmem:[#allocation2 + $0x3b0] sm:$0xff] %v2542
  %2699 = vst [vmem:[#allocation2 + $0x3b8] sm:$0xff] %v2543
  %2700 = vst [vmem:[#allocation2 + $0x3c0] sm:$0xff] %v2544
  %2701 = vst [vmem:[#allocation2 + $0x3c8] sm:$0xff] %v2545
  %2702 = vst [vmem:[#allocation2 + $0x3d0] sm:$0xff] %v2546
  %2703 = vst [vmem:[#allocation2 + $0x3d8] sm:$0xff] %v2547
  %2704 = vst [vmem:[#allocation2 + $0x3e0] sm:$0xff] %v2548
  %2705 = vst [vmem:[#allocation2 + $0x3e8] sm:$0xff] %v2549
  %2706 = vst [vmem:[#allocation2 + $0x3f0] sm:$0xff] %v2550
  %2707 = vst [vmem:[#allocation2 + $0x3f8] sm:$0xff] %v2551
  %2708 = vst [vmem:[#allocation2 + $0x400] sm:$0xff] %v2552
  %2709 = vst [vmem:[#allocation2 + $0x408] sm:$0xff] %v2553
  %2710 = vst [vmem:[#allocation2 + $0x410] sm:$0xff] %v2554
  %2711 = vst [vmem:[#allocation2 + $0x418] sm:$0xff] %v2555
  %2712 = vst [vmem:[#allocation2 + $0x420] sm:$0xff] %v2556
  %2713 = vst [vmem:[#allocation2 + $0x428] sm:$0xff] %v2557
  %2714 = vst [vmem:[#allocation2 + $0x430] sm:$0xff] %v2558
  %2715 = vst [vmem:[#allocation2 + $0x438] sm:$0xff] %v2559
  %2716 = vst [vmem:[#allocation2 + $0x440] sm:$0xff] %v2560
  %2717 = vst [vmem:[#allocation2 + $0x448] sm:$0xff] %v2561
  %2718 = vst [vmem:[#allocation2 + $0x450] sm:$0xff] %v2562
  %2719 = vst [vmem:[#allocation2 + $0x458] sm:$0xff] %v2563
  %2720 = vst [vmem:[#allocation2 + $0x460] sm:$0xff] %v2564
  %2721 = vst [vmem:[#allocation2 + $0x468] sm:$0xff] %v2565
  %2722 = vst [vmem:[#allocation2 + $0x470] sm:$0xff] %v2566
  %2723 = vst [vmem:[#allocation2 + $0x478] sm:$0xff] %v2567
  %2724 = vst [vmem:[#allocation2 + $0x480] sm:$0xff] %v2568
  %2725 = vst [vmem:[#allocation2 + $0x488] sm:$0xff] %v2569
  %2726 = vst [vmem:[#allocation2 + $0x490] sm:$0xff] %v2570
  %2727 = vst [vmem:[#allocation2 + $0x498] sm:$0xff] %v2571
  %2728 = vst [vmem:[#allocation2 + $0x4a0] sm:$0xff] %v2572
  %2729 = vst [vmem:[#allocation2 + $0x4a8] sm:$0xff] %v2573
  %2730 = vst [vmem:[#allocation2 + $0x4b0] sm:$0xff] %v2574
  %2731 = vst [vmem:[#allocation2 + $0x4b8] sm:$0xff] %v2575
  %2732 = vst [vmem:[#allocation2 + $0x4c0] sm:$0xff] %v2576
  %2733 = vst [vmem:[#allocation2 + $0x4c8] sm:$0xff] %v2577
  %2734 = vst [vmem:[#allocation2 + $0x4d0] sm:$0xff] %v2578
  %2735 = vst [vmem:[#allocation2 + $0x4d8] sm:$0xff] %v2579
  %v2736 = vld [vmem:[#allocation2] sm:$0xff]
  %v2737 = vld [vmem:[#allocation2 + $0x8] sm:$0xff]
  %v2738 = vld [vmem:[#allocation2 + $0x10] sm:$0xff]
  %v2739 = vld [vmem:[#allocation2 + $0x18] sm:$0xff]
  %v2740 = vld [vmem:[#allocation2 + $0x20] sm:$0xff]
  %v2741 = vld [vmem:[#allocation2 + $0x28] sm:$0xff]
  %v2742 = vld [vmem:[#allocation2 + $0x30] sm:$0xff]
  %v2743 = vld [vmem:[#allocation2 + $0x38] sm:$0xff]
  %v2744 = vld [vmem:[#allocation2 + $0x40] sm:$0xff]
  %v2745 = vld [vmem:[#allocation2 + $0x48] sm:$0xff]
  %v2746 = vld [vmem:[#allocation2 + $0x50] sm:$0xff]
  %v2747 = vld [vmem:[#allocation2 + $0x58] sm:$0xff]
  %v2748 = vld [vmem:[#allocation2 + $0x60] sm:$0xff]
  %v2749 = vld [vmem:[#allocation2 + $0x68] sm:$0xff]
  %v2750 = vld [vmem:[#allocation2 + $0x70] sm:$0xff]
  %v2751 = vld [vmem:[#allocation2 + $0x78] sm:$0xff]
  %v2752 = vld [vmem:[#allocation2 + $0x80] sm:$0xff]
  %v2753 = vld [vmem:[#allocation2 + $0x88] sm:$0xff]
  %v2754 = vld [vmem:[#allocation2 + $0x90] sm:$0xff]
  %v2755 = vld [vmem:[#allocation2 + $0x98] sm:$0xff]
  %v2756 = vld [vmem:[#allocation2 + $0xa0] sm:$0xff]
  %v2757 = vld [vmem:[#allocation2 + $0xa8] sm:$0xff]
  %v2758 = vld [vmem:[#allocation2 + $0xb0] sm:$0xff]
  %v2759 = vld [vmem:[#allocation2 + $0xb8] sm:$0xff]
  %v2760 = vld [vmem:[#allocation2 + $0xc0] sm:$0xff]
  %v2761 = vld [vmem:[#allocation2 + $0xc8] sm:$0xff]
  %v2762 = vld [vmem:[#allocation2 + $0xd0] sm:$0xff]
  %v2763 = vld [vmem:[#allocation2 + $0xd8] sm:$0xff]
  %v2764 = vld [vmem:[#allocation2 + $0xe0] sm:$0xff]
  %v2765 = vld [vmem:[#allocation2 + $0xe8] sm:$0xff]
  %v2766 = vld [vmem:[#allocation2 + $0xf0] sm:$0xff]
  %v2767 = vld [vmem:[#allocation2 + $0xf8] sm:$0xff]
  %v2768 = vld [vmem:[#allocation2 + $0x100] sm:$0xff]
  %v2769 = vld [vmem:[#allocation2 + $0x108] sm:$0xff]
  %v2770 = vld [vmem:[#allocation2 + $0x110] sm:$0xff]
  %v2771 = vld [vmem:[#allocation2 + $0x118] sm:$0xff]
  %v2772 = vld [vmem:[#allocation2 + $0x120] sm:$0xff]
  %v2773 = vld [vmem:[#allocation2 + $0x128] sm:$0xff]
  %v2774 = vld [vmem:[#allocation2 + $0x130] sm:$0xff]
  %v2775 = vld [vmem:[#allocation2 + $0x138] sm:$0xff]
  %v2776 = vld [vmem:[#allocation2 + $0x140] sm:$0xff]
  %v2777 = vld [vmem:[#allocation2 + $0x148] sm:$0xff]
  %v2778 = vld [vmem:[#allocation2 + $0x150] sm:$0xff]
  %v2779 = vld [vmem:[#allocation2 + $0x158] sm:$0xff]
  %v2780 = vld [vmem:[#allocation2 + $0x160] sm:$0xff]
  %v2781 = vld [vmem:[#allocation2 + $0x168] sm:$0xff]
  %v2782 = vld [vmem:[#allocation2 + $0x170] sm:$0xff]
  %v2783 = vld [vmem:[#allocation2 + $0x178] sm:$0xff]
  %v2784 = vld [vmem:[#allocation2 + $0x180] sm:$0xff]
  %v2785 = vld [vmem:[#allocation2 + $0x188] sm:$0xff]
  %v2786 = vld [vmem:[#allocation2 + $0x190] sm:$0xff]
  %v2787 = vld [vmem:[#allocation2 + $0x198] sm:$0xff]
  %v2788 = vld [vmem:[#allocation2 + $0x1a0] sm:$0xff]
  %v2789 = vld [vmem:[#allocation2 + $0x1a8] sm:$0xff]
  %v2790 = vld [vmem:[#allocation2 + $0x1b0] sm:$0xff]
  %v2791 = vld [vmem:[#allocation2 + $0x1b8] sm:$0xff]
  %v2792 = vld [vmem:[#allocation2 + $0x1c0] sm:$0xff]
  %v2793 = vld [vmem:[#allocation2 + $0x1c8] sm:$0xff]
  %v2794 = vld [vmem:[#allocation2 + $0x1d0] sm:$0xff]
  %v2795 = vld [vmem:[#allocation2 + $0x1d8] sm:$0xff]
  %v2796 = vld [vmem:[#allocation2 + $0x1e0] sm:$0xff]
  %v2797 = vld [vmem:[#allocation2 + $0x1e8] sm:$0xff]
  %v2798 = vld [vmem:[#allocation2 + $0x1f0] sm:$0xff]
  %v2799 = vld [vmem:[#allocation2 + $0x1f8] sm:$0xff]
  %v2800 = vld [vmem:[#allocation2 + $0x200] sm:$0xff]
  %v2801 = vld [vmem:[#allocation2 + $0x208] sm:$0xff]
  %v2802 = vld [vmem:[#allocation2 + $0x210] sm:$0xff]
  %v2803 = vld [vmem:[#allocation2 + $0x218] sm:$0xff]
  %v2804 = vld [vmem:[#allocation2 + $0x220] sm:$0xff]
  %v2805 = vld [vmem:[#allocation2 + $0x228] sm:$0xff]
  %v2806 = vld [vmem:[#allocation2 + $0x230] sm:$0xff]
  %v2807 = vld [vmem:[#allocation2 + $0x238] sm:$0xff]
  %v2808 = vld [vmem:[#allocation2 + $0x240] sm:$0xff]
  %v2809 = vld [vmem:[#allocation2 + $0x248] sm:$0xff]
  %v2810 = vld [vmem:[#allocation2 + $0x250] sm:$0xff]
  %v2811 = vld [vmem:[#allocation2 + $0x258] sm:$0xff]
  %v2812 = vld [vmem:[#allocation2 + $0x260] sm:$0xff]
  %v2813 = vld [vmem:[#allocation2 + $0x268] sm:$0xff]
  %v2814 = vld [vmem:[#allocation2 + $0x270] sm:$0xff]
  %v2815 = vld [vmem:[#allocation2 + $0x278] sm:$0xff]
  %v2816 = vld [vmem:[#allocation2 + $0x280] sm:$0xff]
  %v2817 = vld [vmem:[#allocation2 + $0x288] sm:$0xff]
  %v2818 = vld [vmem:[#allocation2 + $0x290] sm:$0xff]
  %v2819 = vld [vmem:[#allocation2 + $0x298] sm:$0xff]
  %v2820 = vld [vmem:[#allocation2 + $0x2a0] sm:$0xff]
  %v2821 = vld [vmem:[#allocation2 + $0x2a8] sm:$0xff]
  %v2822 = vld [vmem:[#allocation2 + $0x2b0] sm:$0xff]
  %v2823 = vld [vmem:[#allocation2 + $0x2b8] sm:$0xff]
  %v2824 = vld [vmem:[#allocation2 + $0x2c0] sm:$0xff]
  %v2825 = vld [vmem:[#allocation2 + $0x2c8] sm:$0xff]
  %v2826 = vld [vmem:[#allocation2 + $0x2d0] sm:$0xff]
  %v2827 = vld [vmem:[#allocation2 + $0x2d8] sm:$0xff]
  %v2828 = vld [vmem:[#allocation2 + $0x2e0] sm:$0xff]
  %v2829 = vld [vmem:[#allocation2 + $0x2e8] sm:$0xff]
  %v2830 = vld [vmem:[#allocation2 + $0x2f0] sm:$0xff]
  %v2831 = vld [vmem:[#allocation2 + $0x2f8] sm:$0xff]
  %v2832 = vld [vmem:[#allocation2 + $0x300] sm:$0xff]
  %v2833 = vld [vmem:[#allocation2 + $0x308] sm:$0xff]
  %v2834 = vld [vmem:[#allocation2 + $0x310] sm:$0xff]
  %v2835 = vld [vmem:[#allocation2 + $0x318] sm:$0xff]
  %v2836 = vld [vmem:[#allocation2 + $0x320] sm:$0xff]
  %v2837 = vld [vmem:[#allocation2 + $0x328] sm:$0xff]
  %v2838 = vld [vmem:[#allocation2 + $0x330] sm:$0xff]
  %v2839 = vld [vmem:[#allocation2 + $0x338] sm:$0xff]
  %v2840 = vld [vmem:[#allocation2 + $0x340] sm:$0xff]
  %v2841 = vld [vmem:[#allocation2 + $0x348] sm:$0xff]
  %v2842 = vld [vmem:[#allocation2 + $0x350] sm:$0xff]
  %v2843 = vld [vmem:[#allocation2 + $0x358] sm:$0xff]
  %v2844 = vld [vmem:[#allocation2 + $0x360] sm:$0xff]
  %v2845 = vld [vmem:[#allocation2 + $0x368] sm:$0xff]
  %v2846 = vld [vmem:[#allocation2 + $0x370] sm:$0xff]
  %v2847 = vld [vmem:[#allocation2 + $0x378] sm:$0xff]
  %v2848 = vld [vmem:[#allocation2 + $0x380] sm:$0xff]
  %v2849 = vld [vmem:[#allocation2 + $0x388] sm:$0xff]
  %v2850 = vld [vmem:[#allocation2 + $0x390] sm:$0xff]
  %v2851 = vld [vmem:[#allocation2 + $0x398] sm:$0xff]
  %v2852 = vld [vmem:[#allocation2 + $0x3a0] sm:$0xff]
  %v2853 = vld [vmem:[#allocation2 + $0x3a8] sm:$0xff]
  %v2854 = vld [vmem:[#allocation2 + $0x3b0] sm:$0xff]
  %v2855 = vld [vmem:[#allocation2 + $0x3b8] sm:$0xff]
  %v2856 = vld [vmem:[#allocation2 + $0x3c0] sm:$0xff]
  %v2857 = vld [vmem:[#allocation2 + $0x3c8] sm:$0xff]
  %v2858 = vld [vmem:[#allocation2 + $0x3d0] sm:$0xff]
  %v2859 = vld [vmem:[#allocation2 + $0x3d8] sm:$0xff]
  %v2860 = vld [vmem:[#allocation2 + $0x3e0] sm:$0xff]
  %v2861 = vld [vmem:[#allocation2 + $0x3e8] sm:$0xff]
  %v2862 = vld [vmem:[#allocation2 + $0x3f0] sm:$0xff]
  %v2863 = vld [vmem:[#allocation2 + $0x3f8] sm:$0xff]
  %v2864 = vld [vmem:[#allocation2 + $0x400] sm:$0xff]
  %v2865 = vld [vmem:[#allocation2 + $0x408] sm:$0xff]
  %v2866 = vld [vmem:[#allocation2 + $0x410] sm:$0xff]
  %v2867 = vld [vmem:[#allocation2 + $0x418] sm:$0xff]
  %v2868 = vld [vmem:[#allocation2 + $0x420] sm:$0xff]
  %v2869 = vld [vmem:[#allocation2 + $0x428] sm:$0xff]
  %v2870 = vld [vmem:[#allocation2 + $0x430] sm:$0xff]
  %v2871 = vld [vmem:[#allocation2 + $0x438] sm:$0xff]
  %v2872 = vld [vmem:[#allocation2 + $0x440] sm:$0xff]
  %v2873 = vld [vmem:[#allocation2 + $0x448] sm:$0xff]
  %v2874 = vld [vmem:[#allocation2 + $0x450] sm:$0xff]
  %v2875 = vld [vmem:[#allocation2 + $0x458] sm:$0xff]
  %v2876 = vld [vmem:[#allocation2 + $0x460] sm:$0xff]
  %v2877 = vld [vmem:[#allocation2 + $0x468] sm:$0xff]
  %v2878 = vld [vmem:[#allocation2 + $0x470] sm:$0xff]
  %v2879 = vld [vmem:[#allocation2 + $0x478] sm:$0xff]
  %v2880 = vld [vmem:[#allocation2 + $0x480] sm:$0xff]
  %v2881 = vld [vmem:[#allocation2 + $0x488] sm:$0xff]
  %v2882 = vld [vmem:[#allocation2 + $0x490] sm:$0xff]
  %v2883 = vld [vmem:[#allocation2 + $0x498] sm:$0xff]
  %v2884 = vld [vmem:[#allocation2 + $0x4a0] sm:$0xff]
  %v2885 = vld [vmem:[#allocation2 + $0x4a8] sm:$0xff]
  %v2886 = vld [vmem:[#allocation2 + $0x4b0] sm:$0xff]
  %v2887 = vld [vmem:[#allocation2 + $0x4b8] sm:$0xff]
  %v2888 = vld [vmem:[#allocation2 + $0x4c0] sm:$0xff]
  %v2889 = vld [vmem:[#allocation2 + $0x4c8] sm:$0xff]
  %v2890 = vld [vmem:[#allocation2 + $0x4d0] sm:$0xff]
  %v2891 = vld [vmem:[#allocation2 + $0x4d8] sm:$0xff]
  %v2892 = vld [vmem:[%s3] sm:$0xff]
  %v2893 = vld [vmem:[%s3 + $0x8] sm:$0xff]
  %v2894 = vld [vmem:[%s3 + $0x10] sm:$0xf]
  %v2895 = vld [vmem:[%s3 + $0x14] sm:$0xff]
  %v2896 = vld [vmem:[%s3 + $0x1c] sm:$0xff]
  %v2897 = vld [vmem:[%s3 + $0x24] sm:$0xf]
  %v2898 = vld [vmem:[%s3 + $0x28] sm:$0xff]
  %v2899 = vld [vmem:[%s3 + $0x30] sm:$0xff]
  %v2900 = vld [vmem:[%s3 + $0x38] sm:$0xf]
  %v2901 = vld [vmem:[%s3 + $0x3c] sm:$0xff]
  %v2902 = vld [vmem:[%s3 + $0x44] sm:$0xff]
  %v2903 = vld [vmem:[%s3 + $0x4c] sm:$0xf]
  %v2904 = vld [vmem:[%s3 + $0x50] sm:$0xff]
  %v2905 = vld [vmem:[%s3 + $0x58] sm:$0xff]
  %v2906 = vld [vmem:[%s3 + $0x60] sm:$0xf]
  %v2907 = vld [vmem:[%s3 + $0x64] sm:$0xff]
  %v2908 = vld [vmem:[%s3 + $0x6c] sm:$0xff]
  %v2909 = vld [vmem:[%s3 + $0x74] sm:$0xf]
  %v2910 = vld [vmem:[%s3 + $0x78] sm:$0xff]
  %v2911 = vld [vmem:[%s3 + $0x80] sm:$0xff]
  %v2912 = vld [vmem:[%s3 + $0x88] sm:$0xf]
  %v2913 = vld [vmem:[%s3 + $0x8c] sm:$0xff]
  %v2914 = vld [vmem:[%s3 + $0x94] sm:$0xff]
  %v2915 = vld [vmem:[%s3 + $0x9c] sm:$0xf]
  %v2916 = vld [vmem:[%s3 + $0xa0] sm:$0xff]
  %v2917 = vld [vmem:[%s3 + $0xa8] sm:$0xff]
  %v2918 = vld [vmem:[%s3 + $0xb0] sm:$0xf]
  %v2919 = vld [vmem:[%s3 + $0xb4] sm:$0xff]
  %v2920 = vld [vmem:[%s3 + $0xbc] sm:$0xff]
  %v2921 = vld [vmem:[%s3 + $0xc4] sm:$0xf]
  %v2922 = vld [vmem:[%s3 + $0xc8] sm:$0xff]
  %v2923 = vld [vmem:[%s3 + $0xd0] sm:$0xff]
  %v2924 = vld [vmem:[%s3 + $0xd8] sm:$0xf]
  %v2925 = vld [vmem:[%s3 + $0xdc] sm:$0xff]
  %v2926 = vld [vmem:[%s3 + $0xe4] sm:$0xff]
  %v2927 = vld [vmem:[%s3 + $0xec] sm:$0xf]
  %v2928 = vld [vmem:[%s3 + $0xf0] sm:$0xff]
  %v2929 = vld [vmem:[%s3 + $0xf8] sm:$0xff]
  %v2930 = vld [vmem:[%s3 + $0x100] sm:$0xf]
  %v2931 = vld [vmem:[%s3 + $0x104] sm:$0xff]
  %v2932 = vld [vmem:[%s3 + $0x10c] sm:$0xff]
  %v2933 = vld [vmem:[%s3 + $0x114] sm:$0xf]
  %v2934 = vld [vmem:[%s3 + $0x118] sm:$0xff]
  %v2935 = vld [vmem:[%s3 + $0x120] sm:$0xff]
  %v2936 = vld [vmem:[%s3 + $0x128] sm:$0xf]
  %v2937 = vld [vmem:[%s3 + $0x12c] sm:$0xff]
  %v2938 = vld [vmem:[%s3 + $0x134] sm:$0xff]
  %v2939 = vld [vmem:[%s3 + $0x13c] sm:$0xf]
  %v2940 = vld [vmem:[%s3 + $0x140] sm:$0xff]
  %v2941 = vld [vmem:[%s3 + $0x148] sm:$0xff]
  %v2942 = vld [vmem:[%s3 + $0x150] sm:$0xf]
  %v2943 = vld [vmem:[%s3 + $0x154] sm:$0xff]
  %v2944 = vld [vmem:[%s3 + $0x15c] sm:$0xff]
  %v2945 = vld [vmem:[%s3 + $0x164] sm:$0xf]
  %v2946 = vld [vmem:[%s3 + $0x168] sm:$0xff]
  %v2947 = vld [vmem:[%s3 + $0x170] sm:$0xff]
  %v2948 = vld [vmem:[%s3 + $0x178] sm:$0xf]
  %v2949 = vld [vmem:[%s3 + $0x17c] sm:$0xff]
  %v2950 = vld [vmem:[%s3 + $0x184] sm:$0xff]
  %v2951 = vld [vmem:[%s3 + $0x18c] sm:$0xf]
  %v2952 = vld [vmem:[%s3 + $0x190] sm:$0xff]
  %v2953 = vld [vmem:[%s3 + $0x198] sm:$0xff]
  %v2954 = vld [vmem:[%s3 + $0x1a0] sm:$0xf]
  %v2955 = vld [vmem:[%s3 + $0x1a4] sm:$0xff]
  %v2956 = vld [vmem:[%s3 + $0x1ac] sm:$0xff]
  %v2957 = vld [vmem:[%s3 + $0x1b4] sm:$0xf]
  %v2958 = vld [vmem:[%s3 + $0x1b8] sm:$0xff]
  %v2959 = vld [vmem:[%s3 + $0x1c0] sm:$0xff]
  %v2960 = vld [vmem:[%s3 + $0x1c8] sm:$0xf]
  %v2961 = vld [vmem:[%s3 + $0x1cc] sm:$0xff]
  %v2962 = vld [vmem:[%s3 + $0x1d4] sm:$0xff]
  %v2963 = vld [vmem:[%s3 + $0x1dc] sm:$0xf]
  %v2964 = vld [vmem:[%s3 + $0x1e0] sm:$0xff]
  %v2965 = vld [vmem:[%s3 + $0x1e8] sm:$0xff]
  %v2966 = vld [vmem:[%s3 + $0x1f0] sm:$0xf]
  %v2967 = vld [vmem:[%s3 + $0x1f4] sm:$0xff]
  %v2968 = vld [vmem:[%s3 + $0x1fc] sm:$0xff]
  %v2969 = vld [vmem:[%s3 + $0x204] sm:$0xf]
  %v2970 = vld [vmem:[%s3 + $0x208] sm:$0xff]
  %v2971 = vld [vmem:[%s3 + $0x210] sm:$0xff]
  %v2972 = vld [vmem:[%s3 + $0x218] sm:$0xf]
  %v2973 = vld [vmem:[%s3 + $0x21c] sm:$0xff]
  %v2974 = vld [vmem:[%s3 + $0x224] sm:$0xff]
  %v2975 = vld [vmem:[%s3 + $0x22c] sm:$0xf]
  %v2976 = vld [vmem:[%s3 + $0x230] sm:$0xff]
  %v2977 = vld [vmem:[%s3 + $0x238] sm:$0xff]
  %v2978 = vld [vmem:[%s3 + $0x240] sm:$0xf]
  %v2979 = vld [vmem:[%s3 + $0x244] sm:$0xff]
  %v2980 = vld [vmem:[%s3 + $0x24c] sm:$0xff]
  %v2981 = vld [vmem:[%s3 + $0x254] sm:$0xf]
  %v2982 = vld [vmem:[%s3 + $0x258] sm:$0xff]
  %v2983 = vld [vmem:[%s3 + $0x260] sm:$0xff]
  %v2984 = vld [vmem:[%s3 + $0x268] sm:$0xf]
  %v2985 = vld [vmem:[%s3 + $0x26c] sm:$0xff]
  %v2986 = vld [vmem:[%s3 + $0x274] sm:$0xff]
  %v2987 = vld [vmem:[%s3 + $0x27c] sm:$0xf]
  %v2988 = vld [vmem:[%s3 + $0x280] sm:$0xff]
  %v2989 = vld [vmem:[%s3 + $0x288] sm:$0xff]
  %v2990 = vld [vmem:[%s3 + $0x290] sm:$0xf]
  %v2991 = vld [vmem:[%s3 + $0x294] sm:$0xff]
  %v2992 = vld [vmem:[%s3 + $0x29c] sm:$0xff]
  %v2993 = vld [vmem:[%s3 + $0x2a4] sm:$0xf]
  %v2994 = vld [vmem:[%s3 + $0x2a8] sm:$0xff]
  %v2995 = vld [vmem:[%s3 + $0x2b0] sm:$0xff]
  %v2996 = vld [vmem:[%s3 + $0x2b8] sm:$0xf]
  %v2997 = vld [vmem:[%s3 + $0x2bc] sm:$0xff]
  %v2998 = vld [vmem:[%s3 + $0x2c4] sm:$0xff]
  %v2999 = vld [vmem:[%s3 + $0x2cc] sm:$0xf]
  %v3000 = vld [vmem:[%s3 + $0x2d0] sm:$0xff]
  %v3001 = vld [vmem:[%s3 + $0x2d8] sm:$0xff]
  %v3002 = vld [vmem:[%s3 + $0x2e0] sm:$0xf]
  %v3003 = vld [vmem:[%s3 + $0x2e4] sm:$0xff]
  %v3004 = vld [vmem:[%s3 + $0x2ec] sm:$0xff]
  %v3005 = vld [vmem:[%s3 + $0x2f4] sm:$0xf]
  %v3006 = vld [vmem:[%s3 + $0x2f8] sm:$0xff]
  %v3007 = vld [vmem:[%s3 + $0x300] sm:$0xff]
  %v3008 = vld [vmem:[%s3 + $0x308] sm:$0xf]
  %v3009 = vld [vmem:[%s3 + $0x30c] sm:$0xff]
  %v3010 = vld [vmem:[%s3 + $0x314] sm:$0xff]
  %v3011 = vld [vmem:[%s3 + $0x31c] sm:$0xf]
  %v3012 = vld [vmem:[%s3 + $0x320] sm:$0xff]
  %v3013 = vld [vmem:[%s3 + $0x328] sm:$0xff]
  %v3014 = vld [vmem:[%s3 + $0x330] sm:$0xf]
  %v3015 = vld [vmem:[%s3 + $0x334] sm:$0xff]
  %v3016 = vld [vmem:[%s3 + $0x33c] sm:$0xff]
  %v3017 = vld [vmem:[%s3 + $0x344] sm:$0xf]
  %v3018 = vld [vmem:[%s3 + $0x348] sm:$0xff]
  %v3019 = vld [vmem:[%s3 + $0x350] sm:$0xff]
  %v3020 = vld [vmem:[%s3 + $0x358] sm:$0xf]
  %v3021 = vld [vmem:[%s3 + $0x35c] sm:$0xff]
  %v3022 = vld [vmem:[%s3 + $0x364] sm:$0xff]
  %v3023 = vld [vmem:[%s3 + $0x36c] sm:$0xf]
  %v3024 = vld [vmem:[%s3 + $0x370] sm:$0xff]
  %v3025 = vld [vmem:[%s3 + $0x378] sm:$0xff]
  %v3026 = vld [vmem:[%s3 + $0x380] sm:$0xf]
  %v3027 = vld [vmem:[%s3 + $0x384] sm:$0xff]
  %v3028 = vld [vmem:[%s3 + $0x38c] sm:$0xff]
  %v3029 = vld [vmem:[%s3 + $0x394] sm:$0xf]
  %v3030 = vld [vmem:[%s3 + $0x398] sm:$0xff]
  %v3031 = vld [vmem:[%s3 + $0x3a0] sm:$0xff]
  %v3032 = vld [vmem:[%s3 + $0x3a8] sm:$0xf]
  %v3033 = vld [vmem:[%s3 + $0x3ac] sm:$0xff]
  %v3034 = vld [vmem:[%s3 + $0x3b4] sm:$0xff]
  %v3035 = vld [vmem:[%s3 + $0x3bc] sm:$0xf]
  %v3036 = vld [vmem:[%s3 + $0x3c0] sm:$0xff]
  %v3037 = vld [vmem:[%s3 + $0x3c8] sm:$0xff]
  %v3038 = vld [vmem:[%s3 + $0x3d0] sm:$0xf]
  %v3039 = vld [vmem:[%s3 + $0x3d4] sm:$0xff]
  %v3040 = vld [vmem:[%s3 + $0x3dc] sm:$0xff]
  %v3041 = vld [vmem:[%s3 + $0x3e4] sm:$0xf]
  %v3042 = vld [vmem:[%s3 + $0x3e8] sm:$0xff]
  %v3043 = vld [vmem:[%s3 + $0x3f0] sm:$0xff]
  %v3044 = vld [vmem:[%s3 + $0x3f8] sm:$0xf]
  %v3045 = vld [vmem:[%s3 + $0x3fc] sm:$0xff]
  %v3046 = vld [vmem:[%s3 + $0x404] sm:$0xff]
  %v3047 = vld [vmem:[%s3 + $0x40c] sm:$0xf]
  %v3048 = vld [vmem:[%s3 + $0x410] sm:$0xff]
  %v3049 = vld [vmem:[%s3 + $0x418] sm:$0xff]
  %v3050 = vld [vmem:[%s3 + $0x420] sm:$0xf]
  %v3051 = vld [vmem:[%s3 + $0x424] sm:$0xff]
  %v3052 = vld [vmem:[%s3 + $0x42c] sm:$0xff]
  %v3053 = vld [vmem:[%s3 + $0x434] sm:$0xf]
  %v3054 = vld [vmem:[%s3 + $0x438] sm:$0xff]
  %v3055 = vld [vmem:[%s3 + $0x440] sm:$0xff]
  %v3056 = vld [vmem:[%s3 + $0x448] sm:$0xf]
  %v3057 = vld [vmem:[%s3 + $0x44c] sm:$0xff]
  %v3058 = vld [vmem:[%s3 + $0x454] sm:$0xff]
  %v3059 = vld [vmem:[%s3 + $0x45c] sm:$0xf]
  %v3060 = vld [vmem:[%s3 + $0x460] sm:$0xff]
  %v3061 = vld [vmem:[%s3 + $0x468] sm:$0xff]
  %v3062 = vld [vmem:[%s3 + $0x470] sm:$0xf]
  %v3063 = vld [vmem:[%s3 + $0x474] sm:$0xff]
  %v3064 = vld [vmem:[%s3 + $0x47c] sm:$0xff]
  %v3065 = vld [vmem:[%s3 + $0x484] sm:$0xf]
  %v3066 = vld [vmem:[%s3 + $0x488] sm:$0xff]
  %v3067 = vld [vmem:[%s3 + $0x490] sm:$0xff]
  %v3068 = vld [vmem:[%s3 + $0x498] sm:$0xf]
  %v3069 = vld [vmem:[%s3 + $0x49c] sm:$0xff]
  %v3070 = vld [vmem:[%s3 + $0x4a4] sm:$0xff]
  %v3071 = vld [vmem:[%s3 + $0x4ac] sm:$0xf]
  %v3072 = vld [vmem:[%s3 + $0x4b0] sm:$0xff]
  %v3073 = vld [vmem:[%s3 + $0x4b8] sm:$0xff]
  %v3074 = vld [vmem:[%s3 + $0x4c0] sm:$0xf]
  %v3075 = vld [vmem:[%s3 + $0x4c4] sm:$0xff]
  %v3076 = vld [vmem:[%s3 + $0x4cc] sm:$0xff]
  %v3077 = vld [vmem:[%s3 + $0x4d4] sm:$0xf]
  %v3078 = vld [vmem:[%s3 + $0x4d8] sm:$0xff]
  %v3079 = vld [vmem:[%s3 + $0x4e0] sm:$0xff]
  %v3080 = vld [vmem:[%s3 + $0x4e8] sm:$0xf]
  %v3081 = vld [vmem:[%s3 + $0x4ec] sm:$0xff]
  %v3082 = vld [vmem:[%s3 + $0x4f4] sm:$0xff]
  %v3083 = vld [vmem:[%s3 + $0x4fc] sm:$0xf]
  %v3084 = vld [vmem:[%s3 + $0x500] sm:$0xff]
  %v3085 = vld [vmem:[%s3 + $0x508] sm:$0xff]
  %v3086 = vld [vmem:[%s3 + $0x510] sm:$0xf]
  %v3087 = vld [vmem:[%s3 + $0x514] sm:$0xff]
  %v3088 = vld [vmem:[%s3 + $0x51c] sm:$0xff]
  %v3089 = vld [vmem:[%s3 + $0x524] sm:$0xf]
  %v3090 = vld [vmem:[%s3 + $0x528] sm:$0xff]
  %v3091 = vld [vmem:[%s3 + $0x530] sm:$0xff]
  %v3092 = vld [vmem:[%s3 + $0x538] sm:$0xf]
  %v3093 = vld [vmem:[%s3 + $0x53c] sm:$0xff]
  %v3094 = vld [vmem:[%s3 + $0x544] sm:$0xff]
  %v3095 = vld [vmem:[%s3 + $0x54c] sm:$0xf]
  %v3096 = vld [vmem:[%s3 + $0x550] sm:$0xff]
  %v3097 = vld [vmem:[%s3 + $0x558] sm:$0xff]
  %v3098 = vld [vmem:[%s3 + $0x560] sm:$0xf]
  %v3099 = vld [vmem:[%s3 + $0x564] sm:$0xff]
  %v3100 = vld [vmem:[%s3 + $0x56c] sm:$0xff]
  %v3101 = vld [vmem:[%s3 + $0x574] sm:$0xf]
  %v3102 = vld [vmem:[%s3 + $0x578] sm:$0xff]
  %v3103 = vld [vmem:[%s3 + $0x580] sm:$0xff]
  %v3104 = vld [vmem:[%s3 + $0x588] sm:$0xf]
  %v3105 = vld [vmem:[%s3 + $0x58c] sm:$0xff]
  %v3106 = vld [vmem:[%s3 + $0x594] sm:$0xff]
  %v3107 = vld [vmem:[%s3 + $0x59c] sm:$0xf]
  %v3108 = vld [vmem:[%s3 + $0x5a0] sm:$0xff]
  %v3109 = vld [vmem:[%s3 + $0x5a8] sm:$0xff]
  %v3110 = vld [vmem:[%s3 + $0x5b0] sm:$0xf]
  %v3111 = vld [vmem:[%s3 + $0x5b4] sm:$0xff]
  %v3112 = vld [vmem:[%s3 + $0x5bc] sm:$0xff]
  %v3113 = vld [vmem:[%s3 + $0x5c4] sm:$0xf]
  %v3114 = vld [vmem:[%s3 + $0x5c8] sm:$0xff]
  %v3115 = vld [vmem:[%s3 + $0x5d0] sm:$0xff]
  %v3116 = vld [vmem:[%s3 + $0x5d8] sm:$0xf]
  %v3117 = vld [vmem:[%s3 + $0x5dc] sm:$0xff]
  %v3118 = vld [vmem:[%s3 + $0x5e4] sm:$0xff]
  %v3119 = vld [vmem:[%s3 + $0x5ec] sm:$0xf]
  %v3120 = vld [vmem:[%s3 + $0x5f0] sm:$0xff]
  %v3121 = vld [vmem:[%s3 + $0x5f8] sm:$0xff]
  %v3122 = vld [vmem:[%s3 + $0x600] sm:$0xf]
  %v3123 = vld [vmem:[%s3 + $0x604] sm:$0xff]
  %v3124 = vld [vmem:[%s3 + $0x60c] sm:$0xff]
  %v3125 = vld [vmem:[%s3 + $0x614] sm:$0xf]
  %v3126 = vld [vmem:[%s3 + $0x618] sm:$0xff]
  %v3127 = vld [vmem:[%s3 + $0x620] sm:$0xff]
  %v3128 = vld [vmem:[%s3 + $0x628] sm:$0xf]
  %v3129 = vld [vmem:[%s3 + $0x62c] sm:$0xff]
  %v3130 = vld [vmem:[%s3 + $0x634] sm:$0xff]
  %v3131 = vld [vmem:[%s3 + $0x63c] sm:$0xf]
  %v3132 = vld [vmem:[%s3 + $0x640] sm:$0xff]
  %v3133 = vld [vmem:[%s3 + $0x648] sm:$0xff]
  %v3134 = vld [vmem:[%s3 + $0x650] sm:$0xf]
  %v3135 = vld [vmem:[%s3 + $0x654] sm:$0xff]
  %v3136 = vld [vmem:[%s3 + $0x65c] sm:$0xff]
  %v3137 = vld [vmem:[%s3 + $0x664] sm:$0xf]
  %v3138 = vld [vmem:[%s3 + $0x668] sm:$0xff]
  %v3139 = vld [vmem:[%s3 + $0x670] sm:$0xff]
  %v3140 = vld [vmem:[%s3 + $0x678] sm:$0xf]
  %v3141 = vld [vmem:[%s3 + $0x67c] sm:$0xff]
  %v3142 = vld [vmem:[%s3 + $0x684] sm:$0xff]
  %v3143 = vld [vmem:[%s3 + $0x68c] sm:$0xf]
  %v3144 = vld [vmem:[%s3 + $0x690] sm:$0xff]
  %v3145 = vld [vmem:[%s3 + $0x698] sm:$0xff]
  %v3146 = vld [vmem:[%s3 + $0x6a0] sm:$0xf]
  %v3147 = vld [vmem:[%s3 + $0x6a4] sm:$0xff]
  %v3148 = vld [vmem:[%s3 + $0x6ac] sm:$0xff]
  %v3149 = vld [vmem:[%s3 + $0x6b4] sm:$0xf]
  %v3150 = vld [vmem:[%s3 + $0x6b8] sm:$0xff]
  %v3151 = vld [vmem:[%s3 + $0x6c0] sm:$0xff]
  %v3152 = vld [vmem:[%s3 + $0x6c8] sm:$0xf]
  %v3153 = vld [vmem:[%s3 + $0x6cc] sm:$0xff]
  %v3154 = vld [vmem:[%s3 + $0x6d4] sm:$0xff]
  %v3155 = vld [vmem:[%s3 + $0x6dc] sm:$0xf]
  %v3156 = vld [vmem:[%s3 + $0x6e0] sm:$0xff]
  %v3157 = vld [vmem:[%s3 + $0x6e8] sm:$0xff]
  %v3158 = vld [vmem:[%s3 + $0x6f0] sm:$0xf]
  %v3159 = vld [vmem:[%s3 + $0x6f4] sm:$0xff]
  %v3160 = vld [vmem:[%s3 + $0x6fc] sm:$0xff]
  %v3161 = vld [vmem:[%s3 + $0x704] sm:$0xf]
  %v3162 = vld [vmem:[%s3 + $0x708] sm:$0xff]
  %v3163 = vld [vmem:[%s3 + $0x710] sm:$0xff]
  %v3164 = vld [vmem:[%s3 + $0x718] sm:$0xf]
  %v3165 = vld [vmem:[%s3 + $0x71c] sm:$0xff]
  %v3166 = vld [vmem:[%s3 + $0x724] sm:$0xff]
  %v3167 = vld [vmem:[%s3 + $0x72c] sm:$0xf]
  %v3168 = vld [vmem:[%s3 + $0x730] sm:$0xff]
  %v3169 = vld [vmem:[%s3 + $0x738] sm:$0xff]
  %v3170 = vld [vmem:[%s3 + $0x740] sm:$0xf]
  %v3171 = vld [vmem:[%s3 + $0x744] sm:$0xff]
  %v3172 = vld [vmem:[%s3 + $0x74c] sm:$0xff]
  %v3173 = vld [vmem:[%s3 + $0x754] sm:$0xf]
  %v3174 = vld [vmem:[%s3 + $0x758] sm:$0xff]
  %v3175 = vld [vmem:[%s3 + $0x760] sm:$0xff]
  %v3176 = vld [vmem:[%s3 + $0x768] sm:$0xf]
  %v3177 = vld [vmem:[%s3 + $0x76c] sm:$0xff]
  %v3178 = vld [vmem:[%s3 + $0x774] sm:$0xff]
  %v3179 = vld [vmem:[%s3 + $0x77c] sm:$0xf]
  %v3336 = vunpack.c.l.b16 %v2736
  %v3337 = vunpack.c.h.b16 %v2736
  %v3338 = vunpack.c.l.b16 %v2737
  %v3339 = vunpack.c.h.b16 %v2737
  %v3340 = vunpack.c.l.b16 %v2738
  %v3341 = vunpack.c.h.b16 %v2738
  %v3342 = vunpack.c.l.b16 %v2739
  %v3343 = vunpack.c.h.b16 %v2739
  %v3344 = vunpack.c.l.b16 %v2740
  %v3345 = vunpack.c.h.b16 %v2740
  %v3346 = vunpack.c.l.b16 %v2741
  %v3347 = vunpack.c.h.b16 %v2741
  %v3348 = vunpack.c.l.b16 %v2742
  %v3349 = vunpack.c.h.b16 %v2742
  %v3350 = vunpack.c.l.b16 %v2743
  %v3351 = vunpack.c.h.b16 %v2743
  %v3352 = vunpack.c.l.b16 %v2744
  %v3353 = vunpack.c.h.b16 %v2744
  %v3354 = vunpack.c.l.b16 %v2745
  %v3355 = vunpack.c.h.b16 %v2745
  %v3356 = vunpack.c.l.b16 %v2746
  %v3357 = vunpack.c.h.b16 %v2746
  %v3358 = vunpack.c.l.b16 %v2747
  %v3359 = vunpack.c.h.b16 %v2747
  %v3360 = vunpack.c.l.b16 %v2748
  %v3361 = vunpack.c.h.b16 %v2748
  %v3362 = vunpack.c.l.b16 %v2749
  %v3363 = vunpack.c.h.b16 %v2749
  %v3364 = vunpack.c.l.b16 %v2750
  %v3365 = vunpack.c.h.b16 %v2750
  %v3366 = vunpack.c.l.b16 %v2751
  %v3367 = vunpack.c.h.b16 %v2751
  %v3368 = vunpack.c.l.b16 %v2752
  %v3369 = vunpack.c.h.b16 %v2752
  %v3370 = vunpack.c.l.b16 %v2753
  %v3371 = vunpack.c.h.b16 %v2753
  %v3372 = vunpack.c.l.b16 %v2754
  %v3373 = vunpack.c.h.b16 %v2754
  %v3374 = vunpack.c.l.b16 %v2755
  %v3375 = vunpack.c.h.b16 %v2755
  %v3376 = vunpack.c.l.b16 %v2756
  %v3377 = vunpack.c.h.b16 %v2756
  %v3378 = vunpack.c.l.b16 %v2757
  %v3379 = vunpack.c.h.b16 %v2757
  %v3380 = vunpack.c.l.b16 %v2758
  %v3381 = vunpack.c.h.b16 %v2758
  %v3382 = vunpack.c.l.b16 %v2759
  %v3383 = vunpack.c.h.b16 %v2759
  %v3384 = vunpack.c.l.b16 %v2760
  %v3385 = vunpack.c.h.b16 %v2760
  %v3386 = vunpack.c.l.b16 %v2761
  %v3387 = vunpack.c.h.b16 %v2761
  %v3388 = vunpack.c.l.b16 %v2762
  %v3389 = vunpack.c.h.b16 %v2762
  %v3390 = vunpack.c.l.b16 %v2763
  %v3391 = vunpack.c.h.b16 %v2763
  %v3392 = vunpack.c.l.b16 %v2764
  %v3393 = vunpack.c.h.b16 %v2764
  %v3394 = vunpack.c.l.b16 %v2765
  %v3395 = vunpack.c.h.b16 %v2765
  %v3396 = vunpack.c.l.b16 %v2766
  %v3397 = vunpack.c.h.b16 %v2766
  %v3398 = vunpack.c.l.b16 %v2767
  %v3399 = vunpack.c.h.b16 %v2767
  %v3400 = vunpack.c.l.b16 %v2768
  %v3401 = vunpack.c.h.b16 %v2768
  %v3402 = vunpack.c.l.b16 %v2769
  %v3403 = vunpack.c.h.b16 %v2769
  %v3404 = vunpack.c.l.b16 %v2770
  %v3405 = vunpack.c.h.b16 %v2770
  %v3406 = vunpack.c.l.b16 %v2771
  %v3407 = vunpack.c.h.b16 %v2771
  %v3408 = vunpack.c.l.b16 %v2772
  %v3409 = vunpack.c.h.b16 %v2772
  %v3410 = vunpack.c.l.b16 %v2773
  %v3411 = vunpack.c.h.b16 %v2773
  %v3412 = vunpack.c.l.b16 %v2774
  %v3413 = vunpack.c.h.b16 %v2774
  %v3414 = vunpack.c.l.b16 %v2775
  %v3415 = vunpack.c.h.b16 %v2775
  %v3416 = vunpack.c.l.b16 %v2776
  %v3417 = vunpack.c.h.b16 %v2776
  %v3418 = vunpack.c.l.b16 %v2777
  %v3419 = vunpack.c.h.b16 %v2777
  %v3420 = vunpack.c.l.b16 %v2778
  %v3421 = vunpack.c.h.b16 %v2778
  %v3422 = vunpack.c.l.b16 %v2779
  %v3423 = vunpack.c.h.b16 %v2779
  %v3424 = vunpack.c.l.b16 %v2780
  %v3425 = vunpack.c.h.b16 %v2780
  %v3426 = vunpack.c.l.b16 %v2781
  %v3427 = vunpack.c.h.b16 %v2781
  %v3428 = vunpack.c.l.b16 %v2782
  %v3429 = vunpack.c.h.b16 %v2782
  %v3430 = vunpack.c.l.b16 %v2783
  %v3431 = vunpack.c.h.b16 %v2783
  %v3432 = vunpack.c.l.b16 %v2784
  %v3433 = vunpack.c.h.b16 %v2784
  %v3434 = vunpack.c.l.b16 %v2785
  %v3435 = vunpack.c.h.b16 %v2785
  %v3436 = vunpack.c.l.b16 %v2786
  %v3437 = vunpack.c.h.b16 %v2786
  %v3438 = vunpack.c.l.b16 %v2787
  %v3439 = vunpack.c.h.b16 %v2787
  %v3440 = vunpack.c.l.b16 %v2788
  %v3441 = vunpack.c.h.b16 %v2788
  %v3442 = vunpack.c.l.b16 %v2789
  %v3443 = vunpack.c.h.b16 %v2789
  %v3444 = vunpack.c.l.b16 %v2790
  %v3445 = vunpack.c.h.b16 %v2790
  %v3446 = vunpack.c.l.b16 %v2791
  %v3447 = vunpack.c.h.b16 %v2791
  %v3448 = vunpack.c.l.b16 %v2792
  %v3449 = vunpack.c.h.b16 %v2792
  %v3450 = vunpack.c.l.b16 %v2793
  %v3451 = vunpack.c.h.b16 %v2793
  %v3452 = vunpack.c.l.b16 %v2794
  %v3453 = vunpack.c.h.b16 %v2794
  %v3454 = vunpack.c.l.b16 %v2795
  %v3455 = vunpack.c.h.b16 %v2795
  %v3456 = vunpack.c.l.b16 %v2796
  %v3457 = vunpack.c.h.b16 %v2796
  %v3458 = vunpack.c.l.b16 %v2797
  %v3459 = vunpack.c.h.b16 %v2797
  %v3460 = vunpack.c.l.b16 %v2798
  %v3461 = vunpack.c.h.b16 %v2798
  %v3462 = vunpack.c.l.b16 %v2799
  %v3463 = vunpack.c.h.b16 %v2799
  %v3464 = vunpack.c.l.b16 %v2800
  %v3465 = vunpack.c.h.b16 %v2800
  %v3466 = vunpack.c.l.b16 %v2801
  %v3467 = vunpack.c.h.b16 %v2801
  %v3468 = vunpack.c.l.b16 %v2802
  %v3469 = vunpack.c.h.b16 %v2802
  %v3470 = vunpack.c.l.b16 %v2803
  %v3471 = vunpack.c.h.b16 %v2803
  %v3472 = vunpack.c.l.b16 %v2804
  %v3473 = vunpack.c.h.b16 %v2804
  %v3474 = vunpack.c.l.b16 %v2805
  %v3475 = vunpack.c.h.b16 %v2805
  %v3476 = vunpack.c.l.b16 %v2806
  %v3477 = vunpack.c.h.b16 %v2806
  %v3478 = vunpack.c.l.b16 %v2807
  %v3479 = vunpack.c.h.b16 %v2807
  %v3480 = vunpack.c.l.b16 %v2808
  %v3481 = vunpack.c.h.b16 %v2808
  %v3482 = vunpack.c.l.b16 %v2809
  %v3483 = vunpack.c.h.b16 %v2809
  %v3484 = vunpack.c.l.b16 %v2810
  %v3485 = vunpack.c.h.b16 %v2810
  %v3486 = vunpack.c.l.b16 %v2811
  %v3487 = vunpack.c.h.b16 %v2811
  %v3488 = vunpack.c.l.b16 %v2812
  %v3489 = vunpack.c.h.b16 %v2812
  %v3490 = vunpack.c.l.b16 %v2813
  %v3491 = vunpack.c.h.b16 %v2813
  %v3492 = vunpack.c.l.b16 %v2814
  %v3493 = vunpack.c.h.b16 %v2814
  %v3494 = vunpack.c.l.b16 %v2815
  %v3495 = vunpack.c.h.b16 %v2815
  %v3496 = vunpack.c.l.b16 %v2816
  %v3497 = vunpack.c.h.b16 %v2816
  %v3498 = vunpack.c.l.b16 %v2817
  %v3499 = vunpack.c.h.b16 %v2817
  %v3500 = vunpack.c.l.b16 %v2818
  %v3501 = vunpack.c.h.b16 %v2818
  %v3502 = vunpack.c.l.b16 %v2819
  %v3503 = vunpack.c.h.b16 %v2819
  %v3504 = vunpack.c.l.b16 %v2820
  %v3505 = vunpack.c.h.b16 %v2820
  %v3506 = vunpack.c.l.b16 %v2821
  %v3507 = vunpack.c.h.b16 %v2821
  %v3508 = vunpack.c.l.b16 %v2822
  %v3509 = vunpack.c.h.b16 %v2822
  %v3510 = vunpack.c.l.b16 %v2823
  %v3511 = vunpack.c.h.b16 %v2823
  %v3512 = vunpack.c.l.b16 %v2824
  %v3513 = vunpack.c.h.b16 %v2824
  %v3514 = vunpack.c.l.b16 %v2825
  %v3515 = vunpack.c.h.b16 %v2825
  %v3516 = vunpack.c.l.b16 %v2826
  %v3517 = vunpack.c.h.b16 %v2826
  %v3518 = vunpack.c.l.b16 %v2827
  %v3519 = vunpack.c.h.b16 %v2827
  %v3520 = vunpack.c.l.b16 %v2828
  %v3521 = vunpack.c.h.b16 %v2828
  %v3522 = vunpack.c.l.b16 %v2829
  %v3523 = vunpack.c.h.b16 %v2829
  %v3524 = vunpack.c.l.b16 %v2830
  %v3525 = vunpack.c.h.b16 %v2830
  %v3526 = vunpack.c.l.b16 %v2831
  %v3527 = vunpack.c.h.b16 %v2831
  %v3528 = vunpack.c.l.b16 %v2832
  %v3529 = vunpack.c.h.b16 %v2832
  %v3530 = vunpack.c.l.b16 %v2833
  %v3531 = vunpack.c.h.b16 %v2833
  %v3532 = vunpack.c.l.b16 %v2834
  %v3533 = vunpack.c.h.b16 %v2834
  %v3534 = vunpack.c.l.b16 %v2835
  %v3535 = vunpack.c.h.b16 %v2835
  %v3536 = vunpack.c.l.b16 %v2836
  %v3537 = vunpack.c.h.b16 %v2836
  %v3538 = vunpack.c.l.b16 %v2837
  %v3539 = vunpack.c.h.b16 %v2837
  %v3540 = vunpack.c.l.b16 %v2838
  %v3541 = vunpack.c.h.b16 %v2838
  %v3542 = vunpack.c.l.b16 %v2839
  %v3543 = vunpack.c.h.b16 %v2839
  %v3544 = vunpack.c.l.b16 %v2840
  %v3545 = vunpack.c.h.b16 %v2840
  %v3546 = vunpack.c.l.b16 %v2841
  %v3547 = vunpack.c.h.b16 %v2841
  %v3548 = vunpack.c.l.b16 %v2842
  %v3549 = vunpack.c.h.b16 %v2842
  %v3550 = vunpack.c.l.b16 %v2843
  %v3551 = vunpack.c.h.b16 %v2843
  %v3552 = vunpack.c.l.b16 %v2844
  %v3553 = vunpack.c.h.b16 %v2844
  %v3554 = vunpack.c.l.b16 %v2845
  %v3555 = vunpack.c.h.b16 %v2845
  %v3556 = vunpack.c.l.b16 %v2846
  %v3557 = vunpack.c.h.b16 %v2846
  %v3558 = vunpack.c.l.b16 %v2847
  %v3559 = vunpack.c.h.b16 %v2847
  %v3560 = vunpack.c.l.b16 %v2848
  %v3561 = vunpack.c.h.b16 %v2848
  %v3562 = vunpack.c.l.b16 %v2849
  %v3563 = vunpack.c.h.b16 %v2849
  %v3564 = vunpack.c.l.b16 %v2850
  %v3565 = vunpack.c.h.b16 %v2850
  %v3566 = vunpack.c.l.b16 %v2851
  %v3567 = vunpack.c.h.b16 %v2851
  %v3568 = vunpack.c.l.b16 %v2852
  %v3569 = vunpack.c.h.b16 %v2852
  %v3570 = vunpack.c.l.b16 %v2853
  %v3571 = vunpack.c.h.b16 %v2853
  %v3572 = vunpack.c.l.b16 %v2854
  %v3573 = vunpack.c.h.b16 %v2854
  %v3574 = vunpack.c.l.b16 %v2855
  %v3575 = vunpack.c.h.b16 %v2855
  %v3576 = vunpack.c.l.b16 %v2856
  %v3577 = vunpack.c.h.b16 %v2856
  %v3578 = vunpack.c.l.b16 %v2857
  %v3579 = vunpack.c.h.b16 %v2857
  %v3580 = vunpack.c.l.b16 %v2858
  %v3581 = vunpack.c.h.b16 %v2858
  %v3582 = vunpack.c.l.b16 %v2859
  %v3583 = vunpack.c.h.b16 %v2859
  %v3584 = vunpack.c.l.b16 %v2860
  %v3585 = vunpack.c.h.b16 %v2860
  %v3586 = vunpack.c.l.b16 %v2861
  %v3587 = vunpack.c.h.b16 %v2861
  %v3588 = vunpack.c.l.b16 %v2862
  %v3589 = vunpack.c.h.b16 %v2862
  %v3590 = vunpack.c.l.b16 %v2863
  %v3591 = vunpack.c.h.b16 %v2863
  %v3592 = vunpack.c.l.b16 %v2864
  %v3593 = vunpack.c.h.b16 %v2864
  %v3594 = vunpack.c.l.b16 %v2865
  %v3595 = vunpack.c.h.b16 %v2865
  %v3596 = vunpack.c.l.b16 %v2866
  %v3597 = vunpack.c.h.b16 %v2866
  %v3598 = vunpack.c.l.b16 %v2867
  %v3599 = vunpack.c.h.b16 %v2867
  %v3600 = vunpack.c.l.b16 %v2868
  %v3601 = vunpack.c.h.b16 %v2868
  %v3602 = vunpack.c.l.b16 %v2869
  %v3603 = vunpack.c.h.b16 %v2869
  %v3604 = vunpack.c.l.b16 %v2870
  %v3605 = vunpack.c.h.b16 %v2870
  %v3606 = vunpack.c.l.b16 %v2871
  %v3607 = vunpack.c.h.b16 %v2871
  %v3608 = vunpack.c.l.b16 %v2872
  %v3609 = vunpack.c.h.b16 %v2872
  %v3610 = vunpack.c.l.b16 %v2873
  %v3611 = vunpack.c.h.b16 %v2873
  %v3612 = vunpack.c.l.b16 %v2874
  %v3613 = vunpack.c.h.b16 %v2874
  %v3614 = vunpack.c.l.b16 %v2875
  %v3615 = vunpack.c.h.b16 %v2875
  %v3616 = vunpack.c.l.b16 %v2876
  %v3617 = vunpack.c.h.b16 %v2876
  %v3618 = vunpack.c.l.b16 %v2877
  %v3619 = vunpack.c.h.b16 %v2877
  %v3620 = vunpack.c.l.b16 %v2878
  %v3621 = vunpack.c.h.b16 %v2878
  %v3622 = vunpack.c.l.b16 %v2879
  %v3623 = vunpack.c.h.b16 %v2879
  %v3624 = vunpack.c.l.b16 %v2880
  %v3625 = vunpack.c.h.b16 %v2880
  %v3626 = vunpack.c.l.b16 %v2881
  %v3627 = vunpack.c.h.b16 %v2881
  %v3628 = vunpack.c.l.b16 %v2882
  %v3629 = vunpack.c.h.b16 %v2882
  %v3630 = vunpack.c.l.b16 %v2883
  %v3631 = vunpack.c.h.b16 %v2883
  %v3632 = vunpack.c.l.b16 %v2884
  %v3633 = vunpack.c.h.b16 %v2884
  %v3634 = vunpack.c.l.b16 %v2885
  %v3635 = vunpack.c.h.b16 %v2885
  %v3636 = vunpack.c.l.b16 %v2886
  %v3637 = vunpack.c.h.b16 %v2886
  %v3638 = vunpack.c.l.b16 %v2887
  %v3639 = vunpack.c.h.b16 %v2887
  %v3640 = vunpack.c.l.b16 %v2888
  %v3641 = vunpack.c.h.b16 %v2888
  %v3642 = vunpack.c.l.b16 %v2889
  %v3643 = vunpack.c.h.b16 %v2889
  %v3644 = vunpack.c.l.b16 %v2890
  %v3645 = vunpack.c.h.b16 %v2890
  %v3646 = vunpack.c.l.b16 %v2891
  %v3647 = vunpack.c.h.b16 %v2891
  %v3648 = vpack.c.b16 %v3342, %v3336
  %v3649 = vpack.c.b16 %v3343, %v3337
  %v3650 = vpack.c.b16 %v3344, %v3338
  %v3651 = vpack.c.b16 %v3345, %v3339
  %v3652 = vpack.c.b16 %v3346, %v3340
  %v3653 = vpack.c.b16 %v3347, %v3341
  %v3654 = vpack.c.b16 %v3354, %v3348
  %v3655 = vpack.c.b16 %v3355, %v3349
  %v3656 = vpack.c.b16 %v3356, %v3350
  %v3657 = vpack.c.b16 %v3357, %v3351
  %v3658 = vpack.c.b16 %v3358, %v3352
  %v3659 = vpack.c.b16 %v3359, %v3353
  %v3660 = vpack.c.b16 %v3366, %v3360
  %v3661 = vpack.c.b16 %v3367, %v3361
  %v3662 = vpack.c.b16 %v3368, %v3362
  %v3663 = vpack.c.b16 %v3369, %v3363
  %v3664 = vpack.c.b16 %v3370, %v3364
  %v3665 = vpack.c.b16 %v3371, %v3365
  %v3666 = vpack.c.b16 %v3378, %v3372
  %v3667 = vpack.c.b16 %v3379, %v3373
  %v3668 = vpack.c.b16 %v3380, %v3374
  %v3669 = vpack.c.b16 %v3381, %v3375
  %v3670 = vpack.c.b16 %v3382, %v3376
  %v3671 = vpack.c.b16 %v3383, %v3377
  %v3672 = vpack.c.b16 %v3390, %v3384
  %v3673 = vpack.c.b16 %v3391, %v3385
  %v3674 = vpack.c.b16 %v3392, %v3386
  %v3675 = vpack.c.b16 %v3393, %v3387
  %v3676 = vpack.c.b16 %v3394, %v3388
  %v3677 = vpack.c.b16 %v3395, %v3389
  %v3678 = vpack.c.b16 %v3402, %v3396
  %v3679 = vpack.c.b16 %v3403, %v3397
  %v3680 = vpack.c.b16 %v3404, %v3398
  %v3681 = vpack.c.b16 %v3405, %v3399
  %v3682 = vpack.c.b16 %v3406, %v3400
  %v3683 = vpack.c.b16 %v3407, %v3401
  %v3684 = vpack.c.b16 %v3414, %v3408
  %v3685 = vpack.c.b16 %v3415, %v3409
  %v3686 = vpack.c.b16 %v3416, %v3410
  %v3687 = vpack.c.b16 %v3417, %v3411
  %v3688 = vpack.c.b16 %v3418, %v3412
  %v3689 = vpack.c.b16 %v3419, %v3413
  %v3690 = vpack.c.b16 %v3426, %v3420
  %v3691 = vpack.c.b16 %v3427, %v3421
  %v3692 = vpack.c.b16 %v3428, %v3422
  %v3693 = vpack.c.b16 %v3429, %v3423
  %v3694 = vpack.c.b16 %v3430, %v3424
  %v3695 = vpack.c.b16 %v3431, %v3425
  %v3696 = vpack.c.b16 %v3438, %v3432
  %v3697 = vpack.c.b16 %v3439, %v3433
  %v3698 = vpack.c.b16 %v3440, %v3434
  %v3699 = vpack.c.b16 %v3441, %v3435
  %v3700 = vpack.c.b16 %v3442, %v3436
  %v3701 = vpack.c.b16 %v3443, %v3437
  %v3702 = vpack.c.b16 %v3450, %v3444
  %v3703 = vpack.c.b16 %v3451, %v3445
  %v3704 = vpack.c.b16 %v3452, %v3446
  %v3705 = vpack.c.b16 %v3453, %v3447
  %v3706 = vpack.c.b16 %v3454, %v3448
  %v3707 = vpack.c.b16 %v3455, %v3449
  %v3708 = vpack.c.b16 %v3462, %v3456
  %v3709 = vpack.c.b16 %v3463, %v3457
  %v3710 = vpack.c.b16 %v3464, %v3458
  %v3711 = vpack.c.b16 %v3465, %v3459
  %v3712 = vpack.c.b16 %v3466, %v3460
  %v3713 = vpack.c.b16 %v3467, %v3461
  %v3714 = vpack.c.b16 %v3474, %v3468
  %v3715 = vpack.c.b16 %v3475, %v3469
  %v3716 = vpack.c.b16 %v3476, %v3470
  %v3717 = vpack.c.b16 %v3477, %v3471
  %v3718 = vpack.c.b16 %v3478, %v3472
  %v3719 = vpack.c.b16 %v3479, %v3473
  %v3720 = vpack.c.b16 %v3486, %v3480
  %v3721 = vpack.c.b16 %v3487, %v3481
  %v3722 = vpack.c.b16 %v3488, %v3482
  %v3723 = vpack.c.b16 %v3489, %v3483
  %v3724 = vpack.c.b16 %v3490, %v3484
  %v3725 = vpack.c.b16 %v3491, %v3485
  %v3726 = vpack.c.b16 %v3498, %v3492
  %v3727 = vpack.c.b16 %v3499, %v3493
  %v3728 = vpack.c.b16 %v3500, %v3494
  %v3729 = vpack.c.b16 %v3501, %v3495
  %v3730 = vpack.c.b16 %v3502, %v3496
  %v3731 = vpack.c.b16 %v3503, %v3497
  %v3732 = vpack.c.b16 %v3510, %v3504
  %v3733 = vpack.c.b16 %v3511, %v3505
  %v3734 = vpack.c.b16 %v3512, %v3506
  %v3735 = vpack.c.b16 %v3513, %v3507
  %v3736 = vpack.c.b16 %v3514, %v3508
  %v3737 = vpack.c.b16 %v3515, %v3509
  %v3738 = vpack.c.b16 %v3522, %v3516
  %v3739 = vpack.c.b16 %v3523, %v3517
  %v3740 = vpack.c.b16 %v3524, %v3518
  %v3741 = vpack.c.b16 %v3525, %v3519
  %v3742 = vpack.c.b16 %v3526, %v3520
  %v3743 = vpack.c.b16 %v3527, %v3521
  %v3744 = vpack.c.b16 %v3534, %v3528
  %v3745 = vpack.c.b16 %v3535, %v3529
  %v3746 = vpack.c.b16 %v3536, %v3530
  %v3747 = vpack.c.b16 %v3537, %v3531
  %v3748 = vpack.c.b16 %v3538, %v3532
  %v3749 = vpack.c.b16 %v3539, %v3533
  %v3750 = vpack.c.b16 %v3546, %v3540
  %v3751 = vpack.c.b16 %v3547, %v3541
  %v3752 = vpack.c.b16 %v3548, %v3542
  %v3753 = vpack.c.b16 %v3549, %v3543
  %v3754 = vpack.c.b16 %v3550, %v3544
  %v3755 = vpack.c.b16 %v3551, %v3545
  %v3756 = vpack.c.b16 %v3558, %v3552
  %v3757 = vpack.c.b16 %v3559, %v3553
  %v3758 = vpack.c.b16 %v3560, %v3554
  %v3759 = vpack.c.b16 %v3561, %v3555
  %v3760 = vpack.c.b16 %v3562, %v3556
  %v3761 = vpack.c.b16 %v3563, %v3557
  %v3762 = vpack.c.b16 %v3570, %v3564
  %v3763 = vpack.c.b16 %v3571, %v3565
  %v3764 = vpack.c.b16 %v3572, %v3566
  %v3765 = vpack.c.b16 %v3573, %v3567
  %v3766 = vpack.c.b16 %v3574, %v3568
  %v3767 = vpack.c.b16 %v3575, %v3569
  %v3768 = vpack.c.b16 %v3582, %v3576
  %v3769 = vpack.c.b16 %v3583, %v3577
  %v3770 = vpack.c.b16 %v3584, %v3578
  %v3771 = vpack.c.b16 %v3585, %v3579
  %v3772 = vpack.c.b16 %v3586, %v3580
  %v3773 = vpack.c.b16 %v3587, %v3581
  %v3774 = vpack.c.b16 %v3594, %v3588
  %v3775 = vpack.c.b16 %v3595, %v3589
  %v3776 = vpack.c.b16 %v3596, %v3590
  %v3777 = vpack.c.b16 %v3597, %v3591
  %v3778 = vpack.c.b16 %v3598, %v3592
  %v3779 = vpack.c.b16 %v3599, %v3593
  %v3780 = vpack.c.b16 %v3606, %v3600
  %v3781 = vpack.c.b16 %v3607, %v3601
  %v3782 = vpack.c.b16 %v3608, %v3602
  %v3783 = vpack.c.b16 %v3609, %v3603
  %v3784 = vpack.c.b16 %v3610, %v3604
  %v3785 = vpack.c.b16 %v3611, %v3605
  %v3786 = vpack.c.b16 %v3618, %v3612
  %v3787 = vpack.c.b16 %v3619, %v3613
  %v3788 = vpack.c.b16 %v3620, %v3614
  %v3789 = vpack.c.b16 %v3621, %v3615
  %v3790 = vpack.c.b16 %v3622, %v3616
  %v3791 = vpack.c.b16 %v3623, %v3617
  %v3792 = vpack.c.b16 %v3630, %v3624
  %v3793 = vpack.c.b16 %v3631, %v3625
  %v3794 = vpack.c.b16 %v3632, %v3626
  %v3795 = vpack.c.b16 %v3633, %v3627
  %v3796 = vpack.c.b16 %v3634, %v3628
  %v3797 = vpack.c.b16 %v3635, %v3629
  %v3798 = vpack.c.b16 %v3642, %v3636
  %v3799 = vpack.c.b16 %v3643, %v3637
  %v3800 = vpack.c.b16 %v3644, %v3638
  %v3801 = vpack.c.b16 %v3645, %v3639
  %v3802 = vpack.c.b16 %v3646, %v3640
  %v3803 = vpack.c.b16 %v3647, %v3641
  %v4248 = vunpack.c.l.b16 %v2892
  %v4249 = vunpack.c.h.b16 %v2892
  %v4250 = vunpack.c.l.b16 %v2893
  %v4251 = vunpack.c.h.b16 %v2893
  %v4252 = vunpack.c.l.b16 %v2894
  %v4253 = vunpack.c.l.b16 %v2895
  %v4254 = vunpack.c.h.b16 %v2895
  %v4255 = vunpack.c.l.b16 %v2896
  %v4256 = vunpack.c.h.b16 %v2896
  %v4257 = vunpack.c.l.b16 %v2897
  %v4258 = vunpack.c.l.b16 %v2898
  %v4259 = vunpack.c.h.b16 %v2898
  %v4260 = vunpack.c.l.b16 %v2899
  %v4261 = vunpack.c.h.b16 %v2899
  %v4262 = vunpack.c.l.b16 %v2900
  %v4263 = vunpack.c.l.b16 %v2901
  %v4264 = vunpack.c.h.b16 %v2901
  %v4265 = vunpack.c.l.b16 %v2902
  %v4266 = vunpack.c.h.b16 %v2902
  %v4267 = vunpack.c.l.b16 %v2903
  %v4268 = vunpack.c.l.b16 %v2904
  %v4269 = vunpack.c.h.b16 %v2904
  %v4270 = vunpack.c.l.b16 %v2905
  %v4271 = vunpack.c.h.b16 %v2905
  %v4272 = vunpack.c.l.b16 %v2906
  %v4273 = vunpack.c.l.b16 %v2907
  %v4274 = vunpack.c.h.b16 %v2907
  %v4275 = vunpack.c.l.b16 %v2908
  %v4276 = vunpack.c.h.b16 %v2908
  %v4277 = vunpack.c.l.b16 %v2909
  %v4278 = vunpack.c.l.b16 %v2910
  %v4279 = vunpack.c.h.b16 %v2910
  %v4280 = vunpack.c.l.b16 %v2911
  %v4281 = vunpack.c.h.b16 %v2911
  %v4282 = vunpack.c.l.b16 %v2912
  %v4283 = vunpack.c.l.b16 %v2913
  %v4284 = vunpack.c.h.b16 %v2913
  %v4285 = vunpack.c.l.b16 %v2914
  %v4286 = vunpack.c.h.b16 %v2914
  %v4287 = vunpack.c.l.b16 %v2915
  %v4288 = vunpack.c.l.b16 %v2916
  %v4289 = vunpack.c.h.b16 %v2916
  %v4290 = vunpack.c.l.b16 %v2917
  %v4291 = vunpack.c.h.b16 %v2917
  %v4292 = vunpack.c.l.b16 %v2918
  %v4293 = vunpack.c.l.b16 %v2919
  %v4294 = vunpack.c.h.b16 %v2919
  %v4295 = vunpack.c.l.b16 %v2920
  %v4296 = vunpack.c.h.b16 %v2920
  %v4297 = vunpack.c.l.b16 %v2921
  %v4298 = vunpack.c.l.b16 %v2922
  %v4299 = vunpack.c.h.b16 %v2922
  %v4300 = vunpack.c.l.b16 %v2923
  %v4301 = vunpack.c.h.b16 %v2923
  %v4302 = vunpack.c.l.b16 %v2924
  %v4303 = vunpack.c.l.b16 %v2925
  %v4304 = vunpack.c.h.b16 %v2925
  %v4305 = vunpack.c.l.b16 %v2926
  %v4306 = vunpack.c.h.b16 %v2926
  %v4307 = vunpack.c.l.b16 %v2927
  %v4308 = vunpack.c.l.b16 %v2928
  %v4309 = vunpack.c.h.b16 %v2928
  %v4310 = vunpack.c.l.b16 %v2929
  %v4311 = vunpack.c.h.b16 %v2929
  %v4312 = vunpack.c.l.b16 %v2930
  %v4313 = vunpack.c.l.b16 %v2931
  %v4314 = vunpack.c.h.b16 %v2931
  %v4315 = vunpack.c.l.b16 %v2932
  %v4316 = vunpack.c.h.b16 %v2932
  %v4317 = vunpack.c.l.b16 %v2933
  %v4318 = vunpack.c.l.b16 %v2934
  %v4319 = vunpack.c.h.b16 %v2934
  %v4320 = vunpack.c.l.b16 %v2935
  %v4321 = vunpack.c.h.b16 %v2935
  %v4322 = vunpack.c.l.b16 %v2936
  %v4323 = vunpack.c.l.b16 %v2937
  %v4324 = vunpack.c.h.b16 %v2937
  %v4325 = vunpack.c.l.b16 %v2938
  %v4326 = vunpack.c.h.b16 %v2938
  %v4327 = vunpack.c.l.b16 %v2939
  %v4328 = vunpack.c.l.b16 %v2940
  %v4329 = vunpack.c.h.b16 %v2940
  %v4330 = vunpack.c.l.b16 %v2941
  %v4331 = vunpack.c.h.b16 %v2941
  %v4332 = vunpack.c.l.b16 %v2942
  %v4333 = vunpack.c.l.b16 %v2943
  %v4334 = vunpack.c.h.b16 %v2943
  %v4335 = vunpack.c.l.b16 %v2944
  %v4336 = vunpack.c.h.b16 %v2944
  %v4337 = vunpack.c.l.b16 %v2945
  %v4338 = vunpack.c.l.b16 %v2946
  %v4339 = vunpack.c.h.b16 %v2946
  %v4340 = vunpack.c.l.b16 %v2947
  %v4341 = vunpack.c.h.b16 %v2947
  %v4342 = vunpack.c.l.b16 %v2948
  %v4343 = vunpack.c.l.b16 %v2949
  %v4344 = vunpack.c.h.b16 %v2949
  %v4345 = vunpack.c.l.b16 %v2950
  %v4346 = vunpack.c.h.b16 %v2950
  %v4347 = vunpack.c.l.b16 %v2951
  %v4348 = vunpack.c.l.b16 %v2952
  %v4349 = vunpack.c.h.b16 %v2952
  %v4350 = vunpack.c.l.b16 %v2953
  %v4351 = vunpack.c.h.b16 %v2953
  %v4352 = vunpack.c.l.b16 %v2954
  %v4353 = vunpack.c.l.b16 %v2955
  %v4354 = vunpack.c.h.b16 %v2955
  %v4355 = vunpack.c.l.b16 %v2956
  %v4356 = vunpack.c.h.b16 %v2956
  %v4357 = vunpack.c.l.b16 %v2957
  %v4358 = vunpack.c.l.b16 %v2958
  %v4359 = vunpack.c.h.b16 %v2958
  %v4360 = vunpack.c.l.b16 %v2959
  %v4361 = vunpack.c.h.b16 %v2959
  %v4362 = vunpack.c.l.b16 %v2960
  %v4363 = vunpack.c.l.b16 %v2961
  %v4364 = vunpack.c.h.b16 %v2961
  %v4365 = vunpack.c.l.b16 %v2962
  %v4366 = vunpack.c.h.b16 %v2962
  %v4367 = vunpack.c.l.b16 %v2963
  %v4368 = vunpack.c.l.b16 %v2964
  %v4369 = vunpack.c.h.b16 %v2964
  %v4370 = vunpack.c.l.b16 %v2965
  %v4371 = vunpack.c.h.b16 %v2965
  %v4372 = vunpack.c.l.b16 %v2966
  %v4373 = vunpack.c.l.b16 %v2967
  %v4374 = vunpack.c.h.b16 %v2967
  %v4375 = vunpack.c.l.b16 %v2968
  %v4376 = vunpack.c.h.b16 %v2968
  %v4377 = vunpack.c.l.b16 %v2969
  %v4378 = vunpack.c.l.b16 %v2970
  %v4379 = vunpack.c.h.b16 %v2970
  %v4380 = vunpack.c.l.b16 %v2971
  %v4381 = vunpack.c.h.b16 %v2971
  %v4382 = vunpack.c.l.b16 %v2972
  %v4383 = vunpack.c.l.b16 %v2973
  %v4384 = vunpack.c.h.b16 %v2973
  %v4385 = vunpack.c.l.b16 %v2974
  %v4386 = vunpack.c.h.b16 %v2974
  %v4387 = vunpack.c.l.b16 %v2975
  %v4388 = vunpack.c.l.b16 %v2976
  %v4389 = vunpack.c.h.b16 %v2976
  %v4390 = vunpack.c.l.b16 %v2977
  %v4391 = vunpack.c.h.b16 %v2977
  %v4392 = vunpack.c.l.b16 %v2978
  %v4393 = vunpack.c.l.b16 %v2979
  %v4394 = vunpack.c.h.b16 %v2979
  %v4395 = vunpack.c.l.b16 %v2980
  %v4396 = vunpack.c.h.b16 %v2980
  %v4397 = vunpack.c.l.b16 %v2981
  %v4398 = vunpack.c.l.b16 %v2982
  %v4399 = vunpack.c.h.b16 %v2982
  %v4400 = vunpack.c.l.b16 %v2983
  %v4401 = vunpack.c.h.b16 %v2983
  %v4402 = vunpack.c.l.b16 %v2984
  %v4403 = vunpack.c.l.b16 %v2985
  %v4404 = vunpack.c.h.b16 %v2985
  %v4405 = vunpack.c.l.b16 %v2986
  %v4406 = vunpack.c.h.b16 %v2986
  %v4407 = vunpack.c.l.b16 %v2987
  %v4408 = vunpack.c.l.b16 %v2988
  %v4409 = vunpack.c.h.b16 %v2988
  %v4410 = vunpack.c.l.b16 %v2989
  %v4411 = vunpack.c.h.b16 %v2989
  %v4412 = vunpack.c.l.b16 %v2990
  %v4413 = vunpack.c.l.b16 %v2991
  %v4414 = vunpack.c.h.b16 %v2991
  %v4415 = vunpack.c.l.b16 %v2992
  %v4416 = vunpack.c.h.b16 %v2992
  %v4417 = vunpack.c.l.b16 %v2993
  %v4418 = vunpack.c.l.b16 %v2994
  %v4419 = vunpack.c.h.b16 %v2994
  %v4420 = vunpack.c.l.b16 %v2995
  %v4421 = vunpack.c.h.b16 %v2995
  %v4422 = vunpack.c.l.b16 %v2996
  %v4423 = vunpack.c.l.b16 %v2997
  %v4424 = vunpack.c.h.b16 %v2997
  %v4425 = vunpack.c.l.b16 %v2998
  %v4426 = vunpack.c.h.b16 %v2998
  %v4427 = vunpack.c.l.b16 %v2999
  %v4428 = vunpack.c.l.b16 %v3000
  %v4429 = vunpack.c.h.b16 %v3000
  %v4430 = vunpack.c.l.b16 %v3001
  %v4431 = vunpack.c.h.b16 %v3001
  %v4432 = vunpack.c.l.b16 %v3002
  %v4433 = vunpack.c.l.b16 %v3003
  %v4434 = vunpack.c.h.b16 %v3003
  %v4435 = vunpack.c.l.b16 %v3004
  %v4436 = vunpack.c.h.b16 %v3004
  %v4437 = vunpack.c.l.b16 %v3005
  %v4438 = vunpack.c.l.b16 %v3006
  %v4439 = vunpack.c.h.b16 %v3006
  %v4440 = vunpack.c.l.b16 %v3007
  %v4441 = vunpack.c.h.b16 %v3007
  %v4442 = vunpack.c.l.b16 %v3008
  %v4443 = vunpack.c.l.b16 %v3009
  %v4444 = vunpack.c.h.b16 %v3009
  %v4445 = vunpack.c.l.b16 %v3010
  %v4446 = vunpack.c.h.b16 %v3010
  %v4447 = vunpack.c.l.b16 %v3011
  %v4448 = vunpack.c.l.b16 %v3012
  %v4449 = vunpack.c.h.b16 %v3012
  %v4450 = vunpack.c.l.b16 %v3013
  %v4451 = vunpack.c.h.b16 %v3013
  %v4452 = vunpack.c.l.b16 %v3014
  %v4453 = vunpack.c.l.b16 %v3015
  %v4454 = vunpack.c.h.b16 %v3015
  %v4455 = vunpack.c.l.b16 %v3016
  %v4456 = vunpack.c.h.b16 %v3016
  %v4457 = vunpack.c.l.b16 %v3017
  %v4458 = vunpack.c.l.b16 %v3018
  %v4459 = vunpack.c.h.b16 %v3018
  %v4460 = vunpack.c.l.b16 %v3019
  %v4461 = vunpack.c.h.b16 %v3019
  %v4462 = vunpack.c.l.b16 %v3020
  %v4463 = vunpack.c.l.b16 %v3021
  %v4464 = vunpack.c.h.b16 %v3021
  %v4465 = vunpack.c.l.b16 %v3022
  %v4466 = vunpack.c.h.b16 %v3022
  %v4467 = vunpack.c.l.b16 %v3023
  %v4468 = vunpack.c.l.b16 %v3024
  %v4469 = vunpack.c.h.b16 %v3024
  %v4470 = vunpack.c.l.b16 %v3025
  %v4471 = vunpack.c.h.b16 %v3025
  %v4472 = vunpack.c.l.b16 %v3026
  %v4473 = vunpack.c.l.b16 %v3027
  %v4474 = vunpack.c.h.b16 %v3027
  %v4475 = vunpack.c.l.b16 %v3028
  %v4476 = vunpack.c.h.b16 %v3028
  %v4477 = vunpack.c.l.b16 %v3029
  %v4478 = vunpack.c.l.b16 %v3030
  %v4479 = vunpack.c.h.b16 %v3030
  %v4480 = vunpack.c.l.b16 %v3031
  %v4481 = vunpack.c.h.b16 %v3031
  %v4482 = vunpack.c.l.b16 %v3032
  %v4483 = vunpack.c.l.b16 %v3033
  %v4484 = vunpack.c.h.b16 %v3033
  %v4485 = vunpack.c.l.b16 %v3034
  %v4486 = vunpack.c.h.b16 %v3034
  %v4487 = vunpack.c.l.b16 %v3035
  %v4488 = vunpack.c.l.b16 %v3036
  %v4489 = vunpack.c.h.b16 %v3036
  %v4490 = vunpack.c.l.b16 %v3037
  %v4491 = vunpack.c.h.b16 %v3037
  %v4492 = vunpack.c.l.b16 %v3038
  %v4493 = vunpack.c.l.b16 %v3039
  %v4494 = vunpack.c.h.b16 %v3039
  %v4495 = vunpack.c.l.b16 %v3040
  %v4496 = vunpack.c.h.b16 %v3040
  %v4497 = vunpack.c.l.b16 %v3041
  %v4498 = vunpack.c.l.b16 %v3042
  %v4499 = vunpack.c.h.b16 %v3042
  %v4500 = vunpack.c.l.b16 %v3043
  %v4501 = vunpack.c.h.b16 %v3043
  %v4502 = vunpack.c.l.b16 %v3044
  %v4503 = vunpack.c.l.b16 %v3045
  %v4504 = vunpack.c.h.b16 %v3045
  %v4505 = vunpack.c.l.b16 %v3046
  %v4506 = vunpack.c.h.b16 %v3046
  %v4507 = vunpack.c.l.b16 %v3047
  %v4508 = vunpack.c.l.b16 %v3048
  %v4509 = vunpack.c.h.b16 %v3048
  %v4510 = vunpack.c.l.b16 %v3049
  %v4511 = vunpack.c.h.b16 %v3049
  %v4512 = vunpack.c.l.b16 %v3050
  %v4513 = vunpack.c.l.b16 %v3051
  %v4514 = vunpack.c.h.b16 %v3051
  %v4515 = vunpack.c.l.b16 %v3052
  %v4516 = vunpack.c.h.b16 %v3052
  %v4517 = vunpack.c.l.b16 %v3053
  %v4518 = vunpack.c.l.b16 %v3054
  %v4519 = vunpack.c.h.b16 %v3054
  %v4520 = vunpack.c.l.b16 %v3055
  %v4521 = vunpack.c.h.b16 %v3055
  %v4522 = vunpack.c.l.b16 %v3056
  %v4523 = vunpack.c.l.b16 %v3057
  %v4524 = vunpack.c.h.b16 %v3057
  %v4525 = vunpack.c.l.b16 %v3058
  %v4526 = vunpack.c.h.b16 %v3058
  %v4527 = vunpack.c.l.b16 %v3059
  %v4528 = vunpack.c.l.b16 %v3060
  %v4529 = vunpack.c.h.b16 %v3060
  %v4530 = vunpack.c.l.b16 %v3061
  %v4531 = vunpack.c.h.b16 %v3061
  %v4532 = vunpack.c.l.b16 %v3062
  %v4533 = vunpack.c.l.b16 %v3063
  %v4534 = vunpack.c.h.b16 %v3063
  %v4535 = vunpack.c.l.b16 %v3064
  %v4536 = vunpack.c.h.b16 %v3064
  %v4537 = vunpack.c.l.b16 %v3065
  %v4538 = vunpack.c.l.b16 %v3066
  %v4539 = vunpack.c.h.b16 %v3066
  %v4540 = vunpack.c.l.b16 %v3067
  %v4541 = vunpack.c.h.b16 %v3067
  %v4542 = vunpack.c.l.b16 %v3068
  %v4543 = vunpack.c.l.b16 %v3069
  %v4544 = vunpack.c.h.b16 %v3069
  %v4545 = vunpack.c.l.b16 %v3070
  %v4546 = vunpack.c.h.b16 %v3070
  %v4547 = vunpack.c.l.b16 %v3071
  %v4548 = vunpack.c.l.b16 %v3072
  %v4549 = vunpack.c.h.b16 %v3072
  %v4550 = vunpack.c.l.b16 %v3073
  %v4551 = vunpack.c.h.b16 %v3073
  %v4552 = vunpack.c.l.b16 %v3074
  %v4553 = vunpack.c.l.b16 %v3075
  %v4554 = vunpack.c.h.b16 %v3075
  %v4555 = vunpack.c.l.b16 %v3076
  %v4556 = vunpack.c.h.b16 %v3076
  %v4557 = vunpack.c.l.b16 %v3077
  %v4558 = vunpack.c.l.b16 %v3078
  %v4559 = vunpack.c.h.b16 %v3078
  %v4560 = vunpack.c.l.b16 %v3079
  %v4561 = vunpack.c.h.b16 %v3079
  %v4562 = vunpack.c.l.b16 %v3080
  %v4563 = vunpack.c.l.b16 %v3081
  %v4564 = vunpack.c.h.b16 %v3081
  %v4565 = vunpack.c.l.b16 %v3082
  %v4566 = vunpack.c.h.b16 %v3082
  %v4567 = vunpack.c.l.b16 %v3083
  %v4568 = vunpack.c.l.b16 %v3084
  %v4569 = vunpack.c.h.b16 %v3084
  %v4570 = vunpack.c.l.b16 %v3085
  %v4571 = vunpack.c.h.b16 %v3085
  %v4572 = vunpack.c.l.b16 %v3086
  %v4573 = vunpack.c.l.b16 %v3087
  %v4574 = vunpack.c.h.b16 %v3087
  %v4575 = vunpack.c.l.b16 %v3088
  %v4576 = vunpack.c.h.b16 %v3088
  %v4577 = vunpack.c.l.b16 %v3089
  %v4578 = vunpack.c.l.b16 %v3090
  %v4579 = vunpack.c.h.b16 %v3090
  %v4580 = vunpack.c.l.b16 %v3091
  %v4581 = vunpack.c.h.b16 %v3091
  %v4582 = vunpack.c.l.b16 %v3092
  %v4583 = vunpack.c.l.b16 %v3093
  %v4584 = vunpack.c.h.b16 %v3093
  %v4585 = vunpack.c.l.b16 %v3094
  %v4586 = vunpack.c.h.b16 %v3094
  %v4587 = vunpack.c.l.b16 %v3095
  %v4588 = vunpack.c.l.b16 %v3096
  %v4589 = vunpack.c.h.b16 %v3096
  %v4590 = vunpack.c.l.b16 %v3097
  %v4591 = vunpack.c.h.b16 %v3097
  %v4592 = vunpack.c.l.b16 %v3098
  %v4593 = vunpack.c.l.b16 %v3099
  %v4594 = vunpack.c.h.b16 %v3099
  %v4595 = vunpack.c.l.b16 %v3100
  %v4596 = vunpack.c.h.b16 %v3100
  %v4597 = vunpack.c.l.b16 %v3101
  %v4598 = vunpack.c.l.b16 %v3102
  %v4599 = vunpack.c.h.b16 %v3102
  %v4600 = vunpack.c.l.b16 %v3103
  %v4601 = vunpack.c.h.b16 %v3103
  %v4602 = vunpack.c.l.b16 %v3104
  %v4603 = vunpack.c.l.b16 %v3105
  %v4604 = vunpack.c.h.b16 %v3105
  %v4605 = vunpack.c.l.b16 %v3106
  %v4606 = vunpack.c.h.b16 %v3106
  %v4607 = vunpack.c.l.b16 %v3107
  %v4608 = vunpack.c.l.b16 %v3108
  %v4609 = vunpack.c.h.b16 %v3108
  %v4610 = vunpack.c.l.b16 %v3109
  %v4611 = vunpack.c.h.b16 %v3109
  %v4612 = vunpack.c.l.b16 %v3110
  %v4613 = vunpack.c.l.b16 %v3111
  %v4614 = vunpack.c.h.b16 %v3111
  %v4615 = vunpack.c.l.b16 %v3112
  %v4616 = vunpack.c.h.b16 %v3112
  %v4617 = vunpack.c.l.b16 %v3113
  %v4618 = vunpack.c.l.b16 %v3114
  %v4619 = vunpack.c.h.b16 %v3114
  %v4620 = vunpack.c.l.b16 %v3115
  %v4621 = vunpack.c.h.b16 %v3115
  %v4622 = vunpack.c.l.b16 %v3116
  %v4623 = vunpack.c.l.b16 %v3117
  %v4624 = vunpack.c.h.b16 %v3117
  %v4625 = vunpack.c.l.b16 %v3118
  %v4626 = vunpack.c.h.b16 %v3118
  %v4627 = vunpack.c.l.b16 %v3119
  %v4628 = vunpack.c.l.b16 %v3120
  %v4629 = vunpack.c.h.b16 %v3120
  %v4630 = vunpack.c.l.b16 %v3121
  %v4631 = vunpack.c.h.b16 %v3121
  %v4632 = vunpack.c.l.b16 %v3122
  %v4633 = vunpack.c.l.b16 %v3123
  %v4634 = vunpack.c.h.b16 %v3123
  %v4635 = vunpack.c.l.b16 %v3124
  %v4636 = vunpack.c.h.b16 %v3124
  %v4637 = vunpack.c.l.b16 %v3125
  %v4638 = vunpack.c.l.b16 %v3126
  %v4639 = vunpack.c.h.b16 %v3126
  %v4640 = vunpack.c.l.b16 %v3127
  %v4641 = vunpack.c.h.b16 %v3127
  %v4642 = vunpack.c.l.b16 %v3128
  %v4643 = vunpack.c.l.b16 %v3129
  %v4644 = vunpack.c.h.b16 %v3129
  %v4645 = vunpack.c.l.b16 %v3130
  %v4646 = vunpack.c.h.b16 %v3130
  %v4647 = vunpack.c.l.b16 %v3131
  %v4648 = vunpack.c.l.b16 %v3132
  %v4649 = vunpack.c.h.b16 %v3132
  %v4650 = vunpack.c.l.b16 %v3133
  %v4651 = vunpack.c.h.b16 %v3133
  %v4652 = vunpack.c.l.b16 %v3134
  %v4653 = vunpack.c.l.b16 %v3135
  %v4654 = vunpack.c.h.b16 %v3135
  %v4655 = vunpack.c.l.b16 %v3136
  %v4656 = vunpack.c.h.b16 %v3136
  %v4657 = vunpack.c.l.b16 %v3137
  %v4658 = vunpack.c.l.b16 %v3138
  %v4659 = vunpack.c.h.b16 %v3138
  %v4660 = vunpack.c.l.b16 %v3139
  %v4661 = vunpack.c.h.b16 %v3139
  %v4662 = vunpack.c.l.b16 %v3140
  %v4663 = vunpack.c.l.b16 %v3141
  %v4664 = vunpack.c.h.b16 %v3141
  %v4665 = vunpack.c.l.b16 %v3142
  %v4666 = vunpack.c.h.b16 %v3142
  %v4667 = vunpack.c.l.b16 %v3143
  %v4668 = vunpack.c.l.b16 %v3144
  %v4669 = vunpack.c.h.b16 %v3144
  %v4670 = vunpack.c.l.b16 %v3145
  %v4671 = vunpack.c.h.b16 %v3145
  %v4672 = vunpack.c.l.b16 %v3146
  %v4673 = vunpack.c.l.b16 %v3147
  %v4674 = vunpack.c.h.b16 %v3147
  %v4675 = vunpack.c.l.b16 %v3148
  %v4676 = vunpack.c.h.b16 %v3148
  %v4677 = vunpack.c.l.b16 %v3149
  %v4678 = vunpack.c.l.b16 %v3150
  %v4679 = vunpack.c.h.b16 %v3150
  %v4680 = vunpack.c.l.b16 %v3151
  %v4681 = vunpack.c.h.b16 %v3151
  %v4682 = vunpack.c.l.b16 %v3152
  %v4683 = vunpack.c.l.b16 %v3153
  %v4684 = vunpack.c.h.b16 %v3153
  %v4685 = vunpack.c.l.b16 %v3154
  %v4686 = vunpack.c.h.b16 %v3154
  %v4687 = vunpack.c.l.b16 %v3155
  %v4688 = vunpack.c.l.b16 %v3156
  %v4689 = vunpack.c.h.b16 %v3156
  %v4690 = vunpack.c.l.b16 %v3157
  %v4691 = vunpack.c.h.b16 %v3157
  %v4692 = vunpack.c.l.b16 %v3158
  %v4693 = vunpack.c.l.b16 %v3159
  %v4694 = vunpack.c.h.b16 %v3159
  %v4695 = vunpack.c.l.b16 %v3160
  %v4696 = vunpack.c.h.b16 %v3160
  %v4697 = vunpack.c.l.b16 %v3161
  %v4698 = vunpack.c.l.b16 %v3162
  %v4699 = vunpack.c.h.b16 %v3162
  %v4700 = vunpack.c.l.b16 %v3163
  %v4701 = vunpack.c.h.b16 %v3163
  %v4702 = vunpack.c.l.b16 %v3164
  %v4703 = vunpack.c.l.b16 %v3165
  %v4704 = vunpack.c.h.b16 %v3165
  %v4705 = vunpack.c.l.b16 %v3166
  %v4706 = vunpack.c.h.b16 %v3166
  %v4707 = vunpack.c.l.b16 %v3167
  %v4708 = vunpack.c.l.b16 %v3168
  %v4709 = vunpack.c.h.b16 %v3168
  %v4710 = vunpack.c.l.b16 %v3169
  %v4711 = vunpack.c.h.b16 %v3169
  %v4712 = vunpack.c.l.b16 %v3170
  %v4713 = vunpack.c.l.b16 %v3171
  %v4714 = vunpack.c.h.b16 %v3171
  %v4715 = vunpack.c.l.b16 %v3172
  %v4716 = vunpack.c.h.b16 %v3172
  %v4717 = vunpack.c.l.b16 %v3173
  %v4718 = vunpack.c.l.b16 %v3174
  %v4719 = vunpack.c.h.b16 %v3174
  %v4720 = vunpack.c.l.b16 %v3175
  %v4721 = vunpack.c.h.b16 %v3175
  %v4722 = vunpack.c.l.b16 %v3176
  %v4723 = vunpack.c.l.b16 %v3177
  %v4724 = vunpack.c.h.b16 %v3177
  %v4725 = vunpack.c.l.b16 %v3178
  %v4726 = vunpack.c.h.b16 %v3178
  %v4727 = vunpack.c.l.b16 %v3179
  %v4728 = vpack.c.b16 %v4253, %v4248
  %v4729 = vpack.c.b16 %v4254, %v4249
  %v4730 = vpack.c.b16 %v4255, %v4250
  %v4731 = vpack.c.b16 %v4256, %v4251
  %v4732 = vpack.c.b16 %v4257, %v4252
  %v4733 = vpack.c.b16 %v4263, %v4258
  %v4734 = vpack.c.b16 %v4264, %v4259
  %v4735 = vpack.c.b16 %v4265, %v4260
  %v4736 = vpack.c.b16 %v4266, %v4261
  %v4737 = vpack.c.b16 %v4267, %v4262
  %v4738 = vpack.c.b16 %v4273, %v4268
  %v4739 = vpack.c.b16 %v4274, %v4269
  %v4740 = vpack.c.b16 %v4275, %v4270
  %v4741 = vpack.c.b16 %v4276, %v4271
  %v4742 = vpack.c.b16 %v4277, %v4272
  %v4743 = vpack.c.b16 %v4283, %v4278
  %v4744 = vpack.c.b16 %v4284, %v4279
  %v4745 = vpack.c.b16 %v4285, %v4280
  %v4746 = vpack.c.b16 %v4286, %v4281
  %v4747 = vpack.c.b16 %v4287, %v4282
  %v4748 = vpack.c.b16 %v4293, %v4288
  %v4749 = vpack.c.b16 %v4294, %v4289
  %v4750 = vpack.c.b16 %v4295, %v4290
  %v4751 = vpack.c.b16 %v4296, %v4291
  %v4752 = vpack.c.b16 %v4297, %v4292
  %v4753 = vpack.c.b16 %v4303, %v4298
  %v4754 = vpack.c.b16 %v4304, %v4299
  %v4755 = vpack.c.b16 %v4305, %v4300
  %v4756 = vpack.c.b16 %v4306, %v4301
  %v4757 = vpack.c.b16 %v4307, %v4302
  %v4758 = vpack.c.b16 %v4313, %v4308
  %v4759 = vpack.c.b16 %v4314, %v4309
  %v4760 = vpack.c.b16 %v4315, %v4310
  %v4761 = vpack.c.b16 %v4316, %v4311
  %v4762 = vpack.c.b16 %v4317, %v4312
  %v4763 = vpack.c.b16 %v4323, %v4318
  %v4764 = vpack.c.b16 %v4324, %v4319
  %v4765 = vpack.c.b16 %v4325, %v4320
  %v4766 = vpack.c.b16 %v4326, %v4321
  %v4767 = vpack.c.b16 %v4327, %v4322
  %v4768 = vpack.c.b16 %v4333, %v4328
  %v4769 = vpack.c.b16 %v4334, %v4329
  %v4770 = vpack.c.b16 %v4335, %v4330
  %v4771 = vpack.c.b16 %v4336, %v4331
  %v4772 = vpack.c.b16 %v4337, %v4332
  %v4773 = vpack.c.b16 %v4343, %v4338
  %v4774 = vpack.c.b16 %v4344, %v4339
  %v4775 = vpack.c.b16 %v4345, %v4340
  %v4776 = vpack.c.b16 %v4346, %v4341
  %v4777 = vpack.c.b16 %v4347, %v4342
  %v4778 = vpack.c.b16 %v4353, %v4348
  %v4779 = vpack.c.b16 %v4354, %v4349
  %v4780 = vpack.c.b16 %v4355, %v4350
  %v4781 = vpack.c.b16 %v4356, %v4351
  %v4782 = vpack.c.b16 %v4357, %v4352
  %v4783 = vpack.c.b16 %v4363, %v4358
  %v4784 = vpack.c.b16 %v4364, %v4359
  %v4785 = vpack.c.b16 %v4365, %v4360
  %v4786 = vpack.c.b16 %v4366, %v4361
  %v4787 = vpack.c.b16 %v4367, %v4362
  %v4788 = vpack.c.b16 %v4373, %v4368
  %v4789 = vpack.c.b16 %v4374, %v4369
  %v4790 = vpack.c.b16 %v4375, %v4370
  %v4791 = vpack.c.b16 %v4376, %v4371
  %v4792 = vpack.c.b16 %v4377, %v4372
  %v4793 = vpack.c.b16 %v4383, %v4378
  %v4794 = vpack.c.b16 %v4384, %v4379
  %v4795 = vpack.c.b16 %v4385, %v4380
  %v4796 = vpack.c.b16 %v4386, %v4381
  %v4797 = vpack.c.b16 %v4387, %v4382
  %v4798 = vpack.c.b16 %v4393, %v4388
  %v4799 = vpack.c.b16 %v4394, %v4389
  %v4800 = vpack.c.b16 %v4395, %v4390
  %v4801 = vpack.c.b16 %v4396, %v4391
  %v4802 = vpack.c.b16 %v4397, %v4392
  %v4803 = vpack.c.b16 %v4403, %v4398
  %v4804 = vpack.c.b16 %v4404, %v4399
  %v4805 = vpack.c.b16 %v4405, %v4400
  %v4806 = vpack.c.b16 %v4406, %v4401
  %v4807 = vpack.c.b16 %v4407, %v4402
  %v4808 = vpack.c.b16 %v4413, %v4408
  %v4809 = vpack.c.b16 %v4414, %v4409
  %v4810 = vpack.c.b16 %v4415, %v4410
  %v4811 = vpack.c.b16 %v4416, %v4411
  %v4812 = vpack.c.b16 %v4417, %v4412
  %v4813 = vpack.c.b16 %v4423, %v4418
  %v4814 = vpack.c.b16 %v4424, %v4419
  %v4815 = vpack.c.b16 %v4425, %v4420
  %v4816 = vpack.c.b16 %v4426, %v4421
  %v4817 = vpack.c.b16 %v4427, %v4422
  %v4818 = vpack.c.b16 %v4433, %v4428
  %v4819 = vpack.c.b16 %v4434, %v4429
  %v4820 = vpack.c.b16 %v4435, %v4430
  %v4821 = vpack.c.b16 %v4436, %v4431
  %v4822 = vpack.c.b16 %v4437, %v4432
  %v4823 = vpack.c.b16 %v4443, %v4438
  %v4824 = vpack.c.b16 %v4444, %v4439
  %v4825 = vpack.c.b16 %v4445, %v4440
  %v4826 = vpack.c.b16 %v4446, %v4441
  %v4827 = vpack.c.b16 %v4447, %v4442
  %v4828 = vpack.c.b16 %v4453, %v4448
  %v4829 = vpack.c.b16 %v4454, %v4449
  %v4830 = vpack.c.b16 %v4455, %v4450
  %v4831 = vpack.c.b16 %v4456, %v4451
  %v4832 = vpack.c.b16 %v4457, %v4452
  %v4833 = vpack.c.b16 %v4463, %v4458
  %v4834 = vpack.c.b16 %v4464, %v4459
  %v4835 = vpack.c.b16 %v4465, %v4460
  %v4836 = vpack.c.b16 %v4466, %v4461
  %v4837 = vpack.c.b16 %v4467, %v4462
  %v4838 = vpack.c.b16 %v4473, %v4468
  %v4839 = vpack.c.b16 %v4474, %v4469
  %v4840 = vpack.c.b16 %v4475, %v4470
  %v4841 = vpack.c.b16 %v4476, %v4471
  %v4842 = vpack.c.b16 %v4477, %v4472
  %v4843 = vpack.c.b16 %v4483, %v4478
  %v4844 = vpack.c.b16 %v4484, %v4479
  %v4845 = vpack.c.b16 %v4485, %v4480
  %v4846 = vpack.c.b16 %v4486, %v4481
  %v4847 = vpack.c.b16 %v4487, %v4482
  %v4848 = vpack.c.b16 %v4493, %v4488
  %v4849 = vpack.c.b16 %v4494, %v4489
  %v4850 = vpack.c.b16 %v4495, %v4490
  %v4851 = vpack.c.b16 %v4496, %v4491
  %v4852 = vpack.c.b16 %v4497, %v4492
  %v4853 = vpack.c.b16 %v4503, %v4498
  %v4854 = vpack.c.b16 %v4504, %v4499
  %v4855 = vpack.c.b16 %v4505, %v4500
  %v4856 = vpack.c.b16 %v4506, %v4501
  %v4857 = vpack.c.b16 %v4507, %v4502
  %v4858 = vpack.c.b16 %v4513, %v4508
  %v4859 = vpack.c.b16 %v4514, %v4509
  %v4860 = vpack.c.b16 %v4515, %v4510
  %v4861 = vpack.c.b16 %v4516, %v4511
  %v4862 = vpack.c.b16 %v4517, %v4512
  %v4863 = vpack.c.b16 %v4523, %v4518
  %v4864 = vpack.c.b16 %v4524, %v4519
  %v4865 = vpack.c.b16 %v4525, %v4520
  %v4866 = vpack.c.b16 %v4526, %v4521
  %v4867 = vpack.c.b16 %v4527, %v4522
  %v4868 = vpack.c.b16 %v4533, %v4528
  %v4869 = vpack.c.b16 %v4534, %v4529
  %v4870 = vpack.c.b16 %v4535, %v4530
  %v4871 = vpack.c.b16 %v4536, %v4531
  %v4872 = vpack.c.b16 %v4537, %v4532
  %v4873 = vpack.c.b16 %v4543, %v4538
  %v4874 = vpack.c.b16 %v4544, %v4539
  %v4875 = vpack.c.b16 %v4545, %v4540
  %v4876 = vpack.c.b16 %v4546, %v4541
  %v4877 = vpack.c.b16 %v4547, %v4542
  %v4878 = vpack.c.b16 %v4553, %v4548
  %v4879 = vpack.c.b16 %v4554, %v4549
  %v4880 = vpack.c.b16 %v4555, %v4550
  %v4881 = vpack.c.b16 %v4556, %v4551
  %v4882 = vpack.c.b16 %v4557, %v4552
  %v4883 = vpack.c.b16 %v4563, %v4558
  %v4884 = vpack.c.b16 %v4564, %v4559
  %v4885 = vpack.c.b16 %v4565, %v4560
  %v4886 = vpack.c.b16 %v4566, %v4561
  %v4887 = vpack.c.b16 %v4567, %v4562
  %v4888 = vpack.c.b16 %v4573, %v4568
  %v4889 = vpack.c.b16 %v4574, %v4569
  %v4890 = vpack.c.b16 %v4575, %v4570
  %v4891 = vpack.c.b16 %v4576, %v4571
  %v4892 = vpack.c.b16 %v4577, %v4572
  %v4893 = vpack.c.b16 %v4583, %v4578
  %v4894 = vpack.c.b16 %v4584, %v4579
  %v4895 = vpack.c.b16 %v4585, %v4580
  %v4896 = vpack.c.b16 %v4586, %v4581
  %v4897 = vpack.c.b16 %v4587, %v4582
  %v4898 = vpack.c.b16 %v4593, %v4588
  %v4899 = vpack.c.b16 %v4594, %v4589
  %v4900 = vpack.c.b16 %v4595, %v4590
  %v4901 = vpack.c.b16 %v4596, %v4591
  %v4902 = vpack.c.b16 %v4597, %v4592
  %v4903 = vpack.c.b16 %v4603, %v4598
  %v4904 = vpack.c.b16 %v4604, %v4599
  %v4905 = vpack.c.b16 %v4605, %v4600
  %v4906 = vpack.c.b16 %v4606, %v4601
  %v4907 = vpack.c.b16 %v4607, %v4602
  %v4908 = vpack.c.b16 %v4613, %v4608
  %v4909 = vpack.c.b16 %v4614, %v4609
  %v4910 = vpack.c.b16 %v4615, %v4610
  %v4911 = vpack.c.b16 %v4616, %v4611
  %v4912 = vpack.c.b16 %v4617, %v4612
  %v4913 = vpack.c.b16 %v4623, %v4618
  %v4914 = vpack.c.b16 %v4624, %v4619
  %v4915 = vpack.c.b16 %v4625, %v4620
  %v4916 = vpack.c.b16 %v4626, %v4621
  %v4917 = vpack.c.b16 %v4627, %v4622
  %v4918 = vpack.c.b16 %v4633, %v4628
  %v4919 = vpack.c.b16 %v4634, %v4629
  %v4920 = vpack.c.b16 %v4635, %v4630
  %v4921 = vpack.c.b16 %v4636, %v4631
  %v4922 = vpack.c.b16 %v4637, %v4632
  %v4923 = vpack.c.b16 %v4643, %v4638
  %v4924 = vpack.c.b16 %v4644, %v4639
  %v4925 = vpack.c.b16 %v4645, %v4640
  %v4926 = vpack.c.b16 %v4646, %v4641
  %v4927 = vpack.c.b16 %v4647, %v4642
  %v4928 = vpack.c.b16 %v4653, %v4648
  %v4929 = vpack.c.b16 %v4654, %v4649
  %v4930 = vpack.c.b16 %v4655, %v4650
  %v4931 = vpack.c.b16 %v4656, %v4651
  %v4932 = vpack.c.b16 %v4657, %v4652
  %v4933 = vpack.c.b16 %v4663, %v4658
  %v4934 = vpack.c.b16 %v4664, %v4659
  %v4935 = vpack.c.b16 %v4665, %v4660
  %v4936 = vpack.c.b16 %v4666, %v4661
  %v4937 = vpack.c.b16 %v4667, %v4662
  %v4938 = vpack.c.b16 %v4673, %v4668
  %v4939 = vpack.c.b16 %v4674, %v4669
  %v4940 = vpack.c.b16 %v4675, %v4670
  %v4941 = vpack.c.b16 %v4676, %v4671
  %v4942 = vpack.c.b16 %v4677, %v4672
  %v4943 = vpack.c.b16 %v4683, %v4678
  %v4944 = vpack.c.b16 %v4684, %v4679
  %v4945 = vpack.c.b16 %v4685, %v4680
  %v4946 = vpack.c.b16 %v4686, %v4681
  %v4947 = vpack.c.b16 %v4687, %v4682
  %v4948 = vpack.c.b16 %v4693, %v4688
  %v4949 = vpack.c.b16 %v4694, %v4689
  %v4950 = vpack.c.b16 %v4695, %v4690
  %v4951 = vpack.c.b16 %v4696, %v4691
  %v4952 = vpack.c.b16 %v4697, %v4692
  %v4953 = vpack.c.b16 %v4703, %v4698
  %v4954 = vpack.c.b16 %v4704, %v4699
  %v4955 = vpack.c.b16 %v4705, %v4700
  %v4956 = vpack.c.b16 %v4706, %v4701
  %v4957 = vpack.c.b16 %v4707, %v4702
  %v4958 = vpack.c.b16 %v4713, %v4708
  %v4959 = vpack.c.b16 %v4714, %v4709
  %v4960 = vpack.c.b16 %v4715, %v4710
  %v4961 = vpack.c.b16 %v4716, %v4711
  %v4962 = vpack.c.b16 %v4717, %v4712
  %v4963 = vpack.c.b16 %v4723, %v4718
  %v4964 = vpack.c.b16 %v4724, %v4719
  %v4965 = vpack.c.b16 %v4725, %v4720
  %v4966 = vpack.c.b16 %v4726, %v4721
  %v4967 = vpack.c.b16 %v4727, %v4722
  %5208 = vmatprep.subr.bf16.mxu0 %v4764
  %5209 = vmatpush1.bf16.msra.mxu0 %v4763
  %5210 = vmatprep.subr.bf16.mxu0 %v4759
  %5211 = vmatpush1.bf16.msra.mxu0 %v4758
  %5212 = vmatprep.subr.bf16.mxu0 %v4754
  %5213 = vmatpush1.bf16.msra.mxu0 %v4753
  %5214 = vmatprep.subr.bf16.mxu0 %v4749
  %5215 = vmatpush1.bf16.msra.mxu0 %v4748
  %5216 = vmatprep.subr.bf16.mxu0 %v4744
  %5217 = vmatpush1.bf16.msra.mxu0 %v4743
  %5218 = vmatprep.subr.bf16.mxu0 %v4739
  %5219 = vmatpush1.bf16.msra.mxu0 %v4738
  %5220 = vmatprep.subr.bf16.mxu0 %v4734
  %5221 = vmatpush1.bf16.msra.mxu0 %v4733
  %5222 = vmatprep.subr.bf16.mxu0 %v4729
  %5223 = vmatpush1.bf16.msra.mxu0 %v4728
  %5224 = vmatprep.subr.bf16.mxu0 %v4804
  %5225 = vmatpush2.bf16.msra.mxu0 %v4803
  %5226 = vmatprep.subr.bf16.mxu0 %v4799
  %5227 = vmatpush2.bf16.msra.mxu0 %v4798
  %5228 = vmatprep.subr.bf16.mxu0 %v4794
  %5229 = vmatpush2.bf16.msra.mxu0 %v4793
  %5230 = vmatprep.subr.bf16.mxu0 %v4789
  %5231 = vmatpush2.bf16.msra.mxu0 %v4788
  %5232 = vmatprep.subr.bf16.mxu0 %v4784
  %5233 = vmatpush2.bf16.msra.mxu0 %v4783
  %5234 = vmatprep.subr.bf16.mxu0 %v4779
  %5235 = vmatpush2.bf16.msra.mxu0 %v4778
  %5236 = vmatprep.subr.bf16.mxu0 %v4774
  %5237 = vmatpush2.bf16.msra.mxu0 %v4773
  %5238 = vmatprep.subr.bf16.mxu0 %v4769
  %5239 = vmatpush2.bf16.msra.mxu0 %v4768
  %5240 = vmatprep.mubr.bf16.mxu0 %v3649
  %5241 = vmatmul.mubr.bf16.gmra.mxu0 %v3648
  %v5242 = vpop.f32.mrf.mxu0
  %v5243 = vadd.f32 0.0, %v5242
  %v5244 = vpop.f32.mrf.mxu0
  %v5245 = vadd.f32 0.0, %v5244
  %v5246 = vpop.f32.mrf.mxu0
  %v5247 = vadd.f32 0.0, %v5246
  %v5248 = vpop.f32.mrf.mxu0
  %v5249 = vadd.f32 0.0, %v5248
  %5250 = vmatprep.mubr.bf16.mxu0 %v3655
  %5251 = vmatmul.mubr.bf16.gmra.mxu0 %v3654
  %v5252 = vpop.f32.mrf.mxu0
  %v5253 = vadd.f32 0.0, %v5252
  %v5254 = vpop.f32.mrf.mxu0
  %v5255 = vadd.f32 0.0, %v5254
  %v5256 = vpop.f32.mrf.mxu0
  %v5257 = vadd.f32 0.0, %v5256
  %v5258 = vpop.f32.mrf.mxu0
  %v5259 = vadd.f32 0.0, %v5258
  %5260 = vmatprep.mubr.bf16.mxu0 %v3661
  %5261 = vmatmul.mubr.bf16.gmra.mxu0 %v3660
  %v5262 = vpop.f32.mrf.mxu0
  %v5263 = vadd.f32 0.0, %v5262
  %v5264 = vpop.f32.mrf.mxu0
  %v5265 = vadd.f32 0.0, %v5264
  %v5266 = vpop.f32.mrf.mxu0
  %v5267 = vadd.f32 0.0, %v5266
  %v5268 = vpop.f32.mrf.mxu0
  %v5269 = vadd.f32 0.0, %v5268
  %5270 = vmatprep.mubr.bf16.mxu0 %v3667
  %5271 = vmatmul.mubr.bf16.gmra.mxu0 %v3666
  %v5272 = vpop.f32.mrf.mxu0
  %v5273 = vadd.f32 0.0, %v5272
  %v5274 = vpop.f32.mrf.mxu0
  %v5275 = vadd.f32 0.0, %v5274
  %v5276 = vpop.f32.mrf.mxu0
  %v5277 = vadd.f32 0.0, %v5276
  %v5278 = vpop.f32.mrf.mxu0
  %v5279 = vadd.f32 0.0, %v5278
  %5280 = vmatprep.mubr.bf16.mxu0 %v3673
  %5281 = vmatmul.mubr.bf16.gmra.mxu0 %v3672
  %v5282 = vpop.f32.mrf.mxu0
  %v5283 = vadd.f32 0.0, %v5282
  %v5284 = vpop.f32.mrf.mxu0
  %v5285 = vadd.f32 0.0, %v5284
  %v5286 = vpop.f32.mrf.mxu0
  %v5287 = vadd.f32 0.0, %v5286
  %v5288 = vpop.f32.mrf.mxu0
  %v5289 = vadd.f32 0.0, %v5288
  %5290 = vmatprep.mubr.bf16.mxu0 %v3679
  %5291 = vmatmul.mubr.bf16.gmra.mxu0 %v3678
  %v5292 = vpop.f32.mrf.mxu0
  %v5293 = vadd.f32 0.0, %v5292
  %v5294 = vpop.f32.mrf.mxu0
  %v5295 = vadd.f32 0.0, %v5294
  %v5296 = vpop.f32.mrf.mxu0
  %v5297 = vadd.f32 0.0, %v5296
  %v5298 = vpop.f32.mrf.mxu0
  %v5299 = vadd.f32 0.0, %v5298
  %5300 = vmatprep.mubr.bf16.mxu0 %v3685
  %5301 = vmatmul.mubr.bf16.gmra.mxu0 %v3684
  %v5302 = vpop.f32.mrf.mxu0
  %v5303 = vadd.f32 0.0, %v5302
  %v5304 = vpop.f32.mrf.mxu0
  %v5305 = vadd.f32 0.0, %v5304
  %v5306 = vpop.f32.mrf.mxu0
  %v5307 = vadd.f32 0.0, %v5306
  %v5308 = vpop.f32.mrf.mxu0
  %v5309 = vadd.f32 0.0, %v5308
  %5310 = vmatprep.mubr.bf16.mxu0 %v3691
  %5311 = vmatmul.mubr.bf16.gmra.mxu0 %v3690
  %v5312 = vpop.f32.mrf.mxu0
  %v5313 = vadd.f32 0.0, %v5312
  %v5314 = vpop.f32.mrf.mxu0
  %v5315 = vadd.f32 0.0, %v5314
  %v5316 = vpop.f32.mrf.mxu0
  %v5317 = vadd.f32 0.0, %v5316
  %v5318 = vpop.f32.mrf.mxu0
  %v5319 = vadd.f32 0.0, %v5318
  %5320 = vmatprep.mubr.bf16.mxu0 %v3697
  %5321 = vmatmul.mubr.bf16.gmra.mxu0 %v3696
  %v5322 = vpop.f32.mrf.mxu0
  %v5323 = vadd.f32 0.0, %v5322
  %v5324 = vpop.f32.mrf.mxu0
  %v5325 = vadd.f32 0.0, %v5324
  %v5326 = vpop.f32.mrf.mxu0
  %v5327 = vadd.f32 0.0, %v5326
  %v5328 = vpop.f32.mrf.mxu0
  %v5329 = vadd.f32 0.0, %v5328
  %5330 = vmatprep.mubr.bf16.mxu0 %v3703
  %5331 = vmatmul.mubr.bf16.gmra.mxu0 %v3702
  %v5332 = vpop.f32.mrf.mxu0
  %v5333 = vadd.f32 0.0, %v5332
  %v5334 = vpop.f32.mrf.mxu0
  %v5335 = vadd.f32 0.0, %v5334
  %v5336 = vpop.f32.mrf.mxu0
  %v5337 = vadd.f32 0.0, %v5336
  %v5338 = vpop.f32.mrf.mxu0
  %v5339 = vadd.f32 0.0, %v5338
  %5340 = vmatprep.mubr.bf16.mxu0 %v3709
  %5341 = vmatmul.mubr.bf16.gmra.mxu0 %v3708
  %v5342 = vpop.f32.mrf.mxu0
  %v5343 = vadd.f32 0.0, %v5342
  %v5344 = vpop.f32.mrf.mxu0
  %v5345 = vadd.f32 0.0, %v5344
  %v5346 = vpop.f32.mrf.mxu0
  %v5347 = vadd.f32 0.0, %v5346
  %v5348 = vpop.f32.mrf.mxu0
  %v5349 = vadd.f32 0.0, %v5348
  %5350 = vmatprep.mubr.bf16.mxu0 %v3715
  %5351 = vmatmul.mubr.bf16.gmra.mxu0 %v3714
  %v5352 = vpop.f32.mrf.mxu0
  %v5353 = vadd.f32 0.0, %v5352
  %v5354 = vpop.f32.mrf.mxu0
  %v5355 = vadd.f32 0.0, %v5354
  %v5356 = vpop.f32.mrf.mxu0
  %v5357 = vadd.f32 0.0, %v5356
  %v5358 = vpop.f32.mrf.mxu0
  %v5359 = vadd.f32 0.0, %v5358
  %5360 = vmatprep.mubr.bf16.mxu0 %v3721
  %5361 = vmatmul.mubr.bf16.gmra.mxu0 %v3720
  %v5362 = vpop.f32.mrf.mxu0
  %v5363 = vadd.f32 0.0, %v5362
  %v5364 = vpop.f32.mrf.mxu0
  %v5365 = vadd.f32 0.0, %v5364
  %v5366 = vpop.f32.mrf.mxu0
  %v5367 = vadd.f32 0.0, %v5366
  %v5368 = vpop.f32.mrf.mxu0
  %v5369 = vadd.f32 0.0, %v5368
  %5370 = vmatprep.mubr.bf16.mxu0 %v3727
  %5371 = vmatmul.mubr.bf16.gmra.mxu0 %v3726
  %v5372 = vpop.f32.mrf.mxu0
  %v5373 = vadd.f32 0.0, %v5372
  %v5374 = vpop.f32.mrf.mxu0
  %v5375 = vadd.f32 0.0, %v5374
  %v5376 = vpop.f32.mrf.mxu0
  %v5377 = vadd.f32 0.0, %v5376
  %v5378 = vpop.f32.mrf.mxu0
  %v5379 = vadd.f32 0.0, %v5378
  %5380 = vmatprep.mubr.bf16.mxu0 %v3733
  %5381 = vmatmul.mubr.bf16.gmra.mxu0 %v3732
  %v5382 = vpop.f32.mrf.mxu0
  %v5383 = vadd.f32 0.0, %v5382
  %v5384 = vpop.f32.mrf.mxu0
  %v5385 = vadd.f32 0.0, %v5384
  %v5386 = vpop.f32.mrf.mxu0
  %v5387 = vadd.f32 0.0, %v5386
  %v5388 = vpop.f32.mrf.mxu0
  %v5389 = vadd.f32 0.0, %v5388
  %5390 = vmatprep.mubr.bf16.mxu0 %v3739
  %5391 = vmatmul.mubr.bf16.gmra.mxu0 %v3738
  %v5392 = vpop.f32.mrf.mxu0
  %v5393 = vadd.f32 0.0, %v5392
  %v5394 = vpop.f32.mrf.mxu0
  %v5395 = vadd.f32 0.0, %v5394
  %v5396 = vpop.f32.mrf.mxu0
  %v5397 = vadd.f32 0.0, %v5396
  %v5398 = vpop.f32.mrf.mxu0
  %v5399 = vadd.f32 0.0, %v5398
  %5400 = vmatprep.mubr.bf16.mxu0 %v3745
  %5401 = vmatmul.mubr.bf16.gmra.mxu0 %v3744
  %v5402 = vpop.f32.mrf.mxu0
  %v5403 = vadd.f32 0.0, %v5402
  %v5404 = vpop.f32.mrf.mxu0
  %v5405 = vadd.f32 0.0, %v5404
  %v5406 = vpop.f32.mrf.mxu0
  %v5407 = vadd.f32 0.0, %v5406
  %v5408 = vpop.f32.mrf.mxu0
  %v5409 = vadd.f32 0.0, %v5408
  %5410 = vmatprep.mubr.bf16.mxu0 %v3751
  %5411 = vmatmul.mubr.bf16.gmra.mxu0 %v3750
  %v5412 = vpop.f32.mrf.mxu0
  %v5413 = vadd.f32 0.0, %v5412
  %v5414 = vpop.f32.mrf.mxu0
  %v5415 = vadd.f32 0.0, %v5414
  %v5416 = vpop.f32.mrf.mxu0
  %v5417 = vadd.f32 0.0, %v5416
  %v5418 = vpop.f32.mrf.mxu0
  %v5419 = vadd.f32 0.0, %v5418
  %5420 = vmatprep.mubr.bf16.mxu0 %v3757
  %5421 = vmatmul.mubr.bf16.gmra.mxu0 %v3756
  %v5422 = vpop.f32.mrf.mxu0
  %v5423 = vadd.f32 0.0, %v5422
  %v5424 = vpop.f32.mrf.mxu0
  %v5425 = vadd.f32 0.0, %v5424
  %v5426 = vpop.f32.mrf.mxu0
  %v5427 = vadd.f32 0.0, %v5426
  %v5428 = vpop.f32.mrf.mxu0
  %v5429 = vadd.f32 0.0, %v5428
  %5430 = vmatprep.mubr.bf16.mxu0 %v3763
  %5431 = vmatmul.mubr.bf16.gmra.mxu0 %v3762
  %v5432 = vpop.f32.mrf.mxu0
  %v5433 = vadd.f32 0.0, %v5432
  %v5434 = vpop.f32.mrf.mxu0
  %v5435 = vadd.f32 0.0, %v5434
  %v5436 = vpop.f32.mrf.mxu0
  %v5437 = vadd.f32 0.0, %v5436
  %v5438 = vpop.f32.mrf.mxu0
  %v5439 = vadd.f32 0.0, %v5438
  %5440 = vmatprep.mubr.bf16.mxu0 %v3769
  %5441 = vmatmul.mubr.bf16.gmra.mxu0 %v3768
  %v5442 = vpop.f32.mrf.mxu0
  %v5443 = vadd.f32 0.0, %v5442
  %v5444 = vpop.f32.mrf.mxu0
  %v5445 = vadd.f32 0.0, %v5444
  %v5446 = vpop.f32.mrf.mxu0
  %v5447 = vadd.f32 0.0, %v5446
  %v5448 = vpop.f32.mrf.mxu0
  %v5449 = vadd.f32 0.0, %v5448
  %5450 = vmatprep.mubr.bf16.mxu0 %v3775
  %5451 = vmatmul.mubr.bf16.gmra.mxu0 %v3774
  %v5452 = vpop.f32.mrf.mxu0
  %v5453 = vadd.f32 0.0, %v5452
  %v5454 = vpop.f32.mrf.mxu0
  %v5455 = vadd.f32 0.0, %v5454
  %v5456 = vpop.f32.mrf.mxu0
  %v5457 = vadd.f32 0.0, %v5456
  %v5458 = vpop.f32.mrf.mxu0
  %v5459 = vadd.f32 0.0, %v5458
  %5460 = vmatprep.mubr.bf16.mxu0 %v3781
  %5461 = vmatmul.mubr.bf16.gmra.mxu0 %v3780
  %v5462 = vpop.f32.mrf.mxu0
  %v5463 = vadd.f32 0.0, %v5462
  %v5464 = vpop.f32.mrf.mxu0
  %v5465 = vadd.f32 0.0, %v5464
  %v5466 = vpop.f32.mrf.mxu0
  %v5467 = vadd.f32 0.0, %v5466
  %v5468 = vpop.f32.mrf.mxu0
  %v5469 = vadd.f32 0.0, %v5468
  %5470 = vmatprep.mubr.bf16.mxu0 %v3787
  %5471 = vmatmul.mubr.bf16.gmra.mxu0 %v3786
  %v5472 = vpop.f32.mrf.mxu0
  %v5473 = vadd.f32 0.0, %v5472
  %v5474 = vpop.f32.mrf.mxu0
  %v5475 = vadd.f32 0.0, %v5474
  %v5476 = vpop.f32.mrf.mxu0
  %v5477 = vadd.f32 0.0, %v5476
  %v5478 = vpop.f32.mrf.mxu0
  %v5479 = vadd.f32 0.0, %v5478
  %5480 = vmatprep.mubr.bf16.mxu0 %v3793
  %5481 = vmatmul.mubr.bf16.gmra.mxu0 %v3792
  %v5482 = vpop.f32.mrf.mxu0
  %v5483 = vadd.f32 0.0, %v5482
  %v5484 = vpop.f32.mrf.mxu0
  %v5485 = vadd.f32 0.0, %v5484
  %v5486 = vpop.f32.mrf.mxu0
  %v5487 = vadd.f32 0.0, %v5486
  %v5488 = vpop.f32.mrf.mxu0
  %v5489 = vadd.f32 0.0, %v5488
  %5490 = vmatprep.mubr.bf16.mxu0 %v3799
  %5491 = vmatmul.mubr.bf16.gmra.mxu0 %v3798
  %v5492 = vpop.f32.mrf.mxu0
  %v5493 = vadd.f32 0.0, %v5492
  %v5494 = vpop.f32.mrf.mxu0
  %v5495 = vadd.f32 0.0, %v5494
  %v5496 = vpop.f32.mrf.mxu0
  %v5497 = vadd.f32 0.0, %v5496
  %v5498 = vpop.f32.mrf.mxu0
  %v5499 = vadd.f32 0.0, %v5498
  %5500 = vdwg.mxu0
  %5501 = vmatprep.subr.bf16.mxu0 %v4844
  %5502 = vmatpush1.bf16.msra.mxu0 %v4843
  %5503 = vmatprep.subr.bf16.mxu0 %v4839
  %5504 = vmatpush1.bf16.msra.mxu0 %v4838
  %5505 = vmatprep.subr.bf16.mxu0 %v4834
  %5506 = vmatpush1.bf16.msra.mxu0 %v4833
  %5507 = vmatprep.subr.bf16.mxu0 %v4829
  %5508 = vmatpush1.bf16.msra.mxu0 %v4828
  %5509 = vmatprep.subr.bf16.mxu0 %v4824
  %5510 = vmatpush1.bf16.msra.mxu0 %v4823
  %5511 = vmatprep.subr.bf16.mxu0 %v4819
  %5512 = vmatpush1.bf16.msra.mxu0 %v4818
  %5513 = vmatprep.subr.bf16.mxu0 %v4814
  %5514 = vmatpush1.bf16.msra.mxu0 %v4813
  %5515 = vmatprep.subr.bf16.mxu0 %v4809
  %5516 = vmatpush1.bf16.msra.mxu0 %v4808
  %5517 = vmatprep.subr.bf16.mxu0 %v4884
  %5518 = vmatpush2.bf16.msra.mxu0 %v4883
  %5519 = vmatprep.subr.bf16.mxu0 %v4879
  %5520 = vmatpush2.bf16.msra.mxu0 %v4878
  %5521 = vmatprep.subr.bf16.mxu0 %v4874
  %5522 = vmatpush2.bf16.msra.mxu0 %v4873
  %5523 = vmatprep.subr.bf16.mxu0 %v4869
  %5524 = vmatpush2.bf16.msra.mxu0 %v4868
  %5525 = vmatprep.subr.bf16.mxu0 %v4864
  %5526 = vmatpush2.bf16.msra.mxu0 %v4863
  %5527 = vmatprep.subr.bf16.mxu0 %v4859
  %5528 = vmatpush2.bf16.msra.mxu0 %v4858
  %5529 = vmatprep.subr.bf16.mxu0 %v4854
  %5530 = vmatpush2.bf16.msra.mxu0 %v4853
  %5531 = vmatprep.subr.bf16.mxu0 %v4849
  %5532 = vmatpush2.bf16.msra.mxu0 %v4848
  %5533 = vmatprep.mubr.bf16.mxu0 %v3651
  %5534 = vmatmul.mubr.bf16.gmra.mxu0 %v3650
  %v5535 = vpop.f32.mrf.mxu0
  %v5536 = vadd.f32 %v5243, %v5535
  %v5537 = vpop.f32.mrf.mxu0
  %v5538 = vadd.f32 %v5245, %v5537
  %v5539 = vpop.f32.mrf.mxu0
  %v5540 = vadd.f32 %v5247, %v5539
  %v5541 = vpop.f32.mrf.mxu0
  %v5542 = vadd.f32 %v5249, %v5541
  %5543 = vmatprep.mubr.bf16.mxu0 %v3657
  %5544 = vmatmul.mubr.bf16.gmra.mxu0 %v3656
  %v5545 = vpop.f32.mrf.mxu0
  %v5546 = vadd.f32 %v5253, %v5545
  %v5547 = vpop.f32.mrf.mxu0
  %v5548 = vadd.f32 %v5255, %v5547
  %v5549 = vpop.f32.mrf.mxu0
  %v5550 = vadd.f32 %v5257, %v5549
  %v5551 = vpop.f32.mrf.mxu0
  %v5552 = vadd.f32 %v5259, %v5551
  %5553 = vmatprep.mubr.bf16.mxu0 %v3663
  %5554 = vmatmul.mubr.bf16.gmra.mxu0 %v3662
  %v5555 = vpop.f32.mrf.mxu0
  %v5556 = vadd.f32 %v5263, %v5555
  %v5557 = vpop.f32.mrf.mxu0
  %v5558 = vadd.f32 %v5265, %v5557
  %v5559 = vpop.f32.mrf.mxu0
  %v5560 = vadd.f32 %v5267, %v5559
  %v5561 = vpop.f32.mrf.mxu0
  %v5562 = vadd.f32 %v5269, %v5561
  %5563 = vmatprep.mubr.bf16.mxu0 %v3669
  %5564 = vmatmul.mubr.bf16.gmra.mxu0 %v3668
  %v5565 = vpop.f32.mrf.mxu0
  %v5566 = vadd.f32 %v5273, %v5565
  %v5567 = vpop.f32.mrf.mxu0
  %v5568 = vadd.f32 %v5275, %v5567
  %v5569 = vpop.f32.mrf.mxu0
  %v5570 = vadd.f32 %v5277, %v5569
  %v5571 = vpop.f32.mrf.mxu0
  %v5572 = vadd.f32 %v5279, %v5571
  %5573 = vmatprep.mubr.bf16.mxu0 %v3675
  %5574 = vmatmul.mubr.bf16.gmra.mxu0 %v3674
  %v5575 = vpop.f32.mrf.mxu0
  %v5576 = vadd.f32 %v5283, %v5575
  %v5577 = vpop.f32.mrf.mxu0
  %v5578 = vadd.f32 %v5285, %v5577
  %v5579 = vpop.f32.mrf.mxu0
  %v5580 = vadd.f32 %v5287, %v5579
  %v5581 = vpop.f32.mrf.mxu0
  %v5582 = vadd.f32 %v5289, %v5581
  %5583 = vmatprep.mubr.bf16.mxu0 %v3681
  %5584 = vmatmul.mubr.bf16.gmra.mxu0 %v3680
  %v5585 = vpop.f32.mrf.mxu0
  %v5586 = vadd.f32 %v5293, %v5585
  %v5587 = vpop.f32.mrf.mxu0
  %v5588 = vadd.f32 %v5295, %v5587
  %v5589 = vpop.f32.mrf.mxu0
  %v5590 = vadd.f32 %v5297, %v5589
  %v5591 = vpop.f32.mrf.mxu0
  %v5592 = vadd.f32 %v5299, %v5591
  %5593 = vmatprep.mubr.bf16.mxu0 %v3687
  %5594 = vmatmul.mubr.bf16.gmra.mxu0 %v3686
  %v5595 = vpop.f32.mrf.mxu0
  %v5596 = vadd.f32 %v5303, %v5595
  %v5597 = vpop.f32.mrf.mxu0
  %v5598 = vadd.f32 %v5305, %v5597
  %v5599 = vpop.f32.mrf.mxu0
  %v5600 = vadd.f32 %v5307, %v5599
  %v5601 = vpop.f32.mrf.mxu0
  %v5602 = vadd.f32 %v5309, %v5601
  %5603 = vmatprep.mubr.bf16.mxu0 %v3693
  %5604 = vmatmul.mubr.bf16.gmra.mxu0 %v3692
  %v5605 = vpop.f32.mrf.mxu0
  %v5606 = vadd.f32 %v5313, %v5605
  %v5607 = vpop.f32.mrf.mxu0
  %v5608 = vadd.f32 %v5315, %v5607
  %v5609 = vpop.f32.mrf.mxu0
  %v5610 = vadd.f32 %v5317, %v5609
  %v5611 = vpop.f32.mrf.mxu0
  %v5612 = vadd.f32 %v5319, %v5611
  %5613 = vmatprep.mubr.bf16.mxu0 %v3699
  %5614 = vmatmul.mubr.bf16.gmra.mxu0 %v3698
  %v5615 = vpop.f32.mrf.mxu0
  %v5616 = vadd.f32 %v5323, %v5615
  %v5617 = vpop.f32.mrf.mxu0
  %v5618 = vadd.f32 %v5325, %v5617
  %v5619 = vpop.f32.mrf.mxu0
  %v5620 = vadd.f32 %v5327, %v5619
  %v5621 = vpop.f32.mrf.mxu0
  %v5622 = vadd.f32 %v5329, %v5621
  %5623 = vmatprep.mubr.bf16.mxu0 %v3705
  %5624 = vmatmul.mubr.bf16.gmra.mxu0 %v3704
  %v5625 = vpop.f32.mrf.mxu0
  %v5626 = vadd.f32 %v5333, %v5625
  %v5627 = vpop.f32.mrf.mxu0
  %v5628 = vadd.f32 %v5335, %v5627
  %v5629 = vpop.f32.mrf.mxu0
  %v5630 = vadd.f32 %v5337, %v5629
  %v5631 = vpop.f32.mrf.mxu0
  %v5632 = vadd.f32 %v5339, %v5631
  %5633 = vmatprep.mubr.bf16.mxu0 %v3711
  %5634 = vmatmul.mubr.bf16.gmra.mxu0 %v3710
  %v5635 = vpop.f32.mrf.mxu0
  %v5636 = vadd.f32 %v5343, %v5635
  %v5637 = vpop.f32.mrf.mxu0
  %v5638 = vadd.f32 %v5345, %v5637
  %v5639 = vpop.f32.mrf.mxu0
  %v5640 = vadd.f32 %v5347, %v5639
  %v5641 = vpop.f32.mrf.mxu0
  %v5642 = vadd.f32 %v5349, %v5641
  %5643 = vmatprep.mubr.bf16.mxu0 %v3717
  %5644 = vmatmul.mubr.bf16.gmra.mxu0 %v3716
  %v5645 = vpop.f32.mrf.mxu0
  %v5646 = vadd.f32 %v5353, %v5645
  %v5647 = vpop.f32.mrf.mxu0
  %v5648 = vadd.f32 %v5355, %v5647
  %v5649 = vpop.f32.mrf.mxu0
  %v5650 = vadd.f32 %v5357, %v5649
  %v5651 = vpop.f32.mrf.mxu0
  %v5652 = vadd.f32 %v5359, %v5651
  %5653 = vmatprep.mubr.bf16.mxu0 %v3723
  %5654 = vmatmul.mubr.bf16.gmra.mxu0 %v3722
  %v5655 = vpop.f32.mrf.mxu0
  %v5656 = vadd.f32 %v5363, %v5655
  %v5657 = vpop.f32.mrf.mxu0
  %v5658 = vadd.f32 %v5365, %v5657
  %v5659 = vpop.f32.mrf.mxu0
  %v5660 = vadd.f32 %v5367, %v5659
  %v5661 = vpop.f32.mrf.mxu0
  %v5662 = vadd.f32 %v5369, %v5661
  %5663 = vmatprep.mubr.bf16.mxu0 %v3729
  %5664 = vmatmul.mubr.bf16.gmra.mxu0 %v3728
  %v5665 = vpop.f32.mrf.mxu0
  %v5666 = vadd.f32 %v5373, %v5665
  %v5667 = vpop.f32.mrf.mxu0
  %v5668 = vadd.f32 %v5375, %v5667
  %v5669 = vpop.f32.mrf.mxu0
  %v5670 = vadd.f32 %v5377, %v5669
  %v5671 = vpop.f32.mrf.mxu0
  %v5672 = vadd.f32 %v5379, %v5671
  %5673 = vmatprep.mubr.bf16.mxu0 %v3735
  %5674 = vmatmul.mubr.bf16.gmra.mxu0 %v3734
  %v5675 = vpop.f32.mrf.mxu0
  %v5676 = vadd.f32 %v5383, %v5675
  %v5677 = vpop.f32.mrf.mxu0
  %v5678 = vadd.f32 %v5385, %v5677
  %v5679 = vpop.f32.mrf.mxu0
  %v5680 = vadd.f32 %v5387, %v5679
  %v5681 = vpop.f32.mrf.mxu0
  %v5682 = vadd.f32 %v5389, %v5681
  %5683 = vmatprep.mubr.bf16.mxu0 %v3741
  %5684 = vmatmul.mubr.bf16.gmra.mxu0 %v3740
  %v5685 = vpop.f32.mrf.mxu0
  %v5686 = vadd.f32 %v5393, %v5685
  %v5687 = vpop.f32.mrf.mxu0
  %v5688 = vadd.f32 %v5395, %v5687
  %v5689 = vpop.f32.mrf.mxu0
  %v5690 = vadd.f32 %v5397, %v5689
  %v5691 = vpop.f32.mrf.mxu0
  %v5692 = vadd.f32 %v5399, %v5691
  %5693 = vmatprep.mubr.bf16.mxu0 %v3747
  %5694 = vmatmul.mubr.bf16.gmra.mxu0 %v3746
  %v5695 = vpop.f32.mrf.mxu0
  %v5696 = vadd.f32 %v5403, %v5695
  %v5697 = vpop.f32.mrf.mxu0
  %v5698 = vadd.f32 %v5405, %v5697
  %v5699 = vpop.f32.mrf.mxu0
  %v5700 = vadd.f32 %v5407, %v5699
  %v5701 = vpop.f32.mrf.mxu0
  %v5702 = vadd.f32 %v5409, %v5701
  %5703 = vmatprep.mubr.bf16.mxu0 %v3753
  %5704 = vmatmul.mubr.bf16.gmra.mxu0 %v3752
  %v5705 = vpop.f32.mrf.mxu0
  %v5706 = vadd.f32 %v5413, %v5705
  %v5707 = vpop.f32.mrf.mxu0
  %v5708 = vadd.f32 %v5415, %v5707
  %v5709 = vpop.f32.mrf.mxu0
  %v5710 = vadd.f32 %v5417, %v5709
  %v5711 = vpop.f32.mrf.mxu0
  %v5712 = vadd.f32 %v5419, %v5711
  %5713 = vmatprep.mubr.bf16.mxu0 %v3759
  %5714 = vmatmul.mubr.bf16.gmra.mxu0 %v3758
  %v5715 = vpop.f32.mrf.mxu0
  %v5716 = vadd.f32 %v5423, %v5715
  %v5717 = vpop.f32.mrf.mxu0
  %v5718 = vadd.f32 %v5425, %v5717
  %v5719 = vpop.f32.mrf.mxu0
  %v5720 = vadd.f32 %v5427, %v5719
  %v5721 = vpop.f32.mrf.mxu0
  %v5722 = vadd.f32 %v5429, %v5721
  %5723 = vmatprep.mubr.bf16.mxu0 %v3765
  %5724 = vmatmul.mubr.bf16.gmra.mxu0 %v3764
  %v5725 = vpop.f32.mrf.mxu0
  %v5726 = vadd.f32 %v5433, %v5725
  %v5727 = vpop.f32.mrf.mxu0
  %v5728 = vadd.f32 %v5435, %v5727
  %v5729 = vpop.f32.mrf.mxu0
  %v5730 = vadd.f32 %v5437, %v5729
  %v5731 = vpop.f32.mrf.mxu0
  %v5732 = vadd.f32 %v5439, %v5731
  %5733 = vmatprep.mubr.bf16.mxu0 %v3771
  %5734 = vmatmul.mubr.bf16.gmra.mxu0 %v3770
  %v5735 = vpop.f32.mrf.mxu0
  %v5736 = vadd.f32 %v5443, %v5735
  %v5737 = vpop.f32.mrf.mxu0
  %v5738 = vadd.f32 %v5445, %v5737
  %v5739 = vpop.f32.mrf.mxu0
  %v5740 = vadd.f32 %v5447, %v5739
  %v5741 = vpop.f32.mrf.mxu0
  %v5742 = vadd.f32 %v5449, %v5741
  %5743 = vmatprep.mubr.bf16.mxu0 %v3777
  %5744 = vmatmul.mubr.bf16.gmra.mxu0 %v3776
  %v5745 = vpop.f32.mrf.mxu0
  %v5746 = vadd.f32 %v5453, %v5745
  %v5747 = vpop.f32.mrf.mxu0
  %v5748 = vadd.f32 %v5455, %v5747
  %v5749 = vpop.f32.mrf.mxu0
  %v5750 = vadd.f32 %v5457, %v5749
  %v5751 = vpop.f32.mrf.mxu0
  %v5752 = vadd.f32 %v5459, %v5751
  %5753 = vmatprep.mubr.bf16.mxu0 %v3783
  %5754 = vmatmul.mubr.bf16.gmra.mxu0 %v3782
  %v5755 = vpop.f32.mrf.mxu0
  %v5756 = vadd.f32 %v5463, %v5755
  %v5757 = vpop.f32.mrf.mxu0
  %v5758 = vadd.f32 %v5465, %v5757
  %v5759 = vpop.f32.mrf.mxu0
  %v5760 = vadd.f32 %v5467, %v5759
  %v5761 = vpop.f32.mrf.mxu0
  %v5762 = vadd.f32 %v5469, %v5761
  %5763 = vmatprep.mubr.bf16.mxu0 %v3789
  %5764 = vmatmul.mubr.bf16.gmra.mxu0 %v3788
  %v5765 = vpop.f32.mrf.mxu0
  %v5766 = vadd.f32 %v5473, %v5765
  %v5767 = vpop.f32.mrf.mxu0
  %v5768 = vadd.f32 %v5475, %v5767
  %v5769 = vpop.f32.mrf.mxu0
  %v5770 = vadd.f32 %v5477, %v5769
  %v5771 = vpop.f32.mrf.mxu0
  %v5772 = vadd.f32 %v5479, %v5771
  %5773 = vmatprep.mubr.bf16.mxu0 %v3795
  %5774 = vmatmul.mubr.bf16.gmra.mxu0 %v3794
  %v5775 = vpop.f32.mrf.mxu0
  %v5776 = vadd.f32 %v5483, %v5775
  %v5777 = vpop.f32.mrf.mxu0
  %v5778 = vadd.f32 %v5485, %v5777
  %v5779 = vpop.f32.mrf.mxu0
  %v5780 = vadd.f32 %v5487, %v5779
  %v5781 = vpop.f32.mrf.mxu0
  %v5782 = vadd.f32 %v5489, %v5781
  %5783 = vmatprep.mubr.bf16.mxu0 %v3801
  %5784 = vmatmul.mubr.bf16.gmra.mxu0 %v3800
  %v5785 = vpop.f32.mrf.mxu0
  %v5786 = vadd.f32 %v5493, %v5785
  %v5787 = vpop.f32.mrf.mxu0
  %v5788 = vadd.f32 %v5495, %v5787
  %v5789 = vpop.f32.mrf.mxu0
  %v5790 = vadd.f32 %v5497, %v5789
  %v5791 = vpop.f32.mrf.mxu0
  %v5792 = vadd.f32 %v5499, %v5791
  %5793 = vdwg.mxu0
  %5794 = vmatprep.subr.bf16.mxu0 %v4924
  %5795 = vmatpush1.bf16.msra.mxu0 %v4923
  %5796 = vmatprep.subr.bf16.mxu0 %v4919
  %5797 = vmatpush1.bf16.msra.mxu0 %v4918
  %5798 = vmatprep.subr.bf16.mxu0 %v4914
  %5799 = vmatpush1.bf16.msra.mxu0 %v4913
  %5800 = vmatprep.subr.bf16.mxu0 %v4909
  %5801 = vmatpush1.bf16.msra.mxu0 %v4908
  %5802 = vmatprep.subr.bf16.mxu0 %v4904
  %5803 = vmatpush1.bf16.msra.mxu0 %v4903
  %5804 = vmatprep.subr.bf16.mxu0 %v4899
  %5805 = vmatpush1.bf16.msra.mxu0 %v4898
  %5806 = vmatprep.subr.bf16.mxu0 %v4894
  %5807 = vmatpush1.bf16.msra.mxu0 %v4893
  %5808 = vmatprep.subr.bf16.mxu0 %v4889
  %5809 = vmatpush1.bf16.msra.mxu0 %v4888
  %5810 = vmatprep.subr.bf16.mxu0 %v4964
  %5811 = vmatpush2.bf16.msra.mxu0 %v4963
  %5812 = vmatprep.subr.bf16.mxu0 %v4959
  %5813 = vmatpush2.bf16.msra.mxu0 %v4958
  %5814 = vmatprep.subr.bf16.mxu0 %v4954
  %5815 = vmatpush2.bf16.msra.mxu0 %v4953
  %5816 = vmatprep.subr.bf16.mxu0 %v4949
  %5817 = vmatpush2.bf16.msra.mxu0 %v4948
  %5818 = vmatprep.subr.bf16.mxu0 %v4944
  %5819 = vmatpush2.bf16.msra.mxu0 %v4943
  %5820 = vmatprep.subr.bf16.mxu0 %v4939
  %5821 = vmatpush2.bf16.msra.mxu0 %v4938
  %5822 = vmatprep.subr.bf16.mxu0 %v4934
  %5823 = vmatpush2.bf16.msra.mxu0 %v4933
  %5824 = vmatprep.subr.bf16.mxu0 %v4929
  %5825 = vmatpush2.bf16.msra.mxu0 %v4928
  %5826 = vmatprep.mubr.bf16.mxu0 %v3653
  %5827 = vmatmul.mubr.bf16.gmra.mxu0 %v3652
  %v5828 = vpop.f32.mrf.mxu0
  %v5829 = vadd.f32 %v5536, %v5828
  %v5830 = vpop.f32.mrf.mxu0
  %v5831 = vadd.f32 %v5538, %v5830
  %v5832 = vpop.f32.mrf.mxu0
  %v5833 = vadd.f32 %v5540, %v5832
  %v5834 = vpop.f32.mrf.mxu0
  %v5835 = vadd.f32 %v5542, %v5834
  %5836 = vmatprep.mubr.bf16.mxu0 %v3659
  %5837 = vmatmul.mubr.bf16.gmra.mxu0 %v3658
  %v5838 = vpop.f32.mrf.mxu0
  %v5839 = vadd.f32 %v5546, %v5838
  %v5840 = vpop.f32.mrf.mxu0
  %v5841 = vadd.f32 %v5548, %v5840
  %v5842 = vpop.f32.mrf.mxu0
  %v5843 = vadd.f32 %v5550, %v5842
  %v5844 = vpop.f32.mrf.mxu0
  %v5845 = vadd.f32 %v5552, %v5844
  %5846 = vmatprep.mubr.bf16.mxu0 %v3665
  %5847 = vmatmul.mubr.bf16.gmra.mxu0 %v3664
  %v5848 = vpop.f32.mrf.mxu0
  %v5849 = vadd.f32 %v5556, %v5848
  %v5850 = vpop.f32.mrf.mxu0
  %v5851 = vadd.f32 %v5558, %v5850
  %v5852 = vpop.f32.mrf.mxu0
  %v5853 = vadd.f32 %v5560, %v5852
  %v5854 = vpop.f32.mrf.mxu0
  %v5855 = vadd.f32 %v5562, %v5854
  %5856 = vmatprep.mubr.bf16.mxu0 %v3671
  %5857 = vmatmul.mubr.bf16.gmra.mxu0 %v3670
  %v5858 = vpop.f32.mrf.mxu0
  %v5859 = vadd.f32 %v5566, %v5858
  %v5860 = vpop.f32.mrf.mxu0
  %v5861 = vadd.f32 %v5568, %v5860
  %v5862 = vpop.f32.mrf.mxu0
  %v5863 = vadd.f32 %v5570, %v5862
  %v5864 = vpop.f32.mrf.mxu0
  %v5865 = vadd.f32 %v5572, %v5864
  %5866 = vmatprep.mubr.bf16.mxu0 %v3677
  %5867 = vmatmul.mubr.bf16.gmra.mxu0 %v3676
  %v5868 = vpop.f32.mrf.mxu0
  %v5869 = vadd.f32 %v5576, %v5868
  %v5870 = vpop.f32.mrf.mxu0
  %v5871 = vadd.f32 %v5578, %v5870
  %v5872 = vpop.f32.mrf.mxu0
  %v5873 = vadd.f32 %v5580, %v5872
  %v5874 = vpop.f32.mrf.mxu0
  %v5875 = vadd.f32 %v5582, %v5874
  %5876 = vmatprep.mubr.bf16.mxu0 %v3683
  %5877 = vmatmul.mubr.bf16.gmra.mxu0 %v3682
  %v5878 = vpop.f32.mrf.mxu0
  %v5879 = vadd.f32 %v5586, %v5878
  %v5880 = vpop.f32.mrf.mxu0
  %v5881 = vadd.f32 %v5588, %v5880
  %v5882 = vpop.f32.mrf.mxu0
  %v5883 = vadd.f32 %v5590, %v5882
  %v5884 = vpop.f32.mrf.mxu0
  %v5885 = vadd.f32 %v5592, %v5884
  %5886 = vmatprep.mubr.bf16.mxu0 %v3689
  %5887 = vmatmul.mubr.bf16.gmra.mxu0 %v3688
  %v5888 = vpop.f32.mrf.mxu0
  %v5889 = vadd.f32 %v5596, %v5888
  %v5890 = vpop.f32.mrf.mxu0
  %v5891 = vadd.f32 %v5598, %v5890
  %v5892 = vpop.f32.mrf.mxu0
  %v5893 = vadd.f32 %v5600, %v5892
  %v5894 = vpop.f32.mrf.mxu0
  %v5895 = vadd.f32 %v5602, %v5894
  %5896 = vmatprep.mubr.bf16.mxu0 %v3695
  %5897 = vmatmul.mubr.bf16.gmra.mxu0 %v3694
  %v5898 = vpop.f32.mrf.mxu0
  %v5899 = vadd.f32 %v5606, %v5898
  %v5900 = vpop.f32.mrf.mxu0
  %v5901 = vadd.f32 %v5608, %v5900
  %v5902 = vpop.f32.mrf.mxu0
  %v5903 = vadd.f32 %v5610, %v5902
  %v5904 = vpop.f32.mrf.mxu0
  %v5905 = vadd.f32 %v5612, %v5904
  %5906 = vmatprep.mubr.bf16.mxu0 %v3701
  %5907 = vmatmul.mubr.bf16.gmra.mxu0 %v3700
  %v5908 = vpop.f32.mrf.mxu0
  %v5909 = vadd.f32 %v5616, %v5908
  %v5910 = vpop.f32.mrf.mxu0
  %v5911 = vadd.f32 %v5618, %v5910
  %v5912 = vpop.f32.mrf.mxu0
  %v5913 = vadd.f32 %v5620, %v5912
  %v5914 = vpop.f32.mrf.mxu0
  %v5915 = vadd.f32 %v5622, %v5914
  %5916 = vmatprep.mubr.bf16.mxu0 %v3707
  %5917 = vmatmul.mubr.bf16.gmra.mxu0 %v3706
  %v5918 = vpop.f32.mrf.mxu0
  %v5919 = vadd.f32 %v5626, %v5918
  %v5920 = vpop.f32.mrf.mxu0
  %v5921 = vadd.f32 %v5628, %v5920
  %v5922 = vpop.f32.mrf.mxu0
  %v5923 = vadd.f32 %v5630, %v5922
  %v5924 = vpop.f32.mrf.mxu0
  %v5925 = vadd.f32 %v5632, %v5924
  %5926 = vmatprep.mubr.bf16.mxu0 %v3713
  %5927 = vmatmul.mubr.bf16.gmra.mxu0 %v3712
  %v5928 = vpop.f32.mrf.mxu0
  %v5929 = vadd.f32 %v5636, %v5928
  %v5930 = vpop.f32.mrf.mxu0
  %v5931 = vadd.f32 %v5638, %v5930
  %v5932 = vpop.f32.mrf.mxu0
  %v5933 = vadd.f32 %v5640, %v5932
  %v5934 = vpop.f32.mrf.mxu0
  %v5935 = vadd.f32 %v5642, %v5934
  %5936 = vmatprep.mubr.bf16.mxu0 %v3719
  %5937 = vmatmul.mubr.bf16.gmra.mxu0 %v3718
  %v5938 = vpop.f32.mrf.mxu0
  %v5939 = vadd.f32 %v5646, %v5938
  %v5940 = vpop.f32.mrf.mxu0
  %v5941 = vadd.f32 %v5648, %v5940
  %v5942 = vpop.f32.mrf.mxu0
  %v5943 = vadd.f32 %v5650, %v5942
  %v5944 = vpop.f32.mrf.mxu0
  %v5945 = vadd.f32 %v5652, %v5944
  %5946 = vmatprep.mubr.bf16.mxu0 %v3725
  %5947 = vmatmul.mubr.bf16.gmra.mxu0 %v3724
  %v5948 = vpop.f32.mrf.mxu0
  %v5949 = vadd.f32 %v5656, %v5948
  %v5950 = vpop.f32.mrf.mxu0
  %v5951 = vadd.f32 %v5658, %v5950
  %v5952 = vpop.f32.mrf.mxu0
  %v5953 = vadd.f32 %v5660, %v5952
  %v5954 = vpop.f32.mrf.mxu0
  %v5955 = vadd.f32 %v5662, %v5954
  %5956 = vmatprep.mubr.bf16.mxu0 %v3731
  %5957 = vmatmul.mubr.bf16.gmra.mxu0 %v3730
  %v5958 = vpop.f32.mrf.mxu0
  %v5959 = vadd.f32 %v5666, %v5958
  %v5960 = vpop.f32.mrf.mxu0
  %v5961 = vadd.f32 %v5668, %v5960
  %v5962 = vpop.f32.mrf.mxu0
  %v5963 = vadd.f32 %v5670, %v5962
  %v5964 = vpop.f32.mrf.mxu0
  %v5965 = vadd.f32 %v5672, %v5964
  %5966 = vmatprep.mubr.bf16.mxu0 %v3737
  %5967 = vmatmul.mubr.bf16.gmra.mxu0 %v3736
  %v5968 = vpop.f32.mrf.mxu0
  %v5969 = vadd.f32 %v5676, %v5968
  %v5970 = vpop.f32.mrf.mxu0
  %v5971 = vadd.f32 %v5678, %v5970
  %v5972 = vpop.f32.mrf.mxu0
  %v5973 = vadd.f32 %v5680, %v5972
  %v5974 = vpop.f32.mrf.mxu0
  %v5975 = vadd.f32 %v5682, %v5974
  %5976 = vmatprep.mubr.bf16.mxu0 %v3743
  %5977 = vmatmul.mubr.bf16.gmra.mxu0 %v3742
  %v5978 = vpop.f32.mrf.mxu0
  %v5979 = vadd.f32 %v5686, %v5978
  %v5980 = vpop.f32.mrf.mxu0
  %v5981 = vadd.f32 %v5688, %v5980
  %v5982 = vpop.f32.mrf.mxu0
  %v5983 = vadd.f32 %v5690, %v5982
  %v5984 = vpop.f32.mrf.mxu0
  %v5985 = vadd.f32 %v5692, %v5984
  %5986 = vmatprep.mubr.bf16.mxu0 %v3749
  %5987 = vmatmul.mubr.bf16.gmra.mxu0 %v3748
  %v5988 = vpop.f32.mrf.mxu0
  %v5989 = vadd.f32 %v5696, %v5988
  %v5990 = vpop.f32.mrf.mxu0
  %v5991 = vadd.f32 %v5698, %v5990
  %v5992 = vpop.f32.mrf.mxu0
  %v5993 = vadd.f32 %v5700, %v5992
  %v5994 = vpop.f32.mrf.mxu0
  %v5995 = vadd.f32 %v5702, %v5994
  %5996 = vmatprep.mubr.bf16.mxu0 %v3755
  %5997 = vmatmul.mubr.bf16.gmra.mxu0 %v3754
  %v5998 = vpop.f32.mrf.mxu0
  %v5999 = vadd.f32 %v5706, %v5998
  %v6000 = vpop.f32.mrf.mxu0
  %v6001 = vadd.f32 %v5708, %v6000
  %v6002 = vpop.f32.mrf.mxu0
  %v6003 = vadd.f32 %v5710, %v6002
  %v6004 = vpop.f32.mrf.mxu0
  %v6005 = vadd.f32 %v5712, %v6004
  %6006 = vmatprep.mubr.bf16.mxu0 %v3761
  %6007 = vmatmul.mubr.bf16.gmra.mxu0 %v3760
  %v6008 = vpop.f32.mrf.mxu0
  %v6009 = vadd.f32 %v5716, %v6008
  %v6010 = vpop.f32.mrf.mxu0
  %v6011 = vadd.f32 %v5718, %v6010
  %v6012 = vpop.f32.mrf.mxu0
  %v6013 = vadd.f32 %v5720, %v6012
  %v6014 = vpop.f32.mrf.mxu0
  %v6015 = vadd.f32 %v5722, %v6014
  %6016 = vmatprep.mubr.bf16.mxu0 %v3767
  %6017 = vmatmul.mubr.bf16.gmra.mxu0 %v3766
  %v6018 = vpop.f32.mrf.mxu0
  %v6019 = vadd.f32 %v5726, %v6018
  %v6020 = vpop.f32.mrf.mxu0
  %v6021 = vadd.f32 %v5728, %v6020
  %v6022 = vpop.f32.mrf.mxu0
  %v6023 = vadd.f32 %v5730, %v6022
  %v6024 = vpop.f32.mrf.mxu0
  %v6025 = vadd.f32 %v5732, %v6024
  %6026 = vmatprep.mubr.bf16.mxu0 %v3773
  %6027 = vmatmul.mubr.bf16.gmra.mxu0 %v3772
  %v6028 = vpop.f32.mrf.mxu0
  %v6029 = vadd.f32 %v5736, %v6028
  %v6030 = vpop.f32.mrf.mxu0
  %v6031 = vadd.f32 %v5738, %v6030
  %v6032 = vpop.f32.mrf.mxu0
  %v6033 = vadd.f32 %v5740, %v6032
  %v6034 = vpop.f32.mrf.mxu0
  %v6035 = vadd.f32 %v5742, %v6034
  %6036 = vmatprep.mubr.bf16.mxu0 %v3779
  %6037 = vmatmul.mubr.bf16.gmra.mxu0 %v3778
  %v6038 = vpop.f32.mrf.mxu0
  %v6039 = vadd.f32 %v5746, %v6038
  %v6040 = vpop.f32.mrf.mxu0
  %v6041 = vadd.f32 %v5748, %v6040
  %v6042 = vpop.f32.mrf.mxu0
  %v6043 = vadd.f32 %v5750, %v6042
  %v6044 = vpop.f32.mrf.mxu0
  %v6045 = vadd.f32 %v5752, %v6044
  %6046 = vmatprep.mubr.bf16.mxu0 %v3785
  %6047 = vmatmul.mubr.bf16.gmra.mxu0 %v3784
  %v6048 = vpop.f32.mrf.mxu0
  %v6049 = vadd.f32 %v5756, %v6048
  %v6050 = vpop.f32.mrf.mxu0
  %v6051 = vadd.f32 %v5758, %v6050
  %v6052 = vpop.f32.mrf.mxu0
  %v6053 = vadd.f32 %v5760, %v6052
  %v6054 = vpop.f32.mrf.mxu0
  %v6055 = vadd.f32 %v5762, %v6054
  %6056 = vmatprep.mubr.bf16.mxu0 %v3791
  %6057 = vmatmul.mubr.bf16.gmra.mxu0 %v3790
  %v6058 = vpop.f32.mrf.mxu0
  %v6059 = vadd.f32 %v5766, %v6058
  %v6060 = vpop.f32.mrf.mxu0
  %v6061 = vadd.f32 %v5768, %v6060
  %v6062 = vpop.f32.mrf.mxu0
  %v6063 = vadd.f32 %v5770, %v6062
  %v6064 = vpop.f32.mrf.mxu0
  %v6065 = vadd.f32 %v5772, %v6064
  %6066 = vmatprep.mubr.bf16.mxu0 %v3797
  %6067 = vmatmul.mubr.bf16.gmra.mxu0 %v3796
  %v6068 = vpop.f32.mrf.mxu0
  %v6069 = vadd.f32 %v5776, %v6068
  %v6070 = vpop.f32.mrf.mxu0
  %v6071 = vadd.f32 %v5778, %v6070
  %v6072 = vpop.f32.mrf.mxu0
  %v6073 = vadd.f32 %v5780, %v6072
  %v6074 = vpop.f32.mrf.mxu0
  %v6075 = vadd.f32 %v5782, %v6074
  %6076 = vmatprep.mubr.bf16.mxu0 %v3803
  %6077 = vmatmul.mubr.bf16.gmra.mxu0 %v3802
  %v6078 = vpop.f32.mrf.mxu0
  %v6079 = vadd.f32 %v5786, %v6078
  %v6080 = vpop.f32.mrf.mxu0
  %v6081 = vadd.f32 %v5788, %v6080
  %v6082 = vpop.f32.mrf.mxu0
  %v6083 = vadd.f32 %v5790, %v6082
  %v6084 = vpop.f32.mrf.mxu0
  %v6085 = vadd.f32 %v5792, %v6084
  %6086 = vdwg.mxu0
  %6087 = vmatprep.subr.bf16.mxu0 %v4766
  %6088 = vmatpush1.bf16.msra.mxu0 %v4765
  %6089 = vmatprep.subr.bf16.mxu0 %v4761
  %6090 = vmatpush1.bf16.msra.mxu0 %v4760
  %6091 = vmatprep.subr.bf16.mxu0 %v4756
  %6092 = vmatpush1.bf16.msra.mxu0 %v4755
  %6093 = vmatprep.subr.bf16.mxu0 %v4751
  %6094 = vmatpush1.bf16.msra.mxu0 %v4750
  %6095 = vmatprep.subr.bf16.mxu0 %v4746
  %6096 = vmatpush1.bf16.msra.mxu0 %v4745
  %6097 = vmatprep.subr.bf16.mxu0 %v4741
  %6098 = vmatpush1.bf16.msra.mxu0 %v4740
  %6099 = vmatprep.subr.bf16.mxu0 %v4736
  %6100 = vmatpush1.bf16.msra.mxu0 %v4735
  %6101 = vmatprep.subr.bf16.mxu0 %v4731
  %6102 = vmatpush1.bf16.msra.mxu0 %v4730
  %6103 = vmatprep.subr.bf16.mxu0 %v4806
  %6104 = vmatpush2.bf16.msra.mxu0 %v4805
  %6105 = vmatprep.subr.bf16.mxu0 %v4801
  %6106 = vmatpush2.bf16.msra.mxu0 %v4800
  %6107 = vmatprep.subr.bf16.mxu0 %v4796
  %6108 = vmatpush2.bf16.msra.mxu0 %v4795
  %6109 = vmatprep.subr.bf16.mxu0 %v4791
  %6110 = vmatpush2.bf16.msra.mxu0 %v4790
  %6111 = vmatprep.subr.bf16.mxu0 %v4786
  %6112 = vmatpush2.bf16.msra.mxu0 %v4785
  %6113 = vmatprep.subr.bf16.mxu0 %v4781
  %6114 = vmatpush2.bf16.msra.mxu0 %v4780
  %6115 = vmatprep.subr.bf16.mxu0 %v4776
  %6116 = vmatpush2.bf16.msra.mxu0 %v4775
  %6117 = vmatprep.subr.bf16.mxu0 %v4771
  %6118 = vmatpush2.bf16.msra.mxu0 %v4770
  %6119 = vmatprep.mubr.bf16.mxu0 %v3649
  %6120 = vmatmul.mubr.bf16.gmra.mxu0 %v3648
  %v6121 = vpop.f32.mrf.mxu0
  %v6122 = vadd.f32 0.0, %v6121
  %v6123 = vpop.f32.mrf.mxu0
  %v6124 = vadd.f32 0.0, %v6123
  %v6125 = vpop.f32.mrf.mxu0
  %v6126 = vadd.f32 0.0, %v6125
  %v6127 = vpop.f32.mrf.mxu0
  %v6128 = vadd.f32 0.0, %v6127
  %6129 = vmatprep.mubr.bf16.mxu0 %v3655
  %6130 = vmatmul.mubr.bf16.gmra.mxu0 %v3654
  %v6131 = vpop.f32.mrf.mxu0
  %v6132 = vadd.f32 0.0, %v6131
  %v6133 = vpop.f32.mrf.mxu0
  %v6134 = vadd.f32 0.0, %v6133
  %v6135 = vpop.f32.mrf.mxu0
  %v6136 = vadd.f32 0.0, %v6135
  %v6137 = vpop.f32.mrf.mxu0
  %v6138 = vadd.f32 0.0, %v6137
  %6139 = vmatprep.mubr.bf16.mxu0 %v3661
  %6140 = vmatmul.mubr.bf16.gmra.mxu0 %v3660
  %v6141 = vpop.f32.mrf.mxu0
  %v6142 = vadd.f32 0.0, %v6141
  %v6143 = vpop.f32.mrf.mxu0
  %v6144 = vadd.f32 0.0, %v6143
  %v6145 = vpop.f32.mrf.mxu0
  %v6146 = vadd.f32 0.0, %v6145
  %v6147 = vpop.f32.mrf.mxu0
  %v6148 = vadd.f32 0.0, %v6147
  %6149 = vmatprep.mubr.bf16.mxu0 %v3667
  %6150 = vmatmul.mubr.bf16.gmra.mxu0 %v3666
  %v6151 = vpop.f32.mrf.mxu0
  %v6152 = vadd.f32 0.0, %v6151
  %v6153 = vpop.f32.mrf.mxu0
  %v6154 = vadd.f32 0.0, %v6153
  %v6155 = vpop.f32.mrf.mxu0
  %v6156 = vadd.f32 0.0, %v6155
  %v6157 = vpop.f32.mrf.mxu0
  %v6158 = vadd.f32 0.0, %v6157
  %6159 = vmatprep.mubr.bf16.mxu0 %v3673
  %6160 = vmatmul.mubr.bf16.gmra.mxu0 %v3672
  %v6161 = vpop.f32.mrf.mxu0
  %v6162 = vadd.f32 0.0, %v6161
  %v6163 = vpop.f32.mrf.mxu0
  %v6164 = vadd.f32 0.0, %v6163
  %v6165 = vpop.f32.mrf.mxu0
  %v6166 = vadd.f32 0.0, %v6165
  %v6167 = vpop.f32.mrf.mxu0
  %v6168 = vadd.f32 0.0, %v6167
  %6169 = vmatprep.mubr.bf16.mxu0 %v3679
  %6170 = vmatmul.mubr.bf16.gmra.mxu0 %v3678
  %v6171 = vpop.f32.mrf.mxu0
  %v6172 = vadd.f32 0.0, %v6171
  %v6173 = vpop.f32.mrf.mxu0
  %v6174 = vadd.f32 0.0, %v6173
  %v6175 = vpop.f32.mrf.mxu0
  %v6176 = vadd.f32 0.0, %v6175
  %v6177 = vpop.f32.mrf.mxu0
  %v6178 = vadd.f32 0.0, %v6177
  %6179 = vmatprep.mubr.bf16.mxu0 %v3685
  %6180 = vmatmul.mubr.bf16.gmra.mxu0 %v3684
  %v6181 = vpop.f32.mrf.mxu0
  %v6182 = vadd.f32 0.0, %v6181
  %v6183 = vpop.f32.mrf.mxu0
  %v6184 = vadd.f32 0.0, %v6183
  %v6185 = vpop.f32.mrf.mxu0
  %v6186 = vadd.f32 0.0, %v6185
  %v6187 = vpop.f32.mrf.mxu0
  %v6188 = vadd.f32 0.0, %v6187
  %6189 = vmatprep.mubr.bf16.mxu0 %v3691
  %6190 = vmatmul.mubr.bf16.gmra.mxu0 %v3690
  %v6191 = vpop.f32.mrf.mxu0
  %v6192 = vadd.f32 0.0, %v6191
  %v6193 = vpop.f32.mrf.mxu0
  %v6194 = vadd.f32 0.0, %v6193
  %v6195 = vpop.f32.mrf.mxu0
  %v6196 = vadd.f32 0.0, %v6195
  %v6197 = vpop.f32.mrf.mxu0
  %v6198 = vadd.f32 0.0, %v6197
  %6199 = vmatprep.mubr.bf16.mxu0 %v3697
  %6200 = vmatmul.mubr.bf16.gmra.mxu0 %v3696
  %v6201 = vpop.f32.mrf.mxu0
  %v6202 = vadd.f32 0.0, %v6201
  %v6203 = vpop.f32.mrf.mxu0
  %v6204 = vadd.f32 0.0, %v6203
  %v6205 = vpop.f32.mrf.mxu0
  %v6206 = vadd.f32 0.0, %v6205
  %v6207 = vpop.f32.mrf.mxu0
  %v6208 = vadd.f32 0.0, %v6207
  %6209 = vmatprep.mubr.bf16.mxu0 %v3703
  %6210 = vmatmul.mubr.bf16.gmra.mxu0 %v3702
  %v6211 = vpop.f32.mrf.mxu0
  %v6212 = vadd.f32 0.0, %v6211
  %v6213 = vpop.f32.mrf.mxu0
  %v6214 = vadd.f32 0.0, %v6213
  %v6215 = vpop.f32.mrf.mxu0
  %v6216 = vadd.f32 0.0, %v6215
  %v6217 = vpop.f32.mrf.mxu0
  %v6218 = vadd.f32 0.0, %v6217
  %6219 = vmatprep.mubr.bf16.mxu0 %v3709
  %6220 = vmatmul.mubr.bf16.gmra.mxu0 %v3708
  %v6221 = vpop.f32.mrf.mxu0
  %v6222 = vadd.f32 0.0, %v6221
  %v6223 = vpop.f32.mrf.mxu0
  %v6224 = vadd.f32 0.0, %v6223
  %v6225 = vpop.f32.mrf.mxu0
  %v6226 = vadd.f32 0.0, %v6225
  %v6227 = vpop.f32.mrf.mxu0
  %v6228 = vadd.f32 0.0, %v6227
  %6229 = vmatprep.mubr.bf16.mxu0 %v3715
  %6230 = vmatmul.mubr.bf16.gmra.mxu0 %v3714
  %v6231 = vpop.f32.mrf.mxu0
  %v6232 = vadd.f32 0.0, %v6231
  %v6233 = vpop.f32.mrf.mxu0
  %v6234 = vadd.f32 0.0, %v6233
  %v6235 = vpop.f32.mrf.mxu0
  %v6236 = vadd.f32 0.0, %v6235
  %v6237 = vpop.f32.mrf.mxu0
  %v6238 = vadd.f32 0.0, %v6237
  %6239 = vmatprep.mubr.bf16.mxu0 %v3721
  %6240 = vmatmul.mubr.bf16.gmra.mxu0 %v3720
  %v6241 = vpop.f32.mrf.mxu0
  %v6242 = vadd.f32 0.0, %v6241
  %v6243 = vpop.f32.mrf.mxu0
  %v6244 = vadd.f32 0.0, %v6243
  %v6245 = vpop.f32.mrf.mxu0
  %v6246 = vadd.f32 0.0, %v6245
  %v6247 = vpop.f32.mrf.mxu0
  %v6248 = vadd.f32 0.0, %v6247
  %6249 = vmatprep.mubr.bf16.mxu0 %v3727
  %6250 = vmatmul.mubr.bf16.gmra.mxu0 %v3726
  %v6251 = vpop.f32.mrf.mxu0
  %v6252 = vadd.f32 0.0, %v6251
  %v6253 = vpop.f32.mrf.mxu0
  %v6254 = vadd.f32 0.0, %v6253
  %v6255 = vpop.f32.mrf.mxu0
  %v6256 = vadd.f32 0.0, %v6255
  %v6257 = vpop.f32.mrf.mxu0
  %v6258 = vadd.f32 0.0, %v6257
  %6259 = vmatprep.mubr.bf16.mxu0 %v3733
  %6260 = vmatmul.mubr.bf16.gmra.mxu0 %v3732
  %v6261 = vpop.f32.mrf.mxu0
  %v6262 = vadd.f32 0.0, %v6261
  %v6263 = vpop.f32.mrf.mxu0
  %v6264 = vadd.f32 0.0, %v6263
  %v6265 = vpop.f32.mrf.mxu0
  %v6266 = vadd.f32 0.0, %v6265
  %v6267 = vpop.f32.mrf.mxu0
  %v6268 = vadd.f32 0.0, %v6267
  %6269 = vmatprep.mubr.bf16.mxu0 %v3739
  %6270 = vmatmul.mubr.bf16.gmra.mxu0 %v3738
  %v6271 = vpop.f32.mrf.mxu0
  %v6272 = vadd.f32 0.0, %v6271
  %v6273 = vpop.f32.mrf.mxu0
  %v6274 = vadd.f32 0.0, %v6273
  %v6275 = vpop.f32.mrf.mxu0
  %v6276 = vadd.f32 0.0, %v6275
  %v6277 = vpop.f32.mrf.mxu0
  %v6278 = vadd.f32 0.0, %v6277
  %6279 = vmatprep.mubr.bf16.mxu0 %v3745
  %6280 = vmatmul.mubr.bf16.gmra.mxu0 %v3744
  %v6281 = vpop.f32.mrf.mxu0
  %v6282 = vadd.f32 0.0, %v6281
  %v6283 = vpop.f32.mrf.mxu0
  %v6284 = vadd.f32 0.0, %v6283
  %v6285 = vpop.f32.mrf.mxu0
  %v6286 = vadd.f32 0.0, %v6285
  %v6287 = vpop.f32.mrf.mxu0
  %v6288 = vadd.f32 0.0, %v6287
  %6289 = vmatprep.mubr.bf16.mxu0 %v3751
  %6290 = vmatmul.mubr.bf16.gmra.mxu0 %v3750
  %v6291 = vpop.f32.mrf.mxu0
  %v6292 = vadd.f32 0.0, %v6291
  %v6293 = vpop.f32.mrf.mxu0
  %v6294 = vadd.f32 0.0, %v6293
  %v6295 = vpop.f32.mrf.mxu0
  %v6296 = vadd.f32 0.0, %v6295
  %v6297 = vpop.f32.mrf.mxu0
  %v6298 = vadd.f32 0.0, %v6297
  %6299 = vmatprep.mubr.bf16.mxu0 %v3757
  %6300 = vmatmul.mubr.bf16.gmra.mxu0 %v3756
  %v6301 = vpop.f32.mrf.mxu0
  %v6302 = vadd.f32 0.0, %v6301
  %v6303 = vpop.f32.mrf.mxu0
  %v6304 = vadd.f32 0.0, %v6303
  %v6305 = vpop.f32.mrf.mxu0
  %v6306 = vadd.f32 0.0, %v6305
  %v6307 = vpop.f32.mrf.mxu0
  %v6308 = vadd.f32 0.0, %v6307
  %6309 = vmatprep.mubr.bf16.mxu0 %v3763
  %6310 = vmatmul.mubr.bf16.gmra.mxu0 %v3762
  %v6311 = vpop.f32.mrf.mxu0
  %v6312 = vadd.f32 0.0, %v6311
  %v6313 = vpop.f32.mrf.mxu0
  %v6314 = vadd.f32 0.0, %v6313
  %v6315 = vpop.f32.mrf.mxu0
  %v6316 = vadd.f32 0.0, %v6315
  %v6317 = vpop.f32.mrf.mxu0
  %v6318 = vadd.f32 0.0, %v6317
  %6319 = vmatprep.mubr.bf16.mxu0 %v3769
  %6320 = vmatmul.mubr.bf16.gmra.mxu0 %v3768
  %v6321 = vpop.f32.mrf.mxu0
  %v6322 = vadd.f32 0.0, %v6321
  %v6323 = vpop.f32.mrf.mxu0
  %v6324 = vadd.f32 0.0, %v6323
  %v6325 = vpop.f32.mrf.mxu0
  %v6326 = vadd.f32 0.0, %v6325
  %v6327 = vpop.f32.mrf.mxu0
  %v6328 = vadd.f32 0.0, %v6327
  %6329 = vmatprep.mubr.bf16.mxu0 %v3775
  %6330 = vmatmul.mubr.bf16.gmra.mxu0 %v3774
  %v6331 = vpop.f32.mrf.mxu0
  %v6332 = vadd.f32 0.0, %v6331
  %v6333 = vpop.f32.mrf.mxu0
  %v6334 = vadd.f32 0.0, %v6333
  %v6335 = vpop.f32.mrf.mxu0
  %v6336 = vadd.f32 0.0, %v6335
  %v6337 = vpop.f32.mrf.mxu0
  %v6338 = vadd.f32 0.0, %v6337
  %6339 = vmatprep.mubr.bf16.mxu0 %v3781
  %6340 = vmatmul.mubr.bf16.gmra.mxu0 %v3780
  %v6341 = vpop.f32.mrf.mxu0
  %v6342 = vadd.f32 0.0, %v6341
  %v6343 = vpop.f32.mrf.mxu0
  %v6344 = vadd.f32 0.0, %v6343
  %v6345 = vpop.f32.mrf.mxu0
  %v6346 = vadd.f32 0.0, %v6345
  %v6347 = vpop.f32.mrf.mxu0
  %v6348 = vadd.f32 0.0, %v6347
  %6349 = vmatprep.mubr.bf16.mxu0 %v3787
  %6350 = vmatmul.mubr.bf16.gmra.mxu0 %v3786
  %v6351 = vpop.f32.mrf.mxu0
  %v6352 = vadd.f32 0.0, %v6351
  %v6353 = vpop.f32.mrf.mxu0
  %v6354 = vadd.f32 0.0, %v6353
  %v6355 = vpop.f32.mrf.mxu0
  %v6356 = vadd.f32 0.0, %v6355
  %v6357 = vpop.f32.mrf.mxu0
  %v6358 = vadd.f32 0.0, %v6357
  %6359 = vmatprep.mubr.bf16.mxu0 %v3793
  %6360 = vmatmul.mubr.bf16.gmra.mxu0 %v3792
  %v6361 = vpop.f32.mrf.mxu0
  %v6362 = vadd.f32 0.0, %v6361
  %v6363 = vpop.f32.mrf.mxu0
  %v6364 = vadd.f32 0.0, %v6363
  %v6365 = vpop.f32.mrf.mxu0
  %v6366 = vadd.f32 0.0, %v6365
  %v6367 = vpop.f32.mrf.mxu0
  %v6368 = vadd.f32 0.0, %v6367
  %6369 = vmatprep.mubr.bf16.mxu0 %v3799
  %6370 = vmatmul.mubr.bf16.gmra.mxu0 %v3798
  %v6371 = vpop.f32.mrf.mxu0
  %v6372 = vadd.f32 0.0, %v6371
  %v6373 = vpop.f32.mrf.mxu0
  %v6374 = vadd.f32 0.0, %v6373
  %v6375 = vpop.f32.mrf.mxu0
  %v6376 = vadd.f32 0.0, %v6375
  %v6377 = vpop.f32.mrf.mxu0
  %v6378 = vadd.f32 0.0, %v6377
  %6379 = vdwg.mxu0
  %6380 = vmatprep.subr.bf16.mxu0 %v4846
  %6381 = vmatpush1.bf16.msra.mxu0 %v4845
  %6382 = vmatprep.subr.bf16.mxu0 %v4841
  %6383 = vmatpush1.bf16.msra.mxu0 %v4840
  %6384 = vmatprep.subr.bf16.mxu0 %v4836
  %6385 = vmatpush1.bf16.msra.mxu0 %v4835
  %6386 = vmatprep.subr.bf16.mxu0 %v4831
  %6387 = vmatpush1.bf16.msra.mxu0 %v4830
  %6388 = vmatprep.subr.bf16.mxu0 %v4826
  %6389 = vmatpush1.bf16.msra.mxu0 %v4825
  %6390 = vmatprep.subr.bf16.mxu0 %v4821
  %6391 = vmatpush1.bf16.msra.mxu0 %v4820
  %6392 = vmatprep.subr.bf16.mxu0 %v4816
  %6393 = vmatpush1.bf16.msra.mxu0 %v4815
  %6394 = vmatprep.subr.bf16.mxu0 %v4811
  %6395 = vmatpush1.bf16.msra.mxu0 %v4810
  %6396 = vmatprep.subr.bf16.mxu0 %v4886
  %6397 = vmatpush2.bf16.msra.mxu0 %v4885
  %6398 = vmatprep.subr.bf16.mxu0 %v4881
  %6399 = vmatpush2.bf16.msra.mxu0 %v4880
  %6400 = vmatprep.subr.bf16.mxu0 %v4876
  %6401 = vmatpush2.bf16.msra.mxu0 %v4875
  %6402 = vmatprep.subr.bf16.mxu0 %v4871
  %6403 = vmatpush2.bf16.msra.mxu0 %v4870
  %6404 = vmatprep.subr.bf16.mxu0 %v4866
  %6405 = vmatpush2.bf16.msra.mxu0 %v4865
  %6406 = vmatprep.subr.bf16.mxu0 %v4861
  %6407 = vmatpush2.bf16.msra.mxu0 %v4860
  %6408 = vmatprep.subr.bf16.mxu0 %v4856
  %6409 = vmatpush2.bf16.msra.mxu0 %v4855
  %6410 = vmatprep.subr.bf16.mxu0 %v4851
  %6411 = vmatpush2.bf16.msra.mxu0 %v4850
  %6412 = vmatprep.mubr.bf16.mxu0 %v3651
  %6413 = vmatmul.mubr.bf16.gmra.mxu0 %v3650
  %v6414 = vpop.f32.mrf.mxu0
  %v6415 = vadd.f32 %v6122, %v6414
  %v6416 = vpop.f32.mrf.mxu0
  %v6417 = vadd.f32 %v6124, %v6416
  %v6418 = vpop.f32.mrf.mxu0
  %v6419 = vadd.f32 %v6126, %v6418
  %v6420 = vpop.f32.mrf.mxu0
  %v6421 = vadd.f32 %v6128, %v6420
  %6422 = vmatprep.mubr.bf16.mxu0 %v3657
  %6423 = vmatmul.mubr.bf16.gmra.mxu0 %v3656
  %v6424 = vpop.f32.mrf.mxu0
  %v6425 = vadd.f32 %v6132, %v6424
  %v6426 = vpop.f32.mrf.mxu0
  %v6427 = vadd.f32 %v6134, %v6426
  %v6428 = vpop.f32.mrf.mxu0
  %v6429 = vadd.f32 %v6136, %v6428
  %v6430 = vpop.f32.mrf.mxu0
  %v6431 = vadd.f32 %v6138, %v6430
  %6432 = vmatprep.mubr.bf16.mxu0 %v3663
  %6433 = vmatmul.mubr.bf16.gmra.mxu0 %v3662
  %v6434 = vpop.f32.mrf.mxu0
  %v6435 = vadd.f32 %v6142, %v6434
  %v6436 = vpop.f32.mrf.mxu0
  %v6437 = vadd.f32 %v6144, %v6436
  %v6438 = vpop.f32.mrf.mxu0
  %v6439 = vadd.f32 %v6146, %v6438
  %v6440 = vpop.f32.mrf.mxu0
  %v6441 = vadd.f32 %v6148, %v6440
  %6442 = vmatprep.mubr.bf16.mxu0 %v3669
  %6443 = vmatmul.mubr.bf16.gmra.mxu0 %v3668
  %v6444 = vpop.f32.mrf.mxu0
  %v6445 = vadd.f32 %v6152, %v6444
  %v6446 = vpop.f32.mrf.mxu0
  %v6447 = vadd.f32 %v6154, %v6446
  %v6448 = vpop.f32.mrf.mxu0
  %v6449 = vadd.f32 %v6156, %v6448
  %v6450 = vpop.f32.mrf.mxu0
  %v6451 = vadd.f32 %v6158, %v6450
  %6452 = vmatprep.mubr.bf16.mxu0 %v3675
  %6453 = vmatmul.mubr.bf16.gmra.mxu0 %v3674
  %v6454 = vpop.f32.mrf.mxu0
  %v6455 = vadd.f32 %v6162, %v6454
  %v6456 = vpop.f32.mrf.mxu0
  %v6457 = vadd.f32 %v6164, %v6456
  %v6458 = vpop.f32.mrf.mxu0
  %v6459 = vadd.f32 %v6166, %v6458
  %v6460 = vpop.f32.mrf.mxu0
  %v6461 = vadd.f32 %v6168, %v6460
  %6462 = vmatprep.mubr.bf16.mxu0 %v3681
  %6463 = vmatmul.mubr.bf16.gmra.mxu0 %v3680
  %v6464 = vpop.f32.mrf.mxu0
  %v6465 = vadd.f32 %v6172, %v6464
  %v6466 = vpop.f32.mrf.mxu0
  %v6467 = vadd.f32 %v6174, %v6466
  %v6468 = vpop.f32.mrf.mxu0
  %v6469 = vadd.f32 %v6176, %v6468
  %v6470 = vpop.f32.mrf.mxu0
  %v6471 = vadd.f32 %v6178, %v6470
  %6472 = vmatprep.mubr.bf16.mxu0 %v3687
  %6473 = vmatmul.mubr.bf16.gmra.mxu0 %v3686
  %v6474 = vpop.f32.mrf.mxu0
  %v6475 = vadd.f32 %v6182, %v6474
  %v6476 = vpop.f32.mrf.mxu0
  %v6477 = vadd.f32 %v6184, %v6476
  %v6478 = vpop.f32.mrf.mxu0
  %v6479 = vadd.f32 %v6186, %v6478
  %v6480 = vpop.f32.mrf.mxu0
  %v6481 = vadd.f32 %v6188, %v6480
  %6482 = vmatprep.mubr.bf16.mxu0 %v3693
  %6483 = vmatmul.mubr.bf16.gmra.mxu0 %v3692
  %v6484 = vpop.f32.mrf.mxu0
  %v6485 = vadd.f32 %v6192, %v6484
  %v6486 = vpop.f32.mrf.mxu0
  %v6487 = vadd.f32 %v6194, %v6486
  %v6488 = vpop.f32.mrf.mxu0
  %v6489 = vadd.f32 %v6196, %v6488
  %v6490 = vpop.f32.mrf.mxu0
  %v6491 = vadd.f32 %v6198, %v6490
  %6492 = vmatprep.mubr.bf16.mxu0 %v3699
  %6493 = vmatmul.mubr.bf16.gmra.mxu0 %v3698
  %v6494 = vpop.f32.mrf.mxu0
  %v6495 = vadd.f32 %v6202, %v6494
  %v6496 = vpop.f32.mrf.mxu0
  %v6497 = vadd.f32 %v6204, %v6496
  %v6498 = vpop.f32.mrf.mxu0
  %v6499 = vadd.f32 %v6206, %v6498
  %v6500 = vpop.f32.mrf.mxu0
  %v6501 = vadd.f32 %v6208, %v6500
  %6502 = vmatprep.mubr.bf16.mxu0 %v3705
  %6503 = vmatmul.mubr.bf16.gmra.mxu0 %v3704
  %v6504 = vpop.f32.mrf.mxu0
  %v6505 = vadd.f32 %v6212, %v6504
  %v6506 = vpop.f32.mrf.mxu0
  %v6507 = vadd.f32 %v6214, %v6506
  %v6508 = vpop.f32.mrf.mxu0
  %v6509 = vadd.f32 %v6216, %v6508
  %v6510 = vpop.f32.mrf.mxu0
  %v6511 = vadd.f32 %v6218, %v6510
  %6512 = vmatprep.mubr.bf16.mxu0 %v3711
  %6513 = vmatmul.mubr.bf16.gmra.mxu0 %v3710
  %v6514 = vpop.f32.mrf.mxu0
  %v6515 = vadd.f32 %v6222, %v6514
  %v6516 = vpop.f32.mrf.mxu0
  %v6517 = vadd.f32 %v6224, %v6516
  %v6518 = vpop.f32.mrf.mxu0
  %v6519 = vadd.f32 %v6226, %v6518
  %v6520 = vpop.f32.mrf.mxu0
  %v6521 = vadd.f32 %v6228, %v6520
  %6522 = vmatprep.mubr.bf16.mxu0 %v3717
  %6523 = vmatmul.mubr.bf16.gmra.mxu0 %v3716
  %v6524 = vpop.f32.mrf.mxu0
  %v6525 = vadd.f32 %v6232, %v6524
  %v6526 = vpop.f32.mrf.mxu0
  %v6527 = vadd.f32 %v6234, %v6526
  %v6528 = vpop.f32.mrf.mxu0
  %v6529 = vadd.f32 %v6236, %v6528
  %v6530 = vpop.f32.mrf.mxu0
  %v6531 = vadd.f32 %v6238, %v6530
  %6532 = vmatprep.mubr.bf16.mxu0 %v3723
  %6533 = vmatmul.mubr.bf16.gmra.mxu0 %v3722
  %v6534 = vpop.f32.mrf.mxu0
  %v6535 = vadd.f32 %v6242, %v6534
  %v6536 = vpop.f32.mrf.mxu0
  %v6537 = vadd.f32 %v6244, %v6536
  %v6538 = vpop.f32.mrf.mxu0
  %v6539 = vadd.f32 %v6246, %v6538
  %v6540 = vpop.f32.mrf.mxu0
  %v6541 = vadd.f32 %v6248, %v6540
  %6542 = vmatprep.mubr.bf16.mxu0 %v3729
  %6543 = vmatmul.mubr.bf16.gmra.mxu0 %v3728
  %v6544 = vpop.f32.mrf.mxu0
  %v6545 = vadd.f32 %v6252, %v6544
  %v6546 = vpop.f32.mrf.mxu0
  %v6547 = vadd.f32 %v6254, %v6546
  %v6548 = vpop.f32.mrf.mxu0
  %v6549 = vadd.f32 %v6256, %v6548
  %v6550 = vpop.f32.mrf.mxu0
  %v6551 = vadd.f32 %v6258, %v6550
  %6552 = vmatprep.mubr.bf16.mxu0 %v3735
  %6553 = vmatmul.mubr.bf16.gmra.mxu0 %v3734
  %v6554 = vpop.f32.mrf.mxu0
  %v6555 = vadd.f32 %v6262, %v6554
  %v6556 = vpop.f32.mrf.mxu0
  %v6557 = vadd.f32 %v6264, %v6556
  %v6558 = vpop.f32.mrf.mxu0
  %v6559 = vadd.f32 %v6266, %v6558
  %v6560 = vpop.f32.mrf.mxu0
  %v6561 = vadd.f32 %v6268, %v6560
  %6562 = vmatprep.mubr.bf16.mxu0 %v3741
  %6563 = vmatmul.mubr.bf16.gmra.mxu0 %v3740
  %v6564 = vpop.f32.mrf.mxu0
  %v6565 = vadd.f32 %v6272, %v6564
  %v6566 = vpop.f32.mrf.mxu0
  %v6567 = vadd.f32 %v6274, %v6566
  %v6568 = vpop.f32.mrf.mxu0
  %v6569 = vadd.f32 %v6276, %v6568
  %v6570 = vpop.f32.mrf.mxu0
  %v6571 = vadd.f32 %v6278, %v6570
  %6572 = vmatprep.mubr.bf16.mxu0 %v3747
  %6573 = vmatmul.mubr.bf16.gmra.mxu0 %v3746
  %v6574 = vpop.f32.mrf.mxu0
  %v6575 = vadd.f32 %v6282, %v6574
  %v6576 = vpop.f32.mrf.mxu0
  %v6577 = vadd.f32 %v6284, %v6576
  %v6578 = vpop.f32.mrf.mxu0
  %v6579 = vadd.f32 %v6286, %v6578
  %v6580 = vpop.f32.mrf.mxu0
  %v6581 = vadd.f32 %v6288, %v6580
  %6582 = vmatprep.mubr.bf16.mxu0 %v3753
  %6583 = vmatmul.mubr.bf16.gmra.mxu0 %v3752
  %v6584 = vpop.f32.mrf.mxu0
  %v6585 = vadd.f32 %v6292, %v6584
  %v6586 = vpop.f32.mrf.mxu0
  %v6587 = vadd.f32 %v6294, %v6586
  %v6588 = vpop.f32.mrf.mxu0
  %v6589 = vadd.f32 %v6296, %v6588
  %v6590 = vpop.f32.mrf.mxu0
  %v6591 = vadd.f32 %v6298, %v6590
  %6592 = vmatprep.mubr.bf16.mxu0 %v3759
  %6593 = vmatmul.mubr.bf16.gmra.mxu0 %v3758
  %v6594 = vpop.f32.mrf.mxu0
  %v6595 = vadd.f32 %v6302, %v6594
  %v6596 = vpop.f32.mrf.mxu0
  %v6597 = vadd.f32 %v6304, %v6596
  %v6598 = vpop.f32.mrf.mxu0
  %v6599 = vadd.f32 %v6306, %v6598
  %v6600 = vpop.f32.mrf.mxu0
  %v6601 = vadd.f32 %v6308, %v6600
  %6602 = vmatprep.mubr.bf16.mxu0 %v3765
  %6603 = vmatmul.mubr.bf16.gmra.mxu0 %v3764
  %v6604 = vpop.f32.mrf.mxu0
  %v6605 = vadd.f32 %v6312, %v6604
  %v6606 = vpop.f32.mrf.mxu0
  %v6607 = vadd.f32 %v6314, %v6606
  %v6608 = vpop.f32.mrf.mxu0
  %v6609 = vadd.f32 %v6316, %v6608
  %v6610 = vpop.f32.mrf.mxu0
  %v6611 = vadd.f32 %v6318, %v6610
  %6612 = vmatprep.mubr.bf16.mxu0 %v3771
  %6613 = vmatmul.mubr.bf16.gmra.mxu0 %v3770
  %v6614 = vpop.f32.mrf.mxu0
  %v6615 = vadd.f32 %v6322, %v6614
  %v6616 = vpop.f32.mrf.mxu0
  %v6617 = vadd.f32 %v6324, %v6616
  %v6618 = vpop.f32.mrf.mxu0
  %v6619 = vadd.f32 %v6326, %v6618
  %v6620 = vpop.f32.mrf.mxu0
  %v6621 = vadd.f32 %v6328, %v6620
  %6622 = vmatprep.mubr.bf16.mxu0 %v3777
  %6623 = vmatmul.mubr.bf16.gmra.mxu0 %v3776
  %v6624 = vpop.f32.mrf.mxu0
  %v6625 = vadd.f32 %v6332, %v6624
  %v6626 = vpop.f32.mrf.mxu0
  %v6627 = vadd.f32 %v6334, %v6626
  %v6628 = vpop.f32.mrf.mxu0
  %v6629 = vadd.f32 %v6336, %v6628
  %v6630 = vpop.f32.mrf.mxu0
  %v6631 = vadd.f32 %v6338, %v6630
  %6632 = vmatprep.mubr.bf16.mxu0 %v3783
  %6633 = vmatmul.mubr.bf16.gmra.mxu0 %v3782
  %v6634 = vpop.f32.mrf.mxu0
  %v6635 = vadd.f32 %v6342, %v6634
  %v6636 = vpop.f32.mrf.mxu0
  %v6637 = vadd.f32 %v6344, %v6636
  %v6638 = vpop.f32.mrf.mxu0
  %v6639 = vadd.f32 %v6346, %v6638
  %v6640 = vpop.f32.mrf.mxu0
  %v6641 = vadd.f32 %v6348, %v6640
  %6642 = vmatprep.mubr.bf16.mxu0 %v3789
  %6643 = vmatmul.mubr.bf16.gmra.mxu0 %v3788
  %v6644 = vpop.f32.mrf.mxu0
  %v6645 = vadd.f32 %v6352, %v6644
  %v6646 = vpop.f32.mrf.mxu0
  %v6647 = vadd.f32 %v6354, %v6646
  %v6648 = vpop.f32.mrf.mxu0
  %v6649 = vadd.f32 %v6356, %v6648
  %v6650 = vpop.f32.mrf.mxu0
  %v6651 = vadd.f32 %v6358, %v6650
  %6652 = vmatprep.mubr.bf16.mxu0 %v3795
  %6653 = vmatmul.mubr.bf16.gmra.mxu0 %v3794
  %v6654 = vpop.f32.mrf.mxu0
  %v6655 = vadd.f32 %v6362, %v6654
  %v6656 = vpop.f32.mrf.mxu0
  %v6657 = vadd.f32 %v6364, %v6656
  %v6658 = vpop.f32.mrf.mxu0
  %v6659 = vadd.f32 %v6366, %v6658
  %v6660 = vpop.f32.mrf.mxu0
  %v6661 = vadd.f32 %v6368, %v6660
  %6662 = vmatprep.mubr.bf16.mxu0 %v3801
  %6663 = vmatmul.mubr.bf16.gmra.mxu0 %v3800
  %v6664 = vpop.f32.mrf.mxu0
  %v6665 = vadd.f32 %v6372, %v6664
  %v6666 = vpop.f32.mrf.mxu0
  %v6667 = vadd.f32 %v6374, %v6666
  %v6668 = vpop.f32.mrf.mxu0
  %v6669 = vadd.f32 %v6376, %v6668
  %v6670 = vpop.f32.mrf.mxu0
  %v6671 = vadd.f32 %v6378, %v6670
  %6672 = vdwg.mxu0
  %6673 = vmatprep.subr.bf16.mxu0 %v4926
  %6674 = vmatpush1.bf16.msra.mxu0 %v4925
  %6675 = vmatprep.subr.bf16.mxu0 %v4921
  %6676 = vmatpush1.bf16.msra.mxu0 %v4920
  %6677 = vmatprep.subr.bf16.mxu0 %v4916
  %6678 = vmatpush1.bf16.msra.mxu0 %v4915
  %6679 = vmatprep.subr.bf16.mxu0 %v4911
  %6680 = vmatpush1.bf16.msra.mxu0 %v4910
  %6681 = vmatprep.subr.bf16.mxu0 %v4906
  %6682 = vmatpush1.bf16.msra.mxu0 %v4905
  %6683 = vmatprep.subr.bf16.mxu0 %v4901
  %6684 = vmatpush1.bf16.msra.mxu0 %v4900
  %6685 = vmatprep.subr.bf16.mxu0 %v4896
  %6686 = vmatpush1.bf16.msra.mxu0 %v4895
  %6687 = vmatprep.subr.bf16.mxu0 %v4891
  %6688 = vmatpush1.bf16.msra.mxu0 %v4890
  %6689 = vmatprep.subr.bf16.mxu0 %v4966
  %6690 = vmatpush2.bf16.msra.mxu0 %v4965
  %6691 = vmatprep.subr.bf16.mxu0 %v4961
  %6692 = vmatpush2.bf16.msra.mxu0 %v4960
  %6693 = vmatprep.subr.bf16.mxu0 %v4956
  %6694 = vmatpush2.bf16.msra.mxu0 %v4955
  %6695 = vmatprep.subr.bf16.mxu0 %v4951
  %6696 = vmatpush2.bf16.msra.mxu0 %v4950
  %6697 = vmatprep.subr.bf16.mxu0 %v4946
  %6698 = vmatpush2.bf16.msra.mxu0 %v4945
  %6699 = vmatprep.subr.bf16.mxu0 %v4941
  %6700 = vmatpush2.bf16.msra.mxu0 %v4940
  %6701 = vmatprep.subr.bf16.mxu0 %v4936
  %6702 = vmatpush2.bf16.msra.mxu0 %v4935
  %6703 = vmatprep.subr.bf16.mxu0 %v4931
  %6704 = vmatpush2.bf16.msra.mxu0 %v4930
  %6705 = vmatprep.mubr.bf16.mxu0 %v3653
  %6706 = vmatmul.mubr.bf16.gmra.mxu0 %v3652
  %v6707 = vpop.f32.mrf.mxu0
  %v6708 = vadd.f32 %v6415, %v6707
  %v6709 = vpop.f32.mrf.mxu0
  %v6710 = vadd.f32 %v6417, %v6709
  %v6711 = vpop.f32.mrf.mxu0
  %v6712 = vadd.f32 %v6419, %v6711
  %v6713 = vpop.f32.mrf.mxu0
  %v6714 = vadd.f32 %v6421, %v6713
  %6715 = vmatprep.mubr.bf16.mxu0 %v3659
  %6716 = vmatmul.mubr.bf16.gmra.mxu0 %v3658
  %v6717 = vpop.f32.mrf.mxu0
  %v6718 = vadd.f32 %v6425, %v6717
  %v6719 = vpop.f32.mrf.mxu0
  %v6720 = vadd.f32 %v6427, %v6719
  %v6721 = vpop.f32.mrf.mxu0
  %v6722 = vadd.f32 %v6429, %v6721
  %v6723 = vpop.f32.mrf.mxu0
  %v6724 = vadd.f32 %v6431, %v6723
  %6725 = vmatprep.mubr.bf16.mxu0 %v3665
  %6726 = vmatmul.mubr.bf16.gmra.mxu0 %v3664
  %v6727 = vpop.f32.mrf.mxu0
  %v6728 = vadd.f32 %v6435, %v6727
  %v6729 = vpop.f32.mrf.mxu0
  %v6730 = vadd.f32 %v6437, %v6729
  %v6731 = vpop.f32.mrf.mxu0
  %v6732 = vadd.f32 %v6439, %v6731
  %v6733 = vpop.f32.mrf.mxu0
  %v6734 = vadd.f32 %v6441, %v6733
  %6735 = vmatprep.mubr.bf16.mxu0 %v3671
  %6736 = vmatmul.mubr.bf16.gmra.mxu0 %v3670
  %v6737 = vpop.f32.mrf.mxu0
  %v6738 = vadd.f32 %v6445, %v6737
  %v6739 = vpop.f32.mrf.mxu0
  %v6740 = vadd.f32 %v6447, %v6739
  %v6741 = vpop.f32.mrf.mxu0
  %v6742 = vadd.f32 %v6449, %v6741
  %v6743 = vpop.f32.mrf.mxu0
  %v6744 = vadd.f32 %v6451, %v6743
  %6745 = vmatprep.mubr.bf16.mxu0 %v3677
  %6746 = vmatmul.mubr.bf16.gmra.mxu0 %v3676
  %v6747 = vpop.f32.mrf.mxu0
  %v6748 = vadd.f32 %v6455, %v6747
  %v6749 = vpop.f32.mrf.mxu0
  %v6750 = vadd.f32 %v6457, %v6749
  %v6751 = vpop.f32.mrf.mxu0
  %v6752 = vadd.f32 %v6459, %v6751
  %v6753 = vpop.f32.mrf.mxu0
  %v6754 = vadd.f32 %v6461, %v6753
  %6755 = vmatprep.mubr.bf16.mxu0 %v3683
  %6756 = vmatmul.mubr.bf16.gmra.mxu0 %v3682
  %v6757 = vpop.f32.mrf.mxu0
  %v6758 = vadd.f32 %v6465, %v6757
  %v6759 = vpop.f32.mrf.mxu0
  %v6760 = vadd.f32 %v6467, %v6759
  %v6761 = vpop.f32.mrf.mxu0
  %v6762 = vadd.f32 %v6469, %v6761
  %v6763 = vpop.f32.mrf.mxu0
  %v6764 = vadd.f32 %v6471, %v6763
  %6765 = vmatprep.mubr.bf16.mxu0 %v3689
  %6766 = vmatmul.mubr.bf16.gmra.mxu0 %v3688
  %v6767 = vpop.f32.mrf.mxu0
  %v6768 = vadd.f32 %v6475, %v6767
  %v6769 = vpop.f32.mrf.mxu0
  %v6770 = vadd.f32 %v6477, %v6769
  %v6771 = vpop.f32.mrf.mxu0
  %v6772 = vadd.f32 %v6479, %v6771
  %v6773 = vpop.f32.mrf.mxu0
  %v6774 = vadd.f32 %v6481, %v6773
  %6775 = vmatprep.mubr.bf16.mxu0 %v3695
  %6776 = vmatmul.mubr.bf16.gmra.mxu0 %v3694
  %v6777 = vpop.f32.mrf.mxu0
  %v6778 = vadd.f32 %v6485, %v6777
  %v6779 = vpop.f32.mrf.mxu0
  %v6780 = vadd.f32 %v6487, %v6779
  %v6781 = vpop.f32.mrf.mxu0
  %v6782 = vadd.f32 %v6489, %v6781
  %v6783 = vpop.f32.mrf.mxu0
  %v6784 = vadd.f32 %v6491, %v6783
  %6785 = vmatprep.mubr.bf16.mxu0 %v3701
  %6786 = vmatmul.mubr.bf16.gmra.mxu0 %v3700
  %v6787 = vpop.f32.mrf.mxu0
  %v6788 = vadd.f32 %v6495, %v6787
  %v6789 = vpop.f32.mrf.mxu0
  %v6790 = vadd.f32 %v6497, %v6789
  %v6791 = vpop.f32.mrf.mxu0
  %v6792 = vadd.f32 %v6499, %v6791
  %v6793 = vpop.f32.mrf.mxu0
  %v6794 = vadd.f32 %v6501, %v6793
  %6795 = vmatprep.mubr.bf16.mxu0 %v3707
  %6796 = vmatmul.mubr.bf16.gmra.mxu0 %v3706
  %v6797 = vpop.f32.mrf.mxu0
  %v6798 = vadd.f32 %v6505, %v6797
  %v6799 = vpop.f32.mrf.mxu0
  %v6800 = vadd.f32 %v6507, %v6799
  %v6801 = vpop.f32.mrf.mxu0
  %v6802 = vadd.f32 %v6509, %v6801
  %v6803 = vpop.f32.mrf.mxu0
  %v6804 = vadd.f32 %v6511, %v6803
  %6805 = vmatprep.mubr.bf16.mxu0 %v3713
  %6806 = vmatmul.mubr.bf16.gmra.mxu0 %v3712
  %v6807 = vpop.f32.mrf.mxu0
  %v6808 = vadd.f32 %v6515, %v6807
  %v6809 = vpop.f32.mrf.mxu0
  %v6810 = vadd.f32 %v6517, %v6809
  %v6811 = vpop.f32.mrf.mxu0
  %v6812 = vadd.f32 %v6519, %v6811
  %v6813 = vpop.f32.mrf.mxu0
  %v6814 = vadd.f32 %v6521, %v6813
  %6815 = vmatprep.mubr.bf16.mxu0 %v3719
  %6816 = vmatmul.mubr.bf16.gmra.mxu0 %v3718
  %v6817 = vpop.f32.mrf.mxu0
  %v6818 = vadd.f32 %v6525, %v6817
  %v6819 = vpop.f32.mrf.mxu0
  %v6820 = vadd.f32 %v6527, %v6819
  %v6821 = vpop.f32.mrf.mxu0
  %v6822 = vadd.f32 %v6529, %v6821
  %v6823 = vpop.f32.mrf.mxu0
  %v6824 = vadd.f32 %v6531, %v6823
  %6825 = vmatprep.mubr.bf16.mxu0 %v3725
  %6826 = vmatmul.mubr.bf16.gmra.mxu0 %v3724
  %v6827 = vpop.f32.mrf.mxu0
  %v6828 = vadd.f32 %v6535, %v6827
  %v6829 = vpop.f32.mrf.mxu0
  %v6830 = vadd.f32 %v6537, %v6829
  %v6831 = vpop.f32.mrf.mxu0
  %v6832 = vadd.f32 %v6539, %v6831
  %v6833 = vpop.f32.mrf.mxu0
  %v6834 = vadd.f32 %v6541, %v6833
  %6835 = vmatprep.mubr.bf16.mxu0 %v3731
  %6836 = vmatmul.mubr.bf16.gmra.mxu0 %v3730
  %v6837 = vpop.f32.mrf.mxu0
  %v6838 = vadd.f32 %v6545, %v6837
  %v6839 = vpop.f32.mrf.mxu0
  %v6840 = vadd.f32 %v6547, %v6839
  %v6841 = vpop.f32.mrf.mxu0
  %v6842 = vadd.f32 %v6549, %v6841
  %v6843 = vpop.f32.mrf.mxu0
  %v6844 = vadd.f32 %v6551, %v6843
  %6845 = vmatprep.mubr.bf16.mxu0 %v3737
  %6846 = vmatmul.mubr.bf16.gmra.mxu0 %v3736
  %v6847 = vpop.f32.mrf.mxu0
  %v6848 = vadd.f32 %v6555, %v6847
  %v6849 = vpop.f32.mrf.mxu0
  %v6850 = vadd.f32 %v6557, %v6849
  %v6851 = vpop.f32.mrf.mxu0
  %v6852 = vadd.f32 %v6559, %v6851
  %v6853 = vpop.f32.mrf.mxu0
  %v6854 = vadd.f32 %v6561, %v6853
  %6855 = vmatprep.mubr.bf16.mxu0 %v3743
  %6856 = vmatmul.mubr.bf16.gmra.mxu0 %v3742
  %v6857 = vpop.f32.mrf.mxu0
  %v6858 = vadd.f32 %v6565, %v6857
  %v6859 = vpop.f32.mrf.mxu0
  %v6860 = vadd.f32 %v6567, %v6859
  %v6861 = vpop.f32.mrf.mxu0
  %v6862 = vadd.f32 %v6569, %v6861
  %v6863 = vpop.f32.mrf.mxu0
  %v6864 = vadd.f32 %v6571, %v6863
  %6865 = vmatprep.mubr.bf16.mxu0 %v3749
  %6866 = vmatmul.mubr.bf16.gmra.mxu0 %v3748
  %v6867 = vpop.f32.mrf.mxu0
  %v6868 = vadd.f32 %v6575, %v6867
  %v6869 = vpop.f32.mrf.mxu0
  %v6870 = vadd.f32 %v6577, %v6869
  %v6871 = vpop.f32.mrf.mxu0
  %v6872 = vadd.f32 %v6579, %v6871
  %v6873 = vpop.f32.mrf.mxu0
  %v6874 = vadd.f32 %v6581, %v6873
  %6875 = vmatprep.mubr.bf16.mxu0 %v3755
  %6876 = vmatmul.mubr.bf16.gmra.mxu0 %v3754
  %v6877 = vpop.f32.mrf.mxu0
  %v6878 = vadd.f32 %v6585, %v6877
  %v6879 = vpop.f32.mrf.mxu0
  %v6880 = vadd.f32 %v6587, %v6879
  %v6881 = vpop.f32.mrf.mxu0
  %v6882 = vadd.f32 %v6589, %v6881
  %v6883 = vpop.f32.mrf.mxu0
  %v6884 = vadd.f32 %v6591, %v6883
  %6885 = vmatprep.mubr.bf16.mxu0 %v3761
  %6886 = vmatmul.mubr.bf16.gmra.mxu0 %v3760
  %v6887 = vpop.f32.mrf.mxu0
  %v6888 = vadd.f32 %v6595, %v6887
  %v6889 = vpop.f32.mrf.mxu0
  %v6890 = vadd.f32 %v6597, %v6889
  %v6891 = vpop.f32.mrf.mxu0
  %v6892 = vadd.f32 %v6599, %v6891
  %v6893 = vpop.f32.mrf.mxu0
  %v6894 = vadd.f32 %v6601, %v6893
  %6895 = vmatprep.mubr.bf16.mxu0 %v3767
  %6896 = vmatmul.mubr.bf16.gmra.mxu0 %v3766
  %v6897 = vpop.f32.mrf.mxu0
  %v6898 = vadd.f32 %v6605, %v6897
  %v6899 = vpop.f32.mrf.mxu0
  %v6900 = vadd.f32 %v6607, %v6899
  %v6901 = vpop.f32.mrf.mxu0
  %v6902 = vadd.f32 %v6609, %v6901
  %v6903 = vpop.f32.mrf.mxu0
  %v6904 = vadd.f32 %v6611, %v6903
  %6905 = vmatprep.mubr.bf16.mxu0 %v3773
  %6906 = vmatmul.mubr.bf16.gmra.mxu0 %v3772
  %v6907 = vpop.f32.mrf.mxu0
  %v6908 = vadd.f32 %v6615, %v6907
  %v6909 = vpop.f32.mrf.mxu0
  %v6910 = vadd.f32 %v6617, %v6909
  %v6911 = vpop.f32.mrf.mxu0
  %v6912 = vadd.f32 %v6619, %v6911
  %v6913 = vpop.f32.mrf.mxu0
  %v6914 = vadd.f32 %v6621, %v6913
  %6915 = vmatprep.mubr.bf16.mxu0 %v3779
  %6916 = vmatmul.mubr.bf16.gmra.mxu0 %v3778
  %v6917 = vpop.f32.mrf.mxu0
  %v6918 = vadd.f32 %v6625, %v6917
  %v6919 = vpop.f32.mrf.mxu0
  %v6920 = vadd.f32 %v6627, %v6919
  %v6921 = vpop.f32.mrf.mxu0
  %v6922 = vadd.f32 %v6629, %v6921
  %v6923 = vpop.f32.mrf.mxu0
  %v6924 = vadd.f32 %v6631, %v6923
  %6925 = vmatprep.mubr.bf16.mxu0 %v3785
  %6926 = vmatmul.mubr.bf16.gmra.mxu0 %v3784
  %v6927 = vpop.f32.mrf.mxu0
  %v6928 = vadd.f32 %v6635, %v6927
  %v6929 = vpop.f32.mrf.mxu0
  %v6930 = vadd.f32 %v6637, %v6929
  %v6931 = vpop.f32.mrf.mxu0
  %v6932 = vadd.f32 %v6639, %v6931
  %v6933 = vpop.f32.mrf.mxu0
  %v6934 = vadd.f32 %v6641, %v6933
  %6935 = vmatprep.mubr.bf16.mxu0 %v3791
  %6936 = vmatmul.mubr.bf16.gmra.mxu0 %v3790
  %v6937 = vpop.f32.mrf.mxu0
  %v6938 = vadd.f32 %v6645, %v6937
  %v6939 = vpop.f32.mrf.mxu0
  %v6940 = vadd.f32 %v6647, %v6939
  %v6941 = vpop.f32.mrf.mxu0
  %v6942 = vadd.f32 %v6649, %v6941
  %v6943 = vpop.f32.mrf.mxu0
  %v6944 = vadd.f32 %v6651, %v6943
  %6945 = vmatprep.mubr.bf16.mxu0 %v3797
  %6946 = vmatmul.mubr.bf16.gmra.mxu0 %v3796
  %v6947 = vpop.f32.mrf.mxu0
  %v6948 = vadd.f32 %v6655, %v6947
  %v6949 = vpop.f32.mrf.mxu0
  %v6950 = vadd.f32 %v6657, %v6949
  %v6951 = vpop.f32.mrf.mxu0
  %v6952 = vadd.f32 %v6659, %v6951
  %v6953 = vpop.f32.mrf.mxu0
  %v6954 = vadd.f32 %v6661, %v6953
  %6955 = vmatprep.mubr.bf16.mxu0 %v3803
  %6956 = vmatmul.mubr.bf16.gmra.mxu0 %v3802
  %v6957 = vpop.f32.mrf.mxu0
  %v6958 = vadd.f32 %v6665, %v6957
  %v6959 = vpop.f32.mrf.mxu0
  %v6960 = vadd.f32 %v6667, %v6959
  %v6961 = vpop.f32.mrf.mxu0
  %v6962 = vadd.f32 %v6669, %v6961
  %v6963 = vpop.f32.mrf.mxu0
  %v6964 = vadd.f32 %v6671, %v6963
  %6965 = vdwg.mxu0
  %6966 = vmatprep.subr.bf16.mxu0 0
  %6967 = vmatpush1.bf16.msra.mxu0 %v4767
  %6968 = vmatprep.subr.bf16.mxu0 0
  %6969 = vmatpush1.bf16.msra.mxu0 %v4762
  %6970 = vmatprep.subr.bf16.mxu0 0
  %6971 = vmatpush1.bf16.msra.mxu0 %v4757
  %6972 = vmatprep.subr.bf16.mxu0 0
  %6973 = vmatpush1.bf16.msra.mxu0 %v4752
  %6974 = vmatprep.subr.bf16.mxu0 0
  %6975 = vmatpush1.bf16.msra.mxu0 %v4747
  %6976 = vmatprep.subr.bf16.mxu0 0
  %6977 = vmatpush1.bf16.msra.mxu0 %v4742
  %6978 = vmatprep.subr.bf16.mxu0 0
  %6979 = vmatpush1.bf16.msra.mxu0 %v4737
  %6980 = vmatprep.subr.bf16.mxu0 0
  %6981 = vmatpush1.bf16.msra.mxu0 %v4732
  %6982 = vmatprep.subr.bf16.mxu0 0
  %6983 = vmatpush2.bf16.msra.mxu0 %v4807
  %6984 = vmatprep.subr.bf16.mxu0 0
  %6985 = vmatpush2.bf16.msra.mxu0 %v4802
  %6986 = vmatprep.subr.bf16.mxu0 0
  %6987 = vmatpush2.bf16.msra.mxu0 %v4797
  %6988 = vmatprep.subr.bf16.mxu0 0
  %6989 = vmatpush2.bf16.msra.mxu0 %v4792
  %6990 = vmatprep.subr.bf16.mxu0 0
  %6991 = vmatpush2.bf16.msra.mxu0 %v4787
  %6992 = vmatprep.subr.bf16.mxu0 0
  %6993 = vmatpush2.bf16.msra.mxu0 %v4782
  %6994 = vmatprep.subr.bf16.mxu0 0
  %6995 = vmatpush2.bf16.msra.mxu0 %v4777
  %6996 = vmatprep.subr.bf16.mxu0 0
  %6997 = vmatpush2.bf16.msra.mxu0 %v4772
  %6998 = vmatprep.mubr.bf16.mxu0 %v3649
  %6999 = vmatmul.mubr.bf16.gmra.mxu0 %v3648
  %v7000 = vpop.f32.mrf.mxu0
  %v7001 = vadd.f32 0.0, %v7000
  %v7002 = vpop.f32.mrf.mxu0
  %v7003 = vpop.f32.mrf.mxu0
  %v7004 = vadd.f32 0.0, %v7003
  %v7005 = vpop.f32.mrf.mxu0
  %7006 = vmatprep.mubr.bf16.mxu0 %v3655
  %7007 = vmatmul.mubr.bf16.gmra.mxu0 %v3654
  %v7008 = vpop.f32.mrf.mxu0
  %v7009 = vadd.f32 0.0, %v7008
  %v7010 = vpop.f32.mrf.mxu0
  %v7011 = vpop.f32.mrf.mxu0
  %v7012 = vadd.f32 0.0, %v7011
  %v7013 = vpop.f32.mrf.mxu0
  %7014 = vmatprep.mubr.bf16.mxu0 %v3661
  %7015 = vmatmul.mubr.bf16.gmra.mxu0 %v3660
  %v7016 = vpop.f32.mrf.mxu0
  %v7017 = vadd.f32 0.0, %v7016
  %v7018 = vpop.f32.mrf.mxu0
  %v7019 = vpop.f32.mrf.mxu0
  %v7020 = vadd.f32 0.0, %v7019
  %v7021 = vpop.f32.mrf.mxu0
  %7022 = vmatprep.mubr.bf16.mxu0 %v3667
  %7023 = vmatmul.mubr.bf16.gmra.mxu0 %v3666
  %v7024 = vpop.f32.mrf.mxu0
  %v7025 = vadd.f32 0.0, %v7024
  %v7026 = vpop.f32.mrf.mxu0
  %v7027 = vpop.f32.mrf.mxu0
  %v7028 = vadd.f32 0.0, %v7027
  %v7029 = vpop.f32.mrf.mxu0
  %7030 = vmatprep.mubr.bf16.mxu0 %v3673
  %7031 = vmatmul.mubr.bf16.gmra.mxu0 %v3672
  %v7032 = vpop.f32.mrf.mxu0
  %v7033 = vadd.f32 0.0, %v7032
  %v7034 = vpop.f32.mrf.mxu0
  %v7035 = vpop.f32.mrf.mxu0
  %v7036 = vadd.f32 0.0, %v7035
  %v7037 = vpop.f32.mrf.mxu0
  %7038 = vmatprep.mubr.bf16.mxu0 %v3679
  %7039 = vmatmul.mubr.bf16.gmra.mxu0 %v3678
  %v7040 = vpop.f32.mrf.mxu0
  %v7041 = vadd.f32 0.0, %v7040
  %v7042 = vpop.f32.mrf.mxu0
  %v7043 = vpop.f32.mrf.mxu0
  %v7044 = vadd.f32 0.0, %v7043
  %v7045 = vpop.f32.mrf.mxu0
  %7046 = vmatprep.mubr.bf16.mxu0 %v3685
  %7047 = vmatmul.mubr.bf16.gmra.mxu0 %v3684
  %v7048 = vpop.f32.mrf.mxu0
  %v7049 = vadd.f32 0.0, %v7048
  %v7050 = vpop.f32.mrf.mxu0
  %v7051 = vpop.f32.mrf.mxu0
  %v7052 = vadd.f32 0.0, %v7051
  %v7053 = vpop.f32.mrf.mxu0
  %7054 = vmatprep.mubr.bf16.mxu0 %v3691
  %7055 = vmatmul.mubr.bf16.gmra.mxu0 %v3690
  %v7056 = vpop.f32.mrf.mxu0
  %v7057 = vadd.f32 0.0, %v7056
  %v7058 = vpop.f32.mrf.mxu0
  %v7059 = vpop.f32.mrf.mxu0
  %v7060 = vadd.f32 0.0, %v7059
  %v7061 = vpop.f32.mrf.mxu0
  %7062 = vmatprep.mubr.bf16.mxu0 %v3697
  %7063 = vmatmul.mubr.bf16.gmra.mxu0 %v3696
  %v7064 = vpop.f32.mrf.mxu0
  %v7065 = vadd.f32 0.0, %v7064
  %v7066 = vpop.f32.mrf.mxu0
  %v7067 = vpop.f32.mrf.mxu0
  %v7068 = vadd.f32 0.0, %v7067
  %v7069 = vpop.f32.mrf.mxu0
  %7070 = vmatprep.mubr.bf16.mxu0 %v3703
  %7071 = vmatmul.mubr.bf16.gmra.mxu0 %v3702
  %v7072 = vpop.f32.mrf.mxu0
  %v7073 = vadd.f32 0.0, %v7072
  %v7074 = vpop.f32.mrf.mxu0
  %v7075 = vpop.f32.mrf.mxu0
  %v7076 = vadd.f32 0.0, %v7075
  %v7077 = vpop.f32.mrf.mxu0
  %7078 = vmatprep.mubr.bf16.mxu0 %v3709
  %7079 = vmatmul.mubr.bf16.gmra.mxu0 %v3708
  %v7080 = vpop.f32.mrf.mxu0
  %v7081 = vadd.f32 0.0, %v7080
  %v7082 = vpop.f32.mrf.mxu0
  %v7083 = vpop.f32.mrf.mxu0
  %v7084 = vadd.f32 0.0, %v7083
  %v7085 = vpop.f32.mrf.mxu0
  %7086 = vmatprep.mubr.bf16.mxu0 %v3715
  %7087 = vmatmul.mubr.bf16.gmra.mxu0 %v3714
  %v7088 = vpop.f32.mrf.mxu0
  %v7089 = vadd.f32 0.0, %v7088
  %v7090 = vpop.f32.mrf.mxu0
  %v7091 = vpop.f32.mrf.mxu0
  %v7092 = vadd.f32 0.0, %v7091
  %v7093 = vpop.f32.mrf.mxu0
  %7094 = vmatprep.mubr.bf16.mxu0 %v3721
  %7095 = vmatmul.mubr.bf16.gmra.mxu0 %v3720
  %v7096 = vpop.f32.mrf.mxu0
  %v7097 = vadd.f32 0.0, %v7096
  %v7098 = vpop.f32.mrf.mxu0
  %v7099 = vpop.f32.mrf.mxu0
  %v7100 = vadd.f32 0.0, %v7099
  %v7101 = vpop.f32.mrf.mxu0
  %7102 = vmatprep.mubr.bf16.mxu0 %v3727
  %7103 = vmatmul.mubr.bf16.gmra.mxu0 %v3726
  %v7104 = vpop.f32.mrf.mxu0
  %v7105 = vadd.f32 0.0, %v7104
  %v7106 = vpop.f32.mrf.mxu0
  %v7107 = vpop.f32.mrf.mxu0
  %v7108 = vadd.f32 0.0, %v7107
  %v7109 = vpop.f32.mrf.mxu0
  %7110 = vmatprep.mubr.bf16.mxu0 %v3733
  %7111 = vmatmul.mubr.bf16.gmra.mxu0 %v3732
  %v7112 = vpop.f32.mrf.mxu0
  %v7113 = vadd.f32 0.0, %v7112
  %v7114 = vpop.f32.mrf.mxu0
  %v7115 = vpop.f32.mrf.mxu0
  %v7116 = vadd.f32 0.0, %v7115
  %v7117 = vpop.f32.mrf.mxu0
  %7118 = vmatprep.mubr.bf16.mxu0 %v3739
  %7119 = vmatmul.mubr.bf16.gmra.mxu0 %v3738
  %v7120 = vpop.f32.mrf.mxu0
  %v7121 = vadd.f32 0.0, %v7120
  %v7122 = vpop.f32.mrf.mxu0
  %v7123 = vpop.f32.mrf.mxu0
  %v7124 = vadd.f32 0.0, %v7123
  %v7125 = vpop.f32.mrf.mxu0
  %7126 = vmatprep.mubr.bf16.mxu0 %v3745
  %7127 = vmatmul.mubr.bf16.gmra.mxu0 %v3744
  %v7128 = vpop.f32.mrf.mxu0
  %v7129 = vadd.f32 0.0, %v7128
  %v7130 = vpop.f32.mrf.mxu0
  %v7131 = vpop.f32.mrf.mxu0
  %v7132 = vadd.f32 0.0, %v7131
  %v7133 = vpop.f32.mrf.mxu0
  %7134 = vmatprep.mubr.bf16.mxu0 %v3751
  %7135 = vmatmul.mubr.bf16.gmra.mxu0 %v3750
  %v7136 = vpop.f32.mrf.mxu0
  %v7137 = vadd.f32 0.0, %v7136
  %v7138 = vpop.f32.mrf.mxu0
  %v7139 = vpop.f32.mrf.mxu0
  %v7140 = vadd.f32 0.0, %v7139
  %v7141 = vpop.f32.mrf.mxu0
  %7142 = vmatprep.mubr.bf16.mxu0 %v3757
  %7143 = vmatmul.mubr.bf16.gmra.mxu0 %v3756
  %v7144 = vpop.f32.mrf.mxu0
  %v7145 = vadd.f32 0.0, %v7144
  %v7146 = vpop.f32.mrf.mxu0
  %v7147 = vpop.f32.mrf.mxu0
  %v7148 = vadd.f32 0.0, %v7147
  %v7149 = vpop.f32.mrf.mxu0
  %7150 = vmatprep.mubr.bf16.mxu0 %v3763
  %7151 = vmatmul.mubr.bf16.gmra.mxu0 %v3762
  %v7152 = vpop.f32.mrf.mxu0
  %v7153 = vadd.f32 0.0, %v7152
  %v7154 = vpop.f32.mrf.mxu0
  %v7155 = vpop.f32.mrf.mxu0
  %v7156 = vadd.f32 0.0, %v7155
  %v7157 = vpop.f32.mrf.mxu0
  %7158 = vmatprep.mubr.bf16.mxu0 %v3769
  %7159 = vmatmul.mubr.bf16.gmra.mxu0 %v3768
  %v7160 = vpop.f32.mrf.mxu0
  %v7161 = vadd.f32 0.0, %v7160
  %v7162 = vpop.f32.mrf.mxu0
  %v7163 = vpop.f32.mrf.mxu0
  %v7164 = vadd.f32 0.0, %v7163
  %v7165 = vpop.f32.mrf.mxu0
  %7166 = vmatprep.mubr.bf16.mxu0 %v3775
  %7167 = vmatmul.mubr.bf16.gmra.mxu0 %v3774
  %v7168 = vpop.f32.mrf.mxu0
  %v7169 = vadd.f32 0.0, %v7168
  %v7170 = vpop.f32.mrf.mxu0
  %v7171 = vpop.f32.mrf.mxu0
  %v7172 = vadd.f32 0.0, %v7171
  %v7173 = vpop.f32.mrf.mxu0
  %7174 = vmatprep.mubr.bf16.mxu0 %v3781
  %7175 = vmatmul.mubr.bf16.gmra.mxu0 %v3780
  %v7176 = vpop.f32.mrf.mxu0
  %v7177 = vadd.f32 0.0, %v7176
  %v7178 = vpop.f32.mrf.mxu0
  %v7179 = vpop.f32.mrf.mxu0
  %v7180 = vadd.f32 0.0, %v7179
  %v7181 = vpop.f32.mrf.mxu0
  %7182 = vmatprep.mubr.bf16.mxu0 %v3787
  %7183 = vmatmul.mubr.bf16.gmra.mxu0 %v3786
  %v7184 = vpop.f32.mrf.mxu0
  %v7185 = vadd.f32 0.0, %v7184
  %v7186 = vpop.f32.mrf.mxu0
  %v7187 = vpop.f32.mrf.mxu0
  %v7188 = vadd.f32 0.0, %v7187
  %v7189 = vpop.f32.mrf.mxu0
  %7190 = vmatprep.mubr.bf16.mxu0 %v3793
  %7191 = vmatmul.mubr.bf16.gmra.mxu0 %v3792
  %v7192 = vpop.f32.mrf.mxu0
  %v7193 = vadd.f32 0.0, %v7192
  %v7194 = vpop.f32.mrf.mxu0
  %v7195 = vpop.f32.mrf.mxu0
  %v7196 = vadd.f32 0.0, %v7195
  %v7197 = vpop.f32.mrf.mxu0
  %7198 = vmatprep.mubr.bf16.mxu0 %v3799
  %7199 = vmatmul.mubr.bf16.gmra.mxu0 %v3798
  %v7200 = vpop.f32.mrf.mxu0
  %v7201 = vadd.f32 0.0, %v7200
  %v7202 = vpop.f32.mrf.mxu0
  %v7203 = vpop.f32.mrf.mxu0
  %v7204 = vadd.f32 0.0, %v7203
  %v7205 = vpop.f32.mrf.mxu0
  %7206 = vdwg.mxu0
  %7207 = vmatprep.subr.bf16.mxu0 0
  %7208 = vmatpush1.bf16.msra.mxu0 %v4847
  %7209 = vmatprep.subr.bf16.mxu0 0
  %7210 = vmatpush1.bf16.msra.mxu0 %v4842
  %7211 = vmatprep.subr.bf16.mxu0 0
  %7212 = vmatpush1.bf16.msra.mxu0 %v4837
  %7213 = vmatprep.subr.bf16.mxu0 0
  %7214 = vmatpush1.bf16.msra.mxu0 %v4832
  %7215 = vmatprep.subr.bf16.mxu0 0
  %7216 = vmatpush1.bf16.msra.mxu0 %v4827
  %7217 = vmatprep.subr.bf16.mxu0 0
  %7218 = vmatpush1.bf16.msra.mxu0 %v4822
  %7219 = vmatprep.subr.bf16.mxu0 0
  %7220 = vmatpush1.bf16.msra.mxu0 %v4817
  %7221 = vmatprep.subr.bf16.mxu0 0
  %7222 = vmatpush1.bf16.msra.mxu0 %v4812
  %7223 = vmatprep.subr.bf16.mxu0 0
  %7224 = vmatpush2.bf16.msra.mxu0 %v4887
  %7225 = vmatprep.subr.bf16.mxu0 0
  %7226 = vmatpush2.bf16.msra.mxu0 %v4882
  %7227 = vmatprep.subr.bf16.mxu0 0
  %7228 = vmatpush2.bf16.msra.mxu0 %v4877
  %7229 = vmatprep.subr.bf16.mxu0 0
  %7230 = vmatpush2.bf16.msra.mxu0 %v4872
  %7231 = vmatprep.subr.bf16.mxu0 0
  %7232 = vmatpush2.bf16.msra.mxu0 %v4867
  %7233 = vmatprep.subr.bf16.mxu0 0
  %7234 = vmatpush2.bf16.msra.mxu0 %v4862
  %7235 = vmatprep.subr.bf16.mxu0 0
  %7236 = vmatpush2.bf16.msra.mxu0 %v4857
  %7237 = vmatprep.subr.bf16.mxu0 0
  %7238 = vmatpush2.bf16.msra.mxu0 %v4852
  %7239 = vmatprep.mubr.bf16.mxu0 %v3651
  %7240 = vmatmul.mubr.bf16.gmra.mxu0 %v3650
  %v7241 = vpop.f32.mrf.mxu0
  %v7242 = vadd.f32 %v7001, %v7241
  %v7243 = vpop.f32.mrf.mxu0
  %v7244 = vpop.f32.mrf.mxu0
  %v7245 = vadd.f32 %v7004, %v7244
  %v7246 = vpop.f32.mrf.mxu0
  %7247 = vmatprep.mubr.bf16.mxu0 %v3657
  %7248 = vmatmul.mubr.bf16.gmra.mxu0 %v3656
  %v7249 = vpop.f32.mrf.mxu0
  %v7250 = vadd.f32 %v7009, %v7249
  %v7251 = vpop.f32.mrf.mxu0
  %v7252 = vpop.f32.mrf.mxu0
  %v7253 = vadd.f32 %v7012, %v7252
  %v7254 = vpop.f32.mrf.mxu0
  %7255 = vmatprep.mubr.bf16.mxu0 %v3663
  %7256 = vmatmul.mubr.bf16.gmra.mxu0 %v3662
  %v7257 = vpop.f32.mrf.mxu0
  %v7258 = vadd.f32 %v7017, %v7257
  %v7259 = vpop.f32.mrf.mxu0
  %v7260 = vpop.f32.mrf.mxu0
  %v7261 = vadd.f32 %v7020, %v7260
  %v7262 = vpop.f32.mrf.mxu0
  %7263 = vmatprep.mubr.bf16.mxu0 %v3669
  %7264 = vmatmul.mubr.bf16.gmra.mxu0 %v3668
  %v7265 = vpop.f32.mrf.mxu0
  %v7266 = vadd.f32 %v7025, %v7265
  %v7267 = vpop.f32.mrf.mxu0
  %v7268 = vpop.f32.mrf.mxu0
  %v7269 = vadd.f32 %v7028, %v7268
  %v7270 = vpop.f32.mrf.mxu0
  %7271 = vmatprep.mubr.bf16.mxu0 %v3675
  %7272 = vmatmul.mubr.bf16.gmra.mxu0 %v3674
  %v7273 = vpop.f32.mrf.mxu0
  %v7274 = vadd.f32 %v7033, %v7273
  %v7275 = vpop.f32.mrf.mxu0
  %v7276 = vpop.f32.mrf.mxu0
  %v7277 = vadd.f32 %v7036, %v7276
  %v7278 = vpop.f32.mrf.mxu0
  %7279 = vmatprep.mubr.bf16.mxu0 %v3681
  %7280 = vmatmul.mubr.bf16.gmra.mxu0 %v3680
  %v7281 = vpop.f32.mrf.mxu0
  %v7282 = vadd.f32 %v7041, %v7281
  %v7283 = vpop.f32.mrf.mxu0
  %v7284 = vpop.f32.mrf.mxu0
  %v7285 = vadd.f32 %v7044, %v7284
  %v7286 = vpop.f32.mrf.mxu0
  %7287 = vmatprep.mubr.bf16.mxu0 %v3687
  %7288 = vmatmul.mubr.bf16.gmra.mxu0 %v3686
  %v7289 = vpop.f32.mrf.mxu0
  %v7290 = vadd.f32 %v7049, %v7289
  %v7291 = vpop.f32.mrf.mxu0
  %v7292 = vpop.f32.mrf.mxu0
  %v7293 = vadd.f32 %v7052, %v7292
  %v7294 = vpop.f32.mrf.mxu0
  %7295 = vmatprep.mubr.bf16.mxu0 %v3693
  %7296 = vmatmul.mubr.bf16.gmra.mxu0 %v3692
  %v7297 = vpop.f32.mrf.mxu0
  %v7298 = vadd.f32 %v7057, %v7297
  %v7299 = vpop.f32.mrf.mxu0
  %v7300 = vpop.f32.mrf.mxu0
  %v7301 = vadd.f32 %v7060, %v7300
  %v7302 = vpop.f32.mrf.mxu0
  %7303 = vmatprep.mubr.bf16.mxu0 %v3699
  %7304 = vmatmul.mubr.bf16.gmra.mxu0 %v3698
  %v7305 = vpop.f32.mrf.mxu0
  %v7306 = vadd.f32 %v7065, %v7305
  %v7307 = vpop.f32.mrf.mxu0
  %v7308 = vpop.f32.mrf.mxu0
  %v7309 = vadd.f32 %v7068, %v7308
  %v7310 = vpop.f32.mrf.mxu0
  %7311 = vmatprep.mubr.bf16.mxu0 %v3705
  %7312 = vmatmul.mubr.bf16.gmra.mxu0 %v3704
  %v7313 = vpop.f32.mrf.mxu0
  %v7314 = vadd.f32 %v7073, %v7313
  %v7315 = vpop.f32.mrf.mxu0
  %v7316 = vpop.f32.mrf.mxu0
  %v7317 = vadd.f32 %v7076, %v7316
  %v7318 = vpop.f32.mrf.mxu0
  %7319 = vmatprep.mubr.bf16.mxu0 %v3711
  %7320 = vmatmul.mubr.bf16.gmra.mxu0 %v3710
  %v7321 = vpop.f32.mrf.mxu0
  %v7322 = vadd.f32 %v7081, %v7321
  %v7323 = vpop.f32.mrf.mxu0
  %v7324 = vpop.f32.mrf.mxu0
  %v7325 = vadd.f32 %v7084, %v7324
  %v7326 = vpop.f32.mrf.mxu0
  %7327 = vmatprep.mubr.bf16.mxu0 %v3717
  %7328 = vmatmul.mubr.bf16.gmra.mxu0 %v3716
  %v7329 = vpop.f32.mrf.mxu0
  %v7330 = vadd.f32 %v7089, %v7329
  %v7331 = vpop.f32.mrf.mxu0
  %v7332 = vpop.f32.mrf.mxu0
  %v7333 = vadd.f32 %v7092, %v7332
  %v7334 = vpop.f32.mrf.mxu0
  %7335 = vmatprep.mubr.bf16.mxu0 %v3723
  %7336 = vmatmul.mubr.bf16.gmra.mxu0 %v3722
  %v7337 = vpop.f32.mrf.mxu0
  %v7338 = vadd.f32 %v7097, %v7337
  %v7339 = vpop.f32.mrf.mxu0
  %v7340 = vpop.f32.mrf.mxu0
  %v7341 = vadd.f32 %v7100, %v7340
  %v7342 = vpop.f32.mrf.mxu0
  %7343 = vmatprep.mubr.bf16.mxu0 %v3729
  %7344 = vmatmul.mubr.bf16.gmra.mxu0 %v3728
  %v7345 = vpop.f32.mrf.mxu0
  %v7346 = vadd.f32 %v7105, %v7345
  %v7347 = vpop.f32.mrf.mxu0
  %v7348 = vpop.f32.mrf.mxu0
  %v7349 = vadd.f32 %v7108, %v7348
  %v7350 = vpop.f32.mrf.mxu0
  %7351 = vmatprep.mubr.bf16.mxu0 %v3735
  %7352 = vmatmul.mubr.bf16.gmra.mxu0 %v3734
  %v7353 = vpop.f32.mrf.mxu0
  %v7354 = vadd.f32 %v7113, %v7353
  %v7355 = vpop.f32.mrf.mxu0
  %v7356 = vpop.f32.mrf.mxu0
  %v7357 = vadd.f32 %v7116, %v7356
  %v7358 = vpop.f32.mrf.mxu0
  %7359 = vmatprep.mubr.bf16.mxu0 %v3741
  %7360 = vmatmul.mubr.bf16.gmra.mxu0 %v3740
  %v7361 = vpop.f32.mrf.mxu0
  %v7362 = vadd.f32 %v7121, %v7361
  %v7363 = vpop.f32.mrf.mxu0
  %v7364 = vpop.f32.mrf.mxu0
  %v7365 = vadd.f32 %v7124, %v7364
  %v7366 = vpop.f32.mrf.mxu0
  %7367 = vmatprep.mubr.bf16.mxu0 %v3747
  %7368 = vmatmul.mubr.bf16.gmra.mxu0 %v3746
  %v7369 = vpop.f32.mrf.mxu0
  %v7370 = vadd.f32 %v7129, %v7369
  %v7371 = vpop.f32.mrf.mxu0
  %v7372 = vpop.f32.mrf.mxu0
  %v7373 = vadd.f32 %v7132, %v7372
  %v7374 = vpop.f32.mrf.mxu0
  %7375 = vmatprep.mubr.bf16.mxu0 %v3753
  %7376 = vmatmul.mubr.bf16.gmra.mxu0 %v3752
  %v7377 = vpop.f32.mrf.mxu0
  %v7378 = vadd.f32 %v7137, %v7377
  %v7379 = vpop.f32.mrf.mxu0
  %v7380 = vpop.f32.mrf.mxu0
  %v7381 = vadd.f32 %v7140, %v7380
  %v7382 = vpop.f32.mrf.mxu0
  %7383 = vmatprep.mubr.bf16.mxu0 %v3759
  %7384 = vmatmul.mubr.bf16.gmra.mxu0 %v3758
  %v7385 = vpop.f32.mrf.mxu0
  %v7386 = vadd.f32 %v7145, %v7385
  %v7387 = vpop.f32.mrf.mxu0
  %v7388 = vpop.f32.mrf.mxu0
  %v7389 = vadd.f32 %v7148, %v7388
  %v7390 = vpop.f32.mrf.mxu0
  %7391 = vmatprep.mubr.bf16.mxu0 %v3765
  %7392 = vmatmul.mubr.bf16.gmra.mxu0 %v3764
  %v7393 = vpop.f32.mrf.mxu0
  %v7394 = vadd.f32 %v7153, %v7393
  %v7395 = vpop.f32.mrf.mxu0
  %v7396 = vpop.f32.mrf.mxu0
  %v7397 = vadd.f32 %v7156, %v7396
  %v7398 = vpop.f32.mrf.mxu0
  %7399 = vmatprep.mubr.bf16.mxu0 %v3771
  %7400 = vmatmul.mubr.bf16.gmra.mxu0 %v3770
  %v7401 = vpop.f32.mrf.mxu0
  %v7402 = vadd.f32 %v7161, %v7401
  %v7403 = vpop.f32.mrf.mxu0
  %v7404 = vpop.f32.mrf.mxu0
  %v7405 = vadd.f32 %v7164, %v7404
  %v7406 = vpop.f32.mrf.mxu0
  %7407 = vmatprep.mubr.bf16.mxu0 %v3777
  %7408 = vmatmul.mubr.bf16.gmra.mxu0 %v3776
  %v7409 = vpop.f32.mrf.mxu0
  %v7410 = vadd.f32 %v7169, %v7409
  %v7411 = vpop.f32.mrf.mxu0
  %v7412 = vpop.f32.mrf.mxu0
  %v7413 = vadd.f32 %v7172, %v7412
  %v7414 = vpop.f32.mrf.mxu0
  %7415 = vmatprep.mubr.bf16.mxu0 %v3783
  %7416 = vmatmul.mubr.bf16.gmra.mxu0 %v3782
  %v7417 = vpop.f32.mrf.mxu0
  %v7418 = vadd.f32 %v7177, %v7417
  %v7419 = vpop.f32.mrf.mxu0
  %v7420 = vpop.f32.mrf.mxu0
  %v7421 = vadd.f32 %v7180, %v7420
  %v7422 = vpop.f32.mrf.mxu0
  %7423 = vmatprep.mubr.bf16.mxu0 %v3789
  %7424 = vmatmul.mubr.bf16.gmra.mxu0 %v3788
  %v7425 = vpop.f32.mrf.mxu0
  %v7426 = vadd.f32 %v7185, %v7425
  %v7427 = vpop.f32.mrf.mxu0
  %v7428 = vpop.f32.mrf.mxu0
  %v7429 = vadd.f32 %v7188, %v7428
  %v7430 = vpop.f32.mrf.mxu0
  %7431 = vmatprep.mubr.bf16.mxu0 %v3795
  %7432 = vmatmul.mubr.bf16.gmra.mxu0 %v3794
  %v7433 = vpop.f32.mrf.mxu0
  %v7434 = vadd.f32 %v7193, %v7433
  %v7435 = vpop.f32.mrf.mxu0
  %v7436 = vpop.f32.mrf.mxu0
  %v7437 = vadd.f32 %v7196, %v7436
  %v7438 = vpop.f32.mrf.mxu0
  %7439 = vmatprep.mubr.bf16.mxu0 %v3801
  %7440 = vmatmul.mubr.bf16.gmra.mxu0 %v3800
  %v7441 = vpop.f32.mrf.mxu0
  %v7442 = vadd.f32 %v7201, %v7441
  %v7443 = vpop.f32.mrf.mxu0
  %v7444 = vpop.f32.mrf.mxu0
  %v7445 = vadd.f32 %v7204, %v7444
  %v7446 = vpop.f32.mrf.mxu0
  %7447 = vdwg.mxu0
  %7448 = vmatprep.subr.bf16.mxu0 0
  %7449 = vmatpush1.bf16.msra.mxu0 %v4927
  %7450 = vmatprep.subr.bf16.mxu0 0
  %7451 = vmatpush1.bf16.msra.mxu0 %v4922
  %7452 = vmatprep.subr.bf16.mxu0 0
  %7453 = vmatpush1.bf16.msra.mxu0 %v4917
  %7454 = vmatprep.subr.bf16.mxu0 0
  %7455 = vmatpush1.bf16.msra.mxu0 %v4912
  %7456 = vmatprep.subr.bf16.mxu0 0
  %7457 = vmatpush1.bf16.msra.mxu0 %v4907
  %7458 = vmatprep.subr.bf16.mxu0 0
  %7459 = vmatpush1.bf16.msra.mxu0 %v4902
  %7460 = vmatprep.subr.bf16.mxu0 0
  %7461 = vmatpush1.bf16.msra.mxu0 %v4897
  %7462 = vmatprep.subr.bf16.mxu0 0
  %7463 = vmatpush1.bf16.msra.mxu0 %v4892
  %7464 = vmatprep.subr.bf16.mxu0 0
  %7465 = vmatpush2.bf16.msra.mxu0 %v4967
  %7466 = vmatprep.subr.bf16.mxu0 0
  %7467 = vmatpush2.bf16.msra.mxu0 %v4962
  %7468 = vmatprep.subr.bf16.mxu0 0
  %7469 = vmatpush2.bf16.msra.mxu0 %v4957
  %7470 = vmatprep.subr.bf16.mxu0 0
  %7471 = vmatpush2.bf16.msra.mxu0 %v4952
  %7472 = vmatprep.subr.bf16.mxu0 0
  %7473 = vmatpush2.bf16.msra.mxu0 %v4947
  %7474 = vmatprep.subr.bf16.mxu0 0
  %7475 = vmatpush2.bf16.msra.mxu0 %v4942
  %7476 = vmatprep.subr.bf16.mxu0 0
  %7477 = vmatpush2.bf16.msra.mxu0 %v4937
  %7478 = vmatprep.subr.bf16.mxu0 0
  %7479 = vmatpush2.bf16.msra.mxu0 %v4932
  %7480 = vmatprep.mubr.bf16.mxu0 %v3653
  %7481 = vmatmul.mubr.bf16.gmra.mxu0 %v3652
  %v7482 = vpop.f32.mrf.mxu0
  %v7483 = vadd.f32 %v7242, %v7482
  %v7484 = vpop.f32.mrf.mxu0
  %v7485 = vpop.f32.mrf.mxu0
  %v7486 = vadd.f32 %v7245, %v7485
  %v7487 = vpop.f32.mrf.mxu0
  %7488 = vmatprep.mubr.bf16.mxu0 %v3659
  %7489 = vmatmul.mubr.bf16.gmra.mxu0 %v3658
  %v7490 = vpop.f32.mrf.mxu0
  %v7491 = vadd.f32 %v7250, %v7490
  %v7492 = vpop.f32.mrf.mxu0
  %v7493 = vpop.f32.mrf.mxu0
  %v7494 = vadd.f32 %v7253, %v7493
  %v7495 = vpop.f32.mrf.mxu0
  %7496 = vmatprep.mubr.bf16.mxu0 %v3665
  %7497 = vmatmul.mubr.bf16.gmra.mxu0 %v3664
  %v7498 = vpop.f32.mrf.mxu0
  %v7499 = vadd.f32 %v7258, %v7498
  %v7500 = vpop.f32.mrf.mxu0
  %v7501 = vpop.f32.mrf.mxu0
  %v7502 = vadd.f32 %v7261, %v7501
  %v7503 = vpop.f32.mrf.mxu0
  %7504 = vmatprep.mubr.bf16.mxu0 %v3671
  %7505 = vmatmul.mubr.bf16.gmra.mxu0 %v3670
  %v7506 = vpop.f32.mrf.mxu0
  %v7507 = vadd.f32 %v7266, %v7506
  %v7508 = vpop.f32.mrf.mxu0
  %v7509 = vpop.f32.mrf.mxu0
  %v7510 = vadd.f32 %v7269, %v7509
  %v7511 = vpop.f32.mrf.mxu0
  %7512 = vmatprep.mubr.bf16.mxu0 %v3677
  %7513 = vmatmul.mubr.bf16.gmra.mxu0 %v3676
  %v7514 = vpop.f32.mrf.mxu0
  %v7515 = vadd.f32 %v7274, %v7514
  %v7516 = vpop.f32.mrf.mxu0
  %v7517 = vpop.f32.mrf.mxu0
  %v7518 = vadd.f32 %v7277, %v7517
  %v7519 = vpop.f32.mrf.mxu0
  %7520 = vmatprep.mubr.bf16.mxu0 %v3683
  %7521 = vmatmul.mubr.bf16.gmra.mxu0 %v3682
  %v7522 = vpop.f32.mrf.mxu0
  %v7523 = vadd.f32 %v7282, %v7522
  %v7524 = vpop.f32.mrf.mxu0
  %v7525 = vpop.f32.mrf.mxu0
  %v7526 = vadd.f32 %v7285, %v7525
  %v7527 = vpop.f32.mrf.mxu0
  %7528 = vmatprep.mubr.bf16.mxu0 %v3689
  %7529 = vmatmul.mubr.bf16.gmra.mxu0 %v3688
  %v7530 = vpop.f32.mrf.mxu0
  %v7531 = vadd.f32 %v7290, %v7530
  %v7532 = vpop.f32.mrf.mxu0
  %v7533 = vpop.f32.mrf.mxu0
  %v7534 = vadd.f32 %v7293, %v7533
  %v7535 = vpop.f32.mrf.mxu0
  %7536 = vmatprep.mubr.bf16.mxu0 %v3695
  %7537 = vmatmul.mubr.bf16.gmra.mxu0 %v3694
  %v7538 = vpop.f32.mrf.mxu0
  %v7539 = vadd.f32 %v7298, %v7538
  %v7540 = vpop.f32.mrf.mxu0
  %v7541 = vpop.f32.mrf.mxu0
  %v7542 = vadd.f32 %v7301, %v7541
  %v7543 = vpop.f32.mrf.mxu0
  %7544 = vmatprep.mubr.bf16.mxu0 %v3701
  %7545 = vmatmul.mubr.bf16.gmra.mxu0 %v3700
  %v7546 = vpop.f32.mrf.mxu0
  %v7547 = vadd.f32 %v7306, %v7546
  %v7548 = vpop.f32.mrf.mxu0
  %v7549 = vpop.f32.mrf.mxu0
  %v7550 = vadd.f32 %v7309, %v7549
  %v7551 = vpop.f32.mrf.mxu0
  %7552 = vmatprep.mubr.bf16.mxu0 %v3707
  %7553 = vmatmul.mubr.bf16.gmra.mxu0 %v3706
  %v7554 = vpop.f32.mrf.mxu0
  %v7555 = vadd.f32 %v7314, %v7554
  %v7556 = vpop.f32.mrf.mxu0
  %v7557 = vpop.f32.mrf.mxu0
  %v7558 = vadd.f32 %v7317, %v7557
  %v7559 = vpop.f32.mrf.mxu0
  %7560 = vmatprep.mubr.bf16.mxu0 %v3713
  %7561 = vmatmul.mubr.bf16.gmra.mxu0 %v3712
  %v7562 = vpop.f32.mrf.mxu0
  %v7563 = vadd.f32 %v7322, %v7562
  %v7564 = vpop.f32.mrf.mxu0
  %v7565 = vpop.f32.mrf.mxu0
  %v7566 = vadd.f32 %v7325, %v7565
  %v7567 = vpop.f32.mrf.mxu0
  %7568 = vmatprep.mubr.bf16.mxu0 %v3719
  %7569 = vmatmul.mubr.bf16.gmra.mxu0 %v3718
  %v7570 = vpop.f32.mrf.mxu0
  %v7571 = vadd.f32 %v7330, %v7570
  %v7572 = vpop.f32.mrf.mxu0
  %v7573 = vpop.f32.mrf.mxu0
  %v7574 = vadd.f32 %v7333, %v7573
  %v7575 = vpop.f32.mrf.mxu0
  %7576 = vmatprep.mubr.bf16.mxu0 %v3725
  %7577 = vmatmul.mubr.bf16.gmra.mxu0 %v3724
  %v7578 = vpop.f32.mrf.mxu0
  %v7579 = vadd.f32 %v7338, %v7578
  %v7580 = vpop.f32.mrf.mxu0
  %v7581 = vpop.f32.mrf.mxu0
  %v7582 = vadd.f32 %v7341, %v7581
  %v7583 = vpop.f32.mrf.mxu0
  %7584 = vmatprep.mubr.bf16.mxu0 %v3731
  %7585 = vmatmul.mubr.bf16.gmra.mxu0 %v3730
  %v7586 = vpop.f32.mrf.mxu0
  %v7587 = vadd.f32 %v7346, %v7586
  %v7588 = vpop.f32.mrf.mxu0
  %v7589 = vpop.f32.mrf.mxu0
  %v7590 = vadd.f32 %v7349, %v7589
  %v7591 = vpop.f32.mrf.mxu0
  %7592 = vmatprep.mubr.bf16.mxu0 %v3737
  %7593 = vmatmul.mubr.bf16.gmra.mxu0 %v3736
  %v7594 = vpop.f32.mrf.mxu0
  %v7595 = vadd.f32 %v7354, %v7594
  %v7596 = vpop.f32.mrf.mxu0
  %v7597 = vpop.f32.mrf.mxu0
  %v7598 = vadd.f32 %v7357, %v7597
  %v7599 = vpop.f32.mrf.mxu0
  %7600 = vmatprep.mubr.bf16.mxu0 %v3743
  %7601 = vmatmul.mubr.bf16.gmra.mxu0 %v3742
  %v7602 = vpop.f32.mrf.mxu0
  %v7603 = vadd.f32 %v7362, %v7602
  %v7604 = vpop.f32.mrf.mxu0
  %v7605 = vpop.f32.mrf.mxu0
  %v7606 = vadd.f32 %v7365, %v7605
  %v7607 = vpop.f32.mrf.mxu0
  %7608 = vmatprep.mubr.bf16.mxu0 %v3749
  %7609 = vmatmul.mubr.bf16.gmra.mxu0 %v3748
  %v7610 = vpop.f32.mrf.mxu0
  %v7611 = vadd.f32 %v7370, %v7610
  %v7612 = vpop.f32.mrf.mxu0
  %v7613 = vpop.f32.mrf.mxu0
  %v7614 = vadd.f32 %v7373, %v7613
  %v7615 = vpop.f32.mrf.mxu0
  %7616 = vmatprep.mubr.bf16.mxu0 %v3755
  %7617 = vmatmul.mubr.bf16.gmra.mxu0 %v3754
  %v7618 = vpop.f32.mrf.mxu0
  %v7619 = vadd.f32 %v7378, %v7618
  %v7620 = vpop.f32.mrf.mxu0
  %v7621 = vpop.f32.mrf.mxu0
  %v7622 = vadd.f32 %v7381, %v7621
  %v7623 = vpop.f32.mrf.mxu0
  %7624 = vmatprep.mubr.bf16.mxu0 %v3761
  %7625 = vmatmul.mubr.bf16.gmra.mxu0 %v3760
  %v7626 = vpop.f32.mrf.mxu0
  %v7627 = vadd.f32 %v7386, %v7626
  %v7628 = vpop.f32.mrf.mxu0
  %v7629 = vpop.f32.mrf.mxu0
  %v7630 = vadd.f32 %v7389, %v7629
  %v7631 = vpop.f32.mrf.mxu0
  %7632 = vmatprep.mubr.bf16.mxu0 %v3767
  %7633 = vmatmul.mubr.bf16.gmra.mxu0 %v3766
  %v7634 = vpop.f32.mrf.mxu0
  %v7635 = vadd.f32 %v7394, %v7634
  %v7636 = vpop.f32.mrf.mxu0
  %v7637 = vpop.f32.mrf.mxu0
  %v7638 = vadd.f32 %v7397, %v7637
  %v7639 = vpop.f32.mrf.mxu0
  %7640 = vmatprep.mubr.bf16.mxu0 %v3773
  %7641 = vmatmul.mubr.bf16.gmra.mxu0 %v3772
  %v7642 = vpop.f32.mrf.mxu0
  %v7643 = vadd.f32 %v7402, %v7642
  %v7644 = vpop.f32.mrf.mxu0
  %v7645 = vpop.f32.mrf.mxu0
  %v7646 = vadd.f32 %v7405, %v7645
  %v7647 = vpop.f32.mrf.mxu0
  %7648 = vmatprep.mubr.bf16.mxu0 %v3779
  %7649 = vmatmul.mubr.bf16.gmra.mxu0 %v3778
  %v7650 = vpop.f32.mrf.mxu0
  %v7651 = vadd.f32 %v7410, %v7650
  %v7652 = vpop.f32.mrf.mxu0
  %v7653 = vpop.f32.mrf.mxu0
  %v7654 = vadd.f32 %v7413, %v7653
  %v7655 = vpop.f32.mrf.mxu0
  %7656 = vmatprep.mubr.bf16.mxu0 %v3785
  %7657 = vmatmul.mubr.bf16.gmra.mxu0 %v3784
  %v7658 = vpop.f32.mrf.mxu0
  %v7659 = vadd.f32 %v7418, %v7658
  %v7660 = vpop.f32.mrf.mxu0
  %v7661 = vpop.f32.mrf.mxu0
  %v7662 = vadd.f32 %v7421, %v7661
  %v7663 = vpop.f32.mrf.mxu0
  %7664 = vmatprep.mubr.bf16.mxu0 %v3791
  %7665 = vmatmul.mubr.bf16.gmra.mxu0 %v3790
  %v7666 = vpop.f32.mrf.mxu0
  %v7667 = vadd.f32 %v7426, %v7666
  %v7668 = vpop.f32.mrf.mxu0
  %v7669 = vpop.f32.mrf.mxu0
  %v7670 = vadd.f32 %v7429, %v7669
  %v7671 = vpop.f32.mrf.mxu0
  %7672 = vmatprep.mubr.bf16.mxu0 %v3797
  %7673 = vmatmul.mubr.bf16.gmra.mxu0 %v3796
  %v7674 = vpop.f32.mrf.mxu0
  %v7675 = vadd.f32 %v7434, %v7674
  %v7676 = vpop.f32.mrf.mxu0
  %v7677 = vpop.f32.mrf.mxu0
  %v7678 = vadd.f32 %v7437, %v7677
  %v7679 = vpop.f32.mrf.mxu0
  %7680 = vmatprep.mubr.bf16.mxu0 %v3803
  %7681 = vmatmul.mubr.bf16.gmra.mxu0 %v3802
  %v7682 = vpop.f32.mrf.mxu0
  %v7683 = vadd.f32 %v7442, %v7682
  %v7684 = vpop.f32.mrf.mxu0
  %v7685 = vpop.f32.mrf.mxu0
  %v7686 = vadd.f32 %v7445, %v7685
  %v7687 = vpop.f32.mrf.mxu0
  %7688 = vdwg.mxu0
  %7689 = vst [vmem:[#allocation3] sm:$0xff] %v5829
  %7690 = vst [vmem:[#allocation3 + $0x8] sm:$0xff] %v5831
  %7691 = vst [vmem:[#allocation3 + $0x10] sm:$0xff] %v6708
  %7692 = vst [vmem:[#allocation3 + $0x18] sm:$0xff] %v6710
  %vm7693 = vcmask 523264
  %7694 = vst.msk [vmem:[#allocation3 + $0x20] sm:$0xff] %vm7693, %v7483
  %7695 = vst [vmem:[#allocation3 + $0x28] sm:$0xff] %v5833
  %7696 = vst [vmem:[#allocation3 + $0x30] sm:$0xff] %v5835
  %7697 = vst [vmem:[#allocation3 + $0x38] sm:$0xff] %v6712
  %7698 = vst [vmem:[#allocation3 + $0x40] sm:$0xff] %v6714
  %7699 = vst.msk [vmem:[#allocation3 + $0x48] sm:$0xff] %vm7693, %v7486
  %7700 = vst [vmem:[#allocation3 + $0x50] sm:$0xff] %v5839
  %7701 = vst [vmem:[#allocation3 + $0x58] sm:$0xff] %v5841
  %7702 = vst [vmem:[#allocation3 + $0x60] sm:$0xff] %v6718
  %7703 = vst [vmem:[#allocation3 + $0x68] sm:$0xff] %v6720
  %7704 = vst.msk [vmem:[#allocation3 + $0x70] sm:$0xff] %vm7693, %v7491
  %7705 = vst [vmem:[#allocation3 + $0x78] sm:$0xff] %v5843
  %7706 = vst [vmem:[#allocation3 + $0x80] sm:$0xff] %v5845
  %7707 = vst [vmem:[#allocation3 + $0x88] sm:$0xff] %v6722
  %7708 = vst [vmem:[#allocation3 + $0x90] sm:$0xff] %v6724
  %7709 = vst.msk [vmem:[#allocation3 + $0x98] sm:$0xff] %vm7693, %v7494
  %7710 = vst [vmem:[#allocation3 + $0xa0] sm:$0xff] %v5849
  %7711 = vst [vmem:[#allocation3 + $0xa8] sm:$0xff] %v5851
  %7712 = vst [vmem:[#allocation3 + $0xb0] sm:$0xff] %v6728
  %7713 = vst [vmem:[#allocation3 + $0xb8] sm:$0xff] %v6730
  %7714 = vst.msk [vmem:[#allocation3 + $0xc0] sm:$0xff] %vm7693, %v7499
  %7715 = vst [vmem:[#allocation3 + $0xc8] sm:$0xff] %v5853
  %7716 = vst [vmem:[#allocation3 + $0xd0] sm:$0xff] %v5855
  %7717 = vst [vmem:[#allocation3 + $0xd8] sm:$0xff] %v6732
  %7718 = vst [vmem:[#allocation3 + $0xe0] sm:$0xff] %v6734
  %7719 = vst.msk [vmem:[#allocation3 + $0xe8] sm:$0xff] %vm7693, %v7502
  %7720 = vst [vmem:[#allocation3 + $0xf0] sm:$0xff] %v5859
  %7721 = vst [vmem:[#allocation3 + $0xf8] sm:$0xff] %v5861
  %7722 = vst [vmem:[#allocation3 + $0x100] sm:$0xff] %v6738
  %7723 = vst [vmem:[#allocation3 + $0x108] sm:$0xff] %v6740
  %7724 = vst.msk [vmem:[#allocation3 + $0x110] sm:$0xff] %vm7693, %v7507
  %7725 = vst [vmem:[#allocation3 + $0x118] sm:$0xff] %v5863
  %7726 = vst [vmem:[#allocation3 + $0x120] sm:$0xff] %v5865
  %7727 = vst [vmem:[#allocation3 + $0x128] sm:$0xff] %v6742
  %7728 = vst [vmem:[#allocation3 + $0x130] sm:$0xff] %v6744
  %7729 = vst.msk [vmem:[#allocation3 + $0x138] sm:$0xff] %vm7693, %v7510
  %7730 = vst [vmem:[#allocation3 + $0x140] sm:$0xff] %v5869
  %7731 = vst [vmem:[#allocation3 + $0x148] sm:$0xff] %v5871
  %7732 = vst [vmem:[#allocation3 + $0x150] sm:$0xff] %v6748
  %7733 = vst [vmem:[#allocation3 + $0x158] sm:$0xff] %v6750
  %7734 = vst.msk [vmem:[#allocation3 + $0x160] sm:$0xff] %vm7693, %v7515
  %7735 = vst [vmem:[#allocation3 + $0x168] sm:$0xff] %v5873
  %7736 = vst [vmem:[#allocation3 + $0x170] sm:$0xff] %v5875
  %7737 = vst [vmem:[#allocation3 + $0x178] sm:$0xff] %v6752
  %7738 = vst [vmem:[#allocation3 + $0x180] sm:$0xff] %v6754
  %7739 = vst.msk [vmem:[#allocation3 + $0x188] sm:$0xff] %vm7693, %v7518
  %7740 = vst [vmem:[#allocation3 + $0x190] sm:$0xff] %v5879
  %7741 = vst [vmem:[#allocation3 + $0x198] sm:$0xff] %v5881
  %7742 = vst [vmem:[#allocation3 + $0x1a0] sm:$0xff] %v6758
  %7743 = vst [vmem:[#allocation3 + $0x1a8] sm:$0xff] %v6760
  %7744 = vst.msk [vmem:[#allocation3 + $0x1b0] sm:$0xff] %vm7693, %v7523
  %7745 = vst [vmem:[#allocation3 + $0x1b8] sm:$0xff] %v5883
  %7746 = vst [vmem:[#allocation3 + $0x1c0] sm:$0xff] %v5885
  %7747 = vst [vmem:[#allocation3 + $0x1c8] sm:$0xff] %v6762
  %7748 = vst [vmem:[#allocation3 + $0x1d0] sm:$0xff] %v6764
  %7749 = vst.msk [vmem:[#allocation3 + $0x1d8] sm:$0xff] %vm7693, %v7526
  %7750 = vst [vmem:[#allocation3 + $0x1e0] sm:$0xff] %v5889
  %7751 = vst [vmem:[#allocation3 + $0x1e8] sm:$0xff] %v5891
  %7752 = vst [vmem:[#allocation3 + $0x1f0] sm:$0xff] %v6768
  %7753 = vst [vmem:[#allocation3 + $0x1f8] sm:$0xff] %v6770
  %7754 = vst.msk [vmem:[#allocation3 + $0x200] sm:$0xff] %vm7693, %v7531
  %7755 = vst [vmem:[#allocation3 + $0x208] sm:$0xff] %v5893
  %7756 = vst [vmem:[#allocation3 + $0x210] sm:$0xff] %v5895
  %7757 = vst [vmem:[#allocation3 + $0x218] sm:$0xff] %v6772
  %7758 = vst [vmem:[#allocation3 + $0x220] sm:$0xff] %v6774
  %7759 = vst.msk [vmem:[#allocation3 + $0x228] sm:$0xff] %vm7693, %v7534
  %7760 = vst [vmem:[#allocation3 + $0x230] sm:$0xff] %v5899
  %7761 = vst [vmem:[#allocation3 + $0x238] sm:$0xff] %v5901
  %7762 = vst [vmem:[#allocation3 + $0x240] sm:$0xff] %v6778
  %7763 = vst [vmem:[#allocation3 + $0x248] sm:$0xff] %v6780
  %7764 = vst.msk [vmem:[#allocation3 + $0x250] sm:$0xff] %vm7693, %v7539
  %7765 = vst [vmem:[#allocation3 + $0x258] sm:$0xff] %v5903
  %7766 = vst [vmem:[#allocation3 + $0x260] sm:$0xff] %v5905
  %7767 = vst [vmem:[#allocation3 + $0x268] sm:$0xff] %v6782
  %7768 = vst [vmem:[#allocation3 + $0x270] sm:$0xff] %v6784
  %7769 = vst.msk [vmem:[#allocation3 + $0x278] sm:$0xff] %vm7693, %v7542
  %7770 = vst [vmem:[#allocation3 + $0x280] sm:$0xff] %v5909
  %7771 = vst [vmem:[#allocation3 + $0x288] sm:$0xff] %v5911
  %7772 = vst [vmem:[#allocation3 + $0x290] sm:$0xff] %v6788
  %7773 = vst [vmem:[#allocation3 + $0x298] sm:$0xff] %v6790
  %7774 = vst.msk [vmem:[#allocation3 + $0x2a0] sm:$0xff] %vm7693, %v7547
  %7775 = vst [vmem:[#allocation3 + $0x2a8] sm:$0xff] %v5913
  %7776 = vst [vmem:[#allocation3 + $0x2b0] sm:$0xff] %v5915
  %7777 = vst [vmem:[#allocation3 + $0x2b8] sm:$0xff] %v6792
  %7778 = vst [vmem:[#allocation3 + $0x2c0] sm:$0xff] %v6794
  %7779 = vst.msk [vmem:[#allocation3 + $0x2c8] sm:$0xff] %vm7693, %v7550
  %7780 = vst [vmem:[#allocation3 + $0x2d0] sm:$0xff] %v5919
  %7781 = vst [vmem:[#allocation3 + $0x2d8] sm:$0xff] %v5921
  %7782 = vst [vmem:[#allocation3 + $0x2e0] sm:$0xff] %v6798
  %7783 = vst [vmem:[#allocation3 + $0x2e8] sm:$0xff] %v6800
  %7784 = vst.msk [vmem:[#allocation3 + $0x2f0] sm:$0xff] %vm7693, %v7555
  %7785 = vst [vmem:[#allocation3 + $0x2f8] sm:$0xff] %v5923
  %7786 = vst [vmem:[#allocation3 + $0x300] sm:$0xff] %v5925
  %7787 = vst [vmem:[#allocation3 + $0x308] sm:$0xff] %v6802
  %7788 = vst [vmem:[#allocation3 + $0x310] sm:$0xff] %v6804
  %7789 = vst.msk [vmem:[#allocation3 + $0x318] sm:$0xff] %vm7693, %v7558
  %7790 = vst [vmem:[#allocation3 + $0x320] sm:$0xff] %v5929
  %7791 = vst [vmem:[#allocation3 + $0x328] sm:$0xff] %v5931
  %7792 = vst [vmem:[#allocation3 + $0x330] sm:$0xff] %v6808
  %7793 = vst [vmem:[#allocation3 + $0x338] sm:$0xff] %v6810
  %7794 = vst.msk [vmem:[#allocation3 + $0x340] sm:$0xff] %vm7693, %v7563
  %7795 = vst [vmem:[#allocation3 + $0x348] sm:$0xff] %v5933
  %7796 = vst [vmem:[#allocation3 + $0x350] sm:$0xff] %v5935
  %7797 = vst [vmem:[#allocation3 + $0x358] sm:$0xff] %v6812
  %7798 = vst [vmem:[#allocation3 + $0x360] sm:$0xff] %v6814
  %7799 = vst.msk [vmem:[#allocation3 + $0x368] sm:$0xff] %vm7693, %v7566
  %7800 = vst [vmem:[#allocation3 + $0x370] sm:$0xff] %v5939
  %7801 = vst [vmem:[#allocation3 + $0x378] sm:$0xff] %v5941
  %7802 = vst [vmem:[#allocation3 + $0x380] sm:$0xff] %v6818
  %7803 = vst [vmem:[#allocation3 + $0x388] sm:$0xff] %v6820
  %7804 = vst.msk [vmem:[#allocation3 + $0x390] sm:$0xff] %vm7693, %v7571
  %7805 = vst [vmem:[#allocation3 + $0x398] sm:$0xff] %v5943
  %7806 = vst [vmem:[#allocation3 + $0x3a0] sm:$0xff] %v5945
  %7807 = vst [vmem:[#allocation3 + $0x3a8] sm:$0xff] %v6822
  %7808 = vst [vmem:[#allocation3 + $0x3b0] sm:$0xff] %v6824
  %7809 = vst.msk [vmem:[#allocation3 + $0x3b8] sm:$0xff] %vm7693, %v7574
  %7810 = vst [vmem:[#allocation3 + $0x3c0] sm:$0xff] %v5949
  %7811 = vst [vmem:[#allocation3 + $0x3c8] sm:$0xff] %v5951
  %7812 = vst [vmem:[#allocation3 + $0x3d0] sm:$0xff] %v6828
  %7813 = vst [vmem:[#allocation3 + $0x3d8] sm:$0xff] %v6830
  %7814 = vst.msk [vmem:[#allocation3 + $0x3e0] sm:$0xff] %vm7693, %v7579
  %7815 = vst [vmem:[#allocation3 + $0x3e8] sm:$0xff] %v5953
  %7816 = vst [vmem:[#allocation3 + $0x3f0] sm:$0xff] %v5955
  %7817 = vst [vmem:[#allocation3 + $0x3f8] sm:$0xff] %v6832
  %7818 = vst [vmem:[#allocation3 + $0x400] sm:$0xff] %v6834
  %7819 = vst.msk [vmem:[#allocation3 + $0x408] sm:$0xff] %vm7693, %v7582
  %7820 = vst [vmem:[#allocation3 + $0x410] sm:$0xff] %v5959
  %7821 = vst [vmem:[#allocation3 + $0x418] sm:$0xff] %v5961
  %7822 = vst [vmem:[#allocation3 + $0x420] sm:$0xff] %v6838
  %7823 = vst [vmem:[#allocation3 + $0x428] sm:$0xff] %v6840
  %7824 = vst.msk [vmem:[#allocation3 + $0x430] sm:$0xff] %vm7693, %v7587
  %7825 = vst [vmem:[#allocation3 + $0x438] sm:$0xff] %v5963
  %7826 = vst [vmem:[#allocation3 + $0x440] sm:$0xff] %v5965
  %7827 = vst [vmem:[#allocation3 + $0x448] sm:$0xff] %v6842
  %7828 = vst [vmem:[#allocation3 + $0x450] sm:$0xff] %v6844
  %7829 = vst.msk [vmem:[#allocation3 + $0x458] sm:$0xff] %vm7693, %v7590
  %7830 = vst [vmem:[#allocation3 + $0x460] sm:$0xff] %v5969
  %7831 = vst [vmem:[#allocation3 + $0x468] sm:$0xff] %v5971
  %7832 = vst [vmem:[#allocation3 + $0x470] sm:$0xff] %v6848
  %7833 = vst [vmem:[#allocation3 + $0x478] sm:$0xff] %v6850
  %7834 = vst.msk [vmem:[#allocation3 + $0x480] sm:$0xff] %vm7693, %v7595
  %7835 = vst [vmem:[#allocation3 + $0x488] sm:$0xff] %v5973
  %7836 = vst [vmem:[#allocation3 + $0x490] sm:$0xff] %v5975
  %7837 = vst [vmem:[#allocation3 + $0x498] sm:$0xff] %v6852
  %7838 = vst [vmem:[#allocation3 + $0x4a0] sm:$0xff] %v6854
  %7839 = vst.msk [vmem:[#allocation3 + $0x4a8] sm:$0xff] %vm7693, %v7598
  %7840 = vst [vmem:[#allocation3 + $0x4b0] sm:$0xff] %v5979
  %7841 = vst [vmem:[#allocation3 + $0x4b8] sm:$0xff] %v5981
  %7842 = vst [vmem:[#allocation3 + $0x4c0] sm:$0xff] %v6858
  %7843 = vst [vmem:[#allocation3 + $0x4c8] sm:$0xff] %v6860
  %7844 = vst.msk [vmem:[#allocation3 + $0x4d0] sm:$0xff] %vm7693, %v7603
  %7845 = vst [vmem:[#allocation3 + $0x4d8] sm:$0xff] %v5983
  %7846 = vst [vmem:[#allocation3 + $0x4e0] sm:$0xff] %v5985
  %7847 = vst [vmem:[#allocation3 + $0x4e8] sm:$0xff] %v6862
  %7848 = vst [vmem:[#allocation3 + $0x4f0] sm:$0xff] %v6864
  %7849 = vst.msk [vmem:[#allocation3 + $0x4f8] sm:$0xff] %vm7693, %v7606
  %7850 = vst [vmem:[#allocation3 + $0x500] sm:$0xff] %v5989
  %7851 = vst [vmem:[#allocation3 + $0x508] sm:$0xff] %v5991
  %7852 = vst [vmem:[#allocation3 + $0x510] sm:$0xff] %v6868
  %7853 = vst [vmem:[#allocation3 + $0x518] sm:$0xff] %v6870
  %7854 = vst.msk [vmem:[#allocation3 + $0x520] sm:$0xff] %vm7693, %v7611
  %7855 = vst [vmem:[#allocation3 + $0x528] sm:$0xff] %v5993
  %7856 = vst [vmem:[#allocation3 + $0x530] sm:$0xff] %v5995
  %7857 = vst [vmem:[#allocation3 + $0x538] sm:$0xff] %v6872
  %7858 = vst [vmem:[#allocation3 + $0x540] sm:$0xff] %v6874
  %7859 = vst.msk [vmem:[#allocation3 + $0x548] sm:$0xff] %vm7693, %v7614
  %7860 = vst [vmem:[#allocation3 + $0x550] sm:$0xff] %v5999
  %7861 = vst [vmem:[#allocation3 + $0x558] sm:$0xff] %v6001
  %7862 = vst [vmem:[#allocation3 + $0x560] sm:$0xff] %v6878
  %7863 = vst [vmem:[#allocation3 + $0x568] sm:$0xff] %v6880
  %7864 = vst.msk [vmem:[#allocation3 + $0x570] sm:$0xff] %vm7693, %v7619
  %7865 = vst [vmem:[#allocation3 + $0x578] sm:$0xff] %v6003
  %7866 = vst [vmem:[#allocation3 + $0x580] sm:$0xff] %v6005
  %7867 = vst [vmem:[#allocation3 + $0x588] sm:$0xff] %v6882
  %7868 = vst [vmem:[#allocation3 + $0x590] sm:$0xff] %v6884
  %7869 = vst.msk [vmem:[#allocation3 + $0x598] sm:$0xff] %vm7693, %v7622
  %7870 = vst [vmem:[#allocation3 + $0x5a0] sm:$0xff] %v6009
  %7871 = vst [vmem:[#allocation3 + $0x5a8] sm:$0xff] %v6011
  %7872 = vst [vmem:[#allocation3 + $0x5b0] sm:$0xff] %v6888
  %7873 = vst [vmem:[#allocation3 + $0x5b8] sm:$0xff] %v6890
  %7874 = vst.msk [vmem:[#allocation3 + $0x5c0] sm:$0xff] %vm7693, %v7627
  %7875 = vst [vmem:[#allocation3 + $0x5c8] sm:$0xff] %v6013
  %7876 = vst [vmem:[#allocation3 + $0x5d0] sm:$0xff] %v6015
  %7877 = vst [vmem:[#allocation3 + $0x5d8] sm:$0xff] %v6892
  %7878 = vst [vmem:[#allocation3 + $0x5e0] sm:$0xff] %v6894
  %7879 = vst.msk [vmem:[#allocation3 + $0x5e8] sm:$0xff] %vm7693, %v7630
  %7880 = vst [vmem:[#allocation3 + $0x5f0] sm:$0xff] %v6019
  %7881 = vst [vmem:[#allocation3 + $0x5f8] sm:$0xff] %v6021
  %7882 = vst [vmem:[#allocation3 + $0x600] sm:$0xff] %v6898
  %7883 = vst [vmem:[#allocation3 + $0x608] sm:$0xff] %v6900
  %7884 = vst.msk [vmem:[#allocation3 + $0x610] sm:$0xff] %vm7693, %v7635
  %7885 = vst [vmem:[#allocation3 + $0x618] sm:$0xff] %v6023
  %7886 = vst [vmem:[#allocation3 + $0x620] sm:$0xff] %v6025
  %7887 = vst [vmem:[#allocation3 + $0x628] sm:$0xff] %v6902
  %7888 = vst [vmem:[#allocation3 + $0x630] sm:$0xff] %v6904
  %7889 = vst.msk [vmem:[#allocation3 + $0x638] sm:$0xff] %vm7693, %v7638
  %7890 = vst [vmem:[#allocation3 + $0x640] sm:$0xff] %v6029
  %7891 = vst [vmem:[#allocation3 + $0x648] sm:$0xff] %v6031
  %7892 = vst [vmem:[#allocation3 + $0x650] sm:$0xff] %v6908
  %7893 = vst [vmem:[#allocation3 + $0x658] sm:$0xff] %v6910
  %7894 = vst.msk [vmem:[#allocation3 + $0x660] sm:$0xff] %vm7693, %v7643
  %7895 = vst [vmem:[#allocation3 + $0x668] sm:$0xff] %v6033
  %7896 = vst [vmem:[#allocation3 + $0x670] sm:$0xff] %v6035
  %7897 = vst [vmem:[#allocation3 + $0x678] sm:$0xff] %v6912
  %7898 = vst [vmem:[#allocation3 + $0x680] sm:$0xff] %v6914
  %7899 = vst.msk [vmem:[#allocation3 + $0x688] sm:$0xff] %vm7693, %v7646
  %7900 = vst [vmem:[#allocation3 + $0x690] sm:$0xff] %v6039
  %7901 = vst [vmem:[#allocation3 + $0x698] sm:$0xff] %v6041
  %7902 = vst [vmem:[#allocation3 + $0x6a0] sm:$0xff] %v6918
  %7903 = vst [vmem:[#allocation3 + $0x6a8] sm:$0xff] %v6920
  %7904 = vst.msk [vmem:[#allocation3 + $0x6b0] sm:$0xff] %vm7693, %v7651
  %7905 = vst [vmem:[#allocation3 + $0x6b8] sm:$0xff] %v6043
  %7906 = vst [vmem:[#allocation3 + $0x6c0] sm:$0xff] %v6045
  %7907 = vst [vmem:[#allocation3 + $0x6c8] sm:$0xff] %v6922
  %7908 = vst [vmem:[#allocation3 + $0x6d0] sm:$0xff] %v6924
  %7909 = vst.msk [vmem:[#allocation3 + $0x6d8] sm:$0xff] %vm7693, %v7654
  %7910 = vst [vmem:[#allocation3 + $0x6e0] sm:$0xff] %v6049
  %7911 = vst [vmem:[#allocation3 + $0x6e8] sm:$0xff] %v6051
  %7912 = vst [vmem:[#allocation3 + $0x6f0] sm:$0xff] %v6928
  %7913 = vst [vmem:[#allocation3 + $0x6f8] sm:$0xff] %v6930
  %7914 = vst.msk [vmem:[#allocation3 + $0x700] sm:$0xff] %vm7693, %v7659
  %7915 = vst [vmem:[#allocation3 + $0x708] sm:$0xff] %v6053
  %7916 = vst [vmem:[#allocation3 + $0x710] sm:$0xff] %v6055
  %7917 = vst [vmem:[#allocation3 + $0x718] sm:$0xff] %v6932
  %7918 = vst [vmem:[#allocation3 + $0x720] sm:$0xff] %v6934
  %7919 = vst.msk [vmem:[#allocation3 + $0x728] sm:$0xff] %vm7693, %v7662
  %7920 = vst [vmem:[#allocation3 + $0x730] sm:$0xff] %v6059
  %7921 = vst [vmem:[#allocation3 + $0x738] sm:$0xff] %v6061
  %7922 = vst [vmem:[#allocation3 + $0x740] sm:$0xff] %v6938
  %7923 = vst [vmem:[#allocation3 + $0x748] sm:$0xff] %v6940
  %7924 = vst.msk [vmem:[#allocation3 + $0x750] sm:$0xff] %vm7693, %v7667
  %7925 = vst [vmem:[#allocation3 + $0x758] sm:$0xff] %v6063
  %7926 = vst [vmem:[#allocation3 + $0x760] sm:$0xff] %v6065
  %7927 = vst [vmem:[#allocation3 + $0x768] sm:$0xff] %v6942
  %7928 = vst [vmem:[#allocation3 + $0x770] sm:$0xff] %v6944
  %7929 = vst.msk [vmem:[#allocation3 + $0x778] sm:$0xff] %vm7693, %v7670
  %7930 = vst [vmem:[#allocation3 + $0x780] sm:$0xff] %v6069
  %7931 = vst [vmem:[#allocation3 + $0x788] sm:$0xff] %v6071
  %7932 = vst [vmem:[#allocation3 + $0x790] sm:$0xff] %v6948
  %7933 = vst [vmem:[#allocation3 + $0x798] sm:$0xff] %v6950
  %7934 = vst.msk [vmem:[#allocation3 + $0x7a0] sm:$0xff] %vm7693, %v7675
  %7935 = vst [vmem:[#allocation3 + $0x7a8] sm:$0xff] %v6073
  %7936 = vst [vmem:[#allocation3 + $0x7b0] sm:$0xff] %v6075
  %7937 = vst [vmem:[#allocation3 + $0x7b8] sm:$0xff] %v6952
  %7938 = vst [vmem:[#allocation3 + $0x7c0] sm:$0xff] %v6954
  %7939 = vst.msk [vmem:[#allocation3 + $0x7c8] sm:$0xff] %vm7693, %v7678
  %7940 = vst [vmem:[#allocation3 + $0x7d0] sm:$0xff] %v6079
  %7941 = vst [vmem:[#allocation3 + $0x7d8] sm:$0xff] %v6081
  %7942 = vst [vmem:[#allocation3 + $0x7e0] sm:$0xff] %v6958
  %7943 = vst [vmem:[#allocation3 + $0x7e8] sm:$0xff] %v6960
  %7944 = vst.msk [vmem:[#allocation3 + $0x7f0] sm:$0xff] %vm7693, %v7683
  %7945 = vst [vmem:[#allocation3 + $0x7f8] sm:$0xff] %v6083
  %7946 = vst [vmem:[#allocation3 + $0x800] sm:$0xff] %v6085
  %7947 = vst [vmem:[#allocation3 + $0x808] sm:$0xff] %v6962
  %7948 = vst [vmem:[#allocation3 + $0x810] sm:$0xff] %v6964
  %7949 = vst.msk [vmem:[#allocation3 + $0x818] sm:$0xff] %vm7693, %v7686
  %v7950 = vld [vmem:[%s4] sm:$0x1]
  %v7951 = vld [vmem:[%s5] sm:$0xff]
  %v7952 = vld [vmem:[%s5 + $0x8] sm:$0xff]
  %v7953 = vld [vmem:[%s5 + $0x10] sm:$0xff]
  %v7954 = vld [vmem:[%s5 + $0x18] sm:$0xff]
  %v7955 = vld [vmem:[%s5 + $0x20] sm:$0xff]
  %v7956 = vld [vmem:[%s5 + $0x28] sm:$0xff]
  %v7957 = vld [vmem:[%s5 + $0x30] sm:$0xff]
  %v7958 = vld [vmem:[%s5 + $0x38] sm:$0xff]
  %v7959 = vld [vmem:[%s5 + $0x40] sm:$0xf]
  %v7960 = vld [vmem:[%s5 + $0x48] sm:$0xf]
  %v7961 = vld [vmem:[#allocation3] sm:$0xff]
  %v7962 = vld [vmem:[#allocation3 + $0x28] sm:$0xff]
  %v7963 = vld [vmem:[#allocation3 + $0x50] sm:$0xff]
  %v7964 = vld [vmem:[#allocation3 + $0x78] sm:$0xff]
  %v7965 = vld [vmem:[#allocation3 + $0xa0] sm:$0xff]
  %v7966 = vld [vmem:[#allocation3 + $0xc8] sm:$0xff]
  %v7967 = vld [vmem:[#allocation3 + $0xf0] sm:$0xff]
  %v7968 = vld [vmem:[#allocation3 + $0x118] sm:$0xff]
  %v7969 = vld [vmem:[#allocation3 + $0x140] sm:$0xff]
  %v7970 = vld [vmem:[#allocation3 + $0x168] sm:$0xff]
  %v7971 = vld [vmem:[#allocation3 + $0x190] sm:$0xff]
  %v7972 = vld [vmem:[#allocation3 + $0x1b8] sm:$0xff]
  %v7973 = vld [vmem:[#allocation3 + $0x1e0] sm:$0xff]
  %v7974 = vld [vmem:[#allocation3 + $0x208] sm:$0xff]
  %v7975 = vld [vmem:[#allocation3 + $0x230] sm:$0xff]
  %v7976 = vld [vmem:[#allocation3 + $0x258] sm:$0xff]
  %v7977 = vld [vmem:[#allocation3 + $0x280] sm:$0xff]
  %v7978 = vld [vmem:[#allocation3 + $0x2a8] sm:$0xff]
  %v7979 = vld [vmem:[#allocation3 + $0x2d0] sm:$0xff]
  %v7980 = vld [vmem:[#allocation3 + $0x2f8] sm:$0xff]
  %v7981 = vld [vmem:[#allocation3 + $0x320] sm:$0x3f]
  %v7982 = vld [vmem:[#allocation3] sm:$0xfe]
  %v7983 = vld [vmem:[#allocation3 + $0x320] sm:$0x7f]
  %vm8005 = vcmask 1046528
  %v8006 = vrot.slane %v7982, 1
  %v8007 = vrot.slane %v7962, 1
  %v8008 = vsel %vm8005, %v8006, %v8007
  %v8009 = vrot.slane %v7963, 1
  %v8010 = vsel %vm8005, %v8007, %v8009
  %v8011 = vrot.slane %v7964, 1
  %v8012 = vsel %vm8005, %v8009, %v8011
  %v8013 = vrot.slane %v7965, 1
  %v8014 = vsel %vm8005, %v8011, %v8013
  %v8015 = vrot.slane %v7966, 1
  %v8016 = vsel %vm8005, %v8013, %v8015
  %v8017 = vrot.slane %v7967, 1
  %v8018 = vsel %vm8005, %v8015, %v8017
  %v8019 = vrot.slane %v7968, 1
  %v8020 = vsel %vm8005, %v8017, %v8019
  %v8021 = vrot.slane %v7969, 1
  %v8022 = vsel %vm8005, %v8019, %v8021
  %v8023 = vrot.slane %v7970, 1
  %v8024 = vsel %vm8005, %v8021, %v8023
  %v8025 = vrot.slane %v7971, 1
  %v8026 = vsel %vm8005, %v8023, %v8025
  %v8027 = vrot.slane %v7972, 1
  %v8028 = vsel %vm8005, %v8025, %v8027
  %v8029 = vrot.slane %v7973, 1
  %v8030 = vsel %vm8005, %v8027, %v8029
  %v8031 = vrot.slane %v7974, 1
  %v8032 = vsel %vm8005, %v8029, %v8031
  %v8033 = vrot.slane %v7975, 1
  %v8034 = vsel %vm8005, %v8031, %v8033
  %v8035 = vrot.slane %v7976, 1
  %v8036 = vsel %vm8005, %v8033, %v8035
  %v8037 = vrot.slane %v7977, 1
  %v8038 = vsel %vm8005, %v8035, %v8037
  %v8039 = vrot.slane %v7978, 1
  %v8040 = vsel %vm8005, %v8037, %v8039
  %v8041 = vrot.slane %v7979, 1
  %v8042 = vsel %vm8005, %v8039, %v8041
  %v8043 = vrot.slane %v7980, 1
  %v8044 = vsel %vm8005, %v8041, %v8043
  %v8045 = vrot.slane %v7983, 1
  %v8046 = vsel %vm8005, %v8043, %v8045
  %8047 = vrot.lane.b32.xlu0 %v8008, 64
  %v8048 = vpop.permute.xlu0 %8047
  %8049 = vrot.lane.b32.xlu0 %v8010, 64
  %v8050 = vpop.permute.xlu0 %8049
  %8051 = vrot.lane.b32.xlu0 %v8012, 64
  %v8052 = vpop.permute.xlu0 %8051
  %8053 = vrot.lane.b32.xlu0 %v8014, 64
  %v8054 = vpop.permute.xlu0 %8053
  %8055 = vrot.lane.b32.xlu0 %v8016, 64
  %v8056 = vpop.permute.xlu0 %8055
  %8057 = vrot.lane.b32.xlu0 %v8018, 64
  %v8058 = vpop.permute.xlu0 %8057
  %8059 = vrot.lane.b32.xlu0 %v8020, 64
  %v8060 = vpop.permute.xlu0 %8059
  %8061 = vrot.lane.b32.xlu0 %v8022, 64
  %v8062 = vpop.permute.xlu0 %8061
  %8063 = vrot.lane.b32.xlu0 %v8024, 64
  %v8064 = vpop.permute.xlu0 %8063
  %8065 = vrot.lane.b32.xlu0 %v8026, 64
  %v8066 = vpop.permute.xlu0 %8065
  %8067 = vrot.lane.b32.xlu0 %v8028, 64
  %v8068 = vpop.permute.xlu0 %8067
  %8069 = vrot.lane.b32.xlu0 %v8030, 64
  %v8070 = vpop.permute.xlu0 %8069
  %8071 = vrot.lane.b32.xlu0 %v8032, 64
  %v8072 = vpop.permute.xlu0 %8071
  %8073 = vrot.lane.b32.xlu0 %v8034, 64
  %v8074 = vpop.permute.xlu0 %8073
  %8075 = vrot.lane.b32.xlu0 %v8036, 64
  %v8076 = vpop.permute.xlu0 %8075
  %8077 = vrot.lane.b32.xlu0 %v8038, 64
  %v8078 = vpop.permute.xlu0 %8077
  %8079 = vrot.lane.b32.xlu0 %v8040, 64
  %v8080 = vpop.permute.xlu0 %8079
  %8081 = vrot.lane.b32.xlu0 %v8042, 64
  %v8082 = vpop.permute.xlu0 %8081
  %8083 = vrot.lane.b32.xlu0 %v8044, 64
  %v8084 = vpop.permute.xlu0 %8083
  %8085 = vrot.lane.b32.xlu0 %v8046, 64
  %v8086 = vpop.permute.xlu0 %8085
  %8087 = vrot.lane.b32.xlu0 %v8045, 64
  %v8088 = vpop.permute.xlu0 %8087
  %v8110 = vadd.f32 %v7961, %v8048
  %v8111 = vadd.f32 %v7962, %v8050
  %v8112 = vadd.f32 %v7963, %v8052
  %v8113 = vadd.f32 %v7964, %v8054
  %v8114 = vadd.f32 %v7965, %v8056
  %v8115 = vadd.f32 %v7966, %v8058
  %v8116 = vadd.f32 %v7967, %v8060
  %v8117 = vadd.f32 %v7968, %v8062
  %v8118 = vadd.f32 %v7969, %v8064
  %v8119 = vadd.f32 %v7970, %v8066
  %v8120 = vadd.f32 %v7971, %v8068
  %v8121 = vadd.f32 %v7972, %v8070
  %v8122 = vadd.f32 %v7973, %v8072
  %v8123 = vadd.f32 %v7974, %v8074
  %v8124 = vadd.f32 %v7975, %v8076
  %v8125 = vadd.f32 %v7976, %v8078
  %v8126 = vadd.f32 %v7977, %v8080
  %v8127 = vadd.f32 %v7978, %v8082
  %v8128 = vadd.f32 %v7979, %v8084
  %v8129 = vadd.f32 %v7980, %v8086
  %v8130 = vadd.f32 %v7981, %v8088
  %v8131 = vld [vmem:[#allocation3 + $0x8] sm:$0xfc]
  %v8132 = vld [vmem:[#allocation3 + $0x30] sm:$0xff]
  %v8133 = vld [vmem:[#allocation3 + $0x58] sm:$0xff]
  %v8134 = vld [vmem:[#allocation3 + $0x80] sm:$0xff]
  %v8135 = vld [vmem:[#allocation3 + $0xa8] sm:$0xff]
  %v8136 = vld [vmem:[#allocation3 + $0xd0] sm:$0xff]
  %v8137 = vld [vmem:[#allocation3 + $0xf8] sm:$0xff]
  %v8138 = vld [vmem:[#allocation3 + $0x120] sm:$0xff]
  %v8139 = vld [vmem:[#allocation3 + $0x148] sm:$0xff]
  %v8140 = vld [vmem:[#allocation3 + $0x170] sm:$0xff]
  %v8141 = vld [vmem:[#allocation3 + $0x198] sm:$0xff]
  %v8142 = vld [vmem:[#allocation3 + $0x1c0] sm:$0xff]
  %v8143 = vld [vmem:[#allocation3 + $0x1e8] sm:$0xff]
  %v8144 = vld [vmem:[#allocation3 + $0x210] sm:$0xff]
  %v8145 = vld [vmem:[#allocation3 + $0x238] sm:$0xff]
  %v8146 = vld [vmem:[#allocation3 + $0x260] sm:$0xff]
  %v8147 = vld [vmem:[#allocation3 + $0x288] sm:$0xff]
  %v8148 = vld [vmem:[#allocation3 + $0x2b0] sm:$0xff]
  %v8149 = vld [vmem:[#allocation3 + $0x2d8] sm:$0xff]
  %v8150 = vld [vmem:[#allocation3 + $0x300] sm:$0xff]
  %v8151 = vld [vmem:[#allocation3 + $0x328] sm:$0xff]
  %vm8173 = vcmask 1045504
  %v8174 = vrot.slane %v8131, 2
  %v8175 = vrot.slane %v8132, 2
  %v8176 = vsel %vm8173, %v8174, %v8175
  %v8177 = vrot.slane %v8133, 2
  %v8178 = vsel %vm8173, %v8175, %v8177
  %v8179 = vrot.slane %v8134, 2
  %v8180 = vsel %vm8173, %v8177, %v8179
  %v8181 = vrot.slane %v8135, 2
  %v8182 = vsel %vm8173, %v8179, %v8181
  %v8183 = vrot.slane %v8136, 2
  %v8184 = vsel %vm8173, %v8181, %v8183
  %v8185 = vrot.slane %v8137, 2
  %v8186 = vsel %vm8173, %v8183, %v8185
  %v8187 = vrot.slane %v8138, 2
  %v8188 = vsel %vm8173, %v8185, %v8187
  %v8189 = vrot.slane %v8139, 2
  %v8190 = vsel %vm8173, %v8187, %v8189
  %v8191 = vrot.slane %v8140, 2
  %v8192 = vsel %vm8173, %v8189, %v8191
  %v8193 = vrot.slane %v8141, 2
  %v8194 = vsel %vm8173, %v8191, %v8193
  %v8195 = vrot.slane %v8142, 2
  %v8196 = vsel %vm8173, %v8193, %v8195
  %v8197 = vrot.slane %v8143, 2
  %v8198 = vsel %vm8173, %v8195, %v8197
  %v8199 = vrot.slane %v8144, 2
  %v8200 = vsel %vm8173, %v8197, %v8199
  %v8201 = vrot.slane %v8145, 2
  %v8202 = vsel %vm8173, %v8199, %v8201
  %v8203 = vrot.slane %v8146, 2
  %v8204 = vsel %vm8173, %v8201, %v8203
  %v8205 = vrot.slane %v8147, 2
  %v8206 = vsel %vm8173, %v8203, %v8205
  %v8207 = vrot.slane %v8148, 2
  %v8208 = vsel %vm8173, %v8205, %v8207
  %v8209 = vrot.slane %v8149, 2
  %v8210 = vsel %vm8173, %v8207, %v8209
  %v8211 = vrot.slane %v8150, 2
  %v8212 = vsel %vm8173, %v8209, %v8211
  %v8213 = vrot.slane %v8151, 2
  %v8214 = vsel %vm8173, %v8211, %v8213
  %v8236 = vadd.f32 %v8110, %v8176
  %v8237 = vadd.f32 %v8111, %v8178
  %v8238 = vadd.f32 %v8112, %v8180
  %v8239 = vadd.f32 %v8113, %v8182
  %v8240 = vadd.f32 %v8114, %v8184
  %v8241 = vadd.f32 %v8115, %v8186
  %v8242 = vadd.f32 %v8116, %v8188
  %v8243 = vadd.f32 %v8117, %v8190
  %v8244 = vadd.f32 %v8118, %v8192
  %v8245 = vadd.f32 %v8119, %v8194
  %v8246 = vadd.f32 %v8120, %v8196
  %v8247 = vadd.f32 %v8121, %v8198
  %v8248 = vadd.f32 %v8122, %v8200
  %v8249 = vadd.f32 %v8123, %v8202
  %v8250 = vadd.f32 %v8124, %v8204
  %v8251 = vadd.f32 %v8125, %v8206
  %v8252 = vadd.f32 %v8126, %v8208
  %v8253 = vadd.f32 %v8127, %v8210
  %v8254 = vadd.f32 %v8128, %v8212
  %v8255 = vadd.f32 %v8129, %v8214
  %v8256 = vadd.f32 %v8130, %v8213
  %v8257 = vld [vmem:[#allocation3 + $0x30] sm:$0xc0]
  %v8258 = vld [vmem:[#allocation3 + $0x350] sm:$0xff]
  %v8259 = vld [vmem:[#allocation3 + $0x378] sm:$0xf]
  %vm8263 = vcmask 1041408
  %v8264 = vrot.slane %v8257, 6
  %v8265 = vrot.slane %v8133, 6
  %v8266 = vsel %vm8263, %v8264, %v8265
  %v8267 = vrot.slane %v8134, 6
  %v8268 = vsel %vm8263, %v8265, %v8267
  %v8269 = vrot.slane %v8135, 6
  %v8270 = vsel %vm8263, %v8267, %v8269
  %v8271 = vrot.slane %v8136, 6
  %v8272 = vsel %vm8263, %v8269, %v8271
  %v8273 = vrot.slane %v8137, 6
  %v8274 = vsel %vm8263, %v8271, %v8273
  %v8275 = vrot.slane %v8138, 6
  %v8276 = vsel %vm8263, %v8273, %v8275
  %v8277 = vrot.slane %v8139, 6
  %v8278 = vsel %vm8263, %v8275, %v8277
  %v8279 = vrot.slane %v8140, 6
  %v8280 = vsel %vm8263, %v8277, %v8279
  %v8281 = vrot.slane %v8141, 6
  %v8282 = vsel %vm8263, %v8279, %v8281
  %v8283 = vrot.slane %v8142, 6
  %v8284 = vsel %vm8263, %v8281, %v8283
  %v8285 = vrot.slane %v8143, 6
  %v8286 = vsel %vm8263, %v8283, %v8285
  %v8287 = vrot.slane %v8144, 6
  %v8288 = vsel %vm8263, %v8285, %v8287
  %v8289 = vrot.slane %v8145, 6
  %v8290 = vsel %vm8263, %v8287, %v8289
  %v8291 = vrot.slane %v8146, 6
  %v8292 = vsel %vm8263, %v8289, %v8291
  %v8293 = vrot.slane %v8147, 6
  %v8294 = vsel %vm8263, %v8291, %v8293
  %v8295 = vrot.slane %v8148, 6
  %v8296 = vsel %vm8263, %v8293, %v8295
  %v8297 = vrot.slane %v8149, 6
  %v8298 = vsel %vm8263, %v8295, %v8297
  %v8299 = vrot.slane %v8150, 6
  %v8300 = vsel %vm8263, %v8297, %v8299
  %v8301 = vrot.slane %v8151, 6
  %v8302 = vsel %vm8263, %v8299, %v8301
  %v8303 = vrot.slane %v8258, 6
  %v8304 = vsel %vm8263, %v8301, %v8303
  %v8305 = vrot.slane %v8259, 6
  %v8306 = vsel %vm8263, %v8303, %v8305
  %8307 = vrot.lane.b32.xlu0 %v8266, 64
  %v8308 = vpop.permute.xlu0 %8307
  %8309 = vrot.lane.b32.xlu0 %v8268, 64
  %v8310 = vpop.permute.xlu0 %8309
  %8311 = vrot.lane.b32.xlu0 %v8270, 64
  %v8312 = vpop.permute.xlu0 %8311
  %8313 = vrot.lane.b32.xlu0 %v8272, 64
  %v8314 = vpop.permute.xlu0 %8313
  %8315 = vrot.lane.b32.xlu0 %v8274, 64
  %v8316 = vpop.permute.xlu0 %8315
  %8317 = vrot.lane.b32.xlu0 %v8276, 64
  %v8318 = vpop.permute.xlu0 %8317
  %8319 = vrot.lane.b32.xlu0 %v8278, 64
  %v8320 = vpop.permute.xlu0 %8319
  %8321 = vrot.lane.b32.xlu0 %v8280, 64
  %v8322 = vpop.permute.xlu0 %8321
  %8323 = vrot.lane.b32.xlu0 %v8282, 64
  %v8324 = vpop.permute.xlu0 %8323
  %8325 = vrot.lane.b32.xlu0 %v8284, 64
  %v8326 = vpop.permute.xlu0 %8325
  %8327 = vrot.lane.b32.xlu0 %v8286, 64
  %v8328 = vpop.permute.xlu0 %8327
  %8329 = vrot.lane.b32.xlu0 %v8288, 64
  %v8330 = vpop.permute.xlu0 %8329
  %8331 = vrot.lane.b32.xlu0 %v8290, 64
  %v8332 = vpop.permute.xlu0 %8331
  %8333 = vrot.lane.b32.xlu0 %v8292, 64
  %v8334 = vpop.permute.xlu0 %8333
  %8335 = vrot.lane.b32.xlu0 %v8294, 64
  %v8336 = vpop.permute.xlu0 %8335
  %8337 = vrot.lane.b32.xlu0 %v8296, 64
  %v8338 = vpop.permute.xlu0 %8337
  %8339 = vrot.lane.b32.xlu0 %v8298, 64
  %v8340 = vpop.permute.xlu0 %8339
  %8341 = vrot.lane.b32.xlu0 %v8300, 64
  %v8342 = vpop.permute.xlu0 %8341
  %8343 = vrot.lane.b32.xlu0 %v8302, 64
  %v8344 = vpop.permute.xlu0 %8343
  %8345 = vrot.lane.b32.xlu0 %v8304, 64
  %v8346 = vpop.permute.xlu0 %8345
  %8347 = vrot.lane.b32.xlu0 %v8306, 64
  %v8348 = vpop.permute.xlu0 %8347
  %v8370 = vadd.f32 %v8236, %v8308
  %v8371 = vadd.f32 %v8237, %v8310
  %v8372 = vadd.f32 %v8238, %v8312
  %v8373 = vadd.f32 %v8239, %v8314
  %v8374 = vadd.f32 %v8240, %v8316
  %v8375 = vadd.f32 %v8241, %v8318
  %v8376 = vadd.f32 %v8242, %v8320
  %v8377 = vadd.f32 %v8243, %v8322
  %v8378 = vadd.f32 %v8244, %v8324
  %v8379 = vadd.f32 %v8245, %v8326
  %v8380 = vadd.f32 %v8246, %v8328
  %v8381 = vadd.f32 %v8247, %v8330
  %v8382 = vadd.f32 %v8248, %v8332
  %v8383 = vadd.f32 %v8249, %v8334
  %v8384 = vadd.f32 %v8250, %v8336
  %v8385 = vadd.f32 %v8251, %v8338
  %v8386 = vadd.f32 %v8252, %v8340
  %v8387 = vadd.f32 %v8253, %v8342
  %v8388 = vadd.f32 %v8254, %v8344
  %v8389 = vadd.f32 %v8255, %v8346
  %v8390 = vadd.f32 %v8256, %v8348
  %v8391 = vld [vmem:[#allocation3 + $0x38] sm:$0x80]
  %v8392 = vld [vmem:[#allocation3 + $0x60] sm:$0xff]
  %v8393 = vld [vmem:[#allocation3 + $0x88] sm:$0xff]
  %v8394 = vld [vmem:[#allocation3 + $0xb0] sm:$0xff]
  %v8395 = vld [vmem:[#allocation3 + $0xd8] sm:$0xff]
  %v8396 = vld [vmem:[#allocation3 + $0x100] sm:$0xff]
  %v8397 = vld [vmem:[#allocation3 + $0x128] sm:$0xff]
  %v8398 = vld [vmem:[#allocation3 + $0x150] sm:$0xff]
  %v8399 = vld [vmem:[#allocation3 + $0x178] sm:$0xff]
  %v8400 = vld [vmem:[#allocation3 + $0x1a0] sm:$0xff]
  %v8401 = vld [vmem:[#allocation3 + $0x1c8] sm:$0xff]
  %v8402 = vld [vmem:[#allocation3 + $0x1f0] sm:$0xff]
  %v8403 = vld [vmem:[#allocation3 + $0x218] sm:$0xff]
  %v8404 = vld [vmem:[#allocation3 + $0x240] sm:$0xff]
  %v8405 = vld [vmem:[#allocation3 + $0x268] sm:$0xff]
  %v8406 = vld [vmem:[#allocation3 + $0x290] sm:$0xff]
  %v8407 = vld [vmem:[#allocation3 + $0x2b8] sm:$0xff]
  %v8408 = vld [vmem:[#allocation3 + $0x2e0] sm:$0xff]
  %v8409 = vld [vmem:[#allocation3 + $0x308] sm:$0xff]
  %v8410 = vld [vmem:[#allocation3 + $0x330] sm:$0xff]
  %v8411 = vld [vmem:[#allocation3 + $0x358] sm:$0xff]
  %v8412 = vld [vmem:[#allocation3 + $0x380] sm:$0x1f]
  %vm8435 = vcmask 1040384
  %v8436 = vrot.slane %v8391, 7
  %v8437 = vrot.slane %v8392, 7
  %v8438 = vsel %vm8435, %v8436, %v8437
  %v8439 = vrot.slane %v8393, 7
  %v8440 = vsel %vm8435, %v8437, %v8439
  %v8441 = vrot.slane %v8394, 7
  %v8442 = vsel %vm8435, %v8439, %v8441
  %v8443 = vrot.slane %v8395, 7
  %v8444 = vsel %vm8435, %v8441, %v8443
  %v8445 = vrot.slane %v8396, 7
  %v8446 = vsel %vm8435, %v8443, %v8445
  %v8447 = vrot.slane %v8397, 7
  %v8448 = vsel %vm8435, %v8445, %v8447
  %v8449 = vrot.slane %v8398, 7
  %v8450 = vsel %vm8435, %v8447, %v8449
  %v8451 = vrot.slane %v8399, 7
  %v8452 = vsel %vm8435, %v8449, %v8451
  %v8453 = vrot.slane %v8400, 7
  %v8454 = vsel %vm8435, %v8451, %v8453
  %v8455 = vrot.slane %v8401, 7
  %v8456 = vsel %vm8435, %v8453, %v8455
  %v8457 = vrot.slane %v8402, 7
  %v8458 = vsel %vm8435, %v8455, %v8457
  %v8459 = vrot.slane %v8403, 7
  %v8460 = vsel %vm8435, %v8457, %v8459
  %v8461 = vrot.slane %v8404, 7
  %v8462 = vsel %vm8435, %v8459, %v8461
  %v8463 = vrot.slane %v8405, 7
  %v8464 = vsel %vm8435, %v8461, %v8463
  %v8465 = vrot.slane %v8406, 7
  %v8466 = vsel %vm8435, %v8463, %v8465
  %v8467 = vrot.slane %v8407, 7
  %v8468 = vsel %vm8435, %v8465, %v8467
  %v8469 = vrot.slane %v8408, 7
  %v8470 = vsel %vm8435, %v8467, %v8469
  %v8471 = vrot.slane %v8409, 7
  %v8472 = vsel %vm8435, %v8469, %v8471
  %v8473 = vrot.slane %v8410, 7
  %v8474 = vsel %vm8435, %v8471, %v8473
  %v8475 = vrot.slane %v8411, 7
  %v8476 = vsel %vm8435, %v8473, %v8475
  %v8477 = vrot.slane %v8412, 7
  %v8478 = vsel %vm8435, %v8475, %v8477
  %v8500 = vadd.f32 %v8370, %v8438
  %v8501 = vadd.f32 %v8371, %v8440
  %v8502 = vadd.f32 %v8372, %v8442
  %v8503 = vadd.f32 %v8373, %v8444
  %v8504 = vadd.f32 %v8374, %v8446
  %v8505 = vadd.f32 %v8375, %v8448
  %v8506 = vadd.f32 %v8376, %v8450
  %v8507 = vadd.f32 %v8377, %v8452
  %v8508 = vadd.f32 %v8378, %v8454
  %v8509 = vadd.f32 %v8379, %v8456
  %v8510 = vadd.f32 %v8380, %v8458
  %v8511 = vadd.f32 %v8381, %v8460
  %v8512 = vadd.f32 %v8382, %v8462
  %v8513 = vadd.f32 %v8383, %v8464
  %v8514 = vadd.f32 %v8384, %v8466
  %v8515 = vadd.f32 %v8385, %v8468
  %v8516 = vadd.f32 %v8386, %v8470
  %v8517 = vadd.f32 %v8387, %v8472
  %v8518 = vadd.f32 %v8388, %v8474
  %v8519 = vadd.f32 %v8389, %v8476
  %v8520 = vadd.f32 %v8390, %v8478
  %v8521 = vld [vmem:[#allocation3 + $0x380] sm:$0x3f]
  %8523 = vrot.lane.b32.xlu0 %v8392, 64
  %v8524 = vpop.permute.xlu0 %8523
  %8525 = vrot.lane.b32.xlu0 %v8393, 64
  %v8526 = vpop.permute.xlu0 %8525
  %8527 = vrot.lane.b32.xlu0 %v8394, 64
  %v8528 = vpop.permute.xlu0 %8527
  %8529 = vrot.lane.b32.xlu0 %v8395, 64
  %v8530 = vpop.permute.xlu0 %8529
  %8531 = vrot.lane.b32.xlu0 %v8396, 64
  %v8532 = vpop.permute.xlu0 %8531
  %8533 = vrot.lane.b32.xlu0 %v8397, 64
  %v8534 = vpop.permute.xlu0 %8533
  %8535 = vrot.lane.b32.xlu0 %v8398, 64
  %v8536 = vpop.permute.xlu0 %8535
  %8537 = vrot.lane.b32.xlu0 %v8399, 64
  %v8538 = vpop.permute.xlu0 %8537
  %8539 = vrot.lane.b32.xlu0 %v8400, 64
  %v8540 = vpop.permute.xlu0 %8539
  %8541 = vrot.lane.b32.xlu0 %v8401, 64
  %v8542 = vpop.permute.xlu0 %8541
  %8543 = vrot.lane.b32.xlu0 %v8402, 64
  %v8544 = vpop.permute.xlu0 %8543
  %8545 = vrot.lane.b32.xlu0 %v8403, 64
  %v8546 = vpop.permute.xlu0 %8545
  %8547 = vrot.lane.b32.xlu0 %v8404, 64
  %v8548 = vpop.permute.xlu0 %8547
  %8549 = vrot.lane.b32.xlu0 %v8405, 64
  %v8550 = vpop.permute.xlu0 %8549
  %8551 = vrot.lane.b32.xlu0 %v8406, 64
  %v8552 = vpop.permute.xlu0 %8551
  %8553 = vrot.lane.b32.xlu0 %v8407, 64
  %v8554 = vpop.permute.xlu0 %8553
  %8555 = vrot.lane.b32.xlu0 %v8408, 64
  %v8556 = vpop.permute.xlu0 %8555
  %8557 = vrot.lane.b32.xlu0 %v8409, 64
  %v8558 = vpop.permute.xlu0 %8557
  %8559 = vrot.lane.b32.xlu0 %v8410, 64
  %v8560 = vpop.permute.xlu0 %8559
  %8561 = vrot.lane.b32.xlu0 %v8411, 64
  %v8562 = vpop.permute.xlu0 %8561
  %8563 = vrot.lane.b32.xlu0 %v8521, 64
  %v8564 = vpop.permute.xlu0 %8563
  %v8586 = vadd.f32 %v8500, %v8524
  %v8587 = vadd.f32 %v8501, %v8526
  %v8588 = vadd.f32 %v8502, %v8528
  %v8589 = vadd.f32 %v8503, %v8530
  %v8590 = vadd.f32 %v8504, %v8532
  %v8591 = vadd.f32 %v8505, %v8534
  %v8592 = vadd.f32 %v8506, %v8536
  %v8593 = vadd.f32 %v8507, %v8538
  %v8594 = vadd.f32 %v8508, %v8540
  %v8595 = vadd.f32 %v8509, %v8542
  %v8596 = vadd.f32 %v8510, %v8544
  %v8597 = vadd.f32 %v8511, %v8546
  %v8598 = vadd.f32 %v8512, %v8548
  %v8599 = vadd.f32 %v8513, %v8550
  %v8600 = vadd.f32 %v8514, %v8552
  %v8601 = vadd.f32 %v8515, %v8554
  %v8602 = vadd.f32 %v8516, %v8556
  %v8603 = vadd.f32 %v8517, %v8558
  %v8604 = vadd.f32 %v8518, %v8560
  %v8605 = vadd.f32 %v8519, %v8562
  %v8606 = vadd.f32 %v8520, %v8564
  %v8607 = vld [vmem:[#allocation3 + $0x90] sm:$0xf0]
  %v8608 = vld [vmem:[#allocation3 + $0xb8] sm:$0xff]
  %v8609 = vld [vmem:[#allocation3 + $0xe0] sm:$0xff]
  %v8610 = vld [vmem:[#allocation3 + $0x108] sm:$0xff]
  %v8611 = vld [vmem:[#allocation3 + $0x130] sm:$0xff]
  %v8612 = vld [vmem:[#allocation3 + $0x158] sm:$0xff]
  %v8613 = vld [vmem:[#allocation3 + $0x180] sm:$0xff]
  %v8614 = vld [vmem:[#allocation3 + $0x1a8] sm:$0xff]
  %v8615 = vld [vmem:[#allocation3 + $0x1d0] sm:$0xff]
  %v8616 = vld [vmem:[#allocation3 + $0x1f8] sm:$0xff]
  %v8617 = vld [vmem:[#allocation3 + $0x220] sm:$0xff]
  %v8618 = vld [vmem:[#allocation3 + $0x248] sm:$0xff]
  %v8619 = vld [vmem:[#allocation3 + $0x270] sm:$0xff]
  %v8620 = vld [vmem:[#allocation3 + $0x298] sm:$0xff]
  %v8621 = vld [vmem:[#allocation3 + $0x2c0] sm:$0xff]
  %v8622 = vld [vmem:[#allocation3 + $0x2e8] sm:$0xff]
  %v8623 = vld [vmem:[#allocation3 + $0x310] sm:$0xff]
  %v8624 = vld [vmem:[#allocation3 + $0x338] sm:$0xff]
  %v8625 = vld [vmem:[#allocation3 + $0x360] sm:$0xff]
  %v8626 = vld [vmem:[#allocation3 + $0x388] sm:$0xff]
  %v8627 = vld [vmem:[#allocation3 + $0x3b0] sm:$0xff]
  %v8628 = vld [vmem:[#allocation3 + $0x3d8] sm:$0x3]
  %vm8651 = vcmask 1043456
  %v8652 = vrot.slane %v8607, 4
  %v8653 = vrot.slane %v8608, 4
  %v8654 = vsel %vm8651, %v8652, %v8653
  %v8655 = vrot.slane %v8609, 4
  %v8656 = vsel %vm8651, %v8653, %v8655
  %v8657 = vrot.slane %v8610, 4
  %v8658 = vsel %vm8651, %v8655, %v8657
  %v8659 = vrot.slane %v8611, 4
  %v8660 = vsel %vm8651, %v8657, %v8659
  %v8661 = vrot.slane %v8612, 4
  %v8662 = vsel %vm8651, %v8659, %v8661
  %v8663 = vrot.slane %v8613, 4
  %v8664 = vsel %vm8651, %v8661, %v8663
  %v8665 = vrot.slane %v8614, 4
  %v8666 = vsel %vm8651, %v8663, %v8665
  %v8667 = vrot.slane %v8615, 4
  %v8668 = vsel %vm8651, %v8665, %v8667
  %v8669 = vrot.slane %v8616, 4
  %v8670 = vsel %vm8651, %v8667, %v8669
  %v8671 = vrot.slane %v8617, 4
  %v8672 = vsel %vm8651, %v8669, %v8671
  %v8673 = vrot.slane %v8618, 4
  %v8674 = vsel %vm8651, %v8671, %v8673
  %v8675 = vrot.slane %v8619, 4
  %v8676 = vsel %vm8651, %v8673, %v8675
  %v8677 = vrot.slane %v8620, 4
  %v8678 = vsel %vm8651, %v8675, %v8677
  %v8679 = vrot.slane %v8621, 4
  %v8680 = vsel %vm8651, %v8677, %v8679
  %v8681 = vrot.slane %v8622, 4
  %v8682 = vsel %vm8651, %v8679, %v8681
  %v8683 = vrot.slane %v8623, 4
  %v8684 = vsel %vm8651, %v8681, %v8683
  %v8685 = vrot.slane %v8624, 4
  %v8686 = vsel %vm8651, %v8683, %v8685
  %v8687 = vrot.slane %v8625, 4
  %v8688 = vsel %vm8651, %v8685, %v8687
  %v8689 = vrot.slane %v8626, 4
  %v8690 = vsel %vm8651, %v8687, %v8689
  %v8691 = vrot.slane %v8627, 4
  %v8692 = vsel %vm8651, %v8689, %v8691
  %v8693 = vrot.slane %v8628, 4
  %v8694 = vsel %vm8651, %v8691, %v8693
  %v8716 = vadd.f32 %v8586, %v8654
  %v8717 = vadd.f32 %v8587, %v8656
  %v8718 = vadd.f32 %v8588, %v8658
  %v8719 = vadd.f32 %v8589, %v8660
  %v8720 = vadd.f32 %v8590, %v8662
  %v8721 = vadd.f32 %v8591, %v8664
  %v8722 = vadd.f32 %v8592, %v8666
  %v8723 = vadd.f32 %v8593, %v8668
  %v8724 = vadd.f32 %v8594, %v8670
  %v8725 = vadd.f32 %v8595, %v8672
  %v8726 = vadd.f32 %v8596, %v8674
  %v8727 = vadd.f32 %v8597, %v8676
  %v8728 = vadd.f32 %v8598, %v8678
  %v8729 = vadd.f32 %v8599, %v8680
  %v8730 = vadd.f32 %v8600, %v8682
  %v8731 = vadd.f32 %v8601, %v8684
  %v8732 = vadd.f32 %v8602, %v8686
  %v8733 = vadd.f32 %v8603, %v8688
  %v8734 = vadd.f32 %v8604, %v8690
  %v8735 = vadd.f32 %v8605, %v8692
  %v8736 = vadd.f32 %v8606, %v8694
  %v8737 = vld [vmem:[#allocation3 + $0x90] sm:$0xe0]
  %v8738 = vld [vmem:[#allocation3 + $0x3d8] sm:$0x7]
  %vm8741 = vcmask 1042432
  %v8742 = vrot.slane %v8737, 5
  %v8743 = vrot.slane %v8608, 5
  %v8744 = vsel %vm8741, %v8742, %v8743
  %v8745 = vrot.slane %v8609, 5
  %v8746 = vsel %vm8741, %v8743, %v8745
  %v8747 = vrot.slane %v8610, 5
  %v8748 = vsel %vm8741, %v8745, %v8747
  %v8749 = vrot.slane %v8611, 5
  %v8750 = vsel %vm8741, %v8747, %v8749
  %v8751 = vrot.slane %v8612, 5
  %v8752 = vsel %vm8741, %v8749, %v8751
  %v8753 = vrot.slane %v8613, 5
  %v8754 = vsel %vm8741, %v8751, %v8753
  %v8755 = vrot.slane %v8614, 5
  %v8756 = vsel %vm8741, %v8753, %v8755
  %v8757 = vrot.slane %v8615, 5
  %v8758 = vsel %vm8741, %v8755, %v8757
  %v8759 = vrot.slane %v8616, 5
  %v8760 = vsel %vm8741, %v8757, %v8759
  %v8761 = vrot.slane %v8617, 5
  %v8762 = vsel %vm8741, %v8759, %v8761
  %v8763 = vrot.slane %v8618, 5
  %v8764 = vsel %vm8741, %v8761, %v8763
  %v8765 = vrot.slane %v8619, 5
  %v8766 = vsel %vm8741, %v8763, %v8765
  %v8767 = vrot.slane %v8620, 5
  %v8768 = vsel %vm8741, %v8765, %v8767
  %v8769 = vrot.slane %v8621, 5
  %v8770 = vsel %vm8741, %v8767, %v8769
  %v8771 = vrot.slane %v8622, 5
  %v8772 = vsel %vm8741, %v8769, %v8771
  %v8773 = vrot.slane %v8623, 5
  %v8774 = vsel %vm8741, %v8771, %v8773
  %v8775 = vrot.slane %v8624, 5
  %v8776 = vsel %vm8741, %v8773, %v8775
  %v8777 = vrot.slane %v8625, 5
  %v8778 = vsel %vm8741, %v8775, %v8777
  %v8779 = vrot.slane %v8626, 5
  %v8780 = vsel %vm8741, %v8777, %v8779
  %v8781 = vrot.slane %v8627, 5
  %v8782 = vsel %vm8741, %v8779, %v8781
  %v8783 = vrot.slane %v8738, 5
  %v8784 = vsel %vm8741, %v8781, %v8783
  %8785 = vrot.lane.b32.xlu0 %v8744, 64
  %v8786 = vpop.permute.xlu0 %8785
  %8787 = vrot.lane.b32.xlu0 %v8746, 64
  %v8788 = vpop.permute.xlu0 %8787
  %8789 = vrot.lane.b32.xlu0 %v8748, 64
  %v8790 = vpop.permute.xlu0 %8789
  %8791 = vrot.lane.b32.xlu0 %v8750, 64
  %v8792 = vpop.permute.xlu0 %8791
  %8793 = vrot.lane.b32.xlu0 %v8752, 64
  %v8794 = vpop.permute.xlu0 %8793
  %8795 = vrot.lane.b32.xlu0 %v8754, 64
  %v8796 = vpop.permute.xlu0 %8795
  %8797 = vrot.lane.b32.xlu0 %v8756, 64
  %v8798 = vpop.permute.xlu0 %8797
  %8799 = vrot.lane.b32.xlu0 %v8758, 64
  %v8800 = vpop.permute.xlu0 %8799
  %8801 = vrot.lane.b32.xlu0 %v8760, 64
  %v8802 = vpop.permute.xlu0 %8801
  %8803 = vrot.lane.b32.xlu0 %v8762, 64
  %v8804 = vpop.permute.xlu0 %8803
  %8805 = vrot.lane.b32.xlu0 %v8764, 64
  %v8806 = vpop.permute.xlu0 %8805
  %8807 = vrot.lane.b32.xlu0 %v8766, 64
  %v8808 = vpop.permute.xlu0 %8807
  %8809 = vrot.lane.b32.xlu0 %v8768, 64
  %v8810 = vpop.permute.xlu0 %8809
  %8811 = vrot.lane.b32.xlu0 %v8770, 64
  %v8812 = vpop.permute.xlu0 %8811
  %8813 = vrot.lane.b32.xlu0 %v8772, 64
  %v8814 = vpop.permute.xlu0 %8813
  %8815 = vrot.lane.b32.xlu0 %v8774, 64
  %v8816 = vpop.permute.xlu0 %8815
  %8817 = vrot.lane.b32.xlu0 %v8776, 64
  %v8818 = vpop.permute.xlu0 %8817
  %8819 = vrot.lane.b32.xlu0 %v8778, 64
  %v8820 = vpop.permute.xlu0 %8819
  %8821 = vrot.lane.b32.xlu0 %v8780, 64
  %v8822 = vpop.permute.xlu0 %8821
  %8823 = vrot.lane.b32.xlu0 %v8782, 64
  %v8824 = vpop.permute.xlu0 %8823
  %8825 = vrot.lane.b32.xlu0 %v8784, 64
  %v8826 = vpop.permute.xlu0 %8825
  %v8848 = vadd.f32 %v8716, %v8786
  %v8849 = vadd.f32 %v8717, %v8788
  %v8850 = vadd.f32 %v8718, %v8790
  %v8851 = vadd.f32 %v8719, %v8792
  %v8852 = vadd.f32 %v8720, %v8794
  %v8853 = vadd.f32 %v8721, %v8796
  %v8854 = vadd.f32 %v8722, %v8798
  %v8855 = vadd.f32 %v8723, %v8800
  %v8856 = vadd.f32 %v8724, %v8802
  %v8857 = vadd.f32 %v8725, %v8804
  %v8858 = vadd.f32 %v8726, %v8806
  %v8859 = vadd.f32 %v8727, %v8808
  %v8860 = vadd.f32 %v8728, %v8810
  %v8861 = vadd.f32 %v8729, %v8812
  %v8862 = vadd.f32 %v8730, %v8814
  %v8863 = vadd.f32 %v8731, %v8816
  %v8864 = vadd.f32 %v8732, %v8818
  %v8865 = vadd.f32 %v8733, %v8820
  %v8866 = vadd.f32 %v8734, %v8822
  %v8867 = vadd.f32 %v8735, %v8824
  %v8868 = vadd.f32 %v8736, %v8826
  %v8869 = vld [vmem:[#allocation3 + $0x98] sm:$0xc0]
  %v8870 = vld [vmem:[#allocation3 + $0xc0] sm:$0xff]
  %v8871 = vld [vmem:[#allocation3 + $0xe8] sm:$0xff]
  %v8872 = vld [vmem:[#allocation3 + $0x110] sm:$0xff]
  %v8873 = vld [vmem:[#allocation3 + $0x138] sm:$0xff]
  %v8874 = vld [vmem:[#allocation3 + $0x160] sm:$0xff]
  %v8875 = vld [vmem:[#allocation3 + $0x188] sm:$0xff]
  %v8876 = vld [vmem:[#allocation3 + $0x1b0] sm:$0xff]
  %v8877 = vld [vmem:[#allocation3 + $0x1d8] sm:$0xff]
  %v8878 = vld [vmem:[#allocation3 + $0x200] sm:$0xff]
  %v8879 = vld [vmem:[#allocation3 + $0x228] sm:$0xff]
  %v8880 = vld [vmem:[#allocation3 + $0x250] sm:$0xff]
  %v8881 = vld [vmem:[#allocation3 + $0x278] sm:$0xff]
  %v8882 = vld [vmem:[#allocation3 + $0x2a0] sm:$0xff]
  %v8883 = vld [vmem:[#allocation3 + $0x2c8] sm:$0xff]
  %v8884 = vld [vmem:[#allocation3 + $0x2f0] sm:$0xff]
  %v8885 = vld [vmem:[#allocation3 + $0x318] sm:$0xff]
  %v8886 = vld [vmem:[#allocation3 + $0x340] sm:$0xff]
  %v8887 = vld [vmem:[#allocation3 + $0x368] sm:$0xff]
  %v8888 = vld [vmem:[#allocation3 + $0x390] sm:$0xff]
  %v8889 = vld [vmem:[#allocation3 + $0x3b8] sm:$0xff]
  %v8890 = vld [vmem:[#allocation3 + $0x3e0] sm:$0xf]
  %v8913 = vrot.slane %v8869, 6
  %v8914 = vrot.slane %v8870, 6
  %v8915 = vsel %vm8263, %v8913, %v8914
  %v8916 = vrot.slane %v8871, 6
  %v8917 = vsel %vm8263, %v8914, %v8916
  %v8918 = vrot.slane %v8872, 6
  %v8919 = vsel %vm8263, %v8916, %v8918
  %v8920 = vrot.slane %v8873, 6
  %v8921 = vsel %vm8263, %v8918, %v8920
  %v8922 = vrot.slane %v8874, 6
  %v8923 = vsel %vm8263, %v8920, %v8922
  %v8924 = vrot.slane %v8875, 6
  %v8925 = vsel %vm8263, %v8922, %v8924
  %v8926 = vrot.slane %v8876, 6
  %v8927 = vsel %vm8263, %v8924, %v8926
  %v8928 = vrot.slane %v8877, 6
  %v8929 = vsel %vm8263, %v8926, %v8928
  %v8930 = vrot.slane %v8878, 6
  %v8931 = vsel %vm8263, %v8928, %v8930
  %v8932 = vrot.slane %v8879, 6
  %v8933 = vsel %vm8263, %v8930, %v8932
  %v8934 = vrot.slane %v8880, 6
  %v8935 = vsel %vm8263, %v8932, %v8934
  %v8936 = vrot.slane %v8881, 6
  %v8937 = vsel %vm8263, %v8934, %v8936
  %v8938 = vrot.slane %v8882, 6
  %v8939 = vsel %vm8263, %v8936, %v8938
  %v8940 = vrot.slane %v8883, 6
  %v8941 = vsel %vm8263, %v8938, %v8940
  %v8942 = vrot.slane %v8884, 6
  %v8943 = vsel %vm8263, %v8940, %v8942
  %v8944 = vrot.slane %v8885, 6
  %v8945 = vsel %vm8263, %v8942, %v8944
  %v8946 = vrot.slane %v8886, 6
  %v8947 = vsel %vm8263, %v8944, %v8946
  %v8948 = vrot.slane %v8887, 6
  %v8949 = vsel %vm8263, %v8946, %v8948
  %v8950 = vrot.slane %v8888, 6
  %v8951 = vsel %vm8263, %v8948, %v8950
  %v8952 = vrot.slane %v8889, 6
  %v8953 = vsel %vm8263, %v8950, %v8952
  %v8954 = vrot.slane %v8890, 6
  %v8955 = vsel %vm8263, %v8952, %v8954
  %v8977 = vadd.f32 %v8848, %v8915
  %v8978 = vadd.f32 %v8849, %v8917
  %v8979 = vadd.f32 %v8850, %v8919
  %v8980 = vadd.f32 %v8851, %v8921
  %v8981 = vadd.f32 %v8852, %v8923
  %v8982 = vadd.f32 %v8853, %v8925
  %v8983 = vadd.f32 %v8854, %v8927
  %v8984 = vadd.f32 %v8855, %v8929
  %v8985 = vadd.f32 %v8856, %v8931
  %v8986 = vadd.f32 %v8857, %v8933
  %v8987 = vadd.f32 %v8858, %v8935
  %v8988 = vadd.f32 %v8859, %v8937
  %v8989 = vadd.f32 %v8860, %v8939
  %v8990 = vadd.f32 %v8861, %v8941
  %v8991 = vadd.f32 %v8862, %v8943
  %v8992 = vadd.f32 %v8863, %v8945
  %v8993 = vadd.f32 %v8864, %v8947
  %v8994 = vadd.f32 %v8865, %v8949
  %v8995 = vadd.f32 %v8866, %v8951
  %v8996 = vadd.f32 %v8867, %v8953
  %v8997 = vadd.f32 %v8868, %v8955
  %v8999 = vlaneseq
  %v9000 = vshrl.u32 %v8999, 7
  %v9001 = vsub.s32 0, %v9000
  %v9002 = vrot.slane %v7950, %v9001
  %v9004 = vadd.f32 %v8977, %v9002
  %v9005 = vadd.f32 %v8978, %v9002
  %v9006 = vadd.f32 %v8979, %v9002
  %v9007 = vadd.f32 %v8980, %v9002
  %v9008 = vadd.f32 %v8981, %v9002
  %v9009 = vadd.f32 %v8982, %v9002
  %v9010 = vadd.f32 %v8983, %v9002
  %v9011 = vadd.f32 %v8984, %v9002
  %v9012 = vadd.f32 %v8985, %v9002
  %v9013 = vadd.f32 %v8986, %v9002
  %v9014 = vadd.f32 %v8987, %v9002
  %v9015 = vadd.f32 %v8988, %v9002
  %v9016 = vadd.f32 %v8989, %v9002
  %v9017 = vadd.f32 %v8990, %v9002
  %v9018 = vadd.f32 %v8991, %v9002
  %v9019 = vadd.f32 %v8992, %v9002
  %v9020 = vadd.f32 %v8993, %v9002
  %v9021 = vadd.f32 %v8994, %v9002
  %v9022 = vadd.f32 %v8995, %v9002
  %v9023 = vadd.f32 %v8996, %v9002
  %v9024 = vadd.f32 %v8997, %v9002
  %v9025 = vmax.f32 %v9004, 0.0
  %v9026 = vmax.f32 %v9005, 0.0
  %v9027 = vmax.f32 %v9006, 0.0
  %v9028 = vmax.f32 %v9007, 0.0
  %v9029 = vmax.f32 %v9008, 0.0
  %v9030 = vmax.f32 %v9009, 0.0
  %v9031 = vmax.f32 %v9010, 0.0
  %v9032 = vmax.f32 %v9011, 0.0
  %v9033 = vmax.f32 %v9012, 0.0
  %v9034 = vmax.f32 %v9013, 0.0
  %v9035 = vmax.f32 %v9014, 0.0
  %v9036 = vmax.f32 %v9015, 0.0
  %v9037 = vmax.f32 %v9016, 0.0
  %v9038 = vmax.f32 %v9017, 0.0
  %v9039 = vmax.f32 %v9018, 0.0
  %v9040 = vmax.f32 %v9019, 0.0
  %v9041 = vmax.f32 %v9020, 0.0
  %v9042 = vmax.f32 %v9021, 0.0
  %v9043 = vmax.f32 %v9022, 0.0
  %v9044 = vmax.f32 %v9023, 0.0
  %v9045 = vmax.f32 %v9024, 0.0
  %v9066 = vrot.slane %v9026, 6
  %v9067 = vrot.slane %v9027, 6
  %v9068 = vsel %vm8263, %v9066, %v9067
  %v9069 = vrot.slane %v9028, 6
  %v9070 = vsel %vm8263, %v9067, %v9069
  %v9071 = vrot.slane %v9029, 6
  %v9072 = vsel %vm8263, %v9069, %v9071
  %v9073 = vrot.slane %v9030, 6
  %v9074 = vsel %vm8263, %v9071, %v9073
  %v9075 = vrot.slane %v9031, 6
  %v9076 = vsel %vm8263, %v9073, %v9075
  %v9077 = vrot.slane %v9032, 6
  %v9078 = vsel %vm8263, %v9075, %v9077
  %v9079 = vrot.slane %v9033, 6
  %v9080 = vsel %vm8263, %v9077, %v9079
  %v9081 = vrot.slane %v9034, 6
  %v9082 = vsel %vm8263, %v9079, %v9081
  %v9083 = vrot.slane %v9035, 6
  %v9084 = vsel %vm8263, %v9081, %v9083
  %v9085 = vrot.slane %v9036, 6
  %v9086 = vsel %vm8263, %v9083, %v9085
  %v9087 = vrot.slane %v9037, 6
  %v9088 = vsel %vm8263, %v9085, %v9087
  %v9089 = vrot.slane %v9038, 6
  %v9090 = vsel %vm8263, %v9087, %v9089
  %v9091 = vrot.slane %v9039, 6
  %v9092 = vsel %vm8263, %v9089, %v9091
  %v9093 = vrot.slane %v9040, 6
  %v9094 = vsel %vm8263, %v9091, %v9093
  %v9095 = vrot.slane %v9041, 6
  %v9096 = vsel %vm8263, %v9093, %v9095
  %v9097 = vrot.slane %v9042, 6
  %v9098 = vsel %vm8263, %v9095, %v9097
  %v9099 = vrot.slane %v9043, 6
  %v9100 = vsel %vm8263, %v9097, %v9099
  %v9101 = vrot.slane %v9044, 6
  %v9102 = vsel %vm8263, %v9099, %v9101
  %v9103 = vrot.slane %v9045, 6
  %v9104 = vsel %vm8263, %v9101, %v9103
  %v9124 = vmax.f32 %v9025, %v9068
  %v9125 = vmax.f32 %v9026, %v9070
  %v9126 = vmax.f32 %v9027, %v9072
  %v9127 = vmax.f32 %v9028, %v9074
  %v9128 = vmax.f32 %v9029, %v9076
  %v9129 = vmax.f32 %v9030, %v9078
  %v9130 = vmax.f32 %v9031, %v9080
  %v9131 = vmax.f32 %v9032, %v9082
  %v9132 = vmax.f32 %v9033, %v9084
  %v9133 = vmax.f32 %v9034, %v9086
  %v9134 = vmax.f32 %v9035, %v9088
  %v9135 = vmax.f32 %v9036, %v9090
  %v9136 = vmax.f32 %v9037, %v9092
  %v9137 = vmax.f32 %v9038, %v9094
  %v9138 = vmax.f32 %v9039, %v9096
  %v9139 = vmax.f32 %v9040, %v9098
  %v9140 = vmax.f32 %v9041, %v9100
  %v9141 = vmax.f32 %v9042, %v9102
  %v9142 = vmax.f32 %v9043, %v9104
  %v9162 = vrot.slane %v9124, 1
  %v9163 = vrot.slane %v9125, 1
  %v9164 = vsel %vm8005, %v9162, %v9163
  %v9165 = vrot.slane %v9126, 1
  %v9166 = vsel %vm8005, %v9163, %v9165
  %v9167 = vrot.slane %v9127, 1
  %v9168 = vsel %vm8005, %v9165, %v9167
  %v9169 = vrot.slane %v9128, 1
  %v9170 = vsel %vm8005, %v9167, %v9169
  %v9171 = vrot.slane %v9129, 1
  %v9172 = vsel %vm8005, %v9169, %v9171
  %v9173 = vrot.slane %v9130, 1
  %v9174 = vsel %vm8005, %v9171, %v9173
  %v9175 = vrot.slane %v9131, 1
  %v9176 = vsel %vm8005, %v9173, %v9175
  %v9177 = vrot.slane %v9132, 1
  %v9178 = vsel %vm8005, %v9175, %v9177
  %v9179 = vrot.slane %v9133, 1
  %v9180 = vsel %vm8005, %v9177, %v9179
  %v9181 = vrot.slane %v9134, 1
  %v9182 = vsel %vm8005, %v9179, %v9181
  %v9183 = vrot.slane %v9135, 1
  %v9184 = vsel %vm8005, %v9181, %v9183
  %v9185 = vrot.slane %v9136, 1
  %v9186 = vsel %vm8005, %v9183, %v9185
  %v9187 = vrot.slane %v9137, 1
  %v9188 = vsel %vm8005, %v9185, %v9187
  %v9189 = vrot.slane %v9138, 1
  %v9190 = vsel %vm8005, %v9187, %v9189
  %v9191 = vrot.slane %v9139, 1
  %v9192 = vsel %vm8005, %v9189, %v9191
  %v9193 = vrot.slane %v9140, 1
  %v9194 = vsel %vm8005, %v9191, %v9193
  %v9195 = vrot.slane %v9141, 1
  %v9196 = vsel %vm8005, %v9193, %v9195
  %v9197 = vrot.slane %v9142, 1
  %v9198 = vsel %vm8005, %v9195, %v9197
  %v9218 = vmax.f32 %v9124, %v9164
  %v9219 = vmax.f32 %v9125, %v9166
  %v9220 = vmax.f32 %v9126, %v9168
  %v9221 = vmax.f32 %v9127, %v9170
  %v9222 = vmax.f32 %v9128, %v9172
  %v9223 = vmax.f32 %v9129, %v9174
  %v9224 = vmax.f32 %v9130, %v9176
  %v9225 = vmax.f32 %v9131, %v9178
  %v9226 = vmax.f32 %v9132, %v9180
  %v9227 = vmax.f32 %v9133, %v9182
  %v9228 = vmax.f32 %v9134, %v9184
  %v9229 = vmax.f32 %v9135, %v9186
  %v9230 = vmax.f32 %v9136, %v9188
  %v9231 = vmax.f32 %v9137, %v9190
  %v9232 = vmax.f32 %v9138, %v9192
  %v9233 = vmax.f32 %v9139, %v9194
  %v9234 = vmax.f32 %v9140, %v9196
  %v9235 = vmax.f32 %v9141, %v9198
  %v9236 = vmax.f32 %v9142, %v9197
  %vm9237 = vcmask 187392
  %v9239 = vsel %vm9237, %v7952, 0
  %v9242 = vsel %vm9237, %v7954, 0
  %v9245 = vsel %vm9237, %v7956, 0
  %v9248 = vsel %vm9237, %v7958, 0
  %v9251 = vsel %vm9237, %v7960, 0
  %v9254 = vsel %vm8005, %v9236, 0
  %9256 = vmatprep.subr.mxu0 0.0
  %9257 = vmatpush1.msra.mxu0 %v9233
  %9258 = vmatprep.subr.mxu0 0.0
  %9259 = vmatpush1.msra.mxu0 %v9232
  %9260 = vmatprep.subr.mxu0 0.0
  %9261 = vmatpush1.msra.mxu0 %v9231
  %9262 = vmatprep.subr.mxu0 0.0
  %9263 = vmatpush1.msra.mxu0 %v9230
  %9264 = vmatprep.subr.mxu0 0.0
  %9265 = vmatpush1.msra.mxu0 %v9229
  %9266 = vmatprep.subr.mxu0 0.0
  %9267 = vmatpush1.msra.mxu0 %v9228
  %9268 = vmatprep.subr.mxu0 0.0
  %9269 = vmatpush1.msra.mxu0 %v9227
  %9270 = vmatprep.subr.mxu0 0.0
  %9271 = vmatpush1.msra.mxu0 %v9226
  %9272 = vmatprep.subr.mxu0 0.0
  %9273 = vmatpush1.msra.mxu0 %v9225
  %9274 = vmatprep.subr.mxu0 0.0
  %9275 = vmatpush1.msra.mxu0 %v9224
  %9276 = vmatprep.subr.mxu0 0.0
  %9277 = vmatpush1.msra.mxu0 %v9223
  %9278 = vmatprep.subr.mxu0 0.0
  %9279 = vmatpush1.msra.mxu0 %v9222
  %9280 = vmatprep.subr.mxu0 0.0
  %9281 = vmatpush1.msra.mxu0 %v9221
  %9282 = vmatprep.subr.mxu0 0.0
  %9283 = vmatpush1.msra.mxu0 %v9220
  %9284 = vmatprep.subr.mxu0 0.0
  %9285 = vmatpush1.msra.mxu0 %v9219
  %9286 = vmatprep.subr.mxu0 0.0
  %9287 = vmatpush1.msra.mxu0 %v9218
  %9288 = vmatprep.subr.mxu0 0.0
  %9289 = vmatpush2.msra.mxu0 0.0
  %9290 = vmatprep.subr.mxu0 0.0
  %9291 = vmatpush2.msra.mxu0 0.0
  %9292 = vmatprep.subr.mxu0 0.0
  %9293 = vmatpush2.msra.mxu0 0.0
  %9294 = vmatprep.subr.mxu0 0.0
  %9295 = vmatpush2.msra.mxu0 0.0
  %9296 = vmatprep.subr.mxu0 0.0
  %9297 = vmatpush2.msra.mxu0 0.0
  %9298 = vmatprep.subr.mxu0 0.0
  %9299 = vmatpush2.msra.mxu0 0.0
  %9300 = vmatprep.subr.mxu0 0.0
  %9301 = vmatpush2.msra.mxu0 0.0
  %9302 = vmatprep.subr.mxu0 0.0
  %9303 = vmatpush2.msra.mxu0 0.0
  %9304 = vmatprep.subr.mxu0 0.0
  %9305 = vmatpush2.msra.mxu0 0.0
  %9306 = vmatprep.subr.mxu0 0.0
  %9307 = vmatpush2.msra.mxu0 0.0
  %9308 = vmatprep.subr.mxu0 0.0
  %9309 = vmatpush2.msra.mxu0 0.0
  %9310 = vmatprep.subr.mxu0 0.0
  %9311 = vmatpush2.msra.mxu0 0.0
  %9312 = vmatprep.subr.mxu0 0.0
  %9313 = vmatpush2.msra.mxu0 0.0
  %9314 = vmatprep.subr.mxu0 0.0
  %9315 = vmatpush2.msra.mxu0 %v9254
  %9316 = vmatprep.subr.mxu0 0.0
  %9317 = vmatpush2.msra.mxu0 %v9235
  %9318 = vmatprep.subr.mxu0 0.0
  %9319 = vmatpush2.msra.mxu0 %v9234
  %9320 = vmatprep.mubr.f32.mxu0 %v9239
  %9321 = vmatmul.mubr.f32.gmra.mxu0 %v7951
  %v9322 = vpop.f32.mrf.mxu0
  %v9323 = vadd.f32 0.0, %v9322
  %v9324 = vpop.f32.mrf.mxu0
  %9325 = vmatprep.mubr.f32.mxu0 %v9242
  %9326 = vmatmul.mubr.f32.gmra.mxu0 %v7953
  %v9327 = vpop.f32.mrf.mxu0
  %v9328 = vadd.f32 0.0, %v9327
  %v9329 = vpop.f32.mrf.mxu0
  %9330 = vmatprep.mubr.f32.mxu0 %v9245
  %9331 = vmatmul.mubr.f32.gmra.mxu0 %v7955
  %v9332 = vpop.f32.mrf.mxu0
  %v9333 = vadd.f32 0.0, %v9332
  %v9334 = vpop.f32.mrf.mxu0
  %9335 = vmatprep.mubr.f32.mxu0 %v9248
  %9336 = vmatmul.mubr.f32.gmra.mxu0 %v7957
  %v9337 = vpop.f32.mrf.mxu0
  %v9338 = vadd.f32 0.0, %v9337
  %v9339 = vpop.f32.mrf.mxu0
  %9340 = vmatprep.mubr.f32.mxu0 %v9251
  %9341 = vmatmul.mubr.f32.gmra.mxu0 %v7959
  %v9342 = vpop.f32.mrf.mxu0
  %v9343 = vadd.f32 0.0, %v9342
  %v9344 = vpop.f32.mrf.mxu0
  %9345 = vdwg.mxu0
  %9346 = vxpose.xlu0.b32.start [1/16] %v9323, 128
  %9347 = vxpose.xlu0.b32.cont [2/16] %v9328, 128
  %9348 = vxpose.xlu0.b32.cont [3/16] %v9333, 128
  %9349 = vxpose.xlu0.b32.cont [4/16] %v9338, 128
  %9350 = vxpose.xlu0.b32.cont [5/16] %v9343, 128
  %9351 = vxpose.xlu0.b32.cont [6/16] 0.0, 128
  %9352 = vxpose.xlu0.b32.cont [7/16] 0.0, 128
  %9353 = vxpose.xlu0.b32.cont [8/16] 0.0, 128
  %9354 = vxpose.xlu0.b32.cont [9/16] 0.0, 128
  %9355 = vxpose.xlu0.b32.cont [10/16] 0.0, 128
  %9356 = vxpose.xlu0.b32.cont [11/16] 0.0, 128
  %9357 = vxpose.xlu0.b32.cont [12/16] 0.0, 128
  %9358 = vxpose.xlu0.b32.cont [13/16] 0.0, 128
  %9359 = vxpose.xlu0.b32.cont [14/16] 0.0, 128
  %9360 = vxpose.xlu0.b32.cont [15/16] 0.0, 128
  %9361 = vxpose.xlu0.b32.end [16/16] 0.0, 128
  %v9362 = vpop.trf.xlu0
  %v9363 = vpop.trf.xlu0
  %v9364 = vpop.trf.xlu0
  %v9365 = vpop.trf.xlu0
  %v9366 = vpop.trf.xlu0
  %v9367 = vpop.trf.xlu0
  %v9368 = vpop.trf.xlu0
  %v9369 = vpop.trf.xlu0
  %v9370 = vpop.trf.xlu0
  %v9371 = vpop.trf.xlu0
  %v9372 = vpop.trf.xlu0
  %v9373 = vpop.trf.xlu0
  %v9374 = vpop.trf.xlu0
  %v9375 = vpop.trf.xlu0
  %v9376 = vpop.trf.xlu0
  %v9377 = vpop.trf.xlu0
  %vm9378 = vcmask 293888
  %9379 = vst.msk [vmem:[%s6] sm:$0xff] %vm9378, %v9362
  %9380 = vst.msk [vmem:[%s6 + $0x8] sm:$0xff] %vm9378, %v9363
  %9381 = vst.msk [vmem:[%s6 + $0x10] sm:$0xff] %vm9378, %v9364
  %9382 = vst.msk [vmem:[%s6 + $0x18] sm:$0xff] %vm9378, %v9365
  %9383 = vst.msk [vmem:[%s6 + $0x20] sm:$0xff] %vm9378, %v9366
  %9384 = vst.msk [vmem:[%s6 + $0x28] sm:$0xff] %vm9378, %v9367
  %9385 = vst.msk [vmem:[%s6 + $0x30] sm:$0xff] %vm9378, %v9368
  %9386 = vst.msk [vmem:[%s6 + $0x38] sm:$0xff] %vm9378, %v9369
  %v9387 = vld [vmem:[#allocation3 + $0x410] sm:$0xff]
  %v9388 = vld [vmem:[#allocation3 + $0x438] sm:$0xff]
  %v9389 = vld [vmem:[#allocation3 + $0x460] sm:$0xff]
  %v9390 = vld [vmem:[#allocation3 + $0x488] sm:$0xff]
  %v9391 = vld [vmem:[#allocation3 + $0x4b0] sm:$0xff]
  %v9392 = vld [vmem:[#allocation3 + $0x4d8] sm:$0xff]
  %v9393 = vld [vmem:[#allocation3 + $0x500] sm:$0xff]
  %v9394 = vld [vmem:[#allocation3 + $0x528] sm:$0xff]
  %v9395 = vld [vmem:[#allocation3 + $0x550] sm:$0xff]
  %v9396 = vld [vmem:[#allocation3 + $0x578] sm:$0xff]
  %v9397 = vld [vmem:[#allocation3 + $0x5a0] sm:$0xff]
  %v9398 = vld [vmem:[#allocation3 + $0x5c8] sm:$0xff]
  %v9399 = vld [vmem:[#allocation3 + $0x5f0] sm:$0xff]
  %v9400 = vld [vmem:[#allocation3 + $0x618] sm:$0xff]
  %v9401 = vld [vmem:[#allocation3 + $0x640] sm:$0xff]
  %v9402 = vld [vmem:[#allocation3 + $0x668] sm:$0xff]
  %v9403 = vld [vmem:[#allocation3 + $0x690] sm:$0xff]
  %v9404 = vld [vmem:[#allocation3 + $0x6b8] sm:$0xff]
  %v9405 = vld [vmem:[#allocation3 + $0x6e0] sm:$0xff]
  %v9406 = vld [vmem:[#allocation3 + $0x708] sm:$0xff]
  %v9407 = vld [vmem:[#allocation3 + $0x730] sm:$0x3f]
  %v9408 = vld [vmem:[#allocation3 + $0x410] sm:$0xfe]
  %v9409 = vld [vmem:[#allocation3 + $0x730] sm:$0x7f]
  %v9431 = vrot.slane %v9408, 1
  %v9432 = vrot.slane %v9388, 1
  %v9433 = vsel %vm8005, %v9431, %v9432
  %v9434 = vrot.slane %v9389, 1
  %v9435 = vsel %vm8005, %v9432, %v9434
  %v9436 = vrot.slane %v9390, 1
  %v9437 = vsel %vm8005, %v9434, %v9436
  %v9438 = vrot.slane %v9391, 1
  %v9439 = vsel %vm8005, %v9436, %v9438
  %v9440 = vrot.slane %v9392, 1
  %v9441 = vsel %vm8005, %v9438, %v9440
  %v9442 = vrot.slane %v9393, 1
  %v9443 = vsel %vm8005, %v9440, %v9442
  %v9444 = vrot.slane %v9394, 1
  %v9445 = vsel %vm8005, %v9442, %v9444
  %v9446 = vrot.slane %v9395, 1
  %v9447 = vsel %vm8005, %v9444, %v9446
  %v9448 = vrot.slane %v9396, 1
  %v9449 = vsel %vm8005, %v9446, %v9448
  %v9450 = vrot.slane %v9397, 1
  %v9451 = vsel %vm8005, %v9448, %v9450
  %v9452 = vrot.slane %v9398, 1
  %v9453 = vsel %vm8005, %v9450, %v9452
  %v9454 = vrot.slane %v9399, 1
  %v9455 = vsel %vm8005, %v9452, %v9454
  %v9456 = vrot.slane %v9400, 1
  %v9457 = vsel %vm8005, %v9454, %v9456
  %v9458 = vrot.slane %v9401, 1
  %v9459 = vsel %vm8005, %v9456, %v9458
  %v9460 = vrot.slane %v9402, 1
  %v9461 = vsel %vm8005, %v9458, %v9460
  %v9462 = vrot.slane %v9403, 1
  %v9463 = vsel %vm8005, %v9460, %v9462
  %v9464 = vrot.slane %v9404, 1
  %v9465 = vsel %vm8005, %v9462, %v9464
  %v9466 = vrot.slane %v9405, 1
  %v9467 = vsel %vm8005, %v9464, %v9466
  %v9468 = vrot.slane %v9406, 1
  %v9469 = vsel %vm8005, %v9466, %v9468
  %v9470 = vrot.slane %v9409, 1
  %v9471 = vsel %vm8005, %v9468, %v9470
  %9472 = vrot.lane.b32.xlu0 %v9433, 64
  %v9473 = vpop.permute.xlu0 %9472
  %9474 = vrot.lane.b32.xlu0 %v9435, 64
  %v9475 = vpop.permute.xlu0 %9474
  %9476 = vrot.lane.b32.xlu0 %v9437, 64
  %v9477 = vpop.permute.xlu0 %9476
  %9478 = vrot.lane.b32.xlu0 %v9439, 64
  %v9479 = vpop.permute.xlu0 %9478
  %9480 = vrot.lane.b32.xlu0 %v9441, 64
  %v9481 = vpop.permute.xlu0 %9480
  %9482 = vrot.lane.b32.xlu0 %v9443, 64
  %v9483 = vpop.permute.xlu0 %9482
  %9484 = vrot.lane.b32.xlu0 %v9445, 64
  %v9485 = vpop.permute.xlu0 %9484
  %9486 = vrot.lane.b32.xlu0 %v9447, 64
  %v9487 = vpop.permute.xlu0 %9486
  %9488 = vrot.lane.b32.xlu0 %v9449, 64
  %v9489 = vpop.permute.xlu0 %9488
  %9490 = vrot.lane.b32.xlu0 %v9451, 64
  %v9491 = vpop.permute.xlu0 %9490
  %9492 = vrot.lane.b32.xlu0 %v9453, 64
  %v9493 = vpop.permute.xlu0 %9492
  %9494 = vrot.lane.b32.xlu0 %v9455, 64
  %v9495 = vpop.permute.xlu0 %9494
  %9496 = vrot.lane.b32.xlu0 %v9457, 64
  %v9497 = vpop.permute.xlu0 %9496
  %9498 = vrot.lane.b32.xlu0 %v9459, 64
  %v9499 = vpop.permute.xlu0 %9498
  %9500 = vrot.lane.b32.xlu0 %v9461, 64
  %v9501 = vpop.permute.xlu0 %9500
  %9502 = vrot.lane.b32.xlu0 %v9463, 64
  %v9503 = vpop.permute.xlu0 %9502
  %9504 = vrot.lane.b32.xlu0 %v9465, 64
  %v9505 = vpop.permute.xlu0 %9504
  %9506 = vrot.lane.b32.xlu0 %v9467, 64
  %v9507 = vpop.permute.xlu0 %9506
  %9508 = vrot.lane.b32.xlu0 %v9469, 64
  %v9509 = vpop.permute.xlu0 %9508
  %9510 = vrot.lane.b32.xlu0 %v9471, 64
  %v9511 = vpop.permute.xlu0 %9510
  %9512 = vrot.lane.b32.xlu0 %v9470, 64
  %v9513 = vpop.permute.xlu0 %9512
  %v9535 = vadd.f32 %v9387, %v9473
  %v9536 = vadd.f32 %v9388, %v9475
  %v9537 = vadd.f32 %v9389, %v9477
  %v9538 = vadd.f32 %v9390, %v9479
  %v9539 = vadd.f32 %v9391, %v9481
  %v9540 = vadd.f32 %v9392, %v9483
  %v9541 = vadd.f32 %v9393, %v9485
  %v9542 = vadd.f32 %v9394, %v9487
  %v9543 = vadd.f32 %v9395, %v9489
  %v9544 = vadd.f32 %v9396, %v9491
  %v9545 = vadd.f32 %v9397, %v9493
  %v9546 = vadd.f32 %v9398, %v9495
  %v9547 = vadd.f32 %v9399, %v9497
  %v9548 = vadd.f32 %v9400, %v9499
  %v9549 = vadd.f32 %v9401, %v9501
  %v9550 = vadd.f32 %v9402, %v9503
  %v9551 = vadd.f32 %v9403, %v9505
  %v9552 = vadd.f32 %v9404, %v9507
  %v9553 = vadd.f32 %v9405, %v9509
  %v9554 = vadd.f32 %v9406, %v9511
  %v9555 = vadd.f32 %v9407, %v9513
  %v9556 = vld [vmem:[#allocation3 + $0x418] sm:$0xfc]
  %v9557 = vld [vmem:[#allocation3 + $0x440] sm:$0xff]
  %v9558 = vld [vmem:[#allocation3 + $0x468] sm:$0xff]
  %v9559 = vld [vmem:[#allocation3 + $0x490] sm:$0xff]
  %v9560 = vld [vmem:[#allocation3 + $0x4b8] sm:$0xff]
  %v9561 = vld [vmem:[#allocation3 + $0x4e0] sm:$0xff]
  %v9562 = vld [vmem:[#allocation3 + $0x508] sm:$0xff]
  %v9563 = vld [vmem:[#allocation3 + $0x530] sm:$0xff]
  %v9564 = vld [vmem:[#allocation3 + $0x558] sm:$0xff]
  %v9565 = vld [vmem:[#allocation3 + $0x580] sm:$0xff]
  %v9566 = vld [vmem:[#allocation3 + $0x5a8] sm:$0xff]
  %v9567 = vld [vmem:[#allocation3 + $0x5d0] sm:$0xff]
  %v9568 = vld [vmem:[#allocation3 + $0x5f8] sm:$0xff]
  %v9569 = vld [vmem:[#allocation3 + $0x620] sm:$0xff]
  %v9570 = vld [vmem:[#allocation3 + $0x648] sm:$0xff]
  %v9571 = vld [vmem:[#allocation3 + $0x670] sm:$0xff]
  %v9572 = vld [vmem:[#allocation3 + $0x698] sm:$0xff]
  %v9573 = vld [vmem:[#allocation3 + $0x6c0] sm:$0xff]
  %v9574 = vld [vmem:[#allocation3 + $0x6e8] sm:$0xff]
  %v9575 = vld [vmem:[#allocation3 + $0x710] sm:$0xff]
  %v9576 = vld [vmem:[#allocation3 + $0x738] sm:$0xff]
  %v9598 = vrot.slane %v9556, 2
  %v9599 = vrot.slane %v9557, 2
  %v9600 = vsel %vm8173, %v9598, %v9599
  %v9601 = vrot.slane %v9558, 2
  %v9602 = vsel %vm8173, %v9599, %v9601
  %v9603 = vrot.slane %v9559, 2
  %v9604 = vsel %vm8173, %v9601, %v9603
  %v9605 = vrot.slane %v9560, 2
  %v9606 = vsel %vm8173, %v9603, %v9605
  %v9607 = vrot.slane %v9561, 2
  %v9608 = vsel %vm8173, %v9605, %v9607
  %v9609 = vrot.slane %v9562, 2
  %v9610 = vsel %vm8173, %v9607, %v9609
  %v9611 = vrot.slane %v9563, 2
  %v9612 = vsel %vm8173, %v9609, %v9611
  %v9613 = vrot.slane %v9564, 2
  %v9614 = vsel %vm8173, %v9611, %v9613
  %v9615 = vrot.slane %v9565, 2
  %v9616 = vsel %vm8173, %v9613, %v9615
  %v9617 = vrot.slane %v9566, 2
  %v9618 = vsel %vm8173, %v9615, %v9617
  %v9619 = vrot.slane %v9567, 2
  %v9620 = vsel %vm8173, %v9617, %v9619
  %v9621 = vrot.slane %v9568, 2
  %v9622 = vsel %vm8173, %v9619, %v9621
  %v9623 = vrot.slane %v9569, 2
  %v9624 = vsel %vm8173, %v9621, %v9623
  %v9625 = vrot.slane %v9570, 2
  %v9626 = vsel %vm8173, %v9623, %v9625
  %v9627 = vrot.slane %v9571, 2
  %v9628 = vsel %vm8173, %v9625, %v9627
  %v9629 = vrot.slane %v9572, 2
  %v9630 = vsel %vm8173, %v9627, %v9629
  %v9631 = vrot.slane %v9573, 2
  %v9632 = vsel %vm8173, %v9629, %v9631
  %v9633 = vrot.slane %v9574, 2
  %v9634 = vsel %vm8173, %v9631, %v9633
  %v9635 = vrot.slane %v9575, 2
  %v9636 = vsel %vm8173, %v9633, %v9635
  %v9637 = vrot.slane %v9576, 2
  %v9638 = vsel %vm8173, %v9635, %v9637
  %v9660 = vadd.f32 %v9535, %v9600
  %v9661 = vadd.f32 %v9536, %v9602
  %v9662 = vadd.f32 %v9537, %v9604
  %v9663 = vadd.f32 %v9538, %v9606
  %v9664 = vadd.f32 %v9539, %v9608
  %v9665 = vadd.f32 %v9540, %v9610
  %v9666 = vadd.f32 %v9541, %v9612
  %v9667 = vadd.f32 %v9542, %v9614
  %v9668 = vadd.f32 %v9543, %v9616
  %v9669 = vadd.f32 %v9544, %v9618
  %v9670 = vadd.f32 %v9545, %v9620
  %v9671 = vadd.f32 %v9546, %v9622
  %v9672 = vadd.f32 %v9547, %v9624
  %v9673 = vadd.f32 %v9548, %v9626
  %v9674 = vadd.f32 %v9549, %v9628
  %v9675 = vadd.f32 %v9550, %v9630
  %v9676 = vadd.f32 %v9551, %v9632
  %v9677 = vadd.f32 %v9552, %v9634
  %v9678 = vadd.f32 %v9553, %v9636
  %v9679 = vadd.f32 %v9554, %v9638
  %v9680 = vadd.f32 %v9555, %v9637
  %v9681 = vld [vmem:[#allocation3 + $0x440] sm:$0xc0]
  %v9682 = vld [vmem:[#allocation3 + $0x760] sm:$0xff]
  %v9683 = vld [vmem:[#allocation3 + $0x788] sm:$0xf]
  %v9687 = vrot.slane %v9681, 6
  %v9688 = vrot.slane %v9558, 6
  %v9689 = vsel %vm8263, %v9687, %v9688
  %v9690 = vrot.slane %v9559, 6
  %v9691 = vsel %vm8263, %v9688, %v9690
  %v9692 = vrot.slane %v9560, 6
  %v9693 = vsel %vm8263, %v9690, %v9692
  %v9694 = vrot.slane %v9561, 6
  %v9695 = vsel %vm8263, %v9692, %v9694
  %v9696 = vrot.slane %v9562, 6
  %v9697 = vsel %vm8263, %v9694, %v9696
  %v9698 = vrot.slane %v9563, 6
  %v9699 = vsel %vm8263, %v9696, %v9698
  %v9700 = vrot.slane %v9564, 6
  %v9701 = vsel %vm8263, %v9698, %v9700
  %v9702 = vrot.slane %v9565, 6
  %v9703 = vsel %vm8263, %v9700, %v9702
  %v9704 = vrot.slane %v9566, 6
  %v9705 = vsel %vm8263, %v9702, %v9704
  %v9706 = vrot.slane %v9567, 6
  %v9707 = vsel %vm8263, %v9704, %v9706
  %v9708 = vrot.slane %v9568, 6
  %v9709 = vsel %vm8263, %v9706, %v9708
  %v9710 = vrot.slane %v9569, 6
  %v9711 = vsel %vm8263, %v9708, %v9710
  %v9712 = vrot.slane %v9570, 6
  %v9713 = vsel %vm8263, %v9710, %v9712
  %v9714 = vrot.slane %v9571, 6
  %v9715 = vsel %vm8263, %v9712, %v9714
  %v9716 = vrot.slane %v9572, 6
  %v9717 = vsel %vm8263, %v9714, %v9716
  %v9718 = vrot.slane %v9573, 6
  %v9719 = vsel %vm8263, %v9716, %v9718
  %v9720 = vrot.slane %v9574, 6
  %v9721 = vsel %vm8263, %v9718, %v9720
  %v9722 = vrot.slane %v9575, 6
  %v9723 = vsel %vm8263, %v9720, %v9722
  %v9724 = vrot.slane %v9576, 6
  %v9725 = vsel %vm8263, %v9722, %v9724
  %v9726 = vrot.slane %v9682, 6
  %v9727 = vsel %vm8263, %v9724, %v9726
  %v9728 = vrot.slane %v9683, 6
  %v9729 = vsel %vm8263, %v9726, %v9728
  %9730 = vrot.lane.b32.xlu0 %v9689, 64
  %v9731 = vpop.permute.xlu0 %9730
  %9732 = vrot.lane.b32.xlu0 %v9691, 64
  %v9733 = vpop.permute.xlu0 %9732
  %9734 = vrot.lane.b32.xlu0 %v9693, 64
  %v9735 = vpop.permute.xlu0 %9734
  %9736 = vrot.lane.b32.xlu0 %v9695, 64
  %v9737 = vpop.permute.xlu0 %9736
  %9738 = vrot.lane.b32.xlu0 %v9697, 64
  %v9739 = vpop.permute.xlu0 %9738
  %9740 = vrot.lane.b32.xlu0 %v9699, 64
  %v9741 = vpop.permute.xlu0 %9740
  %9742 = vrot.lane.b32.xlu0 %v9701, 64
  %v9743 = vpop.permute.xlu0 %9742
  %9744 = vrot.lane.b32.xlu0 %v9703, 64
  %v9745 = vpop.permute.xlu0 %9744
  %9746 = vrot.lane.b32.xlu0 %v9705, 64
  %v9747 = vpop.permute.xlu0 %9746
  %9748 = vrot.lane.b32.xlu0 %v9707, 64
  %v9749 = vpop.permute.xlu0 %9748
  %9750 = vrot.lane.b32.xlu0 %v9709, 64
  %v9751 = vpop.permute.xlu0 %9750
  %9752 = vrot.lane.b32.xlu0 %v9711, 64
  %v9753 = vpop.permute.xlu0 %9752
  %9754 = vrot.lane.b32.xlu0 %v9713, 64
  %v9755 = vpop.permute.xlu0 %9754
  %9756 = vrot.lane.b32.xlu0 %v9715, 64
  %v9757 = vpop.permute.xlu0 %9756
  %9758 = vrot.lane.b32.xlu0 %v9717, 64
  %v9759 = vpop.permute.xlu0 %9758
  %9760 = vrot.lane.b32.xlu0 %v9719, 64
  %v9761 = vpop.permute.xlu0 %9760
  %9762 = vrot.lane.b32.xlu0 %v9721, 64
  %v9763 = vpop.permute.xlu0 %9762
  %9764 = vrot.lane.b32.xlu0 %v9723, 64
  %v9765 = vpop.permute.xlu0 %9764
  %9766 = vrot.lane.b32.xlu0 %v9725, 64
  %v9767 = vpop.permute.xlu0 %9766
  %9768 = vrot.lane.b32.xlu0 %v9727, 64
  %v9769 = vpop.permute.xlu0 %9768
  %9770 = vrot.lane.b32.xlu0 %v9729, 64
  %v9771 = vpop.permute.xlu0 %9770
  %v9793 = vadd.f32 %v9660, %v9731
  %v9794 = vadd.f32 %v9661, %v9733
  %v9795 = vadd.f32 %v9662, %v9735
  %v9796 = vadd.f32 %v9663, %v9737
  %v9797 = vadd.f32 %v9664, %v9739
  %v9798 = vadd.f32 %v9665, %v9741
  %v9799 = vadd.f32 %v9666, %v9743
  %v9800 = vadd.f32 %v9667, %v9745
  %v9801 = vadd.f32 %v9668, %v9747
  %v9802 = vadd.f32 %v9669, %v9749
  %v9803 = vadd.f32 %v9670, %v9751
  %v9804 = vadd.f32 %v9671, %v9753
  %v9805 = vadd.f32 %v9672, %v9755
  %v9806 = vadd.f32 %v9673, %v9757
  %v9807 = vadd.f32 %v9674, %v9759
  %v9808 = vadd.f32 %v9675, %v9761
  %v9809 = vadd.f32 %v9676, %v9763
  %v9810 = vadd.f32 %v9677, %v9765
  %v9811 = vadd.f32 %v9678, %v9767
  %v9812 = vadd.f32 %v9679, %v9769
  %v9813 = vadd.f32 %v9680, %v9771
  %v9814 = vld [vmem:[#allocation3 + $0x448] sm:$0x80]
  %v9815 = vld [vmem:[#allocation3 + $0x470] sm:$0xff]
  %v9816 = vld [vmem:[#allocation3 + $0x498] sm:$0xff]
  %v9817 = vld [vmem:[#allocation3 + $0x4c0] sm:$0xff]
  %v9818 = vld [vmem:[#allocation3 + $0x4e8] sm:$0xff]
  %v9819 = vld [vmem:[#allocation3 + $0x510] sm:$0xff]
  %v9820 = vld [vmem:[#allocation3 + $0x538] sm:$0xff]
  %v9821 = vld [vmem:[#allocation3 + $0x560] sm:$0xff]
  %v9822 = vld [vmem:[#allocation3 + $0x588] sm:$0xff]
  %v9823 = vld [vmem:[#allocation3 + $0x5b0] sm:$0xff]
  %v9824 = vld [vmem:[#allocation3 + $0x5d8] sm:$0xff]
  %v9825 = vld [vmem:[#allocation3 + $0x600] sm:$0xff]
  %v9826 = vld [vmem:[#allocation3 + $0x628] sm:$0xff]
  %v9827 = vld [vmem:[#allocation3 + $0x650] sm:$0xff]
  %v9828 = vld [vmem:[#allocation3 + $0x678] sm:$0xff]
  %v9829 = vld [vmem:[#allocation3 + $0x6a0] sm:$0xff]
  %v9830 = vld [vmem:[#allocation3 + $0x6c8] sm:$0xff]
  %v9831 = vld [vmem:[#allocation3 + $0x6f0] sm:$0xff]
  %v9832 = vld [vmem:[#allocation3 + $0x718] sm:$0xff]
  %v9833 = vld [vmem:[#allocation3 + $0x740] sm:$0xff]
  %v9834 = vld [vmem:[#allocation3 + $0x768] sm:$0xff]
  %v9835 = vld [vmem:[#allocation3 + $0x790] sm:$0x1f]
  %v9858 = vrot.slane %v9814, 7
  %v9859 = vrot.slane %v9815, 7
  %v9860 = vsel %vm8435, %v9858, %v9859
  %v9861 = vrot.slane %v9816, 7
  %v9862 = vsel %vm8435, %v9859, %v9861
  %v9863 = vrot.slane %v9817, 7
  %v9864 = vsel %vm8435, %v9861, %v9863
  %v9865 = vrot.slane %v9818, 7
  %v9866 = vsel %vm8435, %v9863, %v9865
  %v9867 = vrot.slane %v9819, 7
  %v9868 = vsel %vm8435, %v9865, %v9867
  %v9869 = vrot.slane %v9820, 7
  %v9870 = vsel %vm8435, %v9867, %v9869
  %v9871 = vrot.slane %v9821, 7
  %v9872 = vsel %vm8435, %v9869, %v9871
  %v9873 = vrot.slane %v9822, 7
  %v9874 = vsel %vm8435, %v9871, %v9873
  %v9875 = vrot.slane %v9823, 7
  %v9876 = vsel %vm8435, %v9873, %v9875
  %v9877 = vrot.slane %v9824, 7
  %v9878 = vsel %vm8435, %v9875, %v9877
  %v9879 = vrot.slane %v9825, 7
  %v9880 = vsel %vm8435, %v9877, %v9879
  %v9881 = vrot.slane %v9826, 7
  %v9882 = vsel %vm8435, %v9879, %v9881
  %v9883 = vrot.slane %v9827, 7
  %v9884 = vsel %vm8435, %v9881, %v9883
  %v9885 = vrot.slane %v9828, 7
  %v9886 = vsel %vm8435, %v9883, %v9885
  %v9887 = vrot.slane %v9829, 7
  %v9888 = vsel %vm8435, %v9885, %v9887
  %v9889 = vrot.slane %v9830, 7
  %v9890 = vsel %vm8435, %v9887, %v9889
  %v9891 = vrot.slane %v9831, 7
  %v9892 = vsel %vm8435, %v9889, %v9891
  %v9893 = vrot.slane %v9832, 7
  %v9894 = vsel %vm8435, %v9891, %v9893
  %v9895 = vrot.slane %v9833, 7
  %v9896 = vsel %vm8435, %v9893, %v9895
  %v9897 = vrot.slane %v9834, 7
  %v9898 = vsel %vm8435, %v9895, %v9897
  %v9899 = vrot.slane %v9835, 7
  %v9900 = vsel %vm8435, %v9897, %v9899
  %v9922 = vadd.f32 %v9793, %v9860
  %v9923 = vadd.f32 %v9794, %v9862
  %v9924 = vadd.f32 %v9795, %v9864
  %v9925 = vadd.f32 %v9796, %v9866
  %v9926 = vadd.f32 %v9797, %v9868
  %v9927 = vadd.f32 %v9798, %v9870
  %v9928 = vadd.f32 %v9799, %v9872
  %v9929 = vadd.f32 %v9800, %v9874
  %v9930 = vadd.f32 %v9801, %v9876
  %v9931 = vadd.f32 %v9802, %v9878
  %v9932 = vadd.f32 %v9803, %v9880
  %v9933 = vadd.f32 %v9804, %v9882
  %v9934 = vadd.f32 %v9805, %v9884
  %v9935 = vadd.f32 %v9806, %v9886
  %v9936 = vadd.f32 %v9807, %v9888
  %v9937 = vadd.f32 %v9808, %v9890
  %v9938 = vadd.f32 %v9809, %v9892
  %v9939 = vadd.f32 %v9810, %v9894
  %v9940 = vadd.f32 %v9811, %v9896
  %v9941 = vadd.f32 %v9812, %v9898
  %v9942 = vadd.f32 %v9813, %v9900
  %v9943 = vld [vmem:[#allocation3 + $0x790] sm:$0x3f]
  %9945 = vrot.lane.b32.xlu0 %v9815, 64
  %v9946 = vpop.permute.xlu0 %9945
  %9947 = vrot.lane.b32.xlu0 %v9816, 64
  %v9948 = vpop.permute.xlu0 %9947
  %9949 = vrot.lane.b32.xlu0 %v9817, 64
  %v9950 = vpop.permute.xlu0 %9949
  %9951 = vrot.lane.b32.xlu0 %v9818, 64
  %v9952 = vpop.permute.xlu0 %9951
  %9953 = vrot.lane.b32.xlu0 %v9819, 64
  %v9954 = vpop.permute.xlu0 %9953
  %9955 = vrot.lane.b32.xlu0 %v9820, 64
  %v9956 = vpop.permute.xlu0 %9955
  %9957 = vrot.lane.b32.xlu0 %v9821, 64
  %v9958 = vpop.permute.xlu0 %9957
  %9959 = vrot.lane.b32.xlu0 %v9822, 64
  %v9960 = vpop.permute.xlu0 %9959
  %9961 = vrot.lane.b32.xlu0 %v9823, 64
  %v9962 = vpop.permute.xlu0 %9961
  %9963 = vrot.lane.b32.xlu0 %v9824, 64
  %v9964 = vpop.permute.xlu0 %9963
  %9965 = vrot.lane.b32.xlu0 %v9825, 64
  %v9966 = vpop.permute.xlu0 %9965
  %9967 = vrot.lane.b32.xlu0 %v9826, 64
  %v9968 = vpop.permute.xlu0 %9967
  %9969 = vrot.lane.b32.xlu0 %v9827, 64
  %v9970 = vpop.permute.xlu0 %9969
  %9971 = vrot.lane.b32.xlu0 %v9828, 64
  %v9972 = vpop.permute.xlu0 %9971
  %9973 = vrot.lane.b32.xlu0 %v9829, 64
  %v9974 = vpop.permute.xlu0 %9973
  %9975 = vrot.lane.b32.xlu0 %v9830, 64
  %v9976 = vpop.permute.xlu0 %9975
  %9977 = vrot.lane.b32.xlu0 %v9831, 64
  %v9978 = vpop.permute.xlu0 %9977
  %9979 = vrot.lane.b32.xlu0 %v9832, 64
  %v9980 = vpop.permute.xlu0 %9979
  %9981 = vrot.lane.b32.xlu0 %v9833, 64
  %v9982 = vpop.permute.xlu0 %9981
  %9983 = vrot.lane.b32.xlu0 %v9834, 64
  %v9984 = vpop.permute.xlu0 %9983
  %9985 = vrot.lane.b32.xlu0 %v9943, 64
  %v9986 = vpop.permute.xlu0 %9985
  %v10008 = vadd.f32 %v9922, %v9946
  %v10009 = vadd.f32 %v9923, %v9948
  %v10010 = vadd.f32 %v9924, %v9950
  %v10011 = vadd.f32 %v9925, %v9952
  %v10012 = vadd.f32 %v9926, %v9954
  %v10013 = vadd.f32 %v9927, %v9956
  %v10014 = vadd.f32 %v9928, %v9958
  %v10015 = vadd.f32 %v9929, %v9960
  %v10016 = vadd.f32 %v9930, %v9962
  %v10017 = vadd.f32 %v9931, %v9964
  %v10018 = vadd.f32 %v9932, %v9966
  %v10019 = vadd.f32 %v9933, %v9968
  %v10020 = vadd.f32 %v9934, %v9970
  %v10021 = vadd.f32 %v9935, %v9972
  %v10022 = vadd.f32 %v9936, %v9974
  %v10023 = vadd.f32 %v9937, %v9976
  %v10024 = vadd.f32 %v9938, %v9978
  %v10025 = vadd.f32 %v9939, %v9980
  %v10026 = vadd.f32 %v9940, %v9982
  %v10027 = vadd.f32 %v9941, %v9984
  %v10028 = vadd.f32 %v9942, %v9986
  %v10029 = vld [vmem:[#allocation3 + $0x4a0] sm:$0xf0]
  %v10030 = vld [vmem:[#allocation3 + $0x4c8] sm:$0xff]
  %v10031 = vld [vmem:[#allocation3 + $0x4f0] sm:$0xff]
  %v10032 = vld [vmem:[#allocation3 + $0x518] sm:$0xff]
  %v10033 = vld [vmem:[#allocation3 + $0x540] sm:$0xff]
  %v10034 = vld [vmem:[#allocation3 + $0x568] sm:$0xff]
  %v10035 = vld [vmem:[#allocation3 + $0x590] sm:$0xff]
  %v10036 = vld [vmem:[#allocation3 + $0x5b8] sm:$0xff]
  %v10037 = vld [vmem:[#allocation3 + $0x5e0] sm:$0xff]
  %v10038 = vld [vmem:[#allocation3 + $0x608] sm:$0xff]
  %v10039 = vld [vmem:[#allocation3 + $0x630] sm:$0xff]
  %v10040 = vld [vmem:[#allocation3 + $0x658] sm:$0xff]
  %v10041 = vld [vmem:[#allocation3 + $0x680] sm:$0xff]
  %v10042 = vld [vmem:[#allocation3 + $0x6a8] sm:$0xff]
  %v10043 = vld [vmem:[#allocation3 + $0x6d0] sm:$0xff]
  %v10044 = vld [vmem:[#allocation3 + $0x6f8] sm:$0xff]
  %v10045 = vld [vmem:[#allocation3 + $0x720] sm:$0xff]
  %v10046 = vld [vmem:[#allocation3 + $0x748] sm:$0xff]
  %v10047 = vld [vmem:[#allocation3 + $0x770] sm:$0xff]
  %v10048 = vld [vmem:[#allocation3 + $0x798] sm:$0xff]
  %v10049 = vld [vmem:[#allocation3 + $0x7c0] sm:$0xff]
  %v10050 = vld [vmem:[#allocation3 + $0x7e8] sm:$0x3]
  %v10073 = vrot.slane %v10029, 4
  %v10074 = vrot.slane %v10030, 4
  %v10075 = vsel %vm8651, %v10073, %v10074
  %v10076 = vrot.slane %v10031, 4
  %v10077 = vsel %vm8651, %v10074, %v10076
  %v10078 = vrot.slane %v10032, 4
  %v10079 = vsel %vm8651, %v10076, %v10078
  %v10080 = vrot.slane %v10033, 4
  %v10081 = vsel %vm8651, %v10078, %v10080
  %v10082 = vrot.slane %v10034, 4
  %v10083 = vsel %vm8651, %v10080, %v10082
  %v10084 = vrot.slane %v10035, 4
  %v10085 = vsel %vm8651, %v10082, %v10084
  %v10086 = vrot.slane %v10036, 4
  %v10087 = vsel %vm8651, %v10084, %v10086
  %v10088 = vrot.slane %v10037, 4
  %v10089 = vsel %vm8651, %v10086, %v10088
  %v10090 = vrot.slane %v10038, 4
  %v10091 = vsel %vm8651, %v10088, %v10090
  %v10092 = vrot.slane %v10039, 4
  %v10093 = vsel %vm8651, %v10090, %v10092
  %v10094 = vrot.slane %v10040, 4
  %v10095 = vsel %vm8651, %v10092, %v10094
  %v10096 = vrot.slane %v10041, 4
  %v10097 = vsel %vm8651, %v10094, %v10096
  %v10098 = vrot.slane %v10042, 4
  %v10099 = vsel %vm8651, %v10096, %v10098
  %v10100 = vrot.slane %v10043, 4
  %v10101 = vsel %vm8651, %v10098, %v10100
  %v10102 = vrot.slane %v10044, 4
  %v10103 = vsel %vm8651, %v10100, %v10102
  %v10104 = vrot.slane %v10045, 4
  %v10105 = vsel %vm8651, %v10102, %v10104
  %v10106 = vrot.slane %v10046, 4
  %v10107 = vsel %vm8651, %v10104, %v10106
  %v10108 = vrot.slane %v10047, 4
  %v10109 = vsel %vm8651, %v10106, %v10108
  %v10110 = vrot.slane %v10048, 4
  %v10111 = vsel %vm8651, %v10108, %v10110
  %v10112 = vrot.slane %v10049, 4
  %v10113 = vsel %vm8651, %v10110, %v10112
  %v10114 = vrot.slane %v10050, 4
  %v10115 = vsel %vm8651, %v10112, %v10114
  %v10137 = vadd.f32 %v10008, %v10075
  %v10138 = vadd.f32 %v10009, %v10077
  %v10139 = vadd.f32 %v10010, %v10079
  %v10140 = vadd.f32 %v10011, %v10081
  %v10141 = vadd.f32 %v10012, %v10083
  %v10142 = vadd.f32 %v10013, %v10085
  %v10143 = vadd.f32 %v10014, %v10087
  %v10144 = vadd.f32 %v10015, %v10089
  %v10145 = vadd.f32 %v10016, %v10091
  %v10146 = vadd.f32 %v10017, %v10093
  %v10147 = vadd.f32 %v10018, %v10095
  %v10148 = vadd.f32 %v10019, %v10097
  %v10149 = vadd.f32 %v10020, %v10099
  %v10150 = vadd.f32 %v10021, %v10101
  %v10151 = vadd.f32 %v10022, %v10103
  %v10152 = vadd.f32 %v10023, %v10105
  %v10153 = vadd.f32 %v10024, %v10107
  %v10154 = vadd.f32 %v10025, %v10109
  %v10155 = vadd.f32 %v10026, %v10111
  %v10156 = vadd.f32 %v10027, %v10113
  %v10157 = vadd.f32 %v10028, %v10115
  %v10158 = vld [vmem:[#allocation3 + $0x4a0] sm:$0xe0]
  %v10159 = vld [vmem:[#allocation3 + $0x7e8] sm:$0x7]
  %v10162 = vrot.slane %v10158, 5
  %v10163 = vrot.slane %v10030, 5
  %v10164 = vsel %vm8741, %v10162, %v10163
  %v10165 = vrot.slane %v10031, 5
  %v10166 = vsel %vm8741, %v10163, %v10165
  %v10167 = vrot.slane %v10032, 5
  %v10168 = vsel %vm8741, %v10165, %v10167
  %v10169 = vrot.slane %v10033, 5
  %v10170 = vsel %vm8741, %v10167, %v10169
  %v10171 = vrot.slane %v10034, 5
  %v10172 = vsel %vm8741, %v10169, %v10171
  %v10173 = vrot.slane %v10035, 5
  %v10174 = vsel %vm8741, %v10171, %v10173
  %v10175 = vrot.slane %v10036, 5
  %v10176 = vsel %vm8741, %v10173, %v10175
  %v10177 = vrot.slane %v10037, 5
  %v10178 = vsel %vm8741, %v10175, %v10177
  %v10179 = vrot.slane %v10038, 5
  %v10180 = vsel %vm8741, %v10177, %v10179
  %v10181 = vrot.slane %v10039, 5
  %v10182 = vsel %vm8741, %v10179, %v10181
  %v10183 = vrot.slane %v10040, 5
  %v10184 = vsel %vm8741, %v10181, %v10183
  %v10185 = vrot.slane %v10041, 5
  %v10186 = vsel %vm8741, %v10183, %v10185
  %v10187 = vrot.slane %v10042, 5
  %v10188 = vsel %vm8741, %v10185, %v10187
  %v10189 = vrot.slane %v10043, 5
  %v10190 = vsel %vm8741, %v10187, %v10189
  %v10191 = vrot.slane %v10044, 5
  %v10192 = vsel %vm8741, %v10189, %v10191
  %v10193 = vrot.slane %v10045, 5
  %v10194 = vsel %vm8741, %v10191, %v10193
  %v10195 = vrot.slane %v10046, 5
  %v10196 = vsel %vm8741, %v10193, %v10195
  %v10197 = vrot.slane %v10047, 5
  %v10198 = vsel %vm8741, %v10195, %v10197
  %v10199 = vrot.slane %v10048, 5
  %v10200 = vsel %vm8741, %v10197, %v10199
  %v10201 = vrot.slane %v10049, 5
  %v10202 = vsel %vm8741, %v10199, %v10201
  %v10203 = vrot.slane %v10159, 5
  %v10204 = vsel %vm8741, %v10201, %v10203
  %10205 = vrot.lane.b32.xlu0 %v10164, 64
  %v10206 = vpop.permute.xlu0 %10205
  %10207 = vrot.lane.b32.xlu0 %v10166, 64
  %v10208 = vpop.permute.xlu0 %10207
  %10209 = vrot.lane.b32.xlu0 %v10168, 64
  %v10210 = vpop.permute.xlu0 %10209
  %10211 = vrot.lane.b32.xlu0 %v10170, 64
  %v10212 = vpop.permute.xlu0 %10211
  %10213 = vrot.lane.b32.xlu0 %v10172, 64
  %v10214 = vpop.permute.xlu0 %10213
  %10215 = vrot.lane.b32.xlu0 %v10174, 64
  %v10216 = vpop.permute.xlu0 %10215
  %10217 = vrot.lane.b32.xlu0 %v10176, 64
  %v10218 = vpop.permute.xlu0 %10217
  %10219 = vrot.lane.b32.xlu0 %v10178, 64
  %v10220 = vpop.permute.xlu0 %10219
  %10221 = vrot.lane.b32.xlu0 %v10180, 64
  %v10222 = vpop.permute.xlu0 %10221
  %10223 = vrot.lane.b32.xlu0 %v10182, 64
  %v10224 = vpop.permute.xlu0 %10223
  %10225 = vrot.lane.b32.xlu0 %v10184, 64
  %v10226 = vpop.permute.xlu0 %10225
  %10227 = vrot.lane.b32.xlu0 %v10186, 64
  %v10228 = vpop.permute.xlu0 %10227
  %10229 = vrot.lane.b32.xlu0 %v10188, 64
  %v10230 = vpop.permute.xlu0 %10229
  %10231 = vrot.lane.b32.xlu0 %v10190, 64
  %v10232 = vpop.permute.xlu0 %10231
  %10233 = vrot.lane.b32.xlu0 %v10192, 64
  %v10234 = vpop.permute.xlu0 %10233
  %10235 = vrot.lane.b32.xlu0 %v10194, 64
  %v10236 = vpop.permute.xlu0 %10235
  %10237 = vrot.lane.b32.xlu0 %v10196, 64
  %v10238 = vpop.permute.xlu0 %10237
  %10239 = vrot.lane.b32.xlu0 %v10198, 64
  %v10240 = vpop.permute.xlu0 %10239
  %10241 = vrot.lane.b32.xlu0 %v10200, 64
  %v10242 = vpop.permute.xlu0 %10241
  %10243 = vrot.lane.b32.xlu0 %v10202, 64
  %v10244 = vpop.permute.xlu0 %10243
  %10245 = vrot.lane.b32.xlu0 %v10204, 64
  %v10246 = vpop.permute.xlu0 %10245
  %v10268 = vadd.f32 %v10137, %v10206
  %v10269 = vadd.f32 %v10138, %v10208
  %v10270 = vadd.f32 %v10139, %v10210
  %v10271 = vadd.f32 %v10140, %v10212
  %v10272 = vadd.f32 %v10141, %v10214
  %v10273 = vadd.f32 %v10142, %v10216
  %v10274 = vadd.f32 %v10143, %v10218
  %v10275 = vadd.f32 %v10144, %v10220
  %v10276 = vadd.f32 %v10145, %v10222
  %v10277 = vadd.f32 %v10146, %v10224
  %v10278 = vadd.f32 %v10147, %v10226
  %v10279 = vadd.f32 %v10148, %v10228
  %v10280 = vadd.f32 %v10149, %v10230
  %v10281 = vadd.f32 %v10150, %v10232
  %v10282 = vadd.f32 %v10151, %v10234
  %v10283 = vadd.f32 %v10152, %v10236
  %v10284 = vadd.f32 %v10153, %v10238
  %v10285 = vadd.f32 %v10154, %v10240
  %v10286 = vadd.f32 %v10155, %v10242
  %v10287 = vadd.f32 %v10156, %v10244
  %v10288 = vadd.f32 %v10157, %v10246
  %v10289 = vld [vmem:[#allocation3 + $0x4a8] sm:$0xc0]
  %v10290 = vld [vmem:[#allocation3 + $0x4d0] sm:$0xff]
  %v10291 = vld [vmem:[#allocation3 + $0x4f8] sm:$0xff]
  %v10292 = vld [vmem:[#allocation3 + $0x520] sm:$0xff]
  %v10293 = vld [vmem:[#allocation3 + $0x548] sm:$0xff]
  %v10294 = vld [vmem:[#allocation3 + $0x570] sm:$0xff]
  %v10295 = vld [vmem:[#allocation3 + $0x598] sm:$0xff]
  %v10296 = vld [vmem:[#allocation3 + $0x5c0] sm:$0xff]
  %v10297 = vld [vmem:[#allocation3 + $0x5e8] sm:$0xff]
  %v10298 = vld [vmem:[#allocation3 + $0x610] sm:$0xff]
  %v10299 = vld [vmem:[#allocation3 + $0x638] sm:$0xff]
  %v10300 = vld [vmem:[#allocation3 + $0x660] sm:$0xff]
  %v10301 = vld [vmem:[#allocation3 + $0x688] sm:$0xff]
  %v10302 = vld [vmem:[#allocation3 + $0x6b0] sm:$0xff]
  %v10303 = vld [vmem:[#allocation3 + $0x6d8] sm:$0xff]
  %v10304 = vld [vmem:[#allocation3 + $0x700] sm:$0xff]
  %v10305 = vld [vmem:[#allocation3 + $0x728] sm:$0xff]
  %v10306 = vld [vmem:[#allocation3 + $0x750] sm:$0xff]
  %v10307 = vld [vmem:[#allocation3 + $0x778] sm:$0xff]
  %v10308 = vld [vmem:[#allocation3 + $0x7a0] sm:$0xff]
  %v10309 = vld [vmem:[#allocation3 + $0x7c8] sm:$0xff]
  %v10310 = vld [vmem:[#allocation3 + $0x7f0] sm:$0xf]
  %v10333 = vrot.slane %v10289, 6
  %v10334 = vrot.slane %v10290, 6
  %v10335 = vsel %vm8263, %v10333, %v10334
  %v10336 = vrot.slane %v10291, 6
  %v10337 = vsel %vm8263, %v10334, %v10336
  %v10338 = vrot.slane %v10292, 6
  %v10339 = vsel %vm8263, %v10336, %v10338
  %v10340 = vrot.slane %v10293, 6
  %v10341 = vsel %vm8263, %v10338, %v10340
  %v10342 = vrot.slane %v10294, 6
  %v10343 = vsel %vm8263, %v10340, %v10342
  %v10344 = vrot.slane %v10295, 6
  %v10345 = vsel %vm8263, %v10342, %v10344
  %v10346 = vrot.slane %v10296, 6
  %v10347 = vsel %vm8263, %v10344, %v10346
  %v10348 = vrot.slane %v10297, 6
  %v10349 = vsel %vm8263, %v10346, %v10348
  %v10350 = vrot.slane %v10298, 6
  %v10351 = vsel %vm8263, %v10348, %v10350
  %v10352 = vrot.slane %v10299, 6
  %v10353 = vsel %vm8263, %v10350, %v10352
  %v10354 = vrot.slane %v10300, 6
  %v10355 = vsel %vm8263, %v10352, %v10354
  %v10356 = vrot.slane %v10301, 6
  %v10357 = vsel %vm8263, %v10354, %v10356
  %v10358 = vrot.slane %v10302, 6
  %v10359 = vsel %vm8263, %v10356, %v10358
  %v10360 = vrot.slane %v10303, 6
  %v10361 = vsel %vm8263, %v10358, %v10360
  %v10362 = vrot.slane %v10304, 6
  %v10363 = vsel %vm8263, %v10360, %v10362
  %v10364 = vrot.slane %v10305, 6
  %v10365 = vsel %vm8263, %v10362, %v10364
  %v10366 = vrot.slane %v10306, 6
  %v10367 = vsel %vm8263, %v10364, %v10366
  %v10368 = vrot.slane %v10307, 6
  %v10369 = vsel %vm8263, %v10366, %v10368
  %v10370 = vrot.slane %v10308, 6
  %v10371 = vsel %vm8263, %v10368, %v10370
  %v10372 = vrot.slane %v10309, 6
  %v10373 = vsel %vm8263, %v10370, %v10372
  %v10374 = vrot.slane %v10310, 6
  %v10375 = vsel %vm8263, %v10372, %v10374
  %v10397 = vadd.f32 %v10268, %v10335
  %v10398 = vadd.f32 %v10269, %v10337
  %v10399 = vadd.f32 %v10270, %v10339
  %v10400 = vadd.f32 %v10271, %v10341
  %v10401 = vadd.f32 %v10272, %v10343
  %v10402 = vadd.f32 %v10273, %v10345
  %v10403 = vadd.f32 %v10274, %v10347
  %v10404 = vadd.f32 %v10275, %v10349
  %v10405 = vadd.f32 %v10276, %v10351
  %v10406 = vadd.f32 %v10277, %v10353
  %v10407 = vadd.f32 %v10278, %v10355
  %v10408 = vadd.f32 %v10279, %v10357
  %v10409 = vadd.f32 %v10280, %v10359
  %v10410 = vadd.f32 %v10281, %v10361
  %v10411 = vadd.f32 %v10282, %v10363
  %v10412 = vadd.f32 %v10283, %v10365
  %v10413 = vadd.f32 %v10284, %v10367
  %v10414 = vadd.f32 %v10285, %v10369
  %v10415 = vadd.f32 %v10286, %v10371
  %v10416 = vadd.f32 %v10287, %v10373
  %v10417 = vadd.f32 %v10288, %v10375
  %v10418 = vadd.f32 %v10397, %v9002
  %v10419 = vadd.f32 %v10398, %v9002
  %v10420 = vadd.f32 %v10399, %v9002
  %v10421 = vadd.f32 %v10400, %v9002
  %v10422 = vadd.f32 %v10401, %v9002
  %v10423 = vadd.f32 %v10402, %v9002
  %v10424 = vadd.f32 %v10403, %v9002
  %v10425 = vadd.f32 %v10404, %v9002
  %v10426 = vadd.f32 %v10405, %v9002
  %v10427 = vadd.f32 %v10406, %v9002
  %v10428 = vadd.f32 %v10407, %v9002
  %v10429 = vadd.f32 %v10408, %v9002
  %v10430 = vadd.f32 %v10409, %v9002
  %v10431 = vadd.f32 %v10410, %v9002
  %v10432 = vadd.f32 %v10411, %v9002
  %v10433 = vadd.f32 %v10412, %v9002
  %v10434 = vadd.f32 %v10413, %v9002
  %v10435 = vadd.f32 %v10414, %v9002
  %v10436 = vadd.f32 %v10415, %v9002
  %v10437 = vadd.f32 %v10416, %v9002
  %v10438 = vadd.f32 %v10417, %v9002
  %v10439 = vmax.f32 %v10418, 0.0
  %v10440 = vmax.f32 %v10419, 0.0
  %v10441 = vmax.f32 %v10420, 0.0
  %v10442 = vmax.f32 %v10421, 0.0
  %v10443 = vmax.f32 %v10422, 0.0
  %v10444 = vmax.f32 %v10423, 0.0
  %v10445 = vmax.f32 %v10424, 0.0
  %v10446 = vmax.f32 %v10425, 0.0
  %v10447 = vmax.f32 %v10426, 0.0
  %v10448 = vmax.f32 %v10427, 0.0
  %v10449 = vmax.f32 %v10428, 0.0
  %v10450 = vmax.f32 %v10429, 0.0
  %v10451 = vmax.f32 %v10430, 0.0
  %v10452 = vmax.f32 %v10431, 0.0
  %v10453 = vmax.f32 %v10432, 0.0
  %v10454 = vmax.f32 %v10433, 0.0
  %v10455 = vmax.f32 %v10434, 0.0
  %v10456 = vmax.f32 %v10435, 0.0
  %v10457 = vmax.f32 %v10436, 0.0
  %v10458 = vmax.f32 %v10437, 0.0
  %v10459 = vmax.f32 %v10438, 0.0
  %v10480 = vrot.slane %v10440, 6
  %v10481 = vrot.slane %v10441, 6
  %v10482 = vsel %vm8263, %v10480, %v10481
  %v10483 = vrot.slane %v10442, 6
  %v10484 = vsel %vm8263, %v10481, %v10483
  %v10485 = vrot.slane %v10443, 6
  %v10486 = vsel %vm8263, %v10483, %v10485
  %v10487 = vrot.slane %v10444, 6
  %v10488 = vsel %vm8263, %v10485, %v10487
  %v10489 = vrot.slane %v10445, 6
  %v10490 = vsel %vm8263, %v10487, %v10489
  %v10491 = vrot.slane %v10446, 6
  %v10492 = vsel %vm8263, %v10489, %v10491
  %v10493 = vrot.slane %v10447, 6
  %v10494 = vsel %vm8263, %v10491, %v10493
  %v10495 = vrot.slane %v10448, 6
  %v10496 = vsel %vm8263, %v10493, %v10495
  %v10497 = vrot.slane %v10449, 6
  %v10498 = vsel %vm8263, %v10495, %v10497
  %v10499 = vrot.slane %v10450, 6
  %v10500 = vsel %vm8263, %v10497, %v10499
  %v10501 = vrot.slane %v10451, 6
  %v10502 = vsel %vm8263, %v10499, %v10501
  %v10503 = vrot.slane %v10452, 6
  %v10504 = vsel %vm8263, %v10501, %v10503
  %v10505 = vrot.slane %v10453, 6
  %v10506 = vsel %vm8263, %v10503, %v10505
  %v10507 = vrot.slane %v10454, 6
  %v10508 = vsel %vm8263, %v10505, %v10507
  %v10509 = vrot.slane %v10455, 6
  %v10510 = vsel %vm8263, %v10507, %v10509
  %v10511 = vrot.slane %v10456, 6
  %v10512 = vsel %vm8263, %v10509, %v10511
  %v10513 = vrot.slane %v10457, 6
  %v10514 = vsel %vm8263, %v10511, %v10513
  %v10515 = vrot.slane %v10458, 6
  %v10516 = vsel %vm8263, %v10513, %v10515
  %v10517 = vrot.slane %v10459, 6
  %v10518 = vsel %vm8263, %v10515, %v10517
  %v10538 = vmax.f32 %v10439, %v10482
  %v10539 = vmax.f32 %v10440, %v10484
  %v10540 = vmax.f32 %v10441, %v10486
  %v10541 = vmax.f32 %v10442, %v10488
  %v10542 = vmax.f32 %v10443, %v10490
  %v10543 = vmax.f32 %v10444, %v10492
  %v10544 = vmax.f32 %v10445, %v10494
  %v10545 = vmax.f32 %v10446, %v10496
  %v10546 = vmax.f32 %v10447, %v10498
  %v10547 = vmax.f32 %v10448, %v10500
  %v10548 = vmax.f32 %v10449, %v10502
  %v10549 = vmax.f32 %v10450, %v10504
  %v10550 = vmax.f32 %v10451, %v10506
  %v10551 = vmax.f32 %v10452, %v10508
  %v10552 = vmax.f32 %v10453, %v10510
  %v10553 = vmax.f32 %v10454, %v10512
  %v10554 = vmax.f32 %v10455, %v10514
  %v10555 = vmax.f32 %v10456, %v10516
  %v10556 = vmax.f32 %v10457, %v10518
  %v10576 = vrot.slane %v10538, 1
  %v10577 = vrot.slane %v10539, 1
  %v10578 = vsel %vm8005, %v10576, %v10577
  %v10579 = vrot.slane %v10540, 1
  %v10580 = vsel %vm8005, %v10577, %v10579
  %v10581 = vrot.slane %v10541, 1
  %v10582 = vsel %vm8005, %v10579, %v10581
  %v10583 = vrot.slane %v10542, 1
  %v10584 = vsel %vm8005, %v10581, %v10583
  %v10585 = vrot.slane %v10543, 1
  %v10586 = vsel %vm8005, %v10583, %v10585
  %v10587 = vrot.slane %v10544, 1
  %v10588 = vsel %vm8005, %v10585, %v10587
  %v10589 = vrot.slane %v10545, 1
  %v10590 = vsel %vm8005, %v10587, %v10589
  %v10591 = vrot.slane %v10546, 1
  %v10592 = vsel %vm8005, %v10589, %v10591
  %v10593 = vrot.slane %v10547, 1
  %v10594 = vsel %vm8005, %v10591, %v10593
  %v10595 = vrot.slane %v10548, 1
  %v10596 = vsel %vm8005, %v10593, %v10595
  %v10597 = vrot.slane %v10549, 1
  %v10598 = vsel %vm8005, %v10595, %v10597
  %v10599 = vrot.slane %v10550, 1
  %v10600 = vsel %vm8005, %v10597, %v10599
  %v10601 = vrot.slane %v10551, 1
  %v10602 = vsel %vm8005, %v10599, %v10601
  %v10603 = vrot.slane %v10552, 1
  %v10604 = vsel %vm8005, %v10601, %v10603
  %v10605 = vrot.slane %v10553, 1
  %v10606 = vsel %vm8005, %v10603, %v10605
  %v10607 = vrot.slane %v10554, 1
  %v10608 = vsel %vm8005, %v10605, %v10607
  %v10609 = vrot.slane %v10555, 1
  %v10610 = vsel %vm8005, %v10607, %v10609
  %v10611 = vrot.slane %v10556, 1
  %v10612 = vsel %vm8005, %v10609, %v10611
  %v10632 = vmax.f32 %v10538, %v10578
  %v10633 = vmax.f32 %v10539, %v10580
  %v10634 = vmax.f32 %v10540, %v10582
  %v10635 = vmax.f32 %v10541, %v10584
  %v10636 = vmax.f32 %v10542, %v10586
  %v10637 = vmax.f32 %v10543, %v10588
  %v10638 = vmax.f32 %v10544, %v10590
  %v10639 = vmax.f32 %v10545, %v10592
  %v10640 = vmax.f32 %v10546, %v10594
  %v10641 = vmax.f32 %v10547, %v10596
  %v10642 = vmax.f32 %v10548, %v10598
  %v10643 = vmax.f32 %v10549, %v10600
  %v10644 = vmax.f32 %v10550, %v10602
  %v10645 = vmax.f32 %v10551, %v10604
  %v10646 = vmax.f32 %v10552, %v10606
  %v10647 = vmax.f32 %v10553, %v10608
  %v10648 = vmax.f32 %v10554, %v10610
  %v10649 = vmax.f32 %v10555, %v10612
  %v10650 = vmax.f32 %v10556, %v10611
  %v10652 = vsel %vm8005, %v10650, 0
  %10654 = vmatprep.subr.mxu0 0.0
  %10655 = vmatpush1.msra.mxu0 %v10647
  %10656 = vmatprep.subr.mxu0 0.0
  %10657 = vmatpush1.msra.mxu0 %v10646
  %10658 = vmatprep.subr.mxu0 0.0
  %10659 = vmatpush1.msra.mxu0 %v10645
  %10660 = vmatprep.subr.mxu0 0.0
  %10661 = vmatpush1.msra.mxu0 %v10644
  %10662 = vmatprep.subr.mxu0 0.0
  %10663 = vmatpush1.msra.mxu0 %v10643
  %10664 = vmatprep.subr.mxu0 0.0
  %10665 = vmatpush1.msra.mxu0 %v10642
  %10666 = vmatprep.subr.mxu0 0.0
  %10667 = vmatpush1.msra.mxu0 %v10641
  %10668 = vmatprep.subr.mxu0 0.0
  %10669 = vmatpush1.msra.mxu0 %v10640
  %10670 = vmatprep.subr.mxu0 0.0
  %10671 = vmatpush1.msra.mxu0 %v10639
  %10672 = vmatprep.subr.mxu0 0.0
  %10673 = vmatpush1.msra.mxu0 %v10638
  %10674 = vmatprep.subr.mxu0 0.0
  %10675 = vmatpush1.msra.mxu0 %v10637
  %10676 = vmatprep.subr.mxu0 0.0
  %10677 = vmatpush1.msra.mxu0 %v10636
  %10678 = vmatprep.subr.mxu0 0.0
  %10679 = vmatpush1.msra.mxu0 %v10635
  %10680 = vmatprep.subr.mxu0 0.0
  %10681 = vmatpush1.msra.mxu0 %v10634
  %10682 = vmatprep.subr.mxu0 0.0
  %10683 = vmatpush1.msra.mxu0 %v10633
  %10684 = vmatprep.subr.mxu0 0.0
  %10685 = vmatpush1.msra.mxu0 %v10632
  %10686 = vmatprep.subr.mxu0 0.0
  %10687 = vmatpush2.msra.mxu0 0.0
  %10688 = vmatprep.subr.mxu0 0.0
  %10689 = vmatpush2.msra.mxu0 0.0
  %10690 = vmatprep.subr.mxu0 0.0
  %10691 = vmatpush2.msra.mxu0 0.0
  %10692 = vmatprep.subr.mxu0 0.0
  %10693 = vmatpush2.msra.mxu0 0.0
  %10694 = vmatprep.subr.mxu0 0.0
  %10695 = vmatpush2.msra.mxu0 0.0
  %10696 = vmatprep.subr.mxu0 0.0
  %10697 = vmatpush2.msra.mxu0 0.0
  %10698 = vmatprep.subr.mxu0 0.0
  %10699 = vmatpush2.msra.mxu0 0.0
  %10700 = vmatprep.subr.mxu0 0.0
  %10701 = vmatpush2.msra.mxu0 0.0
  %10702 = vmatprep.subr.mxu0 0.0
  %10703 = vmatpush2.msra.mxu0 0.0
  %10704 = vmatprep.subr.mxu0 0.0
  %10705 = vmatpush2.msra.mxu0 0.0
  %10706 = vmatprep.subr.mxu0 0.0
  %10707 = vmatpush2.msra.mxu0 0.0
  %10708 = vmatprep.subr.mxu0 0.0
  %10709 = vmatpush2.msra.mxu0 0.0
  %10710 = vmatprep.subr.mxu0 0.0
  %10711 = vmatpush2.msra.mxu0 0.0
  %10712 = vmatprep.subr.mxu0 0.0
  %10713 = vmatpush2.msra.mxu0 %v10652
  %10714 = vmatprep.subr.mxu0 0.0
  %10715 = vmatpush2.msra.mxu0 %v10649
  %10716 = vmatprep.subr.mxu0 0.0
  %10717 = vmatpush2.msra.mxu0 %v10648
  %10718 = vmatprep.mubr.f32.mxu0 %v9239
  %10719 = vmatmul.mubr.f32.gmra.mxu0 %v7951
  %v10720 = vpop.f32.mrf.mxu0
  %v10721 = vadd.f32 0.0, %v10720
  %v10722 = vpop.f32.mrf.mxu0
  %10723 = vmatprep.mubr.f32.mxu0 %v9242
  %10724 = vmatmul.mubr.f32.gmra.mxu0 %v7953
  %v10725 = vpop.f32.mrf.mxu0
  %v10726 = vadd.f32 0.0, %v10725
  %v10727 = vpop.f32.mrf.mxu0
  %10728 = vmatprep.mubr.f32.mxu0 %v9245
  %10729 = vmatmul.mubr.f32.gmra.mxu0 %v7955
  %v10730 = vpop.f32.mrf.mxu0
  %v10731 = vadd.f32 0.0, %v10730
  %v10732 = vpop.f32.mrf.mxu0
  %10733 = vmatprep.mubr.f32.mxu0 %v9248
  %10734 = vmatmul.mubr.f32.gmra.mxu0 %v7957
  %v10735 = vpop.f32.mrf.mxu0
  %v10736 = vadd.f32 0.0, %v10735
  %v10737 = vpop.f32.mrf.mxu0
  %10738 = vmatprep.mubr.f32.mxu0 %v9251
  %10739 = vmatmul.mubr.f32.gmra.mxu0 %v7959
  %v10740 = vpop.f32.mrf.mxu0
  %v10741 = vadd.f32 0.0, %v10740
  %v10742 = vpop.f32.mrf.mxu0
  %10743 = vdwg.mxu0
  %10744 = vxpose.xlu0.b32.start [1/16] %v10721, 128
  %10745 = vxpose.xlu0.b32.cont [2/16] %v10726, 128
  %10746 = vxpose.xlu0.b32.cont [3/16] %v10731, 128
  %10747 = vxpose.xlu0.b32.cont [4/16] %v10736, 128
  %10748 = vxpose.xlu0.b32.cont [5/16] %v10741, 128
  %10749 = vxpose.xlu0.b32.cont [6/16] 0.0, 128
  %10750 = vxpose.xlu0.b32.cont [7/16] 0.0, 128
  %10751 = vxpose.xlu0.b32.cont [8/16] 0.0, 128
  %10752 = vxpose.xlu0.b32.cont [9/16] 0.0, 128
  %10753 = vxpose.xlu0.b32.cont [10/16] 0.0, 128
  %10754 = vxpose.xlu0.b32.cont [11/16] 0.0, 128
  %10755 = vxpose.xlu0.b32.cont [12/16] 0.0, 128
  %10756 = vxpose.xlu0.b32.cont [13/16] 0.0, 128
  %10757 = vxpose.xlu0.b32.cont [14/16] 0.0, 128
  %10758 = vxpose.xlu0.b32.cont [15/16] 0.0, 128
  %10759 = vxpose.xlu0.b32.end [16/16] 0.0, 128
  %v10760 = vpop.trf.xlu0
  %v10761 = vpop.trf.xlu0
  %v10762 = vpop.trf.xlu0
  %v10763 = vpop.trf.xlu0
  %v10764 = vpop.trf.xlu0
  %v10765 = vpop.trf.xlu0
  %v10766 = vpop.trf.xlu0
  %v10767 = vpop.trf.xlu0
  %v10768 = vpop.trf.xlu0
  %v10769 = vpop.trf.xlu0
  %v10770 = vpop.trf.xlu0
  %v10771 = vpop.trf.xlu0
  %v10772 = vpop.trf.xlu0
  %v10773 = vpop.trf.xlu0
  %v10774 = vpop.trf.xlu0
  %v10775 = vpop.trf.xlu0
  %s10776 = scalar_lea.vmem %s6, 64
  %10777 = vst.msk [vmem:[%s10776] sm:$0xff] %vm9378, %v10760
  %10778 = vst.msk [vmem:[%s10776 + $0x8] sm:$0xff] %vm9378, %v10761
  %10779 = vst.msk [vmem:[%s10776 + $0x10] sm:$0xff] %vm9378, %v10762
  %10780 = vst.msk [vmem:[%s10776 + $0x18] sm:$0xff] %vm9378, %v10763
  %10781 = vst.msk [vmem:[%s10776 + $0x20] sm:$0xff] %vm9378, %v10764
  %10782 = vst.msk [vmem:[%s10776 + $0x28] sm:$0xff] %vm9378, %v10765
  %10783 = vst.msk [vmem:[%s10776 + $0x30] sm:$0xff] %vm9378, %v10766
  %10784 = vst.msk [vmem:[%s10776 + $0x38] sm:$0xff] %vm9378, %v10767
  // Predicated region
  $region26: #{net_part1_forward.1} parent=0 // pred_check
    _
  $region27: #{net_part1_forward.1} parent=0 // pred_check_branch
    %10786 = sbr.rel (0) target = $region29
  $region28: #{net_part1_forward.1} parent=0 // pred_region
    _
  $region29: #{net_part1_forward.1} parent=0 // pred_fallthru
    _
  // Predicated region
  $region30: #{net_part1_forward.1} parent=0 // pred_check
    _
  $region31: #{net_part1_forward.1} parent=0 // pred_check_branch
    %10788 = sbr.rel (0) target = $region33
  $region32: #{net_part1_forward.1} parent=0 // pred_region
    _
  $region33: #{net_part1_forward.1} parent=0 // pred_fallthru
    _

</llo_original>
